<compile_context>
chip_gen: v7x
topology: tpu7x:2x2x1
jax: 0.10.0
libtpu: 0.0.40
codegen_flags: <defaults>
</compile_context>

<pallas_src>
import functools
import numpy as np
import jax
import jax.numpy as jnp
from jax.experimental import pallas as pl
from jax.experimental.pallas import tpu as pltpu

NEG_SLOPE = 0.01  # torch.nn.LeakyReLU default


def _leaky(x):
    return jnp.where(x > 0, x, NEG_SLOPE * x)


def _pick_chunk(T, target=128):
    """Largest divisor of T that is <= target and a multiple of 8 (or T)."""
    if T <= target:
        return T
    for d in (target, 64, 32, 16, 8):
        if T % d == 0:
            return d
    return T


# --------------------------------------------------------------------- prenet
def _prenet_kernel(zp_ref, w1_ref, b1_ref, w2_ref, b2_ref,
                   wif_ref, bif_ref, wib_ref, bib_ref,
                   gf_ref, gb_ref, *, K1, K2):
    B, TC, G = gf_ref.shape
    Cin = zp_ref.shape[-1]
    C1 = w1_ref.shape[-1]
    p2 = (K2 - 1) // 2
    halo = (K1 - 1) // 2 + p2
    E = TC + 2 * p2                       # conv1 rows needed by this chunk

    c = pl.program_id(0)
    t0 = c * TC
    if TC % 8 == 0:
        t0 = pl.multiple_of(t0, 8)
    zw = zp_ref[:, pl.ds(t0, TC + 2 * halo), :]           # (B, TC+2*halo, Cin)

    # conv1 via im2col: one (B*E, K1*Cin) x (K1*Cin, C1) matmul (depth K1*Cin).
    x1c = jnp.concatenate([zw[:, k:k + E, :] for k in range(K1)], axis=-1)
    x1 = _leaky(jnp.dot(x1c.reshape(B * E, K1 * Cin), w1_ref[...],
                        preferred_element_type=jnp.float32) + b1_ref[...])
    x1 = x1.reshape(B, E, C1)

    # conv2's 'same' padding pads conv1's *output* with zeros, so zero the
    # halo rows that fall outside [0, T).
    T_total = pl.num_programs(0) * TC
    tglob = c * TC - p2 + jax.lax.broadcasted_iota(jnp.int32, (1, E, 1), 1)
    x1 = jnp.where((tglob >= 0) & (tglob < T_total), x1, 0.0)

    # conv2 via im2col: one (B*TC, K2*C1) x (K2*C1, C1) matmul (depth K2*C1).
    x2c = jnp.concatenate([x1[:, k:k + TC, :] for k in range(K2)], axis=-1)
    x2 = jnp.dot(x2c.reshape(B * TC, K2 * C1), w2_ref[...],
                 preferred_element_type=jnp.float32) + b2_ref[...]

    # fused GRU input-gate preactivations for both directions.
    gf = jnp.dot(x2, wif_ref[...], preferred_element_type=jnp.float32) + bif_ref[...]
    gb = jnp.dot(x2, wib_ref[...], preferred_element_type=jnp.float32) + bib_ref[...]
    gf_ref[...] = gf.reshape(B, TC, G)
    gb_ref[...] = gb.reshape(B, TC, G)


def _run_prenet(Z, c1a_w, c1a_b, c1b_w, c1b_b, w_ih_f, b_ih_f, w_ih_b, b_ih_b, TC):
    B, T, Cin = Z.shape
    K1, _, C1 = c1a_w.shape
    K2 = c1b_w.shape[0]
    G = w_ih_f.shape[1]
    halo = (K1 - 1) // 2 + (K2 - 1) // 2
    Nc = T // TC
    Zp = jnp.pad(Z, ((0, 0), (halo, halo), (0, 0)))       # tiny (Cin-wide) pad
    const2 = lambda c: (0, 0)
    tmap = lambda c: (0, c, 0)
    return pl.pallas_call(
        functools.partial(_prenet_kernel, K1=K1, K2=K2),
        out_shape=(jax.ShapeDtypeStruct((B, T, G), jnp.float32),) * 2,
        grid_spec=pltpu.PrefetchScalarGridSpec(
            num_scalar_prefetch=0,
            grid=(Nc,),
            in_specs=[
                pl.BlockSpec((B, T + 2 * halo, Cin), lambda c: (0, 0, 0)),
                pl.BlockSpec((K1 * Cin, C1), const2),
                pl.BlockSpec((1, C1), const2),
                pl.BlockSpec((K2 * C1, C1), const2),
                pl.BlockSpec((1, C1), const2),
                pl.BlockSpec((C1, G), const2),
                pl.BlockSpec((1, G), const2),
                pl.BlockSpec((C1, G), const2),
                pl.BlockSpec((1, G), const2),
            ],
            out_specs=[pl.BlockSpec((B, TC, G), tmap),
                       pl.BlockSpec((B, TC, G), tmap)]),
        compiler_params=pltpu.CompilerParams(dimension_semantics=("parallel",)),
    )(Zp, c1a_w.reshape(K1 * Cin, C1), c1a_b.reshape(1, C1),
      c1b_w.reshape(K2 * C1, C1), c1b_b.reshape(1, C1),
      w_ih_f, b_ih_f.reshape(1, G), w_ih_b, b_ih_b.reshape(1, G))


# --------------------------------------------------- bidirectional chunked GRU
def _bigru_kernel(gxf_ref, gxb_ref, whh_ref, bhh_ref, hf_ref, hb_ref, h_state,
                  *, unroll):
    B, TC, G = gxf_ref.shape
    H = G // 3

    @pl.when(pl.program_id(0) == 0)
    def _():
        h_state[...] = jnp.zeros_like(h_state)

    whh = whh_ref[...]                                     # (H, 2G) = [Whh_f | Whh_b]
    bhh = bhh_ref[...]                                     # (2B, G)
    is_fwd = jax.lax.broadcasted_iota(jnp.int32, (2 * B, 1), 0) < B

    def step(i, h):
        # fwd walks t ascending, bwd walks t descending; one matmul per step.
        gx = jnp.concatenate([gxf_ref[:, i, :], gxb_ref[:, TC - 1 - i, :]], axis=0)
        ghh = jnp.dot(h, whh, preferred_element_type=jnp.float32)   # (2B, 2G)
        gh = jnp.where(is_fwd, ghh[:, :G], ghh[:, G:]) + bhh        # (2B, G)
        rz = jax.nn.sigmoid(gx[:, :2 * H] + gh[:, :2 * H])
        r, z = rz[:, :H], rz[:, H:]
        n = jnp.tanh(gx[:, 2 * H:] + r * gh[:, 2 * H:])
        h_new = (1.0 - z) * n + z * h
        hf_ref[:, i, :] = h_new[:B]
        hb_ref[:, TC - 1 - i, :] = h_new[B:]
        return h_new

    h_state[...] = jax.lax.fori_loop(0, TC, step, h_state[...], unroll=unroll)


def _run_bigru(gxf, gxb, pf, pb, TC, unroll):
    B, T, G = gxf.shape
    H = G // 3
    Nc = T // TC
    whh = jnp.concatenate([pf["w_hh"], pb["w_hh"]], axis=1)            # (H, 2G)
    bhh = jnp.concatenate([jnp.broadcast_to(pf["b_hh"], (B, G)),
                           jnp.broadcast_to(pb["b_hh"], (B, G))], axis=0)
    const2 = lambda c: (0, 0)
    return pl.pallas_call(
        functools.partial(_bigru_kernel, unroll=unroll),
        out_shape=(jax.ShapeDtypeStruct((B, T, H), jnp.float32),) * 2,
        grid_spec=pltpu.PrefetchScalarGridSpec(
            num_scalar_prefetch=0,
            grid=(Nc,),
            in_specs=[pl.BlockSpec((B, TC, G), lambda c: (0, c, 0)),
                      pl.BlockSpec((B, TC, G), lambda c, Nc=Nc: (0, Nc - 1 - c, 0)),
                      pl.BlockSpec((H, 2 * G), const2),
                      pl.BlockSpec((2 * B, G), const2)],
            out_specs=[pl.BlockSpec((B, TC, H), lambda c: (0, c, 0)),
                       pl.BlockSpec((B, TC, H), lambda c, Nc=Nc: (0, Nc - 1 - c, 0))],
            scratch_shapes=[pltpu.VMEM((2 * B, H), jnp.float32)]),
        compiler_params=pltpu.CompilerParams(dimension_semantics=("arbitrary",)),
    )(gxf, gxb, whh, bhh)


# ------------------------------------------- gates for GRU layers >= 2 (if any)
def _gates_kernel(hf_ref, hb_ref, wff_ref, wfb_ref, bf_ref,
                  wbf_ref, wbb_ref, bb_ref, gf_ref, gb_ref):
    B, TT, H = hf_ref.shape
    G = gf_ref.shape[-1]
    hf = hf_ref[...].reshape(B * TT, H)
    hb = hb_ref[...].reshape(B * TT, H)
    gf = (jnp.dot(hf, wff_ref[...], preferred_element_type=jnp.float32)
          + jnp.dot(hb, wfb_ref[...], preferred_element_type=jnp.float32) + bf_ref[...])
    gb = (jnp.dot(hf, wbf_ref[...], preferred_element_type=jnp.float32)
          + jnp.dot(hb, wbb_ref[...], preferred_element_type=jnp.float32) + bb_ref[...])
    gf_ref[...] = gf.reshape(B, TT, G)
    gb_ref[...] = gb.reshape(B, TT, G)


def _run_gates(hf, hb, pf, pb, TC):
    B, T, H = hf.shape
    G = pf["w_ih"].shape[1]
    Nc = T // TC
    const2 = lambda c: (0, 0)
    tmap = lambda c: (0, c, 0)
    return pl.pallas_call(
        _gates_kernel,
        out_shape=(jax.ShapeDtypeStruct((B, T, G), jnp.float32),) * 2,
        grid_spec=pltpu.PrefetchScalarGridSpec(
            num_scalar_prefetch=0,
            grid=(Nc,),
            in_specs=[pl.BlockSpec((B, TC, H), tmap),
                      pl.BlockSpec((B, TC, H), tmap),
                      pl.BlockSpec((H, G), const2),
                      pl.BlockSpec((H, G), const2),
                      pl.BlockSpec((1, G), const2),
                      pl.BlockSpec((H, G), const2),
                      pl.BlockSpec((H, G), const2),
                      pl.BlockSpec((1, G), const2)],
            out_specs=[pl.BlockSpec((B, TC, G), tmap),
                       pl.BlockSpec((B, TC, G), tmap)]),
        compiler_params=pltpu.CompilerParams(dimension_semantics=("parallel",)),
    )(hf, hb, pf["w_ih"][:H], pf["w_ih"][H:], pf["b_ih"].reshape(1, G),
      pb["w_ih"][:H], pb["w_ih"][H:], pb["b_ih"].reshape(1, G))


# ------------------------------------- cnn2 + mask + streaming sum + last Linear
def _head_kernel(hf_ref, hb_ref, m_ref, waf_ref, wab_ref, ba_ref,
                 wb_ref, bb_ref, wl_ref, bl_ref, o_ref, acc_ref):
    B, TT, H = hf_ref.shape
    C2 = waf_ref.shape[-1]
    t = pl.program_id(0)

    @pl.when(t == 0)
    def _():
        acc_ref[...] = jnp.zeros_like(acc_ref)

    hf = hf_ref[...].reshape(B * TT, H)
    hb = hb_ref[...].reshape(B * TT, H)
    y = _leaky(jnp.dot(hf, waf_ref[...], preferred_element_type=jnp.float32)
               + jnp.dot(hb, wab_ref[...], preferred_element_type=jnp.float32)
               + ba_ref[...])
    y = jnp.dot(y, wb_ref[...], preferred_element_type=jnp.float32) + bb_ref[...]
    y = y.reshape(B, TT, C2) * m_ref[...]
    acc_ref[...] += jnp.sum(y, axis=1)

    @pl.when(t == pl.num_programs(0) - 1)
    def _():
        o_ref[...] = (jnp.dot(acc_ref[...], wl_ref[...],
                              preferred_element_type=jnp.float32)
                      + bl_ref[...]).astype(o_ref.dtype)


def _run_head(hf, hb, mask, wa, ba, wb, bb, wl, bl, TC):
    B, T, H = hf.shape
    C2 = wa.shape[1]
    No = wl.shape[1]
    Nc = T // TC
    m3 = mask.astype(jnp.float32).reshape(B, T, 1)
    const2 = lambda c: (0, 0)
    tmap = lambda c: (0, c, 0)
    return pl.pallas_call(
        _head_kernel,
        out_shape=jax.ShapeDtypeStruct((B, No), jnp.float32),
        grid_spec=pltpu.PrefetchScalarGridSpec(
            num_scalar_prefetch=0,
            grid=(Nc,),
            in_specs=[pl.BlockSpec((B, TC, H), tmap),
                      pl.BlockSpec((B, TC, H), tmap),
                      pl.BlockSpec((B, TC, 1), tmap),
                      pl.BlockSpec((H, C2), const2),
                      pl.BlockSpec((H, C2), const2),
                      pl.BlockSpec((1, C2), const2),
                      pl.BlockSpec((C2, C2), const2),
                      pl.BlockSpec((1, C2), const2),
                      pl.BlockSpec((C2, No), const2),
                      pl.BlockSpec((1, No), const2)],
            out_specs=pl.BlockSpec((B, No), const2),
            scratch_shapes=[pltpu.VMEM((B, C2), jnp.float32)]),
        compiler_params=pltpu.CompilerParams(dimension_semantics=("arbitrary",)),
    )(hf, hb, m3, wa[:H], wa[H:], ba.reshape(1, C2), wb, bb.reshape(1, C2),
      wl, bl.reshape(1, No))


# ---------------------------------------------------------------- parameters
def init_params(key, cfg):
    n_in, c1 = cfg["n_inputs"], cfg["n_units_cnn1"]
    H, c2 = cfg["n_units_rnn"], cfg["n_units_cnn2"]
    ndir = 2 if cfg["rnn_bidir"] else 1
    ks = iter(jax.random.split(key, 64))

    def u(shape, fan_in):
        lim = 1.0 / np.sqrt(fan_in)
        return jax.random.uniform(next(ks), shape, jnp.float32, -lim, lim)

    p = {}
    p["c1a_w"], p["c1a_b"] = u((15, n_in, c1), n_in * 15), u((c1,), n_in * 15)
    p["c1b_w"], p["c1b_b"] = u((7, c1, c1), c1 * 7), u((c1,), c1 * 7)
    p["gru"] = []
    in_size = c1
    for _ in range(cfg["rnn_layers"]):
        layer = [dict(w_ih=u((in_size, 3 * H), H), w_hh=u((H, 3 * H), H),
                      b_ih=u((3 * H,), H), b_hh=u((3 * H,), H))
                 for _ in range(ndir)]
        p["gru"].append(layer)
        in_size = ndir * H
    p["c2a_w"], p["c2a_b"] = u((ndir * H, c2), ndir * H), u((c2,), ndir * H)
    p["c2b_w"], p["c2b_b"] = u((c2, c2), c2), u((c2,), c2)
    p["lin_w"], p["lin_b"] = u((c2, 2), c2), u((2,), c2)
    return p


# ------------------------------------------------------------------ forward
def znn_forward(params, Z, mask, cfg):
    # TODO(synk): unidirectional (rnn_bidir=False) GRU variant not implemented
    # in the fused kernels; the model config here uses bidirectional.
    assert cfg["rnn_bidir"], "fused Pallas path implements the bidirectional GRU only"
    B, T, _ = Z.shape
    TC = _pick_chunk(T)
    unroll = True if TC <= 64 else 8

    l0f, l0b = params["gru"][0]
    gxf, gxb = _run_prenet(Z, params["c1a_w"], params["c1a_b"],
                           params["c1b_w"], params["c1b_b"],
                           l0f["w_ih"], l0f["b_ih"], l0b["w_ih"], l0b["b_ih"], TC)
    hf, hb = _run_bigru(gxf, gxb, l0f, l0b, TC, unroll)
    for layer in params["gru"][1:]:
        gxf, gxb = _run_gates(hf, hb, layer[0], layer[1], TC)
        hf, hb = _run_bigru(gxf, gxb, layer[0], layer[1], TC, unroll)
    return _run_head(hf, hb, mask, params["c2a_w"], params["c2a_b"],
                     params["c2b_w"], params["c2b_b"],
                     params["lin_w"], params["lin_b"], TC)


# ------------------------------------------------------- pure-JAX reference
def znn_reference(params, Z, mask, cfg):
    def conv(x, w, b):
        K = w.shape[0]; pad = (K - 1) // 2; T = x.shape[1]
        xp = jnp.pad(x, ((0, 0), (pad, K - 1 - pad), (0, 0)))
        return sum(jnp.einsum("btc,cd->btd", xp[:, k:k + T, :], w[k])
                   for k in range(K)) + b

    H = cfg["n_units_rnn"]
    x = _leaky(conv(Z, params["c1a_w"], params["c1a_b"]))
    x = conv(x, params["c1b_w"], params["c1b_b"])
    B = x.shape[0]
    for layer in params["gru"]:
        outs = []
        for d, pr in enumerate(layer):
            xin = x if d == 0 else jnp.flip(x, 1)
            gx = xin @ pr["w_ih"] + pr["b_ih"]

            def step(h, g, pr=pr):
                gh = h @ pr["w_hh"] + pr["b_hh"]
                r = jax.nn.sigmoid(g[:, :H] + gh[:, :H])
                z = jax.nn.sigmoid(g[:, H:2 * H] + gh[:, H:2 * H])
                n = jnp.tanh(g[:, 2 * H:] + r * gh[:, 2 * H:])
                hn = (1.0 - z) * n + z * h
                return hn, hn

            _, hs = jax.lax.scan(step, jnp.zeros((B, H), jnp.float32),
                                 jnp.transpose(gx, (1, 0, 2)))
            h = jnp.transpose(hs, (1, 0, 2))
            outs.append(h if d == 0 else jnp.flip(h, 1))
        x = jnp.concatenate(outs, -1)
    y = _leaky(x @ params["c2a_w"] + params["c2a_b"])
    y = y @ params["c2b_w"] + params["c2b_b"]
    s = jnp.sum(y * mask[:, :, None], axis=1)
    return s @ params["lin_w"] + params["lin_b"]


if __name__ == "__main__":
    cfg = dict(n_inputs=4, n_units_cnn1=32, n_units_rnn=32, n_units_cnn2=32,
               rnn_bidir=True, rnn_layers=1)
    B, T = 2, 16
    key = jax.random.PRNGKey(0)
    kp, kz, km = jax.random.split(key, 3)
    params = init_params(kp, cfg)
    Z = jax.random.normal(kz, (B, T, cfg["n_inputs"]), jnp.float32)    # batch['Z']
    mask = (jax.random.uniform(km, (B, T)) > 0.2).astype(jnp.float32)  # batch['mask']

    fwd = jax.jit(functools.partial(znn_forward, cfg=cfg))
    out = jax.block_until_ready(fwd(params, Z, mask))
    assert out.shape == (B, 2) and out.dtype == jnp.float32

    ref = np.asarray(znn_reference(params, Z, mask, cfg))
    np.testing.assert_allclose(np.asarray(out), ref, rtol=1e-2, atol=1e-2)
    print("KERNEL_OK")
</pallas_src>

<mosaic_0001>
module attributes {stable_mosaic.version = 11 : i64} {
  func.func @_prenet_kernel(%arg0: i32, %arg1: memref<2x36x4xf32, #tpu.memory_space<vmem>>, %arg2: memref<60x32xf32, #tpu.memory_space<vmem>>, %arg3: memref<1x32xf32, #tpu.memory_space<vmem>>, %arg4: memref<224x32xf32, #tpu.memory_space<vmem>>, %arg5: memref<1x32xf32, #tpu.memory_space<vmem>>, %arg6: memref<32x96xf32, #tpu.memory_space<vmem>>, %arg7: memref<1x96xf32, #tpu.memory_space<vmem>>, %arg8: memref<32x96xf32, #tpu.memory_space<vmem>>, %arg9: memref<1x96xf32, #tpu.memory_space<vmem>>, %arg10: memref<2x16x96xf32, #tpu.memory_space<vmem>>, %arg11: memref<2x16x96xf32, #tpu.memory_space<vmem>>) attributes {dimension_semantics = [#tpu.dimension_semantics<parallel>], iteration_bounds = array<i64: 1>, scalar_prefetch = 0 : i64, scratch_operands = 0 : i64, tpu.core_type = #tpu.core_type<tc>, window_params = [{pipeline_mode = #tpu.pipeline_mode<synchronous>, transform_indices = @transform_0, window_bounds = array<i64: 2, 36, 4>}, {pipeline_mode = #tpu.pipeline_mode<synchronous>, transform_indices = @transform_1, window_bounds = array<i64: 60, 32>}, {pipeline_mode = #tpu.pipeline_mode<synchronous>, transform_indices = @transform_2, window_bounds = array<i64: 1, 32>}, {pipeline_mode = #tpu.pipeline_mode<synchronous>, transform_indices = @transform_3, window_bounds = array<i64: 224, 32>}, {pipeline_mode = #tpu.pipeline_mode<synchronous>, transform_indices = @transform_4, window_bounds = array<i64: 1, 32>}, {pipeline_mode = #tpu.pipeline_mode<synchronous>, transform_indices = @transform_5, window_bounds = array<i64: 32, 96>}, {pipeline_mode = #tpu.pipeline_mode<synchronous>, transform_indices = @transform_6, window_bounds = array<i64: 1, 96>}, {pipeline_mode = #tpu.pipeline_mode<synchronous>, transform_indices = @transform_7, window_bounds = array<i64: 32, 96>}, {pipeline_mode = #tpu.pipeline_mode<synchronous>, transform_indices = @transform_8, window_bounds = array<i64: 1, 96>}, {transform_indices = @transform_9, window_bounds = array<i64: 2, 16, 96>}, {transform_indices = @transform_10, window_bounds = array<i64: 2, 16, 96>}]} {
    %c16_i32 = arith.constant 16 : i32
    %0 = arith.muli %arg0, %c16_i32 : i32
    %1 = tpu.assume_multiple %0, 8 : i32
    %c0 = arith.constant 0 : index
    %2 = arith.index_cast %1 : i32 to index
    %c0_0 = arith.constant 0 : index
    %3 = vector.load %arg1[%c0, %2, %c0_0] : memref<2x36x4xf32, #tpu.memory_space<vmem>>, vector<2x36x4xf32>
    %4 = vector.extract_strided_slice %3 {offsets = [0, 0, 0], sizes = [2, 22, 4], strides = [1, 1, 1]} : vector<2x36x4xf32> to vector<2x22x4xf32>
    %5 = vector.extract_strided_slice %3 {offsets = [0, 1, 0], sizes = [2, 22, 4], strides = [1, 1, 1]} : vector<2x36x4xf32> to vector<2x22x4xf32>
    %6 = vector.extract_strided_slice %3 {offsets = [0, 2, 0], sizes = [2, 22, 4], strides = [1, 1, 1]} : vector<2x36x4xf32> to vector<2x22x4xf32>
    %7 = vector.extract_strided_slice %3 {offsets = [0, 3, 0], sizes = [2, 22, 4], strides = [1, 1, 1]} : vector<2x36x4xf32> to vector<2x22x4xf32>
    %8 = vector.extract_strided_slice %3 {offsets = [0, 4, 0], sizes = [2, 22, 4], strides = [1, 1, 1]} : vector<2x36x4xf32> to vector<2x22x4xf32>
    %9 = vector.extract_strided_slice %3 {offsets = [0, 5, 0], sizes = [2, 22, 4], strides = [1, 1, 1]} : vector<2x36x4xf32> to vector<2x22x4xf32>
    %10 = vector.extract_strided_slice %3 {offsets = [0, 6, 0], sizes = [2, 22, 4], strides = [1, 1, 1]} : vector<2x36x4xf32> to vector<2x22x4xf32>
    %11 = vector.extract_strided_slice %3 {offsets = [0, 7, 0], sizes = [2, 22, 4], strides = [1, 1, 1]} : vector<2x36x4xf32> to vector<2x22x4xf32>
    %12 = vector.extract_strided_slice %3 {offsets = [0, 8, 0], sizes = [2, 22, 4], strides = [1, 1, 1]} : vector<2x36x4xf32> to vector<2x22x4xf32>
    %13 = vector.extract_strided_slice %3 {offsets = [0, 9, 0], sizes = [2, 22, 4], strides = [1, 1, 1]} : vector<2x36x4xf32> to vector<2x22x4xf32>
    %14 = vector.extract_strided_slice %3 {offsets = [0, 10, 0], sizes = [2, 22, 4], strides = [1, 1, 1]} : vector<2x36x4xf32> to vector<2x22x4xf32>
    %15 = vector.extract_strided_slice %3 {offsets = [0, 11, 0], sizes = [2, 22, 4], strides = [1, 1, 1]} : vector<2x36x4xf32> to vector<2x22x4xf32>
    %16 = vector.extract_strided_slice %3 {offsets = [0, 12, 0], sizes = [2, 22, 4], strides = [1, 1, 1]} : vector<2x36x4xf32> to vector<2x22x4xf32>
    %17 = vector.extract_strided_slice %3 {offsets = [0, 13, 0], sizes = [2, 22, 4], strides = [1, 1, 1]} : vector<2x36x4xf32> to vector<2x22x4xf32>
    %18 = vector.extract_strided_slice %3 {offsets = [0, 14, 0], sizes = [2, 22, 4], strides = [1, 1, 1]} : vector<2x36x4xf32> to vector<2x22x4xf32>
    %19 = tpu.concatenate %4, %5, %6, %7, %8, %9, %10, %11, %12, %13, %14, %15, %16, %17, %18 in 2 : vector<2x22x4xf32>, vector<2x22x4xf32>, vector<2x22x4xf32>, vector<2x22x4xf32>, vector<2x22x4xf32>, vector<2x22x4xf32>, vector<2x22x4xf32>, vector<2x22x4xf32>, vector<2x22x4xf32>, vector<2x22x4xf32>, vector<2x22x4xf32>, vector<2x22x4xf32>, vector<2x22x4xf32>, vector<2x22x4xf32>, vector<2x22x4xf32> -> vector<2x22x60xf32>
    %20 = vector.shape_cast %19 : vector<2x22x60xf32> to vector<44x60xf32>
    %c0_1 = arith.constant 0 : index
    %c0_2 = arith.constant 0 : index
    %21 = vector.load %arg2[%c0_1, %c0_2] : memref<60x32xf32, #tpu.memory_space<vmem>>, vector<60x32xf32>
    %cst = arith.constant dense<0.000000e+00> : vector<44x32xf32>
    %22 = tpu.matmul %20, %21, %cst {dimension_numbers = #tpu.dot_dimension_numbers<[1], [0], [0], [1], [0, 0, 1, 1], [], []>} : vector<44x60xf32>, vector<60x32xf32>, vector<44x32xf32> -> vector<44x32xf32>
    %c0_3 = arith.constant 0 : index
    %c0_4 = arith.constant 0 : index
    %23 = vector.load %arg3[%c0_3, %c0_4] : memref<1x32xf32, #tpu.memory_space<vmem>>, vector<1x32xf32>
    %24 = vector.broadcast %23 : vector<1x32xf32> to vector<44x32xf32>
    %25 = arith.addf %22, %24 : vector<44x32xf32>
    %cst_5 = arith.constant 0.000000e+00 : f32
    %26 = vector.broadcast %cst_5 : f32 to vector<44x32xf32>
    %27 = arith.cmpf ogt, %25, %26 : vector<44x32xf32>
    %cst_6 = arith.constant 0.00999999977 : f32
    %28 = vector.broadcast %cst_6 : f32 to vector<44x32xf32>
    %29 = arith.mulf %28, %25 : vector<44x32xf32>
    %30 = arith.select %27, %25, %29 : vector<44x32xi1>, vector<44x32xf32>
    %31 = vector.shape_cast %30 : vector<44x32xf32> to vector<2x22x32xf32>
    %c16_i32_7 = arith.constant 16 : i32
    %32 = arith.muli %arg0, %c16_i32_7 : i32
    %c3_i32 = arith.constant 3 : i32
    %33 = arith.subi %32, %c3_i32 : i32
    %34 = tpu.iota {dimensions = array<i32: 1>} : vector<1x22x1xi32>
    %35 = vector.broadcast %33 : i32 to vector<1x22x1xi32>
    %36 = arith.addi %35, %34 : vector<1x22x1xi32>
    %c0_i32 = arith.constant 0 : i32
    %37 = vector.broadcast %c0_i32 : i32 to vector<1x22x1xi32>
    %38 = arith.cmpi sge, %36, %37 : vector<1x22x1xi32>
    %c16_i32_8 = arith.constant 16 : i32
    %39 = vector.broadcast %c16_i32_8 : i32 to vector<1x22x1xi32>
    %40 = arith.cmpi slt, %36, %39 : vector<1x22x1xi32>
    %41 = arith.andi %38, %40 : vector<1x22x1xi1>
    %cst_9 = arith.constant 0.000000e+00 : f32
    %42 = vector.shape_cast %41 : vector<1x22x1xi1> to vector<1x22x1xi1>
    %43 = vector.broadcast %42 : vector<1x22x1xi1> to vector<2x22x32xi1>
    %44 = vector.broadcast %cst_9 : f32 to vector<2x22x32xf32>
    %45 = arith.select %43, %31, %44 : vector<2x22x32xi1>, vector<2x22x32xf32>
    %46 = vector.extract_strided_slice %45 {offsets = [0, 0, 0], sizes = [2, 16, 32], strides = [1, 1, 1]} : vector<2x22x32xf32> to vector<2x16x32xf32>
    %47 = vector.extract_strided_slice %45 {offsets = [0, 1, 0], sizes = [2, 16, 32], strides = [1, 1, 1]} : vector<2x22x32xf32> to vector<2x16x32xf32>
    %48 = vector.extract_strided_slice %45 {offsets = [0, 2, 0], sizes = [2, 16, 32], strides = [1, 1, 1]} : vector<2x22x32xf32> to vector<2x16x32xf32>
    %49 = vector.extract_strided_slice %45 {offsets = [0, 3, 0], sizes = [2, 16, 32], strides = [1, 1, 1]} : vector<2x22x32xf32> to vector<2x16x32xf32>
    %50 = vector.extract_strided_slice %45 {offsets = [0, 4, 0], sizes = [2, 16, 32], strides = [1, 1, 1]} : vector<2x22x32xf32> to vector<2x16x32xf32>
    %51 = vector.extract_strided_slice %45 {offsets = [0, 5, 0], sizes = [2, 16, 32], strides = [1, 1, 1]} : vector<2x22x32xf32> to vector<2x16x32xf32>
    %52 = vector.extract_strided_slice %45 {offsets = [0, 6, 0], sizes = [2, 16, 32], strides = [1, 1, 1]} : vector<2x22x32xf32> to vector<2x16x32xf32>
    %53 = tpu.concatenate %46, %47, %48, %49, %50, %51, %52 in 2 : vector<2x16x32xf32>, vector<2x16x32xf32>, vector<2x16x32xf32>, vector<2x16x32xf32>, vector<2x16x32xf32>, vector<2x16x32xf32>, vector<2x16x32xf32> -> vector<2x16x224xf32>
    %54 = vector.shape_cast %53 : vector<2x16x224xf32> to vector<32x224xf32>
    %c0_10 = arith.constant 0 : index
    %c0_11 = arith.constant 0 : index
    %55 = vector.load %arg4[%c0_10, %c0_11] : memref<224x32xf32, #tpu.memory_space<vmem>>, vector<224x32xf32>
    %cst_12 = arith.constant dense<0.000000e+00> : vector<32x32xf32>
    %56 = tpu.matmul %54, %55, %cst_12 {dimension_numbers = #tpu.dot_dimension_numbers<[1], [0], [0], [1], [0, 0, 1, 1], [], []>} : vector<32x224xf32>, vector<224x32xf32>, vector<32x32xf32> -> vector<32x32xf32>
    %c0_13 = arith.constant 0 : index
    %c0_14 = arith.constant 0 : index
    %57 = vector.load %arg5[%c0_13, %c0_14] : memref<1x32xf32, #tpu.memory_space<vmem>>, vector<1x32xf32>
    %58 = vector.broadcast %57 : vector<1x32xf32> to vector<32x32xf32>
    %59 = arith.addf %56, %58 : vector<32x32xf32>
    %c0_15 = arith.constant 0 : index
    %c0_16 = arith.constant 0 : index
    %60 = vector.load %arg6[%c0_15, %c0_16] : memref<32x96xf32, #tpu.memory_space<vmem>>, vector<32x96xf32>
    %cst_17 = arith.constant dense<0.000000e+00> : vector<32x96xf32>
    %61 = tpu.matmul %59, %60, %cst_17 {dimension_numbers = #tpu.dot_dimension_numbers<[1], [0], [0], [1], [0, 0, 1, 1], [], []>} : vector<32x32xf32>, vector<32x96xf32>, vector<32x96xf32> -> vector<32x96xf32>
    %c0_18 = arith.constant 0 : index
    %c0_19 = arith.constant 0 : index
    %62 = vector.load %arg7[%c0_18, %c0_19] : memref<1x96xf32, #tpu.memory_space<vmem>>, vector<1x96xf32>
    %63 = vector.broadcast %62 : vector<1x96xf32> to vector<32x96xf32>
    %64 = arith.addf %61, %63 : vector<32x96xf32>
    %c0_20 = arith.constant 0 : index
    %c0_21 = arith.constant 0 : index
    %65 = vector.load %arg8[%c0_20, %c0_21] : memref<32x96xf32, #tpu.memory_space<vmem>>, vector<32x96xf32>
    %cst_22 = arith.constant dense<0.000000e+00> : vector<32x96xf32>
    %66 = tpu.matmul %59, %65, %cst_22 {dimension_numbers = #tpu.dot_dimension_numbers<[1], [0], [0], [1], [0, 0, 1, 1], [], []>} : vector<32x32xf32>, vector<32x96xf32>, vector<32x96xf32> -> vector<32x96xf32>
    %c0_23 = arith.constant 0 : index
    %c0_24 = arith.constant 0 : index
    %67 = vector.load %arg9[%c0_23, %c0_24] : memref<1x96xf32, #tpu.memory_space<vmem>>, vector<1x96xf32>
    %68 = vector.broadcast %67 : vector<1x96xf32> to vector<32x96xf32>
    %69 = arith.addf %66, %68 : vector<32x96xf32>
    %70 = vector.shape_cast %64 : vector<32x96xf32> to vector<2x16x96xf32>
    %c0_25 = arith.constant 0 : index
    %c0_26 = arith.constant 0 : index
    %c0_27 = arith.constant 0 : index
    %71 = vector.load %arg10[%c0_25, %c0_26, %c0_27] : memref<2x16x96xf32, #tpu.memory_space<vmem>>, vector<2x16x96xf32>
    tpu.vector_store %arg10[%c0_25, %c0_26, %c0_27], %70 {strides = array<i32>} : memref<2x16x96xf32, #tpu.memory_space<vmem>>, vector<2x16x96xf32>,
    %72 = vector.shape_cast %69 : vector<32x96xf32> to vector<2x16x96xf32>
    %c0_28 = arith.constant 0 : index
    %c0_29 = arith.constant 0 : index
    %c0_30 = arith.constant 0 : index
    %73 = vector.load %arg11[%c0_28, %c0_29, %c0_30] : memref<2x16x96xf32, #tpu.memory_space<vmem>>, vector<2x16x96xf32>
    tpu.vector_store %arg11[%c0_28, %c0_29, %c0_30], %72 {strides = array<i32>} : memref<2x16x96xf32, #tpu.memory_space<vmem>>, vector<2x16x96xf32>,
    return
  }
  func.func @transform_0(%arg0: i32) -> (i32, i32, i32) {
    %c0_i32 = arith.constant 0 : i32
    %c0_i32_0 = arith.constant 0 : i32
    %c0_i32_1 = arith.constant 0 : i32
    %c0_i32_2 = arith.constant 0 : i32
    return %c0_i32, %c0_i32_0, %c0_i32_1 : i32, i32, i32
  }
  func.func @transform_1(%arg0: i32) -> (i32, i32) {
    %c0_i32 = arith.constant 0 : i32
    %c0_i32_0 = arith.constant 0 : i32
    %c0_i32_1 = arith.constant 0 : i32
    return %c0_i32, %c0_i32_0 : i32, i32
  }
  func.func @transform_2(%arg0: i32) -> (i32, i32) {
    %c0_i32 = arith.constant 0 : i32
    %c0_i32_0 = arith.constant 0 : i32
    %c0_i32_1 = arith.constant 0 : i32
    return %c0_i32, %c0_i32_0 : i32, i32
  }
  func.func @transform_3(%arg0: i32) -> (i32, i32) {
    %c0_i32 = arith.constant 0 : i32
    %c0_i32_0 = arith.constant 0 : i32
    %c0_i32_1 = arith.constant 0 : i32
    return %c0_i32, %c0_i32_0 : i32, i32
  }
  func.func @transform_4(%arg0: i32) -> (i32, i32) {
    %c0_i32 = arith.constant 0 : i32
    %c0_i32_0 = arith.constant 0 : i32
    %c0_i32_1 = arith.constant 0 : i32
    return %c0_i32, %c0_i32_0 : i32, i32
  }
  func.func @transform_5(%arg0: i32) -> (i32, i32) {
    %c0_i32 = arith.constant 0 : i32
    %c0_i32_0 = arith.constant 0 : i32
    %c0_i32_1 = arith.constant 0 : i32
    return %c0_i32, %c0_i32_0 : i32, i32
  }
  func.func @transform_6(%arg0: i32) -> (i32, i32) {
    %c0_i32 = arith.constant 0 : i32
    %c0_i32_0 = arith.constant 0 : i32
    %c0_i32_1 = arith.constant 0 : i32
    return %c0_i32, %c0_i32_0 : i32, i32
  }
  func.func @transform_7(%arg0: i32) -> (i32, i32) {
    %c0_i32 = arith.constant 0 : i32
    %c0_i32_0 = arith.constant 0 : i32
    %c0_i32_1 = arith.constant 0 : i32
    return %c0_i32, %c0_i32_0 : i32, i32
  }
  func.func @transform_8(%arg0: i32) -> (i32, i32) {
    %c0_i32 = arith.constant 0 : i32
    %c0_i32_0 = arith.constant 0 : i32
    %c0_i32_1 = arith.constant 0 : i32
    return %c0_i32, %c0_i32_0 : i32, i32
  }
  func.func @transform_9(%arg0: i32) -> (i32, i32, i32) {
    %c0_i32 = arith.constant 0 : i32
    %c0_i32_0 = arith.constant 0 : i32
    %c0_i32_1 = arith.constant 0 : i32
    return %c0_i32, %arg0, %c0_i32_0 : i32, i32, i32
  }
  func.func @transform_10(%arg0: i32) -> (i32, i32, i32) {
    %c0_i32 = arith.constant 0 : i32
    %c0_i32_0 = arith.constant 0 : i32
    %c0_i32_1 = arith.constant 0 : i32
    return %c0_i32, %arg0, %c0_i32_0 : i32, i32, i32
  }
}

module attributes {stable_mosaic.version = 11 : i64} {
  func.func @_head_kernel(%arg0: i32, %arg1: memref<2x16x32xf32, #tpu.memory_space<vmem>>, %arg2: memref<2x16x32xf32, #tpu.memory_space<vmem>>, %arg3: memref<2x16x1xf32, #tpu.memory_space<vmem>>, %arg4: memref<32x32xf32, #tpu.memory_space<vmem>>, %arg5: memref<32x32xf32, #tpu.memory_space<vmem>>, %arg6: memref<1x32xf32, #tpu.memory_space<vmem>>, %arg7: memref<32x32xf32, #tpu.memory_space<vmem>>, %arg8: memref<1x32xf32, #tpu.memory_space<vmem>>, %arg9: memref<32x2xf32, #tpu.memory_space<vmem>>, %arg10: memref<1x2xf32, #tpu.memory_space<vmem>>, %arg11: memref<2x2xf32, #tpu.memory_space<vmem>>, %arg12: memref<2x32xf32, #tpu.memory_space<vmem>>) attributes {dimension_semantics = [#tpu.dimension_semantics<arbitrary>], iteration_bounds = array<i64: 1>, scalar_prefetch = 0 : i64, scratch_operands = 1 : i64, tpu.core_type = #tpu.core_type<tc>, window_params = [{transform_indices = @transform_0, window_bounds = array<i64: 2, 16, 32>}, {transform_indices = @transform_1, window_bounds = array<i64: 2, 16, 32>}, {transform_indices = @transform_2, window_bounds = array<i64: 2, 16, 1>}, {pipeline_mode = #tpu.pipeline_mode<synchronous>, transform_indices = @transform_3, window_bounds = array<i64: 32, 32>}, {pipeline_mode = #tpu.pipeline_mode<synchronous>, transform_indices = @transform_4, window_bounds = array<i64: 32, 32>}, {pipeline_mode = #tpu.pipeline_mode<synchronous>, transform_indices = @transform_5, window_bounds = array<i64: 1, 32>}, {pipeline_mode = #tpu.pipeline_mode<synchronous>, transform_indices = @transform_6, window_bounds = array<i64: 32, 32>}, {pipeline_mode = #tpu.pipeline_mode<synchronous>, transform_indices = @transform_7, window_bounds = array<i64: 1, 32>}, {pipeline_mode = #tpu.pipeline_mode<synchronous>, transform_indices = @transform_8, window_bounds = array<i64: 32, 2>}, {pipeline_mode = #tpu.pipeline_mode<synchronous>, transform_indices = @transform_9, window_bounds = array<i64: 1, 2>}, {pipeline_mode = #tpu.pipeline_mode<synchronous>, transform_indices = @transform_10, window_bounds = array<i64: 2, 2>}]} {
    %c0_i32 = arith.constant 0 : i32
    %0 = arith.cmpi eq, %arg0, %c0_i32 : i32
    %1 = arith.extui %0 : i1 to i32
    %c0_i32_0 = arith.constant 0 : i32
    %2 = arith.cmpi ne, %1, %c0_i32_0 : i32
    scf.if %2 {
      %cst_30 = arith.constant 0.000000e+00 : f32
      %36 = vector.broadcast %cst_30 : f32 to vector<2x32xf32>
      %c0_31 = arith.constant 0 : index
      %c0_32 = arith.constant 0 : index
      %37 = vector.load %arg12[%c0_31, %c0_32] : memref<2x32xf32, #tpu.memory_space<vmem>>, vector<2x32xf32>
      tpu.vector_store %arg12[%c0_31, %c0_32], %36 {strides = array<i32>} : memref<2x32xf32, #tpu.memory_space<vmem>>, vector<2x32xf32>,
    } else {
    }
    %c0 = arith.constant 0 : index
    %c0_1 = arith.constant 0 : index
    %c0_2 = arith.constant 0 : index
    %3 = vector.load %arg1[%c0, %c0_1, %c0_2] : memref<2x16x32xf32, #tpu.memory_space<vmem>>, vector<2x16x32xf32>
    %4 = vector.shape_cast %3 : vector<2x16x32xf32> to vector<32x32xf32>
    %c0_3 = arith.constant 0 : index
    %c0_4 = arith.constant 0 : index
    %c0_5 = arith.constant 0 : index
    %5 = vector.load %arg2[%c0_3, %c0_4, %c0_5] : memref<2x16x32xf32, #tpu.memory_space<vmem>>, vector<2x16x32xf32>
    %6 = vector.shape_cast %5 : vector<2x16x32xf32> to vector<32x32xf32>
    %c0_6 = arith.constant 0 : index
    %c0_7 = arith.constant 0 : index
    %7 = vector.load %arg4[%c0_6, %c0_7] : memref<32x32xf32, #tpu.memory_space<vmem>>, vector<32x32xf32>
    %cst = arith.constant dense<0.000000e+00> : vector<32x32xf32>
    %8 = tpu.matmul %4, %7, %cst {dimension_numbers = #tpu.dot_dimension_numbers<[1], [0], [0], [1], [0, 0, 1, 1], [], []>} : vector<32x32xf32>, vector<32x32xf32>, vector<32x32xf32> -> vector<32x32xf32>
    %c0_8 = arith.constant 0 : index
    %c0_9 = arith.constant 0 : index
    %9 = vector.load %arg5[%c0_8, %c0_9] : memref<32x32xf32, #tpu.memory_space<vmem>>, vector<32x32xf32>
    %cst_10 = arith.constant dense<0.000000e+00> : vector<32x32xf32>
    %10 = tpu.matmul %6, %9, %cst_10 {dimension_numbers = #tpu.dot_dimension_numbers<[1], [0], [0], [1], [0, 0, 1, 1], [], []>} : vector<32x32xf32>, vector<32x32xf32>, vector<32x32xf32> -> vector<32x32xf32>
    %11 = arith.addf %8, %10 : vector<32x32xf32>
    %c0_11 = arith.constant 0 : index
    %c0_12 = arith.constant 0 : index
    %12 = vector.load %arg6[%c0_11, %c0_12] : memref<1x32xf32, #tpu.memory_space<vmem>>, vector<1x32xf32>
    %13 = vector.broadcast %12 : vector<1x32xf32> to vector<32x32xf32>
    %14 = arith.addf %11, %13 : vector<32x32xf32>
    %cst_13 = arith.constant 0.000000e+00 : f32
    %15 = vector.broadcast %cst_13 : f32 to vector<32x32xf32>
    %16 = arith.cmpf ogt, %14, %15 : vector<32x32xf32>
    %cst_14 = arith.constant 0.00999999977 : f32
    %17 = vector.broadcast %cst_14 : f32 to vector<32x32xf32>
    %18 = arith.mulf %17, %14 : vector<32x32xf32>
    %19 = arith.select %16, %14, %18 : vector<32x32xi1>, vector<32x32xf32>
    %c0_15 = arith.constant 0 : index
    %c0_16 = arith.constant 0 : index
    %20 = vector.load %arg7[%c0_15, %c0_16] : memref<32x32xf32, #tpu.memory_space<vmem>>, vector<32x32xf32>
    %cst_17 = arith.constant dense<0.000000e+00> : vector<32x32xf32>
    %21 = tpu.matmul %19, %20, %cst_17 {dimension_numbers = #tpu.dot_dimension_numbers<[1], [0], [0], [1], [0, 0, 1, 1], [], []>} : vector<32x32xf32>, vector<32x32xf32>, vector<32x32xf32> -> vector<32x32xf32>
    %c0_18 = arith.constant 0 : index
    %c0_19 = arith.constant 0 : index
    %22 = vector.load %arg8[%c0_18, %c0_19] : memref<1x32xf32, #tpu.memory_space<vmem>>, vector<1x32xf32>
    %23 = vector.broadcast %22 : vector<1x32xf32> to vector<32x32xf32>
    %24 = arith.addf %21, %23 : vector<32x32xf32>
    %25 = vector.shape_cast %24 : vector<32x32xf32> to vector<2x16x32xf32>
    %c0_20 = arith.constant 0 : index
    %c0_21 = arith.constant 0 : index
    %c0_22 = arith.constant 0 : index
    %26 = vector.load %arg3[%c0_20, %c0_21, %c0_22] : memref<2x16x1xf32, #tpu.memory_space<vmem>>, vector<2x16x1xf32>
    %27 = vector.broadcast %26 : vector<2x16x1xf32> to vector<2x16x32xf32>
    %28 = arith.mulf %25, %27 : vector<2x16x32xf32>
    %c0_23 = arith.constant 0 : index
    %c0_24 = arith.constant 0 : index
    %29 = vector.load %arg12[%c0_23, %c0_24] : memref<2x32xf32, #tpu.memory_space<vmem>>, vector<2x32xf32>
    %cst_25 = arith.constant dense<0.000000e+00> : vector<2x32xf32>
    %30 = vector.multi_reduction <add>, %28, %cst_25 [1] : vector<2x16x32xf32> to vector<2x32xf32>
    %31 = arith.addf %29, %30 : vector<2x32xf32>
    %c0_26 = arith.constant 0 : index
    %c0_27 = arith.constant 0 : index
    %32 = vector.load %arg12[%c0_26, %c0_27] : memref<2x32xf32, #tpu.memory_space<vmem>>, vector<2x32xf32>
    tpu.vector_store %arg12[%c0_26, %c0_27], %31 {strides = array<i32>} : memref<2x32xf32, #tpu.memory_space<vmem>>, vector<2x32xf32>,
    %c0_i32_28 = arith.constant 0 : i32
    %33 = arith.cmpi eq, %arg0, %c0_i32_28 : i32
    %34 = arith.extui %33 : i1 to i32
    %c0_i32_29 = arith.constant 0 : i32
    %35 = arith.cmpi ne, %34, %c0_i32_29 : i32
    scf.if %35 {
      %c0_30 = arith.constant 0 : index
      %c0_31 = arith.constant 0 : index
      %36 = vector.load %arg12[%c0_30, %c0_31] : memref<2x32xf32, #tpu.memory_space<vmem>>, vector<2x32xf32>
      %c0_32 = arith.constant 0 : index
      %c0_33 = arith.constant 0 : index
      %37 = vector.load %arg9[%c0_32, %c0_33] : memref<32x2xf32, #tpu.memory_space<vmem>>, vector<32x2xf32>
      %cst_34 = arith.constant dense<0.000000e+00> : vector<2x2xf32>
      %38 = tpu.matmul %36, %37, %cst_34 {dimension_numbers = #tpu.dot_dimension_numbers<[1], [0], [0], [1], [0, 0, 1, 1], [], []>} : vector<2x32xf32>, vector<32x2xf32>, vector<2x2xf32> -> vector<2x2xf32>
      %c0_35 = arith.constant 0 : index
      %c0_36 = arith.constant 0 : index
      %39 = vector.load %arg10[%c0_35, %c0_36] : memref<1x2xf32, #tpu.memory_space<vmem>>, vector<1x2xf32>
      %40 = vector.broadcast %39 : vector<1x2xf32> to vector<2x2xf32>
      %41 = arith.addf %38, %40 : vector<2x2xf32>
      %c0_37 = arith.constant 0 : index
      %c0_38 = arith.constant 0 : index
      %42 = vector.load %arg11[%c0_37, %c0_38] : memref<2x2xf32, #tpu.memory_space<vmem>>, vector<2x2xf32>
      tpu.vector_store %arg11[%c0_37, %c0_38], %41 {strides = array<i32>} : memref<2x2xf32, #tpu.memory_space<vmem>>, vector<2x2xf32>,
    } else {
    }
    return
  }
  func.func @transform_0(%arg0: i32) -> (i32, i32, i32) {
    %c0_i32 = arith.constant 0 : i32
    %c0_i32_0 = arith.constant 0 : i32
    %c0_i32_1 = arith.constant 0 : i32
    return %c0_i32, %arg0, %c0_i32_0 : i32, i32, i32
  }
  func.func @transform_1(%arg0: i32) -> (i32, i32, i32) {
    %c0_i32 = arith.constant 0 : i32
    %c0_i32_0 = arith.constant 0 : i32
    %c0_i32_1 = arith.constant 0 : i32
    return %c0_i32, %arg0, %c0_i32_0 : i32, i32, i32
  }
  func.func @transform_2(%arg0: i32) -> (i32, i32, i32) {
    %c0_i32 = arith.constant 0 : i32
    %c0_i32_0 = arith.constant 0 : i32
    %c0_i32_1 = arith.constant 0 : i32
    return %c0_i32, %arg0, %c0_i32_0 : i32, i32, i32
  }
  func.func @transform_3(%arg0: i32) -> (i32, i32) {
    %c0_i32 = arith.constant 0 : i32
    %c0_i32_0 = arith.constant 0 : i32
    %c0_i32_1 = arith.constant 0 : i32
    return %c0_i32, %c0_i32_0 : i32, i32
  }
  func.func @transform_4(%arg0: i32) -> (i32, i32) {
    %c0_i32 = arith.constant 0 : i32
    %c0_i32_0 = arith.constant 0 : i32
    %c0_i32_1 = arith.constant 0 : i32
    return %c0_i32, %c0_i32_0 : i32, i32
  }
  func.func @transform_5(%arg0: i32) -> (i32, i32) {
    %c0_i32 = arith.constant 0 : i32
    %c0_i32_0 = arith.constant 0 : i32
    %c0_i32_1 = arith.constant 0 : i32
    return %c0_i32, %c0_i32_0 : i32, i32
  }
  func.func @transform_6(%arg0: i32) -> (i32, i32) {
    %c0_i32 = arith.constant 0 : i32
    %c0_i32_0 = arith.constant 0 : i32
    %c0_i32_1 = arith.constant 0 : i32
    return %c0_i32, %c0_i32_0 : i32, i32
  }
  func.func @transform_7(%arg0: i32) -> (i32, i32) {
    %c0_i32 = arith.constant 0 : i32
    %c0_i32_0 = arith.constant 0 : i32
    %c0_i32_1 = arith.constant 0 : i32
    return %c0_i32, %c0_i32_0 : i32, i32
  }
  func.func @transform_8(%arg0: i32) -> (i32, i32) {
    %c0_i32 = arith.constant 0 : i32
    %c0_i32_0 = arith.constant 0 : i32
    %c0_i32_1 = arith.constant 0 : i32
    return %c0_i32, %c0_i32_0 : i32, i32
  }
  func.func @transform_9(%arg0: i32) -> (i32, i32) {
    %c0_i32 = arith.constant 0 : i32
    %c0_i32_0 = arith.constant 0 : i32
    %c0_i32_1 = arith.constant 0 : i32
    return %c0_i32, %c0_i32_0 : i32, i32
  }
  func.func @transform_10(%arg0: i32) -> (i32, i32) {
    %c0_i32 = arith.constant 0 : i32
    %c0_i32_0 = arith.constant 0 : i32
    %c0_i32_1 = arith.constant 0 : i32
    return %c0_i32, %c0_i32_0 : i32, i32
  }
}

module attributes {stable_mosaic.version = 11 : i64} {
  func.func @_bigru_kernel(%arg0: i32, %arg1: memref<2x16x96xf32, #tpu.memory_space<vmem>>, %arg2: memref<2x16x96xf32, #tpu.memory_space<vmem>>, %arg3: memref<32x192xf32, #tpu.memory_space<vmem>>, %arg4: memref<4x96xf32, #tpu.memory_space<vmem>>, %arg5: memref<2x16x32xf32, #tpu.memory_space<vmem>>, %arg6: memref<2x16x32xf32, #tpu.memory_space<vmem>>, %arg7: memref<4x32xf32, #tpu.memory_space<vmem>>) attributes {dimension_semantics = [#tpu.dimension_semantics<arbitrary>], iteration_bounds = array<i64: 1>, scalar_prefetch = 0 : i64, scratch_operands = 1 : i64, tpu.core_type = #tpu.core_type<tc>, window_params = [{transform_indices = @transform_0, window_bounds = array<i64: 2, 16, 96>}, {transform_indices = @transform_1, window_bounds = array<i64: 2, 16, 96>}, {pipeline_mode = #tpu.pipeline_mode<synchronous>, transform_indices = @transform_2, window_bounds = array<i64: 32, 192>}, {pipeline_mode = #tpu.pipeline_mode<synchronous>, transform_indices = @transform_3, window_bounds = array<i64: 4, 96>}, {transform_indices = @transform_4, window_bounds = array<i64: 2, 16, 32>}, {transform_indices = @transform_5, window_bounds = array<i64: 2, 16, 32>}]} {
    %c0_i32 = arith.constant 0 : i32
    %0 = arith.cmpi eq, %arg0, %c0_i32 : i32
    %1 = arith.extui %0 : i1 to i32
    %c0_i32_0 = arith.constant 0 : i32
    %2 = arith.cmpi ne, %1, %c0_i32_0 : i32
    scf.if %2 {
      %cst_217 = arith.constant 0.000000e+00 : f32
      %746 = vector.broadcast %cst_217 : f32 to vector<4x32xf32>
      %c0_218 = arith.constant 0 : index
      %c0_219 = arith.constant 0 : index
      %747 = vector.load %arg7[%c0_218, %c0_219] : memref<4x32xf32, #tpu.memory_space<vmem>>, vector<4x32xf32>
      tpu.vector_store %arg7[%c0_218, %c0_219], %746 {strides = array<i32>} : memref<4x32xf32, #tpu.memory_space<vmem>>, vector<4x32xf32>,
    } else {
    }
    %c0 = arith.constant 0 : index
    %c0_1 = arith.constant 0 : index
    %3 = vector.load %arg3[%c0, %c0_1] : memref<32x192xf32, #tpu.memory_space<vmem>>, vector<32x192xf32>
    %c0_2 = arith.constant 0 : index
    %c0_3 = arith.constant 0 : index
    %4 = vector.load %arg4[%c0_2, %c0_3] : memref<4x96xf32, #tpu.memory_space<vmem>>, vector<4x96xf32>
    %5 = tpu.iota {dimensions = array<i32: 0>} : vector<4x1xi32>
    %c2_i32 = arith.constant 2 : i32
    %6 = vector.broadcast %c2_i32 : i32 to vector<4x1xi32>
    %7 = arith.cmpi slt, %5, %6 : vector<4x1xi32>
    %c0_4 = arith.constant 0 : index
    %c0_5 = arith.constant 0 : index
    %8 = vector.load %arg7[%c0_4, %c0_5] : memref<4x32xf32, #tpu.memory_space<vmem>>, vector<4x32xf32>
    %c0_i32_6 = arith.constant 0 : i32
    %c0_7 = arith.constant 0 : index
    %9 = arith.index_cast %c0_i32_6 : i32 to index
    %c0_8 = arith.constant 0 : index
    %10 = vector.load %arg1[%c0_7, %9, %c0_8] : memref<2x16x96xf32, #tpu.memory_space<vmem>>, vector<2x1x96xf32>
    %11 = vector.shape_cast %10 : vector<2x1x96xf32> to vector<2x96xf32>
    %c15_i32 = arith.constant 15 : i32
    %12 = arith.subi %c15_i32, %c0_i32_6 : i32
    %c0_9 = arith.constant 0 : index
    %13 = arith.index_cast %12 : i32 to index
    %c0_10 = arith.constant 0 : index
    %14 = vector.load %arg2[%c0_9, %13, %c0_10] : memref<2x16x96xf32, #tpu.memory_space<vmem>>, vector<2x1x96xf32>
    %15 = vector.shape_cast %14 : vector<2x1x96xf32> to vector<2x96xf32>
    %16 = tpu.concatenate %11, %15 in 0 : vector<2x96xf32>, vector<2x96xf32> -> vector<4x96xf32>
    %cst = arith.constant dense<0.000000e+00> : vector<4x192xf32>
    %17 = tpu.matmul %8, %3, %cst {dimension_numbers = #tpu.dot_dimension_numbers<[1], [0], [0], [1], [0, 0, 1, 1], [], []>} : vector<4x32xf32>, vector<32x192xf32>, vector<4x192xf32> -> vector<4x192xf32>
    %18 = vector.extract_strided_slice %17 {offsets = [0, 0], sizes = [4, 96], strides = [1, 1]} : vector<4x192xf32> to vector<4x96xf32>
    %19 = vector.extract_strided_slice %17 {offsets = [0, 96], sizes = [4, 96], strides = [1, 1]} : vector<4x192xf32> to vector<4x96xf32>
    %20 = vector.shape_cast %7 : vector<4x1xi1> to vector<4x1xi1>
    %21 = vector.broadcast %20 : vector<4x1xi1> to vector<4x96xi1>
    %22 = arith.select %21, %18, %19 : vector<4x96xi1>, vector<4x96xf32>
    %23 = arith.addf %22, %4 : vector<4x96xf32>
    %24 = vector.extract_strided_slice %16 {offsets = [0, 0], sizes = [4, 64], strides = [1, 1]} : vector<4x96xf32> to vector<4x64xf32>
    %25 = vector.extract_strided_slice %23 {offsets = [0, 0], sizes = [4, 64], strides = [1, 1]} : vector<4x96xf32> to vector<4x64xf32>
    %26 = arith.addf %24, %25 : vector<4x64xf32>
    %27 = arith.negf %26 : vector<4x64xf32>
    %28 = math.exp %27 : vector<4x64xf32>
    %cst_11 = arith.constant 1.000000e+00 : f32
    %29 = vector.broadcast %cst_11 : f32 to vector<4x64xf32>
    %30 = arith.addf %29, %28 : vector<4x64xf32>
    %31 = arith.divf %29, %30 : vector<4x64xf32>
    %32 = vector.extract_strided_slice %31 {offsets = [0, 0], sizes = [4, 32], strides = [1, 1]} : vector<4x64xf32> to vector<4x32xf32>
    %33 = vector.extract_strided_slice %31 {offsets = [0, 32], sizes = [4, 32], strides = [1, 1]} : vector<4x64xf32> to vector<4x32xf32>
    %34 = vector.extract_strided_slice %16 {offsets = [0, 64], sizes = [4, 32], strides = [1, 1]} : vector<4x96xf32> to vector<4x32xf32>
    %35 = vector.extract_strided_slice %23 {offsets = [0, 64], sizes = [4, 32], strides = [1, 1]} : vector<4x96xf32> to vector<4x32xf32>
    %36 = arith.mulf %32, %35 : vector<4x32xf32>
    %37 = arith.addf %34, %36 : vector<4x32xf32>
    %38 = math.tanh %37 : vector<4x32xf32>
    %cst_12 = arith.constant 1.000000e+00 : f32
    %39 = vector.broadcast %cst_12 : f32 to vector<4x32xf32>
    %40 = arith.subf %39, %33 : vector<4x32xf32>
    %41 = arith.mulf %40, %38 : vector<4x32xf32>
    %42 = arith.mulf %33, %8 : vector<4x32xf32>
    %43 = arith.addf %41, %42 : vector<4x32xf32>
    %44 = vector.extract_strided_slice %43 {offsets = [0, 0], sizes = [2, 32], strides = [1, 1]} : vector<4x32xf32> to vector<2x32xf32>
    %c0_13 = arith.constant 0 : index
    %45 = arith.index_cast %c0_i32_6 : i32 to index
    %c0_14 = arith.constant 0 : index
    %46 = vector.load %arg5[%c0_13, %45, %c0_14] : memref<2x16x32xf32, #tpu.memory_space<vmem>>, vector<2x1x32xf32>
    %47 = vector.shape_cast %46 : vector<2x1x32xf32> to vector<2x32xf32>
    %48 = vector.shape_cast %44 : vector<2x32xf32> to vector<2x1x32xf32>
    tpu.vector_store %arg5[%c0_13, %45, %c0_14], %48 {strides = array<i32>} : memref<2x16x32xf32, #tpu.memory_space<vmem>>, vector<2x1x32xf32>,
    %49 = vector.extract_strided_slice %43 {offsets = [2, 0], sizes = [2, 32], strides = [1, 1]} : vector<4x32xf32> to vector<2x32xf32>
    %c15_i32_15 = arith.constant 15 : i32
    %50 = arith.subi %c15_i32_15, %c0_i32_6 : i32
    %c0_16 = arith.constant 0 : index
    %51 = arith.index_cast %50 : i32 to index
    %c0_17 = arith.constant 0 : index
    %52 = vector.load %arg6[%c0_16, %51, %c0_17] : memref<2x16x32xf32, #tpu.memory_space<vmem>>, vector<2x1x32xf32>
    %53 = vector.shape_cast %52 : vector<2x1x32xf32> to vector<2x32xf32>
    %54 = vector.shape_cast %49 : vector<2x32xf32> to vector<2x1x32xf32>
    tpu.vector_store %arg6[%c0_16, %51, %c0_17], %54 {strides = array<i32>} : memref<2x16x32xf32, #tpu.memory_space<vmem>>, vector<2x1x32xf32>,
    %c1_i32 = arith.constant 1 : i32
    %c0_18 = arith.constant 0 : index
    %55 = arith.index_cast %c1_i32 : i32 to index
    %c0_19 = arith.constant 0 : index
    %56 = vector.load %arg1[%c0_18, %55, %c0_19] : memref<2x16x96xf32, #tpu.memory_space<vmem>>, vector<2x1x96xf32>
    %57 = vector.shape_cast %56 : vector<2x1x96xf32> to vector<2x96xf32>
    %c15_i32_20 = arith.constant 15 : i32
    %58 = arith.subi %c15_i32_20, %c1_i32 : i32
    %c0_21 = arith.constant 0 : index
    %59 = arith.index_cast %58 : i32 to index
    %c0_22 = arith.constant 0 : index
    %60 = vector.load %arg2[%c0_21, %59, %c0_22] : memref<2x16x96xf32, #tpu.memory_space<vmem>>, vector<2x1x96xf32>
    %61 = vector.shape_cast %60 : vector<2x1x96xf32> to vector<2x96xf32>
    %62 = tpu.concatenate %57, %61 in 0 : vector<2x96xf32>, vector<2x96xf32> -> vector<4x96xf32>
    %cst_23 = arith.constant dense<0.000000e+00> : vector<4x192xf32>
    %63 = tpu.matmul %43, %3, %cst_23 {dimension_numbers = #tpu.dot_dimension_numbers<[1], [0], [0], [1], [0, 0, 1, 1], [], []>} : vector<4x32xf32>, vector<32x192xf32>, vector<4x192xf32> -> vector<4x192xf32>
    %64 = vector.extract_strided_slice %63 {offsets = [0, 0], sizes = [4, 96], strides = [1, 1]} : vector<4x192xf32> to vector<4x96xf32>
    %65 = vector.extract_strided_slice %63 {offsets = [0, 96], sizes = [4, 96], strides = [1, 1]} : vector<4x192xf32> to vector<4x96xf32>
    %66 = vector.shape_cast %7 : vector<4x1xi1> to vector<4x1xi1>
    %67 = vector.broadcast %66 : vector<4x1xi1> to vector<4x96xi1>
    %68 = arith.select %67, %64, %65 : vector<4x96xi1>, vector<4x96xf32>
    %69 = arith.addf %68, %4 : vector<4x96xf32>
    %70 = vector.extract_strided_slice %62 {offsets = [0, 0], sizes = [4, 64], strides = [1, 1]} : vector<4x96xf32> to vector<4x64xf32>
    %71 = vector.extract_strided_slice %69 {offsets = [0, 0], sizes = [4, 64], strides = [1, 1]} : vector<4x96xf32> to vector<4x64xf32>
    %72 = arith.addf %70, %71 : vector<4x64xf32>
    %73 = arith.negf %72 : vector<4x64xf32>
    %74 = math.exp %73 : vector<4x64xf32>
    %cst_24 = arith.constant 1.000000e+00 : f32
    %75 = vector.broadcast %cst_24 : f32 to vector<4x64xf32>
    %76 = arith.addf %75, %74 : vector<4x64xf32>
    %77 = arith.divf %75, %76 : vector<4x64xf32>
    %78 = vector.extract_strided_slice %77 {offsets = [0, 0], sizes = [4, 32], strides = [1, 1]} : vector<4x64xf32> to vector<4x32xf32>
    %79 = vector.extract_strided_slice %77 {offsets = [0, 32], sizes = [4, 32], strides = [1, 1]} : vector<4x64xf32> to vector<4x32xf32>
    %80 = vector.extract_strided_slice %62 {offsets = [0, 64], sizes = [4, 32], strides = [1, 1]} : vector<4x96xf32> to vector<4x32xf32>
    %81 = vector.extract_strided_slice %69 {offsets = [0, 64], sizes = [4, 32], strides = [1, 1]} : vector<4x96xf32> to vector<4x32xf32>
    %82 = arith.mulf %78, %81 : vector<4x32xf32>
    %83 = arith.addf %80, %82 : vector<4x32xf32>
    %84 = math.tanh %83 : vector<4x32xf32>
    %cst_25 = arith.constant 1.000000e+00 : f32
    %85 = vector.broadcast %cst_25 : f32 to vector<4x32xf32>
    %86 = arith.subf %85, %79 : vector<4x32xf32>
    %87 = arith.mulf %86, %84 : vector<4x32xf32>
    %88 = arith.mulf %79, %43 : vector<4x32xf32>
    %89 = arith.addf %87, %88 : vector<4x32xf32>
    %90 = vector.extract_strided_slice %89 {offsets = [0, 0], sizes = [2, 32], strides = [1, 1]} : vector<4x32xf32> to vector<2x32xf32>
    %c0_26 = arith.constant 0 : index
    %91 = arith.index_cast %c1_i32 : i32 to index
    %c0_27 = arith.constant 0 : index
    %92 = vector.load %arg5[%c0_26, %91, %c0_27] : memref<2x16x32xf32, #tpu.memory_space<vmem>>, vector<2x1x32xf32>
    %93 = vector.shape_cast %92 : vector<2x1x32xf32> to vector<2x32xf32>
    %94 = vector.shape_cast %90 : vector<2x32xf32> to vector<2x1x32xf32>
    tpu.vector_store %arg5[%c0_26, %91, %c0_27], %94 {strides = array<i32>} : memref<2x16x32xf32, #tpu.memory_space<vmem>>, vector<2x1x32xf32>,
    %95 = vector.extract_strided_slice %89 {offsets = [2, 0], sizes = [2, 32], strides = [1, 1]} : vector<4x32xf32> to vector<2x32xf32>
    %c15_i32_28 = arith.constant 15 : i32
    %96 = arith.subi %c15_i32_28, %c1_i32 : i32
    %c0_29 = arith.constant 0 : index
    %97 = arith.index_cast %96 : i32 to index
    %c0_30 = arith.constant 0 : index
    %98 = vector.load %arg6[%c0_29, %97, %c0_30] : memref<2x16x32xf32, #tpu.memory_space<vmem>>, vector<2x1x32xf32>
    %99 = vector.shape_cast %98 : vector<2x1x32xf32> to vector<2x32xf32>
    %100 = vector.shape_cast %95 : vector<2x32xf32> to vector<2x1x32xf32>
    tpu.vector_store %arg6[%c0_29, %97, %c0_30], %100 {strides = array<i32>} : memref<2x16x32xf32, #tpu.memory_space<vmem>>, vector<2x1x32xf32>,
    %c2_i32_31 = arith.constant 2 : i32
    %c0_32 = arith.constant 0 : index
    %101 = arith.index_cast %c2_i32_31 : i32 to index
    %c0_33 = arith.constant 0 : index
    %102 = vector.load %arg1[%c0_32, %101, %c0_33] : memref<2x16x96xf32, #tpu.memory_space<vmem>>, vector<2x1x96xf32>
    %103 = vector.shape_cast %102 : vector<2x1x96xf32> to vector<2x96xf32>
    %c15_i32_34 = arith.constant 15 : i32
    %104 = arith.subi %c15_i32_34, %c2_i32_31 : i32
    %c0_35 = arith.constant 0 : index
    %105 = arith.index_cast %104 : i32 to index
    %c0_36 = arith.constant 0 : index
    %106 = vector.load %arg2[%c0_35, %105, %c0_36] : memref<2x16x96xf32, #tpu.memory_space<vmem>>, vector<2x1x96xf32>
    %107 = vector.shape_cast %106 : vector<2x1x96xf32> to vector<2x96xf32>
    %108 = tpu.concatenate %103, %107 in 0 : vector<2x96xf32>, vector<2x96xf32> -> vector<4x96xf32>
    %cst_37 = arith.constant dense<0.000000e+00> : vector<4x192xf32>
    %109 = tpu.matmul %89, %3, %cst_37 {dimension_numbers = #tpu.dot_dimension_numbers<[1], [0], [0], [1], [0, 0, 1, 1], [], []>} : vector<4x32xf32>, vector<32x192xf32>, vector<4x192xf32> -> vector<4x192xf32>
    %110 = vector.extract_strided_slice %109 {offsets = [0, 0], sizes = [4, 96], strides = [1, 1]} : vector<4x192xf32> to vector<4x96xf32>
    %111 = vector.extract_strided_slice %109 {offsets = [0, 96], sizes = [4, 96], strides = [1, 1]} : vector<4x192xf32> to vector<4x96xf32>
    %112 = vector.shape_cast %7 : vector<4x1xi1> to vector<4x1xi1>
    %113 = vector.broadcast %112 : vector<4x1xi1> to vector<4x96xi1>
    %114 = arith.select %113, %110, %111 : vector<4x96xi1>, vector<4x96xf32>
    %115 = arith.addf %114, %4 : vector<4x96xf32>
    %116 = vector.extract_strided_slice %108 {offsets = [0, 0], sizes = [4, 64], strides = [1, 1]} : vector<4x96xf32> to vector<4x64xf32>
    %117 = vector.extract_strided_slice %115 {offsets = [0, 0], sizes = [4, 64], strides = [1, 1]} : vector<4x96xf32> to vector<4x64xf32>
    %118 = arith.addf %116, %117 : vector<4x64xf32>
    %119 = arith.negf %118 : vector<4x64xf32>
    %120 = math.exp %119 : vector<4x64xf32>
    %cst_38 = arith.constant 1.000000e+00 : f32
    %121 = vector.broadcast %cst_38 : f32 to vector<4x64xf32>
    %122 = arith.addf %121, %120 : vector<4x64xf32>
    %123 = arith.divf %121, %122 : vector<4x64xf32>
    %124 = vector.extract_strided_slice %123 {offsets = [0, 0], sizes = [4, 32], strides = [1, 1]} : vector<4x64xf32> to vector<4x32xf32>
    %125 = vector.extract_strided_slice %123 {offsets = [0, 32], sizes = [4, 32], strides = [1, 1]} : vector<4x64xf32> to vector<4x32xf32>
    %126 = vector.extract_strided_slice %108 {offsets = [0, 64], sizes = [4, 32], strides = [1, 1]} : vector<4x96xf32> to vector<4x32xf32>
    %127 = vector.extract_strided_slice %115 {offsets = [0, 64], sizes = [4, 32], strides = [1, 1]} : vector<4x96xf32> to vector<4x32xf32>
    %128 = arith.mulf %124, %127 : vector<4x32xf32>
    %129 = arith.addf %126, %128 : vector<4x32xf32>
    %130 = math.tanh %129 : vector<4x32xf32>
    %cst_39 = arith.constant 1.000000e+00 : f32
    %131 = vector.broadcast %cst_39 : f32 to vector<4x32xf32>
    %132 = arith.subf %131, %125 : vector<4x32xf32>
    %133 = arith.mulf %132, %130 : vector<4x32xf32>
    %134 = arith.mulf %125, %89 : vector<4x32xf32>
    %135 = arith.addf %133, %134 : vector<4x32xf32>
    %136 = vector.extract_strided_slice %135 {offsets = [0, 0], sizes = [2, 32], strides = [1, 1]} : vector<4x32xf32> to vector<2x32xf32>
    %c0_40 = arith.constant 0 : index
    %137 = arith.index_cast %c2_i32_31 : i32 to index
    %c0_41 = arith.constant 0 : index
    %138 = vector.load %arg5[%c0_40, %137, %c0_41] : memref<2x16x32xf32, #tpu.memory_space<vmem>>, vector<2x1x32xf32>
    %139 = vector.shape_cast %138 : vector<2x1x32xf32> to vector<2x32xf32>
    %140 = vector.shape_cast %136 : vector<2x32xf32> to vector<2x1x32xf32>
    tpu.vector_store %arg5[%c0_40, %137, %c0_41], %140 {strides = array<i32>} : memref<2x16x32xf32, #tpu.memory_space<vmem>>, vector<2x1x32xf32>,
    %141 = vector.extract_strided_slice %135 {offsets = [2, 0], sizes = [2, 32], strides = [1, 1]} : vector<4x32xf32> to vector<2x32xf32>
    %c15_i32_42 = arith.constant 15 : i32
    %142 = arith.subi %c15_i32_42, %c2_i32_31 : i32
    %c0_43 = arith.constant 0 : index
    %143 = arith.index_cast %142 : i32 to index
    %c0_44 = arith.constant 0 : index
    %144 = vector.load %arg6[%c0_43, %143, %c0_44] : memref<2x16x32xf32, #tpu.memory_space<vmem>>, vector<2x1x32xf32>
    %145 = vector.shape_cast %144 : vector<2x1x32xf32> to vector<2x32xf32>
    %146 = vector.shape_cast %141 : vector<2x32xf32> to vector<2x1x32xf32>
    tpu.vector_store %arg6[%c0_43, %143, %c0_44], %146 {strides = array<i32>} : memref<2x16x32xf32, #tpu.memory_space<vmem>>, vector<2x1x32xf32>,
    %c3_i32 = arith.constant 3 : i32
    %c0_45 = arith.constant 0 : index
    %147 = arith.index_cast %c3_i32 : i32 to index
    %c0_46 = arith.constant 0 : index
    %148 = vector.load %arg1[%c0_45, %147, %c0_46] : memref<2x16x96xf32, #tpu.memory_space<vmem>>, vector<2x1x96xf32>
    %149 = vector.shape_cast %148 : vector<2x1x96xf32> to vector<2x96xf32>
    %c15_i32_47 = arith.constant 15 : i32
    %150 = arith.subi %c15_i32_47, %c3_i32 : i32
    %c0_48 = arith.constant 0 : index
    %151 = arith.index_cast %150 : i32 to index
    %c0_49 = arith.constant 0 : index
    %152 = vector.load %arg2[%c0_48, %151, %c0_49] : memref<2x16x96xf32, #tpu.memory_space<vmem>>, vector<2x1x96xf32>
    %153 = vector.shape_cast %152 : vector<2x1x96xf32> to vector<2x96xf32>
    %154 = tpu.concatenate %149, %153 in 0 : vector<2x96xf32>, vector<2x96xf32> -> vector<4x96xf32>
    %cst_50 = arith.constant dense<0.000000e+00> : vector<4x192xf32>
    %155 = tpu.matmul %135, %3, %cst_50 {dimension_numbers = #tpu.dot_dimension_numbers<[1], [0], [0], [1], [0, 0, 1, 1], [], []>} : vector<4x32xf32>, vector<32x192xf32>, vector<4x192xf32> -> vector<4x192xf32>
    %156 = vector.extract_strided_slice %155 {offsets = [0, 0], sizes = [4, 96], strides = [1, 1]} : vector<4x192xf32> to vector<4x96xf32>
    %157 = vector.extract_strided_slice %155 {offsets = [0, 96], sizes = [4, 96], strides = [1, 1]} : vector<4x192xf32> to vector<4x96xf32>
    %158 = vector.shape_cast %7 : vector<4x1xi1> to vector<4x1xi1>
    %159 = vector.broadcast %158 : vector<4x1xi1> to vector<4x96xi1>
    %160 = arith.select %159, %156, %157 : vector<4x96xi1>, vector<4x96xf32>
    %161 = arith.addf %160, %4 : vector<4x96xf32>
    %162 = vector.extract_strided_slice %154 {offsets = [0, 0], sizes = [4, 64], strides = [1, 1]} : vector<4x96xf32> to vector<4x64xf32>
    %163 = vector.extract_strided_slice %161 {offsets = [0, 0], sizes = [4, 64], strides = [1, 1]} : vector<4x96xf32> to vector<4x64xf32>
    %164 = arith.addf %162, %163 : vector<4x64xf32>
    %165 = arith.negf %164 : vector<4x64xf32>
    %166 = math.exp %165 : vector<4x64xf32>
    %cst_51 = arith.constant 1.000000e+00 : f32
    %167 = vector.broadcast %cst_51 : f32 to vector<4x64xf32>
    %168 = arith.addf %167, %166 : vector<4x64xf32>
    %169 = arith.divf %167, %168 : vector<4x64xf32>
    %170 = vector.extract_strided_slice %169 {offsets = [0, 0], sizes = [4, 32], strides = [1, 1]} : vector<4x64xf32> to vector<4x32xf32>
    %171 = vector.extract_strided_slice %169 {offsets = [0, 32], sizes = [4, 32], strides = [1, 1]} : vector<4x64xf32> to vector<4x32xf32>
    %172 = vector.extract_strided_slice %154 {offsets = [0, 64], sizes = [4, 32], strides = [1, 1]} : vector<4x96xf32> to vector<4x32xf32>
    %173 = vector.extract_strided_slice %161 {offsets = [0, 64], sizes = [4, 32], strides = [1, 1]} : vector<4x96xf32> to vector<4x32xf32>
    %174 = arith.mulf %170, %173 : vector<4x32xf32>
    %175 = arith.addf %172, %174 : vector<4x32xf32>
    %176 = math.tanh %175 : vector<4x32xf32>
    %cst_52 = arith.constant 1.000000e+00 : f32
    %177 = vector.broadcast %cst_52 : f32 to vector<4x32xf32>
    %178 = arith.subf %177, %171 : vector<4x32xf32>
    %179 = arith.mulf %178, %176 : vector<4x32xf32>
    %180 = arith.mulf %171, %135 : vector<4x32xf32>
    %181 = arith.addf %179, %180 : vector<4x32xf32>
    %182 = vector.extract_strided_slice %181 {offsets = [0, 0], sizes = [2, 32], strides = [1, 1]} : vector<4x32xf32> to vector<2x32xf32>
    %c0_53 = arith.constant 0 : index
    %183 = arith.index_cast %c3_i32 : i32 to index
    %c0_54 = arith.constant 0 : index
    %184 = vector.load %arg5[%c0_53, %183, %c0_54] : memref<2x16x32xf32, #tpu.memory_space<vmem>>, vector<2x1x32xf32>
    %185 = vector.shape_cast %184 : vector<2x1x32xf32> to vector<2x32xf32>
    %186 = vector.shape_cast %182 : vector<2x32xf32> to vector<2x1x32xf32>
    tpu.vector_store %arg5[%c0_53, %183, %c0_54], %186 {strides = array<i32>} : memref<2x16x32xf32, #tpu.memory_space<vmem>>, vector<2x1x32xf32>,
    %187 = vector.extract_strided_slice %181 {offsets = [2, 0], sizes = [2, 32], strides = [1, 1]} : vector<4x32xf32> to vector<2x32xf32>
    %c15_i32_55 = arith.constant 15 : i32
    %188 = arith.subi %c15_i32_55, %c3_i32 : i32
    %c0_56 = arith.constant 0 : index
    %189 = arith.index_cast %188 : i32 to index
    %c0_57 = arith.constant 0 : index
    %190 = vector.load %arg6[%c0_56, %189, %c0_57] : memref<2x16x32xf32, #tpu.memory_space<vmem>>, vector<2x1x32xf32>
    %191 = vector.shape_cast %190 : vector<2x1x32xf32> to vector<2x32xf32>
    %192 = vector.shape_cast %187 : vector<2x32xf32> to vector<2x1x32xf32>
    tpu.vector_store %arg6[%c0_56, %189, %c0_57], %192 {strides = array<i32>} : memref<2x16x32xf32, #tpu.memory_space<vmem>>, vector<2x1x32xf32>,
    %c4_i32 = arith.constant 4 : i32
    %c0_58 = arith.constant 0 : index
    %193 = arith.index_cast %c4_i32 : i32 to index
    %c0_59 = arith.constant 0 : index
    %194 = vector.load %arg1[%c0_58, %193, %c0_59] : memref<2x16x96xf32, #tpu.memory_space<vmem>>, vector<2x1x96xf32>
    %195 = vector.shape_cast %194 : vector<2x1x96xf32> to vector<2x96xf32>
    %c15_i32_60 = arith.constant 15 : i32
    %196 = arith.subi %c15_i32_60, %c4_i32 : i32
    %c0_61 = arith.constant 0 : index
    %197 = arith.index_cast %196 : i32 to index
    %c0_62 = arith.constant 0 : index
    %198 = vector.load %arg2[%c0_61, %197, %c0_62] : memref<2x16x96xf32, #tpu.memory_space<vmem>>, vector<2x1x96xf32>
    %199 = vector.shape_cast %198 : vector<2x1x96xf32> to vector<2x96xf32>
    %200 = tpu.concatenate %195, %199 in 0 : vector<2x96xf32>, vector<2x96xf32> -> vector<4x96xf32>
    %cst_63 = arith.constant dense<0.000000e+00> : vector<4x192xf32>
    %201 = tpu.matmul %181, %3, %cst_63 {dimension_numbers = #tpu.dot_dimension_numbers<[1], [0], [0], [1], [0, 0, 1, 1], [], []>} : vector<4x32xf32>, vector<32x192xf32>, vector<4x192xf32> -> vector<4x192xf32>
    %202 = vector.extract_strided_slice %201 {offsets = [0, 0], sizes = [4, 96], strides = [1, 1]} : vector<4x192xf32> to vector<4x96xf32>
    %203 = vector.extract_strided_slice %201 {offsets = [0, 96], sizes = [4, 96], strides = [1, 1]} : vector<4x192xf32> to vector<4x96xf32>
    %204 = vector.shape_cast %7 : vector<4x1xi1> to vector<4x1xi1>
    %205 = vector.broadcast %204 : vector<4x1xi1> to vector<4x96xi1>
    %206 = arith.select %205, %202, %203 : vector<4x96xi1>, vector<4x96xf32>
    %207 = arith.addf %206, %4 : vector<4x96xf32>
    %208 = vector.extract_strided_slice %200 {offsets = [0, 0], sizes = [4, 64], strides = [1, 1]} : vector<4x96xf32> to vector<4x64xf32>
    %209 = vector.extract_strided_slice %207 {offsets = [0, 0], sizes = [4, 64], strides = [1, 1]} : vector<4x96xf32> to vector<4x64xf32>
    %210 = arith.addf %208, %209 : vector<4x64xf32>
    %211 = arith.negf %210 : vector<4x64xf32>
    %212 = math.exp %211 : vector<4x64xf32>
    %cst_64 = arith.constant 1.000000e+00 : f32
    %213 = vector.broadcast %cst_64 : f32 to vector<4x64xf32>
    %214 = arith.addf %213, %212 : vector<4x64xf32>
    %215 = arith.divf %213, %214 : vector<4x64xf32>
    %216 = vector.extract_strided_slice %215 {offsets = [0, 0], sizes = [4, 32], strides = [1, 1]} : vector<4x64xf32> to vector<4x32xf32>
    %217 = vector.extract_strided_slice %215 {offsets = [0, 32], sizes = [4, 32], strides = [1, 1]} : vector<4x64xf32> to vector<4x32xf32>
    %218 = vector.extract_strided_slice %200 {offsets = [0, 64], sizes = [4, 32], strides = [1, 1]} : vector<4x96xf32> to vector<4x32xf32>
    %219 = vector.extract_strided_slice %207 {offsets = [0, 64], sizes = [4, 32], strides = [1, 1]} : vector<4x96xf32> to vector<4x32xf32>
    %220 = arith.mulf %216, %219 : vector<4x32xf32>
    %221 = arith.addf %218, %220 : vector<4x32xf32>
    %222 = math.tanh %221 : vector<4x32xf32>
    %cst_65 = arith.constant 1.000000e+00 : f32
    %223 = vector.broadcast %cst_65 : f32 to vector<4x32xf32>
    %224 = arith.subf %223, %217 : vector<4x32xf32>
    %225 = arith.mulf %224, %222 : vector<4x32xf32>
    %226 = arith.mulf %217, %181 : vector<4x32xf32>
    %227 = arith.addf %225, %226 : vector<4x32xf32>
    %228 = vector.extract_strided_slice %227 {offsets = [0, 0], sizes = [2, 32], strides = [1, 1]} : vector<4x32xf32> to vector<2x32xf32>
    %c0_66 = arith.constant 0 : index
    %229 = arith.index_cast %c4_i32 : i32 to index
    %c0_67 = arith.constant 0 : index
    %230 = vector.load %arg5[%c0_66, %229, %c0_67] : memref<2x16x32xf32, #tpu.memory_space<vmem>>, vector<2x1x32xf32>
    %231 = vector.shape_cast %230 : vector<2x1x32xf32> to vector<2x32xf32>
    %232 = vector.shape_cast %228 : vector<2x32xf32> to vector<2x1x32xf32>
    tpu.vector_store %arg5[%c0_66, %229, %c0_67], %232 {strides = array<i32>} : memref<2x16x32xf32, #tpu.memory_space<vmem>>, vector<2x1x32xf32>,
    %233 = vector.extract_strided_slice %227 {offsets = [2, 0], sizes = [2, 32], strides = [1, 1]} : vector<4x32xf32> to vector<2x32xf32>
    %c15_i32_68 = arith.constant 15 : i32
    %234 = arith.subi %c15_i32_68, %c4_i32 : i32
    %c0_69 = arith.constant 0 : index
    %235 = arith.index_cast %234 : i32 to index
    %c0_70 = arith.constant 0 : index
    %236 = vector.load %arg6[%c0_69, %235, %c0_70] : memref<2x16x32xf32, #tpu.memory_space<vmem>>, vector<2x1x32xf32>
    %237 = vector.shape_cast %236 : vector<2x1x32xf32> to vector<2x32xf32>
    %238 = vector.shape_cast %233 : vector<2x32xf32> to vector<2x1x32xf32>
    tpu.vector_store %arg6[%c0_69, %235, %c0_70], %238 {strides = array<i32>} : memref<2x16x32xf32, #tpu.memory_space<vmem>>, vector<2x1x32xf32>,
    %c5_i32 = arith.constant 5 : i32
    %c0_71 = arith.constant 0 : index
    %239 = arith.index_cast %c5_i32 : i32 to index
    %c0_72 = arith.constant 0 : index
    %240 = vector.load %arg1[%c0_71, %239, %c0_72] : memref<2x16x96xf32, #tpu.memory_space<vmem>>, vector<2x1x96xf32>
    %241 = vector.shape_cast %240 : vector<2x1x96xf32> to vector<2x96xf32>
    %c15_i32_73 = arith.constant 15 : i32
    %242 = arith.subi %c15_i32_73, %c5_i32 : i32
    %c0_74 = arith.constant 0 : index
    %243 = arith.index_cast %242 : i32 to index
    %c0_75 = arith.constant 0 : index
    %244 = vector.load %arg2[%c0_74, %243, %c0_75] : memref<2x16x96xf32, #tpu.memory_space<vmem>>, vector<2x1x96xf32>
    %245 = vector.shape_cast %244 : vector<2x1x96xf32> to vector<2x96xf32>
    %246 = tpu.concatenate %241, %245 in 0 : vector<2x96xf32>, vector<2x96xf32> -> vector<4x96xf32>
    %cst_76 = arith.constant dense<0.000000e+00> : vector<4x192xf32>
    %247 = tpu.matmul %227, %3, %cst_76 {dimension_numbers = #tpu.dot_dimension_numbers<[1], [0], [0], [1], [0, 0, 1, 1], [], []>} : vector<4x32xf32>, vector<32x192xf32>, vector<4x192xf32> -> vector<4x192xf32>
    %248 = vector.extract_strided_slice %247 {offsets = [0, 0], sizes = [4, 96], strides = [1, 1]} : vector<4x192xf32> to vector<4x96xf32>
    %249 = vector.extract_strided_slice %247 {offsets = [0, 96], sizes = [4, 96], strides = [1, 1]} : vector<4x192xf32> to vector<4x96xf32>
    %250 = vector.shape_cast %7 : vector<4x1xi1> to vector<4x1xi1>
    %251 = vector.broadcast %250 : vector<4x1xi1> to vector<4x96xi1>
    %252 = arith.select %251, %248, %249 : vector<4x96xi1>, vector<4x96xf32>
    %253 = arith.addf %252, %4 : vector<4x96xf32>
    %254 = vector.extract_strided_slice %246 {offsets = [0, 0], sizes = [4, 64], strides = [1, 1]} : vector<4x96xf32> to vector<4x64xf32>
    %255 = vector.extract_strided_slice %253 {offsets = [0, 0], sizes = [4, 64], strides = [1, 1]} : vector<4x96xf32> to vector<4x64xf32>
    %256 = arith.addf %254, %255 : vector<4x64xf32>
    %257 = arith.negf %256 : vector<4x64xf32>
    %258 = math.exp %257 : vector<4x64xf32>
    %cst_77 = arith.constant 1.000000e+00 : f32
    %259 = vector.broadcast %cst_77 : f32 to vector<4x64xf32>
    %260 = arith.addf %259, %258 : vector<4x64xf32>
    %261 = arith.divf %259, %260 : vector<4x64xf32>
    %262 = vector.extract_strided_slice %261 {offsets = [0, 0], sizes = [4, 32], strides = [1, 1]} : vector<4x64xf32> to vector<4x32xf32>
    %263 = vector.extract_strided_slice %261 {offsets = [0, 32], sizes = [4, 32], strides = [1, 1]} : vector<4x64xf32> to vector<4x32xf32>
    %264 = vector.extract_strided_slice %246 {offsets = [0, 64], sizes = [4, 32], strides = [1, 1]} : vector<4x96xf32> to vector<4x32xf32>
    %265 = vector.extract_strided_slice %253 {offsets = [0, 64], sizes = [4, 32], strides = [1, 1]} : vector<4x96xf32> to vector<4x32xf32>
    %266 = arith.mulf %262, %265 : vector<4x32xf32>
    %267 = arith.addf %264, %266 : vector<4x32xf32>
    %268 = math.tanh %267 : vector<4x32xf32>
    %cst_78 = arith.constant 1.000000e+00 : f32
    %269 = vector.broadcast %cst_78 : f32 to vector<4x32xf32>
    %270 = arith.subf %269, %263 : vector<4x32xf32>
    %271 = arith.mulf %270, %268 : vector<4x32xf32>
    %272 = arith.mulf %263, %227 : vector<4x32xf32>
    %273 = arith.addf %271, %272 : vector<4x32xf32>
    %274 = vector.extract_strided_slice %273 {offsets = [0, 0], sizes = [2, 32], strides = [1, 1]} : vector<4x32xf32> to vector<2x32xf32>
    %c0_79 = arith.constant 0 : index
    %275 = arith.index_cast %c5_i32 : i32 to index
    %c0_80 = arith.constant 0 : index
    %276 = vector.load %arg5[%c0_79, %275, %c0_80] : memref<2x16x32xf32, #tpu.memory_space<vmem>>, vector<2x1x32xf32>
    %277 = vector.shape_cast %276 : vector<2x1x32xf32> to vector<2x32xf32>
    %278 = vector.shape_cast %274 : vector<2x32xf32> to vector<2x1x32xf32>
    tpu.vector_store %arg5[%c0_79, %275, %c0_80], %278 {strides = array<i32>} : memref<2x16x32xf32, #tpu.memory_space<vmem>>, vector<2x1x32xf32>,
    %279 = vector.extract_strided_slice %273 {offsets = [2, 0], sizes = [2, 32], strides = [1, 1]} : vector<4x32xf32> to vector<2x32xf32>
    %c15_i32_81 = arith.constant 15 : i32
    %280 = arith.subi %c15_i32_81, %c5_i32 : i32
    %c0_82 = arith.constant 0 : index
    %281 = arith.index_cast %280 : i32 to index
    %c0_83 = arith.constant 0 : index
    %282 = vector.load %arg6[%c0_82, %281, %c0_83] : memref<2x16x32xf32, #tpu.memory_space<vmem>>, vector<2x1x32xf32>
    %283 = vector.shape_cast %282 : vector<2x1x32xf32> to vector<2x32xf32>
    %284 = vector.shape_cast %279 : vector<2x32xf32> to vector<2x1x32xf32>
    tpu.vector_store %arg6[%c0_82, %281, %c0_83], %284 {strides = array<i32>} : memref<2x16x32xf32, #tpu.memory_space<vmem>>, vector<2x1x32xf32>,
    %c6_i32 = arith.constant 6 : i32
    %c0_84 = arith.constant 0 : index
    %285 = arith.index_cast %c6_i32 : i32 to index
    %c0_85 = arith.constant 0 : index
    %286 = vector.load %arg1[%c0_84, %285, %c0_85] : memref<2x16x96xf32, #tpu.memory_space<vmem>>, vector<2x1x96xf32>
    %287 = vector.shape_cast %286 : vector<2x1x96xf32> to vector<2x96xf32>
    %c15_i32_86 = arith.constant 15 : i32
    %288 = arith.subi %c15_i32_86, %c6_i32 : i32
    %c0_87 = arith.constant 0 : index
    %289 = arith.index_cast %288 : i32 to index
    %c0_88 = arith.constant 0 : index
    %290 = vector.load %arg2[%c0_87, %289, %c0_88] : memref<2x16x96xf32, #tpu.memory_space<vmem>>, vector<2x1x96xf32>
    %291 = vector.shape_cast %290 : vector<2x1x96xf32> to vector<2x96xf32>
    %292 = tpu.concatenate %287, %291 in 0 : vector<2x96xf32>, vector<2x96xf32> -> vector<4x96xf32>
    %cst_89 = arith.constant dense<0.000000e+00> : vector<4x192xf32>
    %293 = tpu.matmul %273, %3, %cst_89 {dimension_numbers = #tpu.dot_dimension_numbers<[1], [0], [0], [1], [0, 0, 1, 1], [], []>} : vector<4x32xf32>, vector<32x192xf32>, vector<4x192xf32> -> vector<4x192xf32>
    %294 = vector.extract_strided_slice %293 {offsets = [0, 0], sizes = [4, 96], strides = [1, 1]} : vector<4x192xf32> to vector<4x96xf32>
    %295 = vector.extract_strided_slice %293 {offsets = [0, 96], sizes = [4, 96], strides = [1, 1]} : vector<4x192xf32> to vector<4x96xf32>
    %296 = vector.shape_cast %7 : vector<4x1xi1> to vector<4x1xi1>
    %297 = vector.broadcast %296 : vector<4x1xi1> to vector<4x96xi1>
    %298 = arith.select %297, %294, %295 : vector<4x96xi1>, vector<4x96xf32>
    %299 = arith.addf %298, %4 : vector<4x96xf32>
    %300 = vector.extract_strided_slice %292 {offsets = [0, 0], sizes = [4, 64], strides = [1, 1]} : vector<4x96xf32> to vector<4x64xf32>
    %301 = vector.extract_strided_slice %299 {offsets = [0, 0], sizes = [4, 64], strides = [1, 1]} : vector<4x96xf32> to vector<4x64xf32>
    %302 = arith.addf %300, %301 : vector<4x64xf32>
    %303 = arith.negf %302 : vector<4x64xf32>
    %304 = math.exp %303 : vector<4x64xf32>
    %cst_90 = arith.constant 1.000000e+00 : f32
    %305 = vector.broadcast %cst_90 : f32 to vector<4x64xf32>
    %306 = arith.addf %305, %304 : vector<4x64xf32>
    %307 = arith.divf %305, %306 : vector<4x64xf32>
    %308 = vector.extract_strided_slice %307 {offsets = [0, 0], sizes = [4, 32], strides = [1, 1]} : vector<4x64xf32> to vector<4x32xf32>
    %309 = vector.extract_strided_slice %307 {offsets = [0, 32], sizes = [4, 32], strides = [1, 1]} : vector<4x64xf32> to vector<4x32xf32>
    %310 = vector.extract_strided_slice %292 {offsets = [0, 64], sizes = [4, 32], strides = [1, 1]} : vector<4x96xf32> to vector<4x32xf32>
    %311 = vector.extract_strided_slice %299 {offsets = [0, 64], sizes = [4, 32], strides = [1, 1]} : vector<4x96xf32> to vector<4x32xf32>
    %312 = arith.mulf %308, %311 : vector<4x32xf32>
    %313 = arith.addf %310, %312 : vector<4x32xf32>
    %314 = math.tanh %313 : vector<4x32xf32>
    %cst_91 = arith.constant 1.000000e+00 : f32
    %315 = vector.broadcast %cst_91 : f32 to vector<4x32xf32>
    %316 = arith.subf %315, %309 : vector<4x32xf32>
    %317 = arith.mulf %316, %314 : vector<4x32xf32>
    %318 = arith.mulf %309, %273 : vector<4x32xf32>
    %319 = arith.addf %317, %318 : vector<4x32xf32>
    %320 = vector.extract_strided_slice %319 {offsets = [0, 0], sizes = [2, 32], strides = [1, 1]} : vector<4x32xf32> to vector<2x32xf32>
    %c0_92 = arith.constant 0 : index
    %321 = arith.index_cast %c6_i32 : i32 to index
    %c0_93 = arith.constant 0 : index
    %322 = vector.load %arg5[%c0_92, %321, %c0_93] : memref<2x16x32xf32, #tpu.memory_space<vmem>>, vector<2x1x32xf32>
    %323 = vector.shape_cast %322 : vector<2x1x32xf32> to vector<2x32xf32>
    %324 = vector.shape_cast %320 : vector<2x32xf32> to vector<2x1x32xf32>
    tpu.vector_store %arg5[%c0_92, %321, %c0_93], %324 {strides = array<i32>} : memref<2x16x32xf32, #tpu.memory_space<vmem>>, vector<2x1x32xf32>,
    %325 = vector.extract_strided_slice %319 {offsets = [2, 0], sizes = [2, 32], strides = [1, 1]} : vector<4x32xf32> to vector<2x32xf32>
    %c15_i32_94 = arith.constant 15 : i32
    %326 = arith.subi %c15_i32_94, %c6_i32 : i32
    %c0_95 = arith.constant 0 : index
    %327 = arith.index_cast %326 : i32 to index
    %c0_96 = arith.constant 0 : index
    %328 = vector.load %arg6[%c0_95, %327, %c0_96] : memref<2x16x32xf32, #tpu.memory_space<vmem>>, vector<2x1x32xf32>
    %329 = vector.shape_cast %328 : vector<2x1x32xf32> to vector<2x32xf32>
    %330 = vector.shape_cast %325 : vector<2x32xf32> to vector<2x1x32xf32>
    tpu.vector_store %arg6[%c0_95, %327, %c0_96], %330 {strides = array<i32>} : memref<2x16x32xf32, #tpu.memory_space<vmem>>, vector<2x1x32xf32>,
    %c7_i32 = arith.constant 7 : i32
    %c0_97 = arith.constant 0 : index
    %331 = arith.index_cast %c7_i32 : i32 to index
    %c0_98 = arith.constant 0 : index
    %332 = vector.load %arg1[%c0_97, %331, %c0_98] : memref<2x16x96xf32, #tpu.memory_space<vmem>>, vector<2x1x96xf32>
    %333 = vector.shape_cast %332 : vector<2x1x96xf32> to vector<2x96xf32>
    %c15_i32_99 = arith.constant 15 : i32
    %334 = arith.subi %c15_i32_99, %c7_i32 : i32
    %c0_100 = arith.constant 0 : index
    %335 = arith.index_cast %334 : i32 to index
    %c0_101 = arith.constant 0 : index
    %336 = vector.load %arg2[%c0_100, %335, %c0_101] : memref<2x16x96xf32, #tpu.memory_space<vmem>>, vector<2x1x96xf32>
    %337 = vector.shape_cast %336 : vector<2x1x96xf32> to vector<2x96xf32>
    %338 = tpu.concatenate %333, %337 in 0 : vector<2x96xf32>, vector<2x96xf32> -> vector<4x96xf32>
    %cst_102 = arith.constant dense<0.000000e+00> : vector<4x192xf32>
    %339 = tpu.matmul %319, %3, %cst_102 {dimension_numbers = #tpu.dot_dimension_numbers<[1], [0], [0], [1], [0, 0, 1, 1], [], []>} : vector<4x32xf32>, vector<32x192xf32>, vector<4x192xf32> -> vector<4x192xf32>
    %340 = vector.extract_strided_slice %339 {offsets = [0, 0], sizes = [4, 96], strides = [1, 1]} : vector<4x192xf32> to vector<4x96xf32>
    %341 = vector.extract_strided_slice %339 {offsets = [0, 96], sizes = [4, 96], strides = [1, 1]} : vector<4x192xf32> to vector<4x96xf32>
    %342 = vector.shape_cast %7 : vector<4x1xi1> to vector<4x1xi1>
    %343 = vector.broadcast %342 : vector<4x1xi1> to vector<4x96xi1>
    %344 = arith.select %343, %340, %341 : vector<4x96xi1>, vector<4x96xf32>
    %345 = arith.addf %344, %4 : vector<4x96xf32>
    %346 = vector.extract_strided_slice %338 {offsets = [0, 0], sizes = [4, 64], strides = [1, 1]} : vector<4x96xf32> to vector<4x64xf32>
    %347 = vector.extract_strided_slice %345 {offsets = [0, 0], sizes = [4, 64], strides = [1, 1]} : vector<4x96xf32> to vector<4x64xf32>
    %348 = arith.addf %346, %347 : vector<4x64xf32>
    %349 = arith.negf %348 : vector<4x64xf32>
    %350 = math.exp %349 : vector<4x64xf32>
    %cst_103 = arith.constant 1.000000e+00 : f32
    %351 = vector.broadcast %cst_103 : f32 to vector<4x64xf32>
    %352 = arith.addf %351, %350 : vector<4x64xf32>
    %353 = arith.divf %351, %352 : vector<4x64xf32>
    %354 = vector.extract_strided_slice %353 {offsets = [0, 0], sizes = [4, 32], strides = [1, 1]} : vector<4x64xf32> to vector<4x32xf32>
    %355 = vector.extract_strided_slice %353 {offsets = [0, 32], sizes = [4, 32], strides = [1, 1]} : vector<4x64xf32> to vector<4x32xf32>
    %356 = vector.extract_strided_slice %338 {offsets = [0, 64], sizes = [4, 32], strides = [1, 1]} : vector<4x96xf32> to vector<4x32xf32>
    %357 = vector.extract_strided_slice %345 {offsets = [0, 64], sizes = [4, 32], strides = [1, 1]} : vector<4x96xf32> to vector<4x32xf32>
    %358 = arith.mulf %354, %357 : vector<4x32xf32>
    %359 = arith.addf %356, %358 : vector<4x32xf32>
    %360 = math.tanh %359 : vector<4x32xf32>
    %cst_104 = arith.constant 1.000000e+00 : f32
    %361 = vector.broadcast %cst_104 : f32 to vector<4x32xf32>
    %362 = arith.subf %361, %355 : vector<4x32xf32>
    %363 = arith.mulf %362, %360 : vector<4x32xf32>
    %364 = arith.mulf %355, %319 : vector<4x32xf32>
    %365 = arith.addf %363, %364 : vector<4x32xf32>
    %366 = vector.extract_strided_slice %365 {offsets = [0, 0], sizes = [2, 32], strides = [1, 1]} : vector<4x32xf32> to vector<2x32xf32>
    %c0_105 = arith.constant 0 : index
    %367 = arith.index_cast %c7_i32 : i32 to index
    %c0_106 = arith.constant 0 : index
    %368 = vector.load %arg5[%c0_105, %367, %c0_106] : memref<2x16x32xf32, #tpu.memory_space<vmem>>, vector<2x1x32xf32>
    %369 = vector.shape_cast %368 : vector<2x1x32xf32> to vector<2x32xf32>
    %370 = vector.shape_cast %366 : vector<2x32xf32> to vector<2x1x32xf32>
    tpu.vector_store %arg5[%c0_105, %367, %c0_106], %370 {strides = array<i32>} : memref<2x16x32xf32, #tpu.memory_space<vmem>>, vector<2x1x32xf32>,
    %371 = vector.extract_strided_slice %365 {offsets = [2, 0], sizes = [2, 32], strides = [1, 1]} : vector<4x32xf32> to vector<2x32xf32>
    %c15_i32_107 = arith.constant 15 : i32
    %372 = arith.subi %c15_i32_107, %c7_i32 : i32
    %c0_108 = arith.constant 0 : index
    %373 = arith.index_cast %372 : i32 to index
    %c0_109 = arith.constant 0 : index
    %374 = vector.load %arg6[%c0_108, %373, %c0_109] : memref<2x16x32xf32, #tpu.memory_space<vmem>>, vector<2x1x32xf32>
    %375 = vector.shape_cast %374 : vector<2x1x32xf32> to vector<2x32xf32>
    %376 = vector.shape_cast %371 : vector<2x32xf32> to vector<2x1x32xf32>
    tpu.vector_store %arg6[%c0_108, %373, %c0_109], %376 {strides = array<i32>} : memref<2x16x32xf32, #tpu.memory_space<vmem>>, vector<2x1x32xf32>,
    %c8_i32 = arith.constant 8 : i32
    %c0_110 = arith.constant 0 : index
    %377 = arith.index_cast %c8_i32 : i32 to index
    %c0_111 = arith.constant 0 : index
    %378 = vector.load %arg1[%c0_110, %377, %c0_111] : memref<2x16x96xf32, #tpu.memory_space<vmem>>, vector<2x1x96xf32>
    %379 = vector.shape_cast %378 : vector<2x1x96xf32> to vector<2x96xf32>
    %c15_i32_112 = arith.constant 15 : i32
    %380 = arith.subi %c15_i32_112, %c8_i32 : i32
    %c0_113 = arith.constant 0 : index
    %381 = arith.index_cast %380 : i32 to index
    %c0_114 = arith.constant 0 : index
    %382 = vector.load %arg2[%c0_113, %381, %c0_114] : memref<2x16x96xf32, #tpu.memory_space<vmem>>, vector<2x1x96xf32>
    %383 = vector.shape_cast %382 : vector<2x1x96xf32> to vector<2x96xf32>
    %384 = tpu.concatenate %379, %383 in 0 : vector<2x96xf32>, vector<2x96xf32> -> vector<4x96xf32>
    %cst_115 = arith.constant dense<0.000000e+00> : vector<4x192xf32>
    %385 = tpu.matmul %365, %3, %cst_115 {dimension_numbers = #tpu.dot_dimension_numbers<[1], [0], [0], [1], [0, 0, 1, 1], [], []>} : vector<4x32xf32>, vector<32x192xf32>, vector<4x192xf32> -> vector<4x192xf32>
    %386 = vector.extract_strided_slice %385 {offsets = [0, 0], sizes = [4, 96], strides = [1, 1]} : vector<4x192xf32> to vector<4x96xf32>
    %387 = vector.extract_strided_slice %385 {offsets = [0, 96], sizes = [4, 96], strides = [1, 1]} : vector<4x192xf32> to vector<4x96xf32>
    %388 = vector.shape_cast %7 : vector<4x1xi1> to vector<4x1xi1>
    %389 = vector.broadcast %388 : vector<4x1xi1> to vector<4x96xi1>
    %390 = arith.select %389, %386, %387 : vector<4x96xi1>, vector<4x96xf32>
    %391 = arith.addf %390, %4 : vector<4x96xf32>
    %392 = vector.extract_strided_slice %384 {offsets = [0, 0], sizes = [4, 64], strides = [1, 1]} : vector<4x96xf32> to vector<4x64xf32>
    %393 = vector.extract_strided_slice %391 {offsets = [0, 0], sizes = [4, 64], strides = [1, 1]} : vector<4x96xf32> to vector<4x64xf32>
    %394 = arith.addf %392, %393 : vector<4x64xf32>
    %395 = arith.negf %394 : vector<4x64xf32>
    %396 = math.exp %395 : vector<4x64xf32>
    %cst_116 = arith.constant 1.000000e+00 : f32
    %397 = vector.broadcast %cst_116 : f32 to vector<4x64xf32>
    %398 = arith.addf %397, %396 : vector<4x64xf32>
    %399 = arith.divf %397, %398 : vector<4x64xf32>
    %400 = vector.extract_strided_slice %399 {offsets = [0, 0], sizes = [4, 32], strides = [1, 1]} : vector<4x64xf32> to vector<4x32xf32>
    %401 = vector.extract_strided_slice %399 {offsets = [0, 32], sizes = [4, 32], strides = [1, 1]} : vector<4x64xf32> to vector<4x32xf32>
    %402 = vector.extract_strided_slice %384 {offsets = [0, 64], sizes = [4, 32], strides = [1, 1]} : vector<4x96xf32> to vector<4x32xf32>
    %403 = vector.extract_strided_slice %391 {offsets = [0, 64], sizes = [4, 32], strides = [1, 1]} : vector<4x96xf32> to vector<4x32xf32>
    %404 = arith.mulf %400, %403 : vector<4x32xf32>
    %405 = arith.addf %402, %404 : vector<4x32xf32>
    %406 = math.tanh %405 : vector<4x32xf32>
    %cst_117 = arith.constant 1.000000e+00 : f32
    %407 = vector.broadcast %cst_117 : f32 to vector<4x32xf32>
    %408 = arith.subf %407, %401 : vector<4x32xf32>
    %409 = arith.mulf %408, %406 : vector<4x32xf32>
    %410 = arith.mulf %401, %365 : vector<4x32xf32>
    %411 = arith.addf %409, %410 : vector<4x32xf32>
    %412 = vector.extract_strided_slice %411 {offsets = [0, 0], sizes = [2, 32], strides = [1, 1]} : vector<4x32xf32> to vector<2x32xf32>
    %c0_118 = arith.constant 0 : index
    %413 = arith.index_cast %c8_i32 : i32 to index
    %c0_119 = arith.constant 0 : index
    %414 = vector.load %arg5[%c0_118, %413, %c0_119] : memref<2x16x32xf32, #tpu.memory_space<vmem>>, vector<2x1x32xf32>
    %415 = vector.shape_cast %414 : vector<2x1x32xf32> to vector<2x32xf32>
    %416 = vector.shape_cast %412 : vector<2x32xf32> to vector<2x1x32xf32>
    tpu.vector_store %arg5[%c0_118, %413, %c0_119], %416 {strides = array<i32>} : memref<2x16x32xf32, #tpu.memory_space<vmem>>, vector<2x1x32xf32>,
    %417 = vector.extract_strided_slice %411 {offsets = [2, 0], sizes = [2, 32], strides = [1, 1]} : vector<4x32xf32> to vector<2x32xf32>
    %c15_i32_120 = arith.constant 15 : i32
    %418 = arith.subi %c15_i32_120, %c8_i32 : i32
    %c0_121 = arith.constant 0 : index
    %419 = arith.index_cast %418 : i32 to index
    %c0_122 = arith.constant 0 : index
    %420 = vector.load %arg6[%c0_121, %419, %c0_122] : memref<2x16x32xf32, #tpu.memory_space<vmem>>, vector<2x1x32xf32>
    %421 = vector.shape_cast %420 : vector<2x1x32xf32> to vector<2x32xf32>
    %422 = vector.shape_cast %417 : vector<2x32xf32> to vector<2x1x32xf32>
    tpu.vector_store %arg6[%c0_121, %419, %c0_122], %422 {strides = array<i32>} : memref<2x16x32xf32, #tpu.memory_space<vmem>>, vector<2x1x32xf32>,
    %c9_i32 = arith.constant 9 : i32
    %c0_123 = arith.constant 0 : index
    %423 = arith.index_cast %c9_i32 : i32 to index
    %c0_124 = arith.constant 0 : index
    %424 = vector.load %arg1[%c0_123, %423, %c0_124] : memref<2x16x96xf32, #tpu.memory_space<vmem>>, vector<2x1x96xf32>
    %425 = vector.shape_cast %424 : vector<2x1x96xf32> to vector<2x96xf32>
    %c15_i32_125 = arith.constant 15 : i32
    %426 = arith.subi %c15_i32_125, %c9_i32 : i32
    %c0_126 = arith.constant 0 : index
    %427 = arith.index_cast %426 : i32 to index
    %c0_127 = arith.constant 0 : index
    %428 = vector.load %arg2[%c0_126, %427, %c0_127] : memref<2x16x96xf32, #tpu.memory_space<vmem>>, vector<2x1x96xf32>
    %429 = vector.shape_cast %428 : vector<2x1x96xf32> to vector<2x96xf32>
    %430 = tpu.concatenate %425, %429 in 0 : vector<2x96xf32>, vector<2x96xf32> -> vector<4x96xf32>
    %cst_128 = arith.constant dense<0.000000e+00> : vector<4x192xf32>
    %431 = tpu.matmul %411, %3, %cst_128 {dimension_numbers = #tpu.dot_dimension_numbers<[1], [0], [0], [1], [0, 0, 1, 1], [], []>} : vector<4x32xf32>, vector<32x192xf32>, vector<4x192xf32> -> vector<4x192xf32>
    %432 = vector.extract_strided_slice %431 {offsets = [0, 0], sizes = [4, 96], strides = [1, 1]} : vector<4x192xf32> to vector<4x96xf32>
    %433 = vector.extract_strided_slice %431 {offsets = [0, 96], sizes = [4, 96], strides = [1, 1]} : vector<4x192xf32> to vector<4x96xf32>
    %434 = vector.shape_cast %7 : vector<4x1xi1> to vector<4x1xi1>
    %435 = vector.broadcast %434 : vector<4x1xi1> to vector<4x96xi1>
    %436 = arith.select %435, %432, %433 : vector<4x96xi1>, vector<4x96xf32>
    %437 = arith.addf %436, %4 : vector<4x96xf32>
    %438 = vector.extract_strided_slice %430 {offsets = [0, 0], sizes = [4, 64], strides = [1, 1]} : vector<4x96xf32> to vector<4x64xf32>
    %439 = vector.extract_strided_slice %437 {offsets = [0, 0], sizes = [4, 64], strides = [1, 1]} : vector<4x96xf32> to vector<4x64xf32>
    %440 = arith.addf %438, %439 : vector<4x64xf32>
    %441 = arith.negf %440 : vector<4x64xf32>
    %442 = math.exp %441 : vector<4x64xf32>
    %cst_129 = arith.constant 1.000000e+00 : f32
    %443 = vector.broadcast %cst_129 : f32 to vector<4x64xf32>
    %444 = arith.addf %443, %442 : vector<4x64xf32>
    %445 = arith.divf %443, %444 : vector<4x64xf32>
    %446 = vector.extract_strided_slice %445 {offsets = [0, 0], sizes = [4, 32], strides = [1, 1]} : vector<4x64xf32> to vector<4x32xf32>
    %447 = vector.extract_strided_slice %445 {offsets = [0, 32], sizes = [4, 32], strides = [1, 1]} : vector<4x64xf32> to vector<4x32xf32>
    %448 = vector.extract_strided_slice %430 {offsets = [0, 64], sizes = [4, 32], strides = [1, 1]} : vector<4x96xf32> to vector<4x32xf32>
    %449 = vector.extract_strided_slice %437 {offsets = [0, 64], sizes = [4, 32], strides = [1, 1]} : vector<4x96xf32> to vector<4x32xf32>
    %450 = arith.mulf %446, %449 : vector<4x32xf32>
    %451 = arith.addf %448, %450 : vector<4x32xf32>
    %452 = math.tanh %451 : vector<4x32xf32>
    %cst_130 = arith.constant 1.000000e+00 : f32
    %453 = vector.broadcast %cst_130 : f32 to vector<4x32xf32>
    %454 = arith.subf %453, %447 : vector<4x32xf32>
    %455 = arith.mulf %454, %452 : vector<4x32xf32>
    %456 = arith.mulf %447, %411 : vector<4x32xf32>
    %457 = arith.addf %455, %456 : vector<4x32xf32>
    %458 = vector.extract_strided_slice %457 {offsets = [0, 0], sizes = [2, 32], strides = [1, 1]} : vector<4x32xf32> to vector<2x32xf32>
    %c0_131 = arith.constant 0 : index
    %459 = arith.index_cast %c9_i32 : i32 to index
    %c0_132 = arith.constant 0 : index
    %460 = vector.load %arg5[%c0_131, %459, %c0_132] : memref<2x16x32xf32, #tpu.memory_space<vmem>>, vector<2x1x32xf32>
    %461 = vector.shape_cast %460 : vector<2x1x32xf32> to vector<2x32xf32>
    %462 = vector.shape_cast %458 : vector<2x32xf32> to vector<2x1x32xf32>
    tpu.vector_store %arg5[%c0_131, %459, %c0_132], %462 {strides = array<i32>} : memref<2x16x32xf32, #tpu.memory_space<vmem>>, vector<2x1x32xf32>,
    %463 = vector.extract_strided_slice %457 {offsets = [2, 0], sizes = [2, 32], strides = [1, 1]} : vector<4x32xf32> to vector<2x32xf32>
    %c15_i32_133 = arith.constant 15 : i32
    %464 = arith.subi %c15_i32_133, %c9_i32 : i32
    %c0_134 = arith.constant 0 : index
    %465 = arith.index_cast %464 : i32 to index
    %c0_135 = arith.constant 0 : index
    %466 = vector.load %arg6[%c0_134, %465, %c0_135] : memref<2x16x32xf32, #tpu.memory_space<vmem>>, vector<2x1x32xf32>
    %467 = vector.shape_cast %466 : vector<2x1x32xf32> to vector<2x32xf32>
    %468 = vector.shape_cast %463 : vector<2x32xf32> to vector<2x1x32xf32>
    tpu.vector_store %arg6[%c0_134, %465, %c0_135], %468 {strides = array<i32>} : memref<2x16x32xf32, #tpu.memory_space<vmem>>, vector<2x1x32xf32>,
    %c10_i32 = arith.constant 10 : i32
    %c0_136 = arith.constant 0 : index
    %469 = arith.index_cast %c10_i32 : i32 to index
    %c0_137 = arith.constant 0 : index
    %470 = vector.load %arg1[%c0_136, %469, %c0_137] : memref<2x16x96xf32, #tpu.memory_space<vmem>>, vector<2x1x96xf32>
    %471 = vector.shape_cast %470 : vector<2x1x96xf32> to vector<2x96xf32>
    %c15_i32_138 = arith.constant 15 : i32
    %472 = arith.subi %c15_i32_138, %c10_i32 : i32
    %c0_139 = arith.constant 0 : index
    %473 = arith.index_cast %472 : i32 to index
    %c0_140 = arith.constant 0 : index
    %474 = vector.load %arg2[%c0_139, %473, %c0_140] : memref<2x16x96xf32, #tpu.memory_space<vmem>>, vector<2x1x96xf32>
    %475 = vector.shape_cast %474 : vector<2x1x96xf32> to vector<2x96xf32>
    %476 = tpu.concatenate %471, %475 in 0 : vector<2x96xf32>, vector<2x96xf32> -> vector<4x96xf32>
    %cst_141 = arith.constant dense<0.000000e+00> : vector<4x192xf32>
    %477 = tpu.matmul %457, %3, %cst_141 {dimension_numbers = #tpu.dot_dimension_numbers<[1], [0], [0], [1], [0, 0, 1, 1], [], []>} : vector<4x32xf32>, vector<32x192xf32>, vector<4x192xf32> -> vector<4x192xf32>
    %478 = vector.extract_strided_slice %477 {offsets = [0, 0], sizes = [4, 96], strides = [1, 1]} : vector<4x192xf32> to vector<4x96xf32>
    %479 = vector.extract_strided_slice %477 {offsets = [0, 96], sizes = [4, 96], strides = [1, 1]} : vector<4x192xf32> to vector<4x96xf32>
    %480 = vector.shape_cast %7 : vector<4x1xi1> to vector<4x1xi1>
    %481 = vector.broadcast %480 : vector<4x1xi1> to vector<4x96xi1>
    %482 = arith.select %481, %478, %479 : vector<4x96xi1>, vector<4x96xf32>
    %483 = arith.addf %482, %4 : vector<4x96xf32>
    %484 = vector.extract_strided_slice %476 {offsets = [0, 0], sizes = [4, 64], strides = [1, 1]} : vector<4x96xf32> to vector<4x64xf32>
    %485 = vector.extract_strided_slice %483 {offsets = [0, 0], sizes = [4, 64], strides = [1, 1]} : vector<4x96xf32> to vector<4x64xf32>
    %486 = arith.addf %484, %485 : vector<4x64xf32>
    %487 = arith.negf %486 : vector<4x64xf32>
    %488 = math.exp %487 : vector<4x64xf32>
    %cst_142 = arith.constant 1.000000e+00 : f32
    %489 = vector.broadcast %cst_142 : f32 to vector<4x64xf32>
    %490 = arith.addf %489, %488 : vector<4x64xf32>
    %491 = arith.divf %489, %490 : vector<4x64xf32>
    %492 = vector.extract_strided_slice %491 {offsets = [0, 0], sizes = [4, 32], strides = [1, 1]} : vector<4x64xf32> to vector<4x32xf32>
    %493 = vector.extract_strided_slice %491 {offsets = [0, 32], sizes = [4, 32], strides = [1, 1]} : vector<4x64xf32> to vector<4x32xf32>
    %494 = vector.extract_strided_slice %476 {offsets = [0, 64], sizes = [4, 32], strides = [1, 1]} : vector<4x96xf32> to vector<4x32xf32>
    %495 = vector.extract_strided_slice %483 {offsets = [0, 64], sizes = [4, 32], strides = [1, 1]} : vector<4x96xf32> to vector<4x32xf32>
    %496 = arith.mulf %492, %495 : vector<4x32xf32>
    %497 = arith.addf %494, %496 : vector<4x32xf32>
    %498 = math.tanh %497 : vector<4x32xf32>
    %cst_143 = arith.constant 1.000000e+00 : f32
    %499 = vector.broadcast %cst_143 : f32 to vector<4x32xf32>
    %500 = arith.subf %499, %493 : vector<4x32xf32>
    %501 = arith.mulf %500, %498 : vector<4x32xf32>
    %502 = arith.mulf %493, %457 : vector<4x32xf32>
    %503 = arith.addf %501, %502 : vector<4x32xf32>
    %504 = vector.extract_strided_slice %503 {offsets = [0, 0], sizes = [2, 32], strides = [1, 1]} : vector<4x32xf32> to vector<2x32xf32>
    %c0_144 = arith.constant 0 : index
    %505 = arith.index_cast %c10_i32 : i32 to index
    %c0_145 = arith.constant 0 : index
    %506 = vector.load %arg5[%c0_144, %505, %c0_145] : memref<2x16x32xf32, #tpu.memory_space<vmem>>, vector<2x1x32xf32>
    %507 = vector.shape_cast %506 : vector<2x1x32xf32> to vector<2x32xf32>
    %508 = vector.shape_cast %504 : vector<2x32xf32> to vector<2x1x32xf32>
    tpu.vector_store %arg5[%c0_144, %505, %c0_145], %508 {strides = array<i32>} : memref<2x16x32xf32, #tpu.memory_space<vmem>>, vector<2x1x32xf32>,
    %509 = vector.extract_strided_slice %503 {offsets = [2, 0], sizes = [2, 32], strides = [1, 1]} : vector<4x32xf32> to vector<2x32xf32>
    %c15_i32_146 = arith.constant 15 : i32
    %510 = arith.subi %c15_i32_146, %c10_i32 : i32
    %c0_147 = arith.constant 0 : index
    %511 = arith.index_cast %510 : i32 to index
    %c0_148 = arith.constant 0 : index
    %512 = vector.load %arg6[%c0_147, %511, %c0_148] : memref<2x16x32xf32, #tpu.memory_space<vmem>>, vector<2x1x32xf32>
    %513 = vector.shape_cast %512 : vector<2x1x32xf32> to vector<2x32xf32>
    %514 = vector.shape_cast %509 : vector<2x32xf32> to vector<2x1x32xf32>
    tpu.vector_store %arg6[%c0_147, %511, %c0_148], %514 {strides = array<i32>} : memref<2x16x32xf32, #tpu.memory_space<vmem>>, vector<2x1x32xf32>,
    %c11_i32 = arith.constant 11 : i32
    %c0_149 = arith.constant 0 : index
    %515 = arith.index_cast %c11_i32 : i32 to index
    %c0_150 = arith.constant 0 : index
    %516 = vector.load %arg1[%c0_149, %515, %c0_150] : memref<2x16x96xf32, #tpu.memory_space<vmem>>, vector<2x1x96xf32>
    %517 = vector.shape_cast %516 : vector<2x1x96xf32> to vector<2x96xf32>
    %c15_i32_151 = arith.constant 15 : i32
    %518 = arith.subi %c15_i32_151, %c11_i32 : i32
    %c0_152 = arith.constant 0 : index
    %519 = arith.index_cast %518 : i32 to index
    %c0_153 = arith.constant 0 : index
    %520 = vector.load %arg2[%c0_152, %519, %c0_153] : memref<2x16x96xf32, #tpu.memory_space<vmem>>, vector<2x1x96xf32>
    %521 = vector.shape_cast %520 : vector<2x1x96xf32> to vector<2x96xf32>
    %522 = tpu.concatenate %517, %521 in 0 : vector<2x96xf32>, vector<2x96xf32> -> vector<4x96xf32>
    %cst_154 = arith.constant dense<0.000000e+00> : vector<4x192xf32>
    %523 = tpu.matmul %503, %3, %cst_154 {dimension_numbers = #tpu.dot_dimension_numbers<[1], [0], [0], [1], [0, 0, 1, 1], [], []>} : vector<4x32xf32>, vector<32x192xf32>, vector<4x192xf32> -> vector<4x192xf32>
    %524 = vector.extract_strided_slice %523 {offsets = [0, 0], sizes = [4, 96], strides = [1, 1]} : vector<4x192xf32> to vector<4x96xf32>
    %525 = vector.extract_strided_slice %523 {offsets = [0, 96], sizes = [4, 96], strides = [1, 1]} : vector<4x192xf32> to vector<4x96xf32>
    %526 = vector.shape_cast %7 : vector<4x1xi1> to vector<4x1xi1>
    %527 = vector.broadcast %526 : vector<4x1xi1> to vector<4x96xi1>
    %528 = arith.select %527, %524, %525 : vector<4x96xi1>, vector<4x96xf32>
    %529 = arith.addf %528, %4 : vector<4x96xf32>
    %530 = vector.extract_strided_slice %522 {offsets = [0, 0], sizes = [4, 64], strides = [1, 1]} : vector<4x96xf32> to vector<4x64xf32>
    %531 = vector.extract_strided_slice %529 {offsets = [0, 0], sizes = [4, 64], strides = [1, 1]} : vector<4x96xf32> to vector<4x64xf32>
    %532 = arith.addf %530, %531 : vector<4x64xf32>
    %533 = arith.negf %532 : vector<4x64xf32>
    %534 = math.exp %533 : vector<4x64xf32>
    %cst_155 = arith.constant 1.000000e+00 : f32
    %535 = vector.broadcast %cst_155 : f32 to vector<4x64xf32>
    %536 = arith.addf %535, %534 : vector<4x64xf32>
    %537 = arith.divf %535, %536 : vector<4x64xf32>
    %538 = vector.extract_strided_slice %537 {offsets = [0, 0], sizes = [4, 32], strides = [1, 1]} : vector<4x64xf32> to vector<4x32xf32>
    %539 = vector.extract_strided_slice %537 {offsets = [0, 32], sizes = [4, 32], strides = [1, 1]} : vector<4x64xf32> to vector<4x32xf32>
    %540 = vector.extract_strided_slice %522 {offsets = [0, 64], sizes = [4, 32], strides = [1, 1]} : vector<4x96xf32> to vector<4x32xf32>
    %541 = vector.extract_strided_slice %529 {offsets = [0, 64], sizes = [4, 32], strides = [1, 1]} : vector<4x96xf32> to vector<4x32xf32>
    %542 = arith.mulf %538, %541 : vector<4x32xf32>
    %543 = arith.addf %540, %542 : vector<4x32xf32>
    %544 = math.tanh %543 : vector<4x32xf32>
    %cst_156 = arith.constant 1.000000e+00 : f32
    %545 = vector.broadcast %cst_156 : f32 to vector<4x32xf32>
    %546 = arith.subf %545, %539 : vector<4x32xf32>
    %547 = arith.mulf %546, %544 : vector<4x32xf32>
    %548 = arith.mulf %539, %503 : vector<4x32xf32>
    %549 = arith.addf %547, %548 : vector<4x32xf32>
    %550 = vector.extract_strided_slice %549 {offsets = [0, 0], sizes = [2, 32], strides = [1, 1]} : vector<4x32xf32> to vector<2x32xf32>
    %c0_157 = arith.constant 0 : index
    %551 = arith.index_cast %c11_i32 : i32 to index
    %c0_158 = arith.constant 0 : index
    %552 = vector.load %arg5[%c0_157, %551, %c0_158] : memref<2x16x32xf32, #tpu.memory_space<vmem>>, vector<2x1x32xf32>
    %553 = vector.shape_cast %552 : vector<2x1x32xf32> to vector<2x32xf32>
    %554 = vector.shape_cast %550 : vector<2x32xf32> to vector<2x1x32xf32>
    tpu.vector_store %arg5[%c0_157, %551, %c0_158], %554 {strides = array<i32>} : memref<2x16x32xf32, #tpu.memory_space<vmem>>, vector<2x1x32xf32>,
    %555 = vector.extract_strided_slice %549 {offsets = [2, 0], sizes = [2, 32], strides = [1, 1]} : vector<4x32xf32> to vector<2x32xf32>
    %c15_i32_159 = arith.constant 15 : i32
    %556 = arith.subi %c15_i32_159, %c11_i32 : i32
    %c0_160 = arith.constant 0 : index
    %557 = arith.index_cast %556 : i32 to index
    %c0_161 = arith.constant 0 : index
    %558 = vector.load %arg6[%c0_160, %557, %c0_161] : memref<2x16x32xf32, #tpu.memory_space<vmem>>, vector<2x1x32xf32>
    %559 = vector.shape_cast %558 : vector<2x1x32xf32> to vector<2x32xf32>
    %560 = vector.shape_cast %555 : vector<2x32xf32> to vector<2x1x32xf32>
    tpu.vector_store %arg6[%c0_160, %557, %c0_161], %560 {strides = array<i32>} : memref<2x16x32xf32, #tpu.memory_space<vmem>>, vector<2x1x32xf32>,
    %c12_i32 = arith.constant 12 : i32
    %c0_162 = arith.constant 0 : index
    %561 = arith.index_cast %c12_i32 : i32 to index
    %c0_163 = arith.constant 0 : index
    %562 = vector.load %arg1[%c0_162, %561, %c0_163] : memref<2x16x96xf32, #tpu.memory_space<vmem>>, vector<2x1x96xf32>
    %563 = vector.shape_cast %562 : vector<2x1x96xf32> to vector<2x96xf32>
    %c15_i32_164 = arith.constant 15 : i32
    %564 = arith.subi %c15_i32_164, %c12_i32 : i32
    %c0_165 = arith.constant 0 : index
    %565 = arith.index_cast %564 : i32 to index
    %c0_166 = arith.constant 0 : index
    %566 = vector.load %arg2[%c0_165, %565, %c0_166] : memref<2x16x96xf32, #tpu.memory_space<vmem>>, vector<2x1x96xf32>
    %567 = vector.shape_cast %566 : vector<2x1x96xf32> to vector<2x96xf32>
    %568 = tpu.concatenate %563, %567 in 0 : vector<2x96xf32>, vector<2x96xf32> -> vector<4x96xf32>
    %cst_167 = arith.constant dense<0.000000e+00> : vector<4x192xf32>
    %569 = tpu.matmul %549, %3, %cst_167 {dimension_numbers = #tpu.dot_dimension_numbers<[1], [0], [0], [1], [0, 0, 1, 1], [], []>} : vector<4x32xf32>, vector<32x192xf32>, vector<4x192xf32> -> vector<4x192xf32>
    %570 = vector.extract_strided_slice %569 {offsets = [0, 0], sizes = [4, 96], strides = [1, 1]} : vector<4x192xf32> to vector<4x96xf32>
    %571 = vector.extract_strided_slice %569 {offsets = [0, 96], sizes = [4, 96], strides = [1, 1]} : vector<4x192xf32> to vector<4x96xf32>
    %572 = vector.shape_cast %7 : vector<4x1xi1> to vector<4x1xi1>
    %573 = vector.broadcast %572 : vector<4x1xi1> to vector<4x96xi1>
    %574 = arith.select %573, %570, %571 : vector<4x96xi1>, vector<4x96xf32>
    %575 = arith.addf %574, %4 : vector<4x96xf32>
    %576 = vector.extract_strided_slice %568 {offsets = [0, 0], sizes = [4, 64], strides = [1, 1]} : vector<4x96xf32> to vector<4x64xf32>
    %577 = vector.extract_strided_slice %575 {offsets = [0, 0], sizes = [4, 64], strides = [1, 1]} : vector<4x96xf32> to vector<4x64xf32>
    %578 = arith.addf %576, %577 : vector<4x64xf32>
    %579 = arith.negf %578 : vector<4x64xf32>
    %580 = math.exp %579 : vector<4x64xf32>
    %cst_168 = arith.constant 1.000000e+00 : f32
    %581 = vector.broadcast %cst_168 : f32 to vector<4x64xf32>
    %582 = arith.addf %581, %580 : vector<4x64xf32>
    %583 = arith.divf %581, %582 : vector<4x64xf32>
    %584 = vector.extract_strided_slice %583 {offsets = [0, 0], sizes = [4, 32], strides = [1, 1]} : vector<4x64xf32> to vector<4x32xf32>
    %585 = vector.extract_strided_slice %583 {offsets = [0, 32], sizes = [4, 32], strides = [1, 1]} : vector<4x64xf32> to vector<4x32xf32>
    %586 = vector.extract_strided_slice %568 {offsets = [0, 64], sizes = [4, 32], strides = [1, 1]} : vector<4x96xf32> to vector<4x32xf32>
    %587 = vector.extract_strided_slice %575 {offsets = [0, 64], sizes = [4, 32], strides = [1, 1]} : vector<4x96xf32> to vector<4x32xf32>
    %588 = arith.mulf %584, %587 : vector<4x32xf32>
    %589 = arith.addf %586, %588 : vector<4x32xf32>
    %590 = math.tanh %589 : vector<4x32xf32>
    %cst_169 = arith.constant 1.000000e+00 : f32
    %591 = vector.broadcast %cst_169 : f32 to vector<4x32xf32>
    %592 = arith.subf %591, %585 : vector<4x32xf32>
    %593 = arith.mulf %592, %590 : vector<4x32xf32>
    %594 = arith.mulf %585, %549 : vector<4x32xf32>
    %595 = arith.addf %593, %594 : vector<4x32xf32>
    %596 = vector.extract_strided_slice %595 {offsets = [0, 0], sizes = [2, 32], strides = [1, 1]} : vector<4x32xf32> to vector<2x32xf32>
    %c0_170 = arith.constant 0 : index
    %597 = arith.index_cast %c12_i32 : i32 to index
    %c0_171 = arith.constant 0 : index
    %598 = vector.load %arg5[%c0_170, %597, %c0_171] : memref<2x16x32xf32, #tpu.memory_space<vmem>>, vector<2x1x32xf32>
    %599 = vector.shape_cast %598 : vector<2x1x32xf32> to vector<2x32xf32>
    %600 = vector.shape_cast %596 : vector<2x32xf32> to vector<2x1x32xf32>
    tpu.vector_store %arg5[%c0_170, %597, %c0_171], %600 {strides = array<i32>} : memref<2x16x32xf32, #tpu.memory_space<vmem>>, vector<2x1x32xf32>,
    %601 = vector.extract_strided_slice %595 {offsets = [2, 0], sizes = [2, 32], strides = [1, 1]} : vector<4x32xf32> to vector<2x32xf32>
    %c15_i32_172 = arith.constant 15 : i32
    %602 = arith.subi %c15_i32_172, %c12_i32 : i32
    %c0_173 = arith.constant 0 : index
    %603 = arith.index_cast %602 : i32 to index
    %c0_174 = arith.constant 0 : index
    %604 = vector.load %arg6[%c0_173, %603, %c0_174] : memref<2x16x32xf32, #tpu.memory_space<vmem>>, vector<2x1x32xf32>
    %605 = vector.shape_cast %604 : vector<2x1x32xf32> to vector<2x32xf32>
    %606 = vector.shape_cast %601 : vector<2x32xf32> to vector<2x1x32xf32>
    tpu.vector_store %arg6[%c0_173, %603, %c0_174], %606 {strides = array<i32>} : memref<2x16x32xf32, #tpu.memory_space<vmem>>, vector<2x1x32xf32>,
    %c13_i32 = arith.constant 13 : i32
    %c0_175 = arith.constant 0 : index
    %607 = arith.index_cast %c13_i32 : i32 to index
    %c0_176 = arith.constant 0 : index
    %608 = vector.load %arg1[%c0_175, %607, %c0_176] : memref<2x16x96xf32, #tpu.memory_space<vmem>>, vector<2x1x96xf32>
    %609 = vector.shape_cast %608 : vector<2x1x96xf32> to vector<2x96xf32>
    %c15_i32_177 = arith.constant 15 : i32
    %610 = arith.subi %c15_i32_177, %c13_i32 : i32
    %c0_178 = arith.constant 0 : index
    %611 = arith.index_cast %610 : i32 to index
    %c0_179 = arith.constant 0 : index
    %612 = vector.load %arg2[%c0_178, %611, %c0_179] : memref<2x16x96xf32, #tpu.memory_space<vmem>>, vector<2x1x96xf32>
    %613 = vector.shape_cast %612 : vector<2x1x96xf32> to vector<2x96xf32>
    %614 = tpu.concatenate %609, %613 in 0 : vector<2x96xf32>, vector<2x96xf32> -> vector<4x96xf32>
    %cst_180 = arith.constant dense<0.000000e+00> : vector<4x192xf32>
    %615 = tpu.matmul %595, %3, %cst_180 {dimension_numbers = #tpu.dot_dimension_numbers<[1], [0], [0], [1], [0, 0, 1, 1], [], []>} : vector<4x32xf32>, vector<32x192xf32>, vector<4x192xf32> -> vector<4x192xf32>
    %616 = vector.extract_strided_slice %615 {offsets = [0, 0], sizes = [4, 96], strides = [1, 1]} : vector<4x192xf32> to vector<4x96xf32>
    %617 = vector.extract_strided_slice %615 {offsets = [0, 96], sizes = [4, 96], strides = [1, 1]} : vector<4x192xf32> to vector<4x96xf32>
    %618 = vector.shape_cast %7 : vector<4x1xi1> to vector<4x1xi1>
    %619 = vector.broadcast %618 : vector<4x1xi1> to vector<4x96xi1>
    %620 = arith.select %619, %616, %617 : vector<4x96xi1>, vector<4x96xf32>
    %621 = arith.addf %620, %4 : vector<4x96xf32>
    %622 = vector.extract_strided_slice %614 {offsets = [0, 0], sizes = [4, 64], strides = [1, 1]} : vector<4x96xf32> to vector<4x64xf32>
    %623 = vector.extract_strided_slice %621 {offsets = [0, 0], sizes = [4, 64], strides = [1, 1]} : vector<4x96xf32> to vector<4x64xf32>
    %624 = arith.addf %622, %623 : vector<4x64xf32>
    %625 = arith.negf %624 : vector<4x64xf32>
    %626 = math.exp %625 : vector<4x64xf32>
    %cst_181 = arith.constant 1.000000e+00 : f32
    %627 = vector.broadcast %cst_181 : f32 to vector<4x64xf32>
    %628 = arith.addf %627, %626 : vector<4x64xf32>
    %629 = arith.divf %627, %628 : vector<4x64xf32>
    %630 = vector.extract_strided_slice %629 {offsets = [0, 0], sizes = [4, 32], strides = [1, 1]} : vector<4x64xf32> to vector<4x32xf32>
    %631 = vector.extract_strided_slice %629 {offsets = [0, 32], sizes = [4, 32], strides = [1, 1]} : vector<4x64xf32> to vector<4x32xf32>
    %632 = vector.extract_strided_slice %614 {offsets = [0, 64], sizes = [4, 32], strides = [1, 1]} : vector<4x96xf32> to vector<4x32xf32>
    %633 = vector.extract_strided_slice %621 {offsets = [0, 64], sizes = [4, 32], strides = [1, 1]} : vector<4x96xf32> to vector<4x32xf32>
    %634 = arith.mulf %630, %633 : vector<4x32xf32>
    %635 = arith.addf %632, %634 : vector<4x32xf32>
    %636 = math.tanh %635 : vector<4x32xf32>
    %cst_182 = arith.constant 1.000000e+00 : f32
    %637 = vector.broadcast %cst_182 : f32 to vector<4x32xf32>
    %638 = arith.subf %637, %631 : vector<4x32xf32>
    %639 = arith.mulf %638, %636 : vector<4x32xf32>
    %640 = arith.mulf %631, %595 : vector<4x32xf32>
    %641 = arith.addf %639, %640 : vector<4x32xf32>
    %642 = vector.extract_strided_slice %641 {offsets = [0, 0], sizes = [2, 32], strides = [1, 1]} : vector<4x32xf32> to vector<2x32xf32>
    %c0_183 = arith.constant 0 : index
    %643 = arith.index_cast %c13_i32 : i32 to index
    %c0_184 = arith.constant 0 : index
    %644 = vector.load %arg5[%c0_183, %643, %c0_184] : memref<2x16x32xf32, #tpu.memory_space<vmem>>, vector<2x1x32xf32>
    %645 = vector.shape_cast %644 : vector<2x1x32xf32> to vector<2x32xf32>
    %646 = vector.shape_cast %642 : vector<2x32xf32> to vector<2x1x32xf32>
    tpu.vector_store %arg5[%c0_183, %643, %c0_184], %646 {strides = array<i32>} : memref<2x16x32xf32, #tpu.memory_space<vmem>>, vector<2x1x32xf32>,
    %647 = vector.extract_strided_slice %641 {offsets = [2, 0], sizes = [2, 32], strides = [1, 1]} : vector<4x32xf32> to vector<2x32xf32>
    %c15_i32_185 = arith.constant 15 : i32
    %648 = arith.subi %c15_i32_185, %c13_i32 : i32
    %c0_186 = arith.constant 0 : index
    %649 = arith.index_cast %648 : i32 to index
    %c0_187 = arith.constant 0 : index
    %650 = vector.load %arg6[%c0_186, %649, %c0_187] : memref<2x16x32xf32, #tpu.memory_space<vmem>>, vector<2x1x32xf32>
    %651 = vector.shape_cast %650 : vector<2x1x32xf32> to vector<2x32xf32>
    %652 = vector.shape_cast %647 : vector<2x32xf32> to vector<2x1x32xf32>
    tpu.vector_store %arg6[%c0_186, %649, %c0_187], %652 {strides = array<i32>} : memref<2x16x32xf32, #tpu.memory_space<vmem>>, vector<2x1x32xf32>,
    %c14_i32 = arith.constant 14 : i32
    %c0_188 = arith.constant 0 : index
    %653 = arith.index_cast %c14_i32 : i32 to index
    %c0_189 = arith.constant 0 : index
    %654 = vector.load %arg1[%c0_188, %653, %c0_189] : memref<2x16x96xf32, #tpu.memory_space<vmem>>, vector<2x1x96xf32>
    %655 = vector.shape_cast %654 : vector<2x1x96xf32> to vector<2x96xf32>
    %c15_i32_190 = arith.constant 15 : i32
    %656 = arith.subi %c15_i32_190, %c14_i32 : i32
    %c0_191 = arith.constant 0 : index
    %657 = arith.index_cast %656 : i32 to index
    %c0_192 = arith.constant 0 : index
    %658 = vector.load %arg2[%c0_191, %657, %c0_192] : memref<2x16x96xf32, #tpu.memory_space<vmem>>, vector<2x1x96xf32>
    %659 = vector.shape_cast %658 : vector<2x1x96xf32> to vector<2x96xf32>
    %660 = tpu.concatenate %655, %659 in 0 : vector<2x96xf32>, vector<2x96xf32> -> vector<4x96xf32>
    %cst_193 = arith.constant dense<0.000000e+00> : vector<4x192xf32>
    %661 = tpu.matmul %641, %3, %cst_193 {dimension_numbers = #tpu.dot_dimension_numbers<[1], [0], [0], [1], [0, 0, 1, 1], [], []>} : vector<4x32xf32>, vector<32x192xf32>, vector<4x192xf32> -> vector<4x192xf32>
    %662 = vector.extract_strided_slice %661 {offsets = [0, 0], sizes = [4, 96], strides = [1, 1]} : vector<4x192xf32> to vector<4x96xf32>
    %663 = vector.extract_strided_slice %661 {offsets = [0, 96], sizes = [4, 96], strides = [1, 1]} : vector<4x192xf32> to vector<4x96xf32>
    %664 = vector.shape_cast %7 : vector<4x1xi1> to vector<4x1xi1>
    %665 = vector.broadcast %664 : vector<4x1xi1> to vector<4x96xi1>
    %666 = arith.select %665, %662, %663 : vector<4x96xi1>, vector<4x96xf32>
    %667 = arith.addf %666, %4 : vector<4x96xf32>
    %668 = vector.extract_strided_slice %660 {offsets = [0, 0], sizes = [4, 64], strides = [1, 1]} : vector<4x96xf32> to vector<4x64xf32>
    %669 = vector.extract_strided_slice %667 {offsets = [0, 0], sizes = [4, 64], strides = [1, 1]} : vector<4x96xf32> to vector<4x64xf32>
    %670 = arith.addf %668, %669 : vector<4x64xf32>
    %671 = arith.negf %670 : vector<4x64xf32>
    %672 = math.exp %671 : vector<4x64xf32>
    %cst_194 = arith.constant 1.000000e+00 : f32
    %673 = vector.broadcast %cst_194 : f32 to vector<4x64xf32>
    %674 = arith.addf %673, %672 : vector<4x64xf32>
    %675 = arith.divf %673, %674 : vector<4x64xf32>
    %676 = vector.extract_strided_slice %675 {offsets = [0, 0], sizes = [4, 32], strides = [1, 1]} : vector<4x64xf32> to vector<4x32xf32>
    %677 = vector.extract_strided_slice %675 {offsets = [0, 32], sizes = [4, 32], strides = [1, 1]} : vector<4x64xf32> to vector<4x32xf32>
    %678 = vector.extract_strided_slice %660 {offsets = [0, 64], sizes = [4, 32], strides = [1, 1]} : vector<4x96xf32> to vector<4x32xf32>
    %679 = vector.extract_strided_slice %667 {offsets = [0, 64], sizes = [4, 32], strides = [1, 1]} : vector<4x96xf32> to vector<4x32xf32>
    %680 = arith.mulf %676, %679 : vector<4x32xf32>
    %681 = arith.addf %678, %680 : vector<4x32xf32>
    %682 = math.tanh %681 : vector<4x32xf32>
    %cst_195 = arith.constant 1.000000e+00 : f32
    %683 = vector.broadcast %cst_195 : f32 to vector<4x32xf32>
    %684 = arith.subf %683, %677 : vector<4x32xf32>
    %685 = arith.mulf %684, %682 : vector<4x32xf32>
    %686 = arith.mulf %677, %641 : vector<4x32xf32>
    %687 = arith.addf %685, %686 : vector<4x32xf32>
    %688 = vector.extract_strided_slice %687 {offsets = [0, 0], sizes = [2, 32], strides = [1, 1]} : vector<4x32xf32> to vector<2x32xf32>
    %c0_196 = arith.constant 0 : index
    %689 = arith.index_cast %c14_i32 : i32 to index
    %c0_197 = arith.constant 0 : index
    %690 = vector.load %arg5[%c0_196, %689, %c0_197] : memref<2x16x32xf32, #tpu.memory_space<vmem>>, vector<2x1x32xf32>
    %691 = vector.shape_cast %690 : vector<2x1x32xf32> to vector<2x32xf32>
    %692 = vector.shape_cast %688 : vector<2x32xf32> to vector<2x1x32xf32>
    tpu.vector_store %arg5[%c0_196, %689, %c0_197], %692 {strides = array<i32>} : memref<2x16x32xf32, #tpu.memory_space<vmem>>, vector<2x1x32xf32>,
    %693 = vector.extract_strided_slice %687 {offsets = [2, 0], sizes = [2, 32], strides = [1, 1]} : vector<4x32xf32> to vector<2x32xf32>
    %c15_i32_198 = arith.constant 15 : i32
    %694 = arith.subi %c15_i32_198, %c14_i32 : i32
    %c0_199 = arith.constant 0 : index
    %695 = arith.index_cast %694 : i32 to index
    %c0_200 = arith.constant 0 : index
    %696 = vector.load %arg6[%c0_199, %695, %c0_200] : memref<2x16x32xf32, #tpu.memory_space<vmem>>, vector<2x1x32xf32>
    %697 = vector.shape_cast %696 : vector<2x1x32xf32> to vector<2x32xf32>
    %698 = vector.shape_cast %693 : vector<2x32xf32> to vector<2x1x32xf32>
    tpu.vector_store %arg6[%c0_199, %695, %c0_200], %698 {strides = array<i32>} : memref<2x16x32xf32, #tpu.memory_space<vmem>>, vector<2x1x32xf32>,
    %c15_i32_201 = arith.constant 15 : i32
    %c0_202 = arith.constant 0 : index
    %699 = arith.index_cast %c15_i32_201 : i32 to index
    %c0_203 = arith.constant 0 : index
    %700 = vector.load %arg1[%c0_202, %699, %c0_203] : memref<2x16x96xf32, #tpu.memory_space<vmem>>, vector<2x1x96xf32>
    %701 = vector.shape_cast %700 : vector<2x1x96xf32> to vector<2x96xf32>
    %c15_i32_204 = arith.constant 15 : i32
    %702 = arith.subi %c15_i32_204, %c15_i32_201 : i32
    %c0_205 = arith.constant 0 : index
    %703 = arith.index_cast %702 : i32 to index
    %c0_206 = arith.constant 0 : index
    %704 = vector.load %arg2[%c0_205, %703, %c0_206] : memref<2x16x96xf32, #tpu.memory_space<vmem>>, vector<2x1x96xf32>
    %705 = vector.shape_cast %704 : vector<2x1x96xf32> to vector<2x96xf32>
    %706 = tpu.concatenate %701, %705 in 0 : vector<2x96xf32>, vector<2x96xf32> -> vector<4x96xf32>
    %cst_207 = arith.constant dense<0.000000e+00> : vector<4x192xf32>
    %707 = tpu.matmul %687, %3, %cst_207 {dimension_numbers = #tpu.dot_dimension_numbers<[1], [0], [0], [1], [0, 0, 1, 1], [], []>} : vector<4x32xf32>, vector<32x192xf32>, vector<4x192xf32> -> vector<4x192xf32>
    %708 = vector.extract_strided_slice %707 {offsets = [0, 0], sizes = [4, 96], strides = [1, 1]} : vector<4x192xf32> to vector<4x96xf32>
    %709 = vector.extract_strided_slice %707 {offsets = [0, 96], sizes = [4, 96], strides = [1, 1]} : vector<4x192xf32> to vector<4x96xf32>
    %710 = vector.shape_cast %7 : vector<4x1xi1> to vector<4x1xi1>
    %711 = vector.broadcast %710 : vector<4x1xi1> to vector<4x96xi1>
    %712 = arith.select %711, %708, %709 : vector<4x96xi1>, vector<4x96xf32>
    %713 = arith.addf %712, %4 : vector<4x96xf32>
    %714 = vector.extract_strided_slice %706 {offsets = [0, 0], sizes = [4, 64], strides = [1, 1]} : vector<4x96xf32> to vector<4x64xf32>
    %715 = vector.extract_strided_slice %713 {offsets = [0, 0], sizes = [4, 64], strides = [1, 1]} : vector<4x96xf32> to vector<4x64xf32>
    %716 = arith.addf %714, %715 : vector<4x64xf32>
    %717 = arith.negf %716 : vector<4x64xf32>
    %718 = math.exp %717 : vector<4x64xf32>
    %cst_208 = arith.constant 1.000000e+00 : f32
    %719 = vector.broadcast %cst_208 : f32 to vector<4x64xf32>
    %720 = arith.addf %719, %718 : vector<4x64xf32>
    %721 = arith.divf %719, %720 : vector<4x64xf32>
    %722 = vector.extract_strided_slice %721 {offsets = [0, 0], sizes = [4, 32], strides = [1, 1]} : vector<4x64xf32> to vector<4x32xf32>
    %723 = vector.extract_strided_slice %721 {offsets = [0, 32], sizes = [4, 32], strides = [1, 1]} : vector<4x64xf32> to vector<4x32xf32>
    %724 = vector.extract_strided_slice %706 {offsets = [0, 64], sizes = [4, 32], strides = [1, 1]} : vector<4x96xf32> to vector<4x32xf32>
    %725 = vector.extract_strided_slice %713 {offsets = [0, 64], sizes = [4, 32], strides = [1, 1]} : vector<4x96xf32> to vector<4x32xf32>
    %726 = arith.mulf %722, %725 : vector<4x32xf32>
    %727 = arith.addf %724, %726 : vector<4x32xf32>
    %728 = math.tanh %727 : vector<4x32xf32>
    %cst_209 = arith.constant 1.000000e+00 : f32
    %729 = vector.broadcast %cst_209 : f32 to vector<4x32xf32>
    %730 = arith.subf %729, %723 : vector<4x32xf32>
    %731 = arith.mulf %730, %728 : vector<4x32xf32>
    %732 = arith.mulf %723, %687 : vector<4x32xf32>
    %733 = arith.addf %731, %732 : vector<4x32xf32>
    %734 = vector.extract_strided_slice %733 {offsets = [0, 0], sizes = [2, 32], strides = [1, 1]} : vector<4x32xf32> to vector<2x32xf32>
    %c0_210 = arith.constant 0 : index
    %735 = arith.index_cast %c15_i32_201 : i32 to index
    %c0_211 = arith.constant 0 : index
    %736 = vector.load %arg5[%c0_210, %735, %c0_211] : memref<2x16x32xf32, #tpu.memory_space<vmem>>, vector<2x1x32xf32>
    %737 = vector.shape_cast %736 : vector<2x1x32xf32> to vector<2x32xf32>
    %738 = vector.shape_cast %734 : vector<2x32xf32> to vector<2x1x32xf32>
    tpu.vector_store %arg5[%c0_210, %735, %c0_211], %738 {strides = array<i32>} : memref<2x16x32xf32, #tpu.memory_space<vmem>>, vector<2x1x32xf32>,
    %739 = vector.extract_strided_slice %733 {offsets = [2, 0], sizes = [2, 32], strides = [1, 1]} : vector<4x32xf32> to vector<2x32xf32>
    %c15_i32_212 = arith.constant 15 : i32
    %740 = arith.subi %c15_i32_212, %c15_i32_201 : i32
    %c0_213 = arith.constant 0 : index
    %741 = arith.index_cast %740 : i32 to index
    %c0_214 = arith.constant 0 : index
    %742 = vector.load %arg6[%c0_213, %741, %c0_214] : memref<2x16x32xf32, #tpu.memory_space<vmem>>, vector<2x1x32xf32>
    %743 = vector.shape_cast %742 : vector<2x1x32xf32> to vector<2x32xf32>
    %744 = vector.shape_cast %739 : vector<2x32xf32> to vector<2x1x32xf32>
    tpu.vector_store %arg6[%c0_213, %741, %c0_214], %744 {strides = array<i32>} : memref<2x16x32xf32, #tpu.memory_space<vmem>>, vector<2x1x32xf32>,
    %c16_i32 = arith.constant 16 : i32
    %c0_215 = arith.constant 0 : index
    %c0_216 = arith.constant 0 : index
    %745 = vector.load %arg7[%c0_215, %c0_216] : memref<4x32xf32, #tpu.memory_space<vmem>>, vector<4x32xf32>
    tpu.vector_store %arg7[%c0_215, %c0_216], %733 {strides = array<i32>} : memref<4x32xf32, #tpu.memory_space<vmem>>, vector<4x32xf32>,
    return
  }
  func.func @transform_0(%arg0: i32) -> (i32, i32, i32) {
    %c0_i32 = arith.constant 0 : i32
    %c0_i32_0 = arith.constant 0 : i32
    %c0_i32_1 = arith.constant 0 : i32
    return %c0_i32, %arg0, %c0_i32_0 : i32, i32, i32
  }
  func.func @transform_1(%arg0: i32) -> (i32, i32, i32) {
    %c0_i32 = arith.constant 0 : i32
    %0 = arith.subi %c0_i32, %arg0 : i32
    %c0_i32_0 = arith.constant 0 : i32
    %c0_i32_1 = arith.constant 0 : i32
    %c0_i32_2 = arith.constant 0 : i32
    return %c0_i32_0, %0, %c0_i32_1 : i32, i32, i32
  }
  func.func @transform_2(%arg0: i32) -> (i32, i32) {
    %c0_i32 = arith.constant 0 : i32
    %c0_i32_0 = arith.constant 0 : i32
    %c0_i32_1 = arith.constant 0 : i32
    return %c0_i32, %c0_i32_0 : i32, i32
  }
  func.func @transform_3(%arg0: i32) -> (i32, i32) {
    %c0_i32 = arith.constant 0 : i32
    %c0_i32_0 = arith.constant 0 : i32
    %c0_i32_1 = arith.constant 0 : i32
    return %c0_i32, %c0_i32_0 : i32, i32
  }
  func.func @transform_4(%arg0: i32) -> (i32, i32, i32) {
    %c0_i32 = arith.constant 0 : i32
    %c0_i32_0 = arith.constant 0 : i32
    %c0_i32_1 = arith.constant 0 : i32
    return %c0_i32, %arg0, %c0_i32_0 : i32, i32, i32
  }
  func.func @transform_5(%arg0: i32) -> (i32, i32, i32) {
    %c0_i32 = arith.constant 0 : i32
    %0 = arith.subi %c0_i32, %arg0 : i32
    %c0_i32_0 = arith.constant 0 : i32
    %c0_i32_1 = arith.constant 0 : i32
    %c0_i32_2 = arith.constant 0 : i32
    return %c0_i32_0, %0, %c0_i32_1 : i32, i32, i32
  }
}

</mosaic_0001>

<llo_original>
// kernel: znn_forward.5
$region0: #{znn_forward.5}
  #allocation0 [shape = 'u32[]', space=smem, size = 0x4, offset = 0x4, fixed_abs, tag = 'smem constant byte address 0x4 - core index']
  #allocation1 [shape = 'u32[144,128]{1,0:T(1,128)}', space=vmem, size = 0x12000, scoped, tag = 'internal scratch']
  #allocation2 [shape = 'f32[2,32]{1,0:T(2,128)}', space=vmem, size = 0x400, scoped, tag = 'scratch operand']
  %s0 = inlined_call_operand.vmem [shape: f32[2,16,32], index: 0, kind: input, shape index: {}]
  %s1 = inlined_call_operand.vmem [shape: f32[2,16,32], index: 1, kind: input, shape index: {}]
  %s2 = inlined_call_operand.vmem [shape: f32[2,16,1], index: 2, kind: input, shape index: {}]
  %s3 = inlined_call_operand.vmem [shape: f32[32,32], index: 3, kind: input, shape index: {}]
  %s4 = inlined_call_operand.vmem [shape: f32[32,32], index: 4, kind: input, shape index: {}]
  %s5 = inlined_call_operand.vmem [shape: f32[1,32], index: 5, kind: input, shape index: {}]
  %s6 = inlined_call_operand.vmem [shape: f32[32,32], index: 6, kind: input, shape index: {}]
  %s7 = inlined_call_operand.vmem [shape: f32[1,32], index: 7, kind: input, shape index: {}]
  %s8 = inlined_call_operand.vmem [shape: f32[32,2], index: 8, kind: input, shape index: {}]
  %s9 = inlined_call_operand.vmem [shape: f32[1,2], index: 9, kind: input, shape index: {}]
  %s10 = inlined_call_operand.hbm [shape: f32[2,2], index: 10, kind: output, shape index: {}]
  %s11 = sld [smem:[#allocation0]]
  $region58: #{znn_forward.5} parent=0
    _
  %s13 = ssub.s32 1, %s11
  %s14 = scalar_select 0, %s13, %s11
  $region1: #{znn_forward.5} parent=0
    #allocation3 [shape = 'u8[1024]{0}', space=vmem, size = 0x400, scoped, tag = 'output window, operand 0, single buffered']
    #allocation4 [shape = 's32[1]{0}', space=sflag, size = 0x4, scoped, tag = 'scoped memory for znn_forward.5']
    %15 = vsyncpa [#allocation4], 0
    // Predicated region
    $region2: #{znn_forward.5} parent=1 // pred_check
      _
    $region3: #{znn_forward.5} parent=1 // pred_check_branch
      %17 = sbr.rel (0) target = $region5
    $region4: #{znn_forward.5} parent=1 // pred_region
      _
    $region5: #{znn_forward.5} parent=1 // pred_fallthru
      _
    // Predicated region
    $region6: #{znn_forward.5} parent=1 // pred_check
      _
    $region7: #{znn_forward.5} parent=1 // pred_check_branch
      %19 = sbr.rel (0) target = $region9
    $region8: #{znn_forward.5} parent=1 // pred_region
      _
    $region9: #{znn_forward.5} parent=1 // pred_fallthru
      _
    // Predicated region
    $region10: #{znn_forward.5} parent=1 // pred_check
      _
    $region11: #{znn_forward.5} parent=1 // pred_check_branch
      %21 = sbr.rel (0) target = $region13
    $region12: #{znn_forward.5} parent=1 // pred_region
      _
    $region13: #{znn_forward.5} parent=1 // pred_fallthru
      _
    // Predicated region
    $region14: #{znn_forward.5} parent=1 // pred_check
      _
    $region15: #{znn_forward.5} parent=1 // pred_check_branch
      %23 = sbr.rel (0) target = $region17
    $region16: #{znn_forward.5} parent=1 // pred_region
      _
    $region17: #{znn_forward.5} parent=1 // pred_fallthru
      _
    // Predicated region
    $region18: #{znn_forward.5} parent=1 // pred_check
      _
    $region19: #{znn_forward.5} parent=1 // pred_check_branch
      %25 = sbr.rel (0) target = $region21
    $region20: #{znn_forward.5} parent=1 // pred_region
      _
    $region21: #{znn_forward.5} parent=1 // pred_fallthru
      _
    // Predicated region
    $region22: #{znn_forward.5} parent=1 // pred_check
      _
    $region23: #{znn_forward.5} parent=1 // pred_check_branch
      %27 = sbr.rel (0) target = $region25
    $region24: #{znn_forward.5} parent=1 // pred_region
      _
    $region25: #{znn_forward.5} parent=1 // pred_fallthru
      _
    // Predicated region
    $region26: #{znn_forward.5} parent=1 // pred_check
      _
    $region27: #{znn_forward.5} parent=1 // pred_check_branch
      %29 = sbr.rel (0) target = $region29
    $region28: #{znn_forward.5} parent=1 // pred_region
      _
    $region29: #{znn_forward.5} parent=1 // pred_fallthru
      _
    // Predicated region
    $region30: #{znn_forward.5} parent=1 // pred_check
      _
    $region31: #{znn_forward.5} parent=1 // pred_check_branch
      %31 = sbr.rel (0) target = $region33
    $region32: #{znn_forward.5} parent=1 // pred_region
      _
    $region33: #{znn_forward.5} parent=1 // pred_fallthru
      _
    // Predicated region
    $region34: #{znn_forward.5} parent=1 // pred_check
      _
    $region35: #{znn_forward.5} parent=1 // pred_check_branch
      %33 = sbr.rel (0) target = $region37
    $region36: #{znn_forward.5} parent=1 // pred_region
      _
    $region37: #{znn_forward.5} parent=1 // pred_fallthru
      _
    // Predicated region
    $region38: #{znn_forward.5} parent=1 // pred_check
      _
    $region39: #{znn_forward.5} parent=1 // pred_check_branch
      %35 = sbr.rel (0) target = $region41
    $region40: #{znn_forward.5} parent=1 // pred_region
      _
    $region41: #{znn_forward.5} parent=1 // pred_fallthru
      _
    %p36 = scmp.eq.s32.totalorder 0, 0
    // Predicated region
    $region42: #{znn_forward.5} parent=1 // pred_check
      %p37 = pneg %p36
    $region43: #{znn_forward.5} parent=1 // pred_check_branch
      %39 = sbr.rel (%p37) target = $region45
    $region44: #{znn_forward.5} parent=1 // pred_region
      %vm40 = vcmask 254976
      %41 = vst.msk [vmem:[#allocation2] sm:$0x3] %vm40, 0.0
    $region45: #{znn_forward.5} parent=1 // pred_fallthru
      _
    %v42 = vld [vmem:[%s0] sm:$0xff]
    %v43 = vld [vmem:[%s0 + $0x8] sm:$0xff]
    %v44 = vld [vmem:[%s0 + $0x10] sm:$0xff]
    %v45 = vld [vmem:[%s0 + $0x18] sm:$0xff]
    %v46 = vld [vmem:[%s1] sm:$0xff]
    %v47 = vld [vmem:[%s1 + $0x8] sm:$0xff]
    %v48 = vld [vmem:[%s1 + $0x10] sm:$0xff]
    %v49 = vld [vmem:[%s1 + $0x18] sm:$0xff]
    %v50 = vld [vmem:[%s3] sm:$0xff]
    %v51 = vld [vmem:[%s3 + $0x8] sm:$0xff]
    %v52 = vld [vmem:[%s3 + $0x10] sm:$0xff]
    %v53 = vld [vmem:[%s3 + $0x18] sm:$0xff]
    %v54 = vld [vmem:[%s4] sm:$0xff]
    %v55 = vld [vmem:[%s4 + $0x8] sm:$0xff]
    %v56 = vld [vmem:[%s4 + $0x10] sm:$0xff]
    %v57 = vld [vmem:[%s4 + $0x18] sm:$0xff]
    %vm58 = vcmask 261120
    %v60 = vsel %vm58, %v46, 0
    %v63 = vsel %vm58, %v47, 0
    %v66 = vsel %vm58, %v48, 0
    %v69 = vsel %vm58, %v49, 0
    %71 = vmatprep.subr.mxu0 0.0
    %72 = vmatpush1.msra.mxu0 %v54
    %73 = vmatprep.subr.mxu0 0.0
    %74 = vmatpush1.msra.mxu0 %v55
    %75 = vmatprep.subr.mxu0 0.0
    %76 = vmatpush1.msra.mxu0 %v56
    %77 = vmatprep.subr.mxu0 0.0
    %78 = vmatpush1.msra.mxu0 %v57
    %79 = vmatprep.subr.mxu0 0.0
    %80 = vmatpush1.msra.mxu0 0.0
    %81 = vmatprep.subr.mxu0 0.0
    %82 = vmatpush1.msra.mxu0 0.0
    %83 = vmatprep.subr.mxu0 0.0
    %84 = vmatpush1.msra.mxu0 0.0
    %85 = vmatprep.subr.mxu0 0.0
    %86 = vmatpush1.msra.mxu0 0.0
    %87 = vmatprep.subr.mxu0 0.0
    %88 = vmatpush1.msra.mxu0 0.0
    %89 = vmatprep.subr.mxu0 0.0
    %90 = vmatpush1.msra.mxu0 0.0
    %91 = vmatprep.subr.mxu0 0.0
    %92 = vmatpush1.msra.mxu0 0.0
    %93 = vmatprep.subr.mxu0 0.0
    %94 = vmatpush1.msra.mxu0 0.0
    %95 = vmatprep.subr.mxu0 0.0
    %96 = vmatpush1.msra.mxu0 0.0
    %97 = vmatprep.subr.mxu0 0.0
    %98 = vmatpush1.msra.mxu0 0.0
    %99 = vmatprep.subr.mxu0 0.0
    %100 = vmatpush1.msra.mxu0 0.0
    %101 = vmatprep.subr.mxu0 0.0
    %102 = vmatpush1.msra.mxu0 0.0
    %103 = vmatprep.subr.mxu0 0.0
    %104 = vmatpush1.msra.mxu0 0.0
    %105 = vmatprep.subr.mxu0 0.0
    %106 = vmatpush1.msra.mxu0 0.0
    %107 = vmatprep.subr.mxu0 0.0
    %108 = vmatpush1.msra.mxu0 0.0
    %109 = vmatprep.subr.mxu0 0.0
    %110 = vmatpush1.msra.mxu0 0.0
    %111 = vmatprep.subr.mxu0 0.0
    %112 = vmatpush1.msra.mxu0 0.0
    %113 = vmatprep.subr.mxu0 0.0
    %114 = vmatpush1.msra.mxu0 0.0
    %115 = vmatprep.subr.mxu0 0.0
    %116 = vmatpush1.msra.mxu0 0.0
    %117 = vmatprep.subr.mxu0 0.0
    %118 = vmatpush1.msra.mxu0 0.0
    %119 = vmatprep.subr.mxu0 0.0
    %120 = vmatpush1.msra.mxu0 0.0
    %121 = vmatprep.subr.mxu0 0.0
    %122 = vmatpush1.msra.mxu0 0.0
    %123 = vmatprep.subr.mxu0 0.0
    %124 = vmatpush1.msra.mxu0 0.0
    %125 = vmatprep.subr.mxu0 0.0
    %126 = vmatpush1.msra.mxu0 0.0
    %127 = vmatprep.subr.mxu0 0.0
    %128 = vmatpush1.msra.mxu0 0.0
    %129 = vmatprep.subr.mxu0 0.0
    %130 = vmatpush1.msra.mxu0 0.0
    %131 = vmatprep.subr.mxu0 0.0
    %132 = vmatpush1.msra.mxu0 0.0
    %133 = vmatprep.subr.mxu0 0.0
    %134 = vmatpush1.msra.mxu0 0.0
    %135 = vmatprep.mubr.f32.mxu0 0.0
    %136 = vmatmul.mubr.f32.gmra.mrb[0].mxu0 %v60
    %v137 = vpop.f32.mrb[0].mxu0
    %v138 = vadd.f32 0.0, %v137
    %v139 = vpop.f32.mrb[0].mxu0
    %140 = vmatprep.mubr.f32.mxu0 0.0
    %141 = vmatmul.mubr.f32.gmra.mrb[0].mxu0 %v63
    %v142 = vpop.f32.mrb[0].mxu0
    %v143 = vadd.f32 0.0, %v142
    %v144 = vpop.f32.mrb[0].mxu0
    %145 = vmatprep.mubr.f32.mxu0 0.0
    %146 = vmatmul.mubr.f32.gmra.mrb[0].mxu0 %v66
    %v147 = vpop.f32.mrb[0].mxu0
    %v148 = vadd.f32 0.0, %v147
    %v149 = vpop.f32.mrb[0].mxu0
    %150 = vmatprep.mubr.f32.mxu0 0.0
    %151 = vmatmul.mubr.f32.gmra.mrb[0].mxu0 %v69
    %v152 = vpop.f32.mrb[0].mxu0
    %v153 = vadd.f32 0.0, %v152
    %v154 = vpop.f32.mrb[0].mxu0
    %155 = vdwg.mxu0
    %v157 = vsel %vm58, %v42, 0
    %v160 = vsel %vm58, %v43, 0
    %v163 = vsel %vm58, %v44, 0
    %v166 = vsel %vm58, %v45, 0
    %168 = vmatprep.subr.mxu0 0.0
    %169 = vmatpush1.msra.mxu0 %v50
    %170 = vmatprep.subr.mxu0 0.0
    %171 = vmatpush1.msra.mxu0 %v51
    %172 = vmatprep.subr.mxu0 0.0
    %173 = vmatpush1.msra.mxu0 %v52
    %174 = vmatprep.subr.mxu0 0.0
    %175 = vmatpush1.msra.mxu0 %v53
    %176 = vmatprep.subr.mxu0 0.0
    %177 = vmatpush1.msra.mxu0 0.0
    %178 = vmatprep.subr.mxu0 0.0
    %179 = vmatpush1.msra.mxu0 0.0
    %180 = vmatprep.subr.mxu0 0.0
    %181 = vmatpush1.msra.mxu0 0.0
    %182 = vmatprep.subr.mxu0 0.0
    %183 = vmatpush1.msra.mxu0 0.0
    %184 = vmatprep.subr.mxu0 0.0
    %185 = vmatpush1.msra.mxu0 0.0
    %186 = vmatprep.subr.mxu0 0.0
    %187 = vmatpush1.msra.mxu0 0.0
    %188 = vmatprep.subr.mxu0 0.0
    %189 = vmatpush1.msra.mxu0 0.0
    %190 = vmatprep.subr.mxu0 0.0
    %191 = vmatpush1.msra.mxu0 0.0
    %192 = vmatprep.subr.mxu0 0.0
    %193 = vmatpush1.msra.mxu0 0.0
    %194 = vmatprep.subr.mxu0 0.0
    %195 = vmatpush1.msra.mxu0 0.0
    %196 = vmatprep.subr.mxu0 0.0
    %197 = vmatpush1.msra.mxu0 0.0
    %198 = vmatprep.subr.mxu0 0.0
    %199 = vmatpush1.msra.mxu0 0.0
    %200 = vmatprep.subr.mxu0 0.0
    %201 = vmatpush1.msra.mxu0 0.0
    %202 = vmatprep.subr.mxu0 0.0
    %203 = vmatpush1.msra.mxu0 0.0
    %204 = vmatprep.subr.mxu0 0.0
    %205 = vmatpush1.msra.mxu0 0.0
    %206 = vmatprep.subr.mxu0 0.0
    %207 = vmatpush1.msra.mxu0 0.0
    %208 = vmatprep.subr.mxu0 0.0
    %209 = vmatpush1.msra.mxu0 0.0
    %210 = vmatprep.subr.mxu0 0.0
    %211 = vmatpush1.msra.mxu0 0.0
    %212 = vmatprep.subr.mxu0 0.0
    %213 = vmatpush1.msra.mxu0 0.0
    %214 = vmatprep.subr.mxu0 0.0
    %215 = vmatpush1.msra.mxu0 0.0
    %216 = vmatprep.subr.mxu0 0.0
    %217 = vmatpush1.msra.mxu0 0.0
    %218 = vmatprep.subr.mxu0 0.0
    %219 = vmatpush1.msra.mxu0 0.0
    %220 = vmatprep.subr.mxu0 0.0
    %221 = vmatpush1.msra.mxu0 0.0
    %222 = vmatprep.subr.mxu0 0.0
    %223 = vmatpush1.msra.mxu0 0.0
    %224 = vmatprep.subr.mxu0 0.0
    %225 = vmatpush1.msra.mxu0 0.0
    %226 = vmatprep.subr.mxu0 0.0
    %227 = vmatpush1.msra.mxu0 0.0
    %228 = vmatprep.subr.mxu0 0.0
    %229 = vmatpush1.msra.mxu0 0.0
    %230 = vmatprep.subr.mxu0 0.0
    %231 = vmatpush1.msra.mxu0 0.0
    %232 = vmatprep.mubr.f32.mxu0 0.0
    %233 = vmatmul.mubr.f32.gmra.mrb[0].mxu0 %v157
    %v234 = vpop.f32.mrb[0].mxu0
    %v235 = vadd.f32 %v138, %v234
    %v236 = vpop.f32.mrb[0].mxu0
    %237 = vmatprep.mubr.f32.mxu0 0.0
    %238 = vmatmul.mubr.f32.gmra.mrb[0].mxu0 %v160
    %v239 = vpop.f32.mrb[0].mxu0
    %v240 = vadd.f32 %v143, %v239
    %v241 = vpop.f32.mrb[0].mxu0
    %242 = vmatprep.mubr.f32.mxu0 0.0
    %243 = vmatmul.mubr.f32.gmra.mrb[0].mxu0 %v163
    %v244 = vpop.f32.mrb[0].mxu0
    %v245 = vadd.f32 %v148, %v244
    %v246 = vpop.f32.mrb[0].mxu0
    %247 = vmatprep.mubr.f32.mxu0 0.0
    %248 = vmatmul.mubr.f32.gmra.mrb[0].mxu0 %v166
    %v249 = vpop.f32.mrb[0].mxu0
    %v250 = vadd.f32 %v153, %v249
    %v251 = vpop.f32.mrb[0].mxu0
    %252 = vdwg.mxu0
    %v253 = vld [vmem:[%s5] sm:$0x1]
    %v255 = vlaneseq
    %v256 = vshrl.u32 %v255, 7
    %v257 = vsub.s32 0, %v256
    %v258 = vrot.slane %v253, %v257
    %v260 = vadd.f32 %v235, %v258
    %v261 = vadd.f32 %v240, %v258
    %v262 = vadd.f32 %v245, %v258
    %v263 = vadd.f32 %v250, %v258
    %vm264 = vcmp.gt.f32.partialorder %v260, 0.0
    %vm265 = vcmp.gt.f32.partialorder %v261, 0.0
    %vm266 = vcmp.gt.f32.partialorder %v262, 0.0
    %vm267 = vcmp.gt.f32.partialorder %v263, 0.0
    %v268 = vmul.f32 %v260, 0.01
    %v269 = vmul.f32 %v261, 0.01
    %v270 = vmul.f32 %v262, 0.01
    %v271 = vmul.f32 %v263, 0.01
    %v272 = vsel %vm264, %v260, %v268
    %v273 = vsel %vm265, %v261, %v269
    %v274 = vsel %vm266, %v262, %v270
    %v275 = vsel %vm267, %v263, %v271
    %v276 = vld [vmem:[%s6] sm:$0xff]
    %v277 = vld [vmem:[%s6 + $0x8] sm:$0xff]
    %v278 = vld [vmem:[%s6 + $0x10] sm:$0xff]
    %v279 = vld [vmem:[%s6 + $0x18] sm:$0xff]
    %v280 = vld [vmem:[%s7] sm:$0x1]
    %v282 = vlaneseq
    %v283 = vshrl.u32 %v282, 7
    %v284 = vsub.s32 0, %v283
    %v285 = vrot.slane %v280, %v284
    %v288 = vsel %vm58, %v272, 0
    %v291 = vsel %vm58, %v273, 0
    %v294 = vsel %vm58, %v274, 0
    %v297 = vsel %vm58, %v275, 0
    %299 = vmatprep.subr.mxu0 0.0
    %300 = vmatpush1.msra.mxu0 %v276
    %301 = vmatprep.subr.mxu0 0.0
    %302 = vmatpush1.msra.mxu0 %v277
    %303 = vmatprep.subr.mxu0 0.0
    %304 = vmatpush1.msra.mxu0 %v278
    %305 = vmatprep.subr.mxu0 0.0
    %306 = vmatpush1.msra.mxu0 %v279
    %307 = vmatprep.subr.mxu0 0.0
    %308 = vmatpush1.msra.mxu0 0.0
    %309 = vmatprep.subr.mxu0 0.0
    %310 = vmatpush1.msra.mxu0 0.0
    %311 = vmatprep.subr.mxu0 0.0
    %312 = vmatpush1.msra.mxu0 0.0
    %313 = vmatprep.subr.mxu0 0.0
    %314 = vmatpush1.msra.mxu0 0.0
    %315 = vmatprep.subr.mxu0 0.0
    %316 = vmatpush1.msra.mxu0 0.0
    %317 = vmatprep.subr.mxu0 0.0
    %318 = vmatpush1.msra.mxu0 0.0
    %319 = vmatprep.subr.mxu0 0.0
    %320 = vmatpush1.msra.mxu0 0.0
    %321 = vmatprep.subr.mxu0 0.0
    %322 = vmatpush1.msra.mxu0 0.0
    %323 = vmatprep.subr.mxu0 0.0
    %324 = vmatpush1.msra.mxu0 0.0
    %325 = vmatprep.subr.mxu0 0.0
    %326 = vmatpush1.msra.mxu0 0.0
    %327 = vmatprep.subr.mxu0 0.0
    %328 = vmatpush1.msra.mxu0 0.0
    %329 = vmatprep.subr.mxu0 0.0
    %330 = vmatpush1.msra.mxu0 0.0
    %331 = vmatprep.subr.mxu0 0.0
    %332 = vmatpush1.msra.mxu0 0.0
    %333 = vmatprep.subr.mxu0 0.0
    %334 = vmatpush1.msra.mxu0 0.0
    %335 = vmatprep.subr.mxu0 0.0
    %336 = vmatpush1.msra.mxu0 0.0
    %337 = vmatprep.subr.mxu0 0.0
    %338 = vmatpush1.msra.mxu0 0.0
    %339 = vmatprep.subr.mxu0 0.0
    %340 = vmatpush1.msra.mxu0 0.0
    %341 = vmatprep.subr.mxu0 0.0
    %342 = vmatpush1.msra.mxu0 0.0
    %343 = vmatprep.subr.mxu0 0.0
    %344 = vmatpush1.msra.mxu0 0.0
    %345 = vmatprep.subr.mxu0 0.0
    %346 = vmatpush1.msra.mxu0 0.0
    %347 = vmatprep.subr.mxu0 0.0
    %348 = vmatpush1.msra.mxu0 0.0
    %349 = vmatprep.subr.mxu0 0.0
    %350 = vmatpush1.msra.mxu0 0.0
    %351 = vmatprep.subr.mxu0 0.0
    %352 = vmatpush1.msra.mxu0 0.0
    %353 = vmatprep.subr.mxu0 0.0
    %354 = vmatpush1.msra.mxu0 0.0
    %355 = vmatprep.subr.mxu0 0.0
    %356 = vmatpush1.msra.mxu0 0.0
    %357 = vmatprep.subr.mxu0 0.0
    %358 = vmatpush1.msra.mxu0 0.0
    %359 = vmatprep.subr.mxu0 0.0
    %360 = vmatpush1.msra.mxu0 0.0
    %361 = vmatprep.subr.mxu0 0.0
    %362 = vmatpush1.msra.mxu0 0.0
    %363 = vmatprep.mubr.f32.mxu0 0.0
    %364 = vmatmul.mubr.f32.gmra.mrb[0].mxu0 %v288
    %v365 = vpop.f32.mrb[0].mxu0
    %v366 = vadd.f32 %v285, %v365
    %v367 = vpop.f32.mrb[0].mxu0
    %368 = vmatprep.mubr.f32.mxu0 0.0
    %369 = vmatmul.mubr.f32.gmra.mrb[0].mxu0 %v291
    %v370 = vpop.f32.mrb[0].mxu0
    %v371 = vadd.f32 %v285, %v370
    %v372 = vpop.f32.mrb[0].mxu0
    %373 = vmatprep.mubr.f32.mxu0 0.0
    %374 = vmatmul.mubr.f32.gmra.mrb[0].mxu0 %v294
    %v375 = vpop.f32.mrb[0].mxu0
    %v376 = vadd.f32 %v285, %v375
    %v377 = vpop.f32.mrb[0].mxu0
    %378 = vmatprep.mubr.f32.mxu0 0.0
    %379 = vmatmul.mubr.f32.gmra.mrb[0].mxu0 %v297
    %v380 = vpop.f32.mrb[0].mxu0
    %v381 = vadd.f32 %v285, %v380
    %v382 = vpop.f32.mrb[0].mxu0
    %383 = vdwg.mxu0
    %v384 = vld [vmem:[%s2] sm:$0xff]
    %v385 = vld [vmem:[%s2 + $0x8] sm:$0xff]
    %v386 = vld [vmem:[%s2 + $0x10] sm:$0xff]
    %v387 = vld [vmem:[%s2 + $0x18] sm:$0xff]
    %389 = vset.pattern.permute.xlu0 0
    %390 = vperm.xlu0 %389, %v384
    %v391 = vpop.permute.xlu0 %390
    %394 = vset.pattern.permute.xlu0 0
    %395 = vperm.xlu0 %394, %v385
    %v396 = vpop.permute.xlu0 %395
    %399 = vset.pattern.permute.xlu0 0
    %400 = vperm.xlu0 %399, %v386
    %v401 = vpop.permute.xlu0 %400
    %404 = vset.pattern.permute.xlu0 0
    %405 = vperm.xlu0 %404, %v387
    %v406 = vpop.permute.xlu0 %405
    %v408 = vmul.f32 %v366, %v391
    %v409 = vmul.f32 %v371, %v396
    %v410 = vmul.f32 %v376, %v401
    %v411 = vmul.f32 %v381, %v406
    %v412 = vld [vmem:[#allocation2] sm:$0x3]
    %v413 = vsel %vm58, %v408, 0.0
    %v414 = vsel %vm58, %v409, 0.0
    %v415 = vadd.f32 %v413, %v414
    %v416 = vrot.slane %v415, 4
    %v417 = vadd.f32 %v415, %v416
    %v418 = vrot.slane %v417, 2
    %v419 = vadd.f32 %v417, %v418
    %v420 = vrot.slane %v419, 1
    %v421 = vadd.f32 %v419, %v420
    %v422 = vsel %vm58, %v410, 0.0
    %v423 = vsel %vm58, %v411, 0.0
    %v424 = vadd.f32 %v422, %v423
    %v425 = vrot.slane %v424, 4
    %v426 = vadd.f32 %v424, %v425
    %v427 = vrot.slane %v426, 2
    %v428 = vadd.f32 %v426, %v427
    %v429 = vrot.slane %v428, 1
    %v430 = vadd.f32 %v428, %v429
    %vm433 = vcmask 1041409
    %v434 = vsel %vm433, %v430, %v421
    %v436 = vadd.f32 %v412, %v434
    %vm437 = vcmask 254976
    %438 = vst.msk [vmem:[#allocation2] sm:$0x3] %vm437, %v436
    // Predicated region
    $region46: #{znn_forward.5} parent=1 // pred_check
      %p439 = pneg %p36
    $region47: #{znn_forward.5} parent=1 // pred_check_branch
      %441 = sbr.rel (%p439) target = $region49
    $region48: #{znn_forward.5} parent=1 // pred_region
      %v442 = vld [vmem:[#allocation2] sm:$0x3]
      %v443 = vld [vmem:[%s8] sm:$0xff]
      %v444 = vld [vmem:[%s8 + $0x8] sm:$0xff]
      %v445 = vld [vmem:[%s8 + $0x10] sm:$0xff]
      %v446 = vld [vmem:[%s8 + $0x18] sm:$0xff]
      %v447 = vld [vmem:[%s9] sm:$0x1]
      %v449 = vlaneseq
      %v450 = vshrl.u32 %v449, 7
      %v451 = vsub.s32 0, %v450
      %v452 = vrot.slane %v447, %v451
      %v455 = vsel %vm58, %v442, 0
      %457 = vmatprep.subr.mxu0 0.0
      %458 = vmatpush1.msra.mxu0 %v443
      %459 = vmatprep.subr.mxu0 0.0
      %460 = vmatpush1.msra.mxu0 %v444
      %461 = vmatprep.subr.mxu0 0.0
      %462 = vmatpush1.msra.mxu0 %v445
      %463 = vmatprep.subr.mxu0 0.0
      %464 = vmatpush1.msra.mxu0 %v446
      %465 = vmatprep.subr.mxu0 0.0
      %466 = vmatpush1.msra.mxu0 0.0
      %467 = vmatprep.subr.mxu0 0.0
      %468 = vmatpush1.msra.mxu0 0.0
      %469 = vmatprep.subr.mxu0 0.0
      %470 = vmatpush1.msra.mxu0 0.0
      %471 = vmatprep.subr.mxu0 0.0
      %472 = vmatpush1.msra.mxu0 0.0
      %473 = vmatprep.subr.mxu0 0.0
      %474 = vmatpush1.msra.mxu0 0.0
      %475 = vmatprep.subr.mxu0 0.0
      %476 = vmatpush1.msra.mxu0 0.0
      %477 = vmatprep.subr.mxu0 0.0
      %478 = vmatpush1.msra.mxu0 0.0
      %479 = vmatprep.subr.mxu0 0.0
      %480 = vmatpush1.msra.mxu0 0.0
      %481 = vmatprep.subr.mxu0 0.0
      %482 = vmatpush1.msra.mxu0 0.0
      %483 = vmatprep.subr.mxu0 0.0
      %484 = vmatpush1.msra.mxu0 0.0
      %485 = vmatprep.subr.mxu0 0.0
      %486 = vmatpush1.msra.mxu0 0.0
      %487 = vmatprep.subr.mxu0 0.0
      %488 = vmatpush1.msra.mxu0 0.0
      %489 = vmatprep.subr.mxu0 0.0
      %490 = vmatpush1.msra.mxu0 0.0
      %491 = vmatprep.subr.mxu0 0.0
      %492 = vmatpush1.msra.mxu0 0.0
      %493 = vmatprep.subr.mxu0 0.0
      %494 = vmatpush1.msra.mxu0 0.0
      %495 = vmatprep.subr.mxu0 0.0
      %496 = vmatpush1.msra.mxu0 0.0
      %497 = vmatprep.subr.mxu0 0.0
      %498 = vmatpush1.msra.mxu0 0.0
      %499 = vmatprep.subr.mxu0 0.0
      %500 = vmatpush1.msra.mxu0 0.0
      %501 = vmatprep.subr.mxu0 0.0
      %502 = vmatpush1.msra.mxu0 0.0
      %503 = vmatprep.subr.mxu0 0.0
      %504 = vmatpush1.msra.mxu0 0.0
      %505 = vmatprep.subr.mxu0 0.0
      %506 = vmatpush1.msra.mxu0 0.0
      %507 = vmatprep.subr.mxu0 0.0
      %508 = vmatpush1.msra.mxu0 0.0
      %509 = vmatprep.subr.mxu0 0.0
      %510 = vmatpush1.msra.mxu0 0.0
      %511 = vmatprep.subr.mxu0 0.0
      %512 = vmatpush1.msra.mxu0 0.0
      %513 = vmatprep.subr.mxu0 0.0
      %514 = vmatpush1.msra.mxu0 0.0
      %515 = vmatprep.subr.mxu0 0.0
      %516 = vmatpush1.msra.mxu0 0.0
      %517 = vmatprep.subr.mxu0 0.0
      %518 = vmatpush1.msra.mxu0 0.0
      %519 = vmatprep.subr.mxu0 0.0
      %520 = vmatpush1.msra.mxu0 0.0
      %521 = vmatprep.mubr.f32.mxu0 0.0
      %522 = vmatmul.mubr.f32.gmra.mrb[0].mxu0 %v455
      %v523 = vpop.f32.mrb[0].mxu0
      %v524 = vadd.f32 %v452, %v523
      %v525 = vpop.f32.mrb[0].mxu0
      %526 = vdwg.mxu0
      %vm527 = vcmask 9216
      %528 = vst.msk [vmem:[#allocation3] sm:$0x3] %vm527, %v524
    $region49: #{znn_forward.5} parent=1 // pred_fallthru
      _
    // Predicated region
    $region50: #{znn_forward.5} parent=1 // pred_check
      _
    $region51: #{znn_forward.5} parent=1 // pred_check_branch
      %530 = sbr.rel (0) target = $region53
    $region52: #{znn_forward.5} parent=1 // pred_region
      %s532 = ssub.s32 32, 32
      %533 = vsyncadd [#allocation4], %s532
      %s535 = sshll.u32 [#allocation3], 4
      %s536 = int_to_ptr.vmem [resolvable:$true] %s535
      %538 = dma.vmem_to_hbm [thread:$0]  %s536, 32, %s10, [#allocation4]
    $region53: #{znn_forward.5} parent=1 // pred_fallthru
      _
    // Predicated region
    $region54: #{znn_forward.5} parent=1 // pred_check
      _
    $region55: #{znn_forward.5} parent=1 // pred_check_branch
      %540 = sbr.rel (0) target = $region57
    $region56: #{znn_forward.5} parent=1 // pred_region
      %541 = dma.done [#allocation4], 32
    $region57: #{znn_forward.5} parent=1 // pred_fallthru
      _
    %542 = vsyncpa [#allocation4], 1

// kernel: znn_forward.3
$region0: #{znn_forward.3}
  #allocation0 [shape = 'u32[]', space=smem, size = 0x4, offset = 0x4, fixed_abs, tag = 'smem constant byte address 0x4 - core index']
  #allocation1 [shape = 'u32[144,128]{1,0:T(1,128)}', space=vmem, size = 0x12000, scoped, tag = 'internal scratch']
  %s0 = inlined_call_operand.vmem [shape: f32[2,36,4], index: 0, kind: input, shape index: {}]
  %s1 = inlined_call_operand.vmem [shape: f32[60,32], index: 1, kind: input, shape index: {}]
  %s2 = inlined_call_operand.vmem [shape: f32[1,32], index: 2, kind: input, shape index: {}]
  %s3 = inlined_call_operand.vmem [shape: f32[224,32], index: 3, kind: input, shape index: {}]
  %s4 = inlined_call_operand.vmem [shape: f32[1,32], index: 4, kind: input, shape index: {}]
  %s5 = inlined_call_operand.vmem [shape: f32[32,96], index: 5, kind: input, shape index: {}]
  %s6 = inlined_call_operand.vmem [shape: f32[1,96], index: 6, kind: input, shape index: {}]
  %s7 = inlined_call_operand.vmem [shape: f32[32,96], index: 7, kind: input, shape index: {}]
  %s8 = inlined_call_operand.vmem [shape: f32[1,96], index: 8, kind: input, shape index: {}]
  %s9 = inlined_call_operand.vmem [shape: f32[2,16,96], index: 9, kind: output, shape index: {0}]
  %s10 = inlined_call_operand.vmem [shape: f32[2,16,96], index: 10, kind: output, shape index: {1}]
  %11 = xla_tuple %s9, %s10
  %s12 = sld [smem:[#allocation0]]
  $region54: #{znn_forward.3} parent=0
    _
  %s14 = ssub.s32 1, %s12
  %s15 = scalar_select 0, %s14, %s12
  // Predicated region
  $region2: #{znn_forward.3} parent=0 // pred_check
    _
  $region3: #{znn_forward.3} parent=0 // pred_check_branch
    %17 = sbr.rel (0) target = $region5
  $region4: #{znn_forward.3} parent=0 // pred_region
    _
  $region5: #{znn_forward.3} parent=0 // pred_fallthru
    _
  // Predicated region
  $region6: #{znn_forward.3} parent=0 // pred_check
    _
  $region7: #{znn_forward.3} parent=0 // pred_check_branch
    %19 = sbr.rel (0) target = $region9
  $region8: #{znn_forward.3} parent=0 // pred_region
    _
  $region9: #{znn_forward.3} parent=0 // pred_fallthru
    _
  // Predicated region
  $region10: #{znn_forward.3} parent=0 // pred_check
    _
  $region11: #{znn_forward.3} parent=0 // pred_check_branch
    %21 = sbr.rel (0) target = $region13
  $region12: #{znn_forward.3} parent=0 // pred_region
    _
  $region13: #{znn_forward.3} parent=0 // pred_fallthru
    _
  // Predicated region
  $region14: #{znn_forward.3} parent=0 // pred_check
    _
  $region15: #{znn_forward.3} parent=0 // pred_check_branch
    %23 = sbr.rel (0) target = $region17
  $region16: #{znn_forward.3} parent=0 // pred_region
    _
  $region17: #{znn_forward.3} parent=0 // pred_fallthru
    _
  // Predicated region
  $region18: #{znn_forward.3} parent=0 // pred_check
    _
  $region19: #{znn_forward.3} parent=0 // pred_check_branch
    %25 = sbr.rel (0) target = $region21
  $region20: #{znn_forward.3} parent=0 // pred_region
    _
  $region21: #{znn_forward.3} parent=0 // pred_fallthru
    _
  // Predicated region
  $region22: #{znn_forward.3} parent=0 // pred_check
    _
  $region23: #{znn_forward.3} parent=0 // pred_check_branch
    %27 = sbr.rel (0) target = $region25
  $region24: #{znn_forward.3} parent=0 // pred_region
    _
  $region25: #{znn_forward.3} parent=0 // pred_fallthru
    _
  // Predicated region
  $region26: #{znn_forward.3} parent=0 // pred_check
    _
  $region27: #{znn_forward.3} parent=0 // pred_check_branch
    %29 = sbr.rel (0) target = $region29
  $region28: #{znn_forward.3} parent=0 // pred_region
    _
  $region29: #{znn_forward.3} parent=0 // pred_fallthru
    _
  // Predicated region
  $region30: #{znn_forward.3} parent=0 // pred_check
    _
  $region31: #{znn_forward.3} parent=0 // pred_check_branch
    %31 = sbr.rel (0) target = $region33
  $region32: #{znn_forward.3} parent=0 // pred_region
    _
  $region33: #{znn_forward.3} parent=0 // pred_fallthru
    _
  // Predicated region
  $region34: #{znn_forward.3} parent=0 // pred_check
    _
  $region35: #{znn_forward.3} parent=0 // pred_check_branch
    %33 = sbr.rel (0) target = $region37
  $region36: #{znn_forward.3} parent=0 // pred_region
    _
  $region37: #{znn_forward.3} parent=0 // pred_fallthru
    _
  %s34 = smul.u32 0, 16
  %s35 = scalar_lea.vmem %s0, %s34
  %v36 = vld [vmem:[%s35] sm:$0xff]
  %v37 = vld [vmem:[%s35 + $0x8] sm:$0xff]
  %v38 = vld [vmem:[%s35 + $0x10] sm:$0xff]
  %v39 = vld [vmem:[%s35 + $0x18] sm:$0xff]
  %v40 = vld [vmem:[%s35 + $0x20] sm:$0xf]
  %v41 = vld [vmem:[%s35 + $0x28] sm:$0xff]
  %v42 = vld [vmem:[%s35 + $0x30] sm:$0xff]
  %v43 = vld [vmem:[%s35 + $0x38] sm:$0xff]
  %v44 = vld [vmem:[%s35 + $0x40] sm:$0xff]
  %v45 = vld [vmem:[%s35 + $0x48] sm:$0xf]
  %vm52 = vcmask 1046528
  %v53 = vrot.slane %v36, 1
  %v54 = vrot.slane %v37, 1
  %v55 = vsel %vm52, %v53, %v54
  %v56 = vrot.slane %v38, 1
  %v57 = vsel %vm52, %v54, %v56
  %v58 = vrot.slane %v41, 1
  %v59 = vrot.slane %v42, 1
  %v60 = vsel %vm52, %v58, %v59
  %v61 = vrot.slane %v43, 1
  %v62 = vsel %vm52, %v59, %v61
  %63 = vrot.lane.b32.xlu0 %v55, 4
  %v64 = vpop.permute.xlu0 %63
  %65 = vrot.lane.b32.xlu0 %v57, 4
  %v66 = vpop.permute.xlu0 %65
  %67 = vrot.lane.b32.xlu0 %v56, 4
  %v68 = vpop.permute.xlu0 %67
  %69 = vrot.lane.b32.xlu0 %v60, 4
  %v70 = vpop.permute.xlu0 %69
  %71 = vrot.lane.b32.xlu0 %v62, 4
  %v72 = vpop.permute.xlu0 %71
  %73 = vrot.lane.b32.xlu0 %v61, 4
  %v74 = vpop.permute.xlu0 %73
  %vm81 = vcmask 1045504
  %v82 = vrot.slane %v36, 2
  %v83 = vrot.slane %v37, 2
  %v84 = vsel %vm81, %v82, %v83
  %v85 = vrot.slane %v38, 2
  %v86 = vsel %vm81, %v83, %v85
  %v87 = vrot.slane %v41, 2
  %v88 = vrot.slane %v42, 2
  %v89 = vsel %vm81, %v87, %v88
  %v90 = vrot.slane %v43, 2
  %v91 = vsel %vm81, %v88, %v90
  %92 = vrot.lane.b32.xlu0 %v84, 8
  %v93 = vpop.permute.xlu0 %92
  %94 = vrot.lane.b32.xlu0 %v86, 8
  %v95 = vpop.permute.xlu0 %94
  %96 = vrot.lane.b32.xlu0 %v85, 8
  %v97 = vpop.permute.xlu0 %96
  %98 = vrot.lane.b32.xlu0 %v89, 8
  %v99 = vpop.permute.xlu0 %98
  %100 = vrot.lane.b32.xlu0 %v91, 8
  %v101 = vpop.permute.xlu0 %100
  %102 = vrot.lane.b32.xlu0 %v90, 8
  %v103 = vpop.permute.xlu0 %102
  %vm112 = vcmask 1044480
  %v113 = vrot.slane %v36, 3
  %v114 = vrot.slane %v37, 3
  %v115 = vsel %vm112, %v113, %v114
  %v116 = vrot.slane %v38, 3
  %v117 = vsel %vm112, %v114, %v116
  %v118 = vrot.slane %v39, 3
  %v119 = vsel %vm112, %v116, %v118
  %v120 = vrot.slane %v41, 3
  %v121 = vrot.slane %v42, 3
  %v122 = vsel %vm112, %v120, %v121
  %v123 = vrot.slane %v43, 3
  %v124 = vsel %vm112, %v121, %v123
  %v125 = vrot.slane %v44, 3
  %v126 = vsel %vm112, %v123, %v125
  %127 = vrot.lane.b32.xlu0 %v115, 12
  %v128 = vpop.permute.xlu0 %127
  %129 = vrot.lane.b32.xlu0 %v117, 12
  %v130 = vpop.permute.xlu0 %129
  %131 = vrot.lane.b32.xlu0 %v119, 12
  %v132 = vpop.permute.xlu0 %131
  %133 = vrot.lane.b32.xlu0 %v122, 12
  %v134 = vpop.permute.xlu0 %133
  %135 = vrot.lane.b32.xlu0 %v124, 12
  %v136 = vpop.permute.xlu0 %135
  %137 = vrot.lane.b32.xlu0 %v126, 12
  %v138 = vpop.permute.xlu0 %137
  %vm145 = vcmask 1043456
  %v146 = vrot.slane %v36, 4
  %v147 = vrot.slane %v37, 4
  %v148 = vsel %vm145, %v146, %v147
  %v149 = vrot.slane %v38, 4
  %v150 = vsel %vm145, %v147, %v149
  %v151 = vrot.slane %v39, 4
  %v152 = vsel %vm145, %v149, %v151
  %v153 = vrot.slane %v41, 4
  %v154 = vrot.slane %v42, 4
  %v155 = vsel %vm145, %v153, %v154
  %v156 = vrot.slane %v43, 4
  %v157 = vsel %vm145, %v154, %v156
  %v158 = vrot.slane %v44, 4
  %v159 = vsel %vm145, %v156, %v158
  %160 = vrot.lane.b32.xlu0 %v148, 16
  %v161 = vpop.permute.xlu0 %160
  %162 = vrot.lane.b32.xlu0 %v150, 16
  %v163 = vpop.permute.xlu0 %162
  %164 = vrot.lane.b32.xlu0 %v152, 16
  %v165 = vpop.permute.xlu0 %164
  %166 = vrot.lane.b32.xlu0 %v155, 16
  %v167 = vpop.permute.xlu0 %166
  %168 = vrot.lane.b32.xlu0 %v157, 16
  %v169 = vpop.permute.xlu0 %168
  %170 = vrot.lane.b32.xlu0 %v159, 16
  %v171 = vpop.permute.xlu0 %170
  %vm178 = vcmask 1042432
  %v179 = vrot.slane %v36, 5
  %v180 = vrot.slane %v37, 5
  %v181 = vsel %vm178, %v179, %v180
  %v182 = vrot.slane %v38, 5
  %v183 = vsel %vm178, %v180, %v182
  %v184 = vrot.slane %v39, 5
  %v185 = vsel %vm178, %v182, %v184
  %v186 = vrot.slane %v41, 5
  %v187 = vrot.slane %v42, 5
  %v188 = vsel %vm178, %v186, %v187
  %v189 = vrot.slane %v43, 5
  %v190 = vsel %vm178, %v187, %v189
  %v191 = vrot.slane %v44, 5
  %v192 = vsel %vm178, %v189, %v191
  %193 = vrot.lane.b32.xlu0 %v181, 20
  %v194 = vpop.permute.xlu0 %193
  %195 = vrot.lane.b32.xlu0 %v183, 20
  %v196 = vpop.permute.xlu0 %195
  %197 = vrot.lane.b32.xlu0 %v185, 20
  %v198 = vpop.permute.xlu0 %197
  %199 = vrot.lane.b32.xlu0 %v188, 20
  %v200 = vpop.permute.xlu0 %199
  %201 = vrot.lane.b32.xlu0 %v190, 20
  %v202 = vpop.permute.xlu0 %201
  %203 = vrot.lane.b32.xlu0 %v192, 20
  %v204 = vpop.permute.xlu0 %203
  %vm211 = vcmask 1041408
  %v212 = vrot.slane %v36, 6
  %v213 = vrot.slane %v37, 6
  %v214 = vsel %vm211, %v212, %v213
  %v215 = vrot.slane %v38, 6
  %v216 = vsel %vm211, %v213, %v215
  %v217 = vrot.slane %v39, 6
  %v218 = vsel %vm211, %v215, %v217
  %v219 = vrot.slane %v41, 6
  %v220 = vrot.slane %v42, 6
  %v221 = vsel %vm211, %v219, %v220
  %v222 = vrot.slane %v43, 6
  %v223 = vsel %vm211, %v220, %v222
  %v224 = vrot.slane %v44, 6
  %v225 = vsel %vm211, %v222, %v224
  %226 = vrot.lane.b32.xlu0 %v214, 24
  %v227 = vpop.permute.xlu0 %226
  %228 = vrot.lane.b32.xlu0 %v216, 24
  %v229 = vpop.permute.xlu0 %228
  %230 = vrot.lane.b32.xlu0 %v218, 24
  %v231 = vpop.permute.xlu0 %230
  %232 = vrot.lane.b32.xlu0 %v221, 24
  %v233 = vpop.permute.xlu0 %232
  %234 = vrot.lane.b32.xlu0 %v223, 24
  %v235 = vpop.permute.xlu0 %234
  %236 = vrot.lane.b32.xlu0 %v225, 24
  %v237 = vpop.permute.xlu0 %236
  %vm244 = vcmask 1040384
  %v245 = vrot.slane %v36, 7
  %v246 = vrot.slane %v37, 7
  %v247 = vsel %vm244, %v245, %v246
  %v248 = vrot.slane %v38, 7
  %v249 = vsel %vm244, %v246, %v248
  %v250 = vrot.slane %v39, 7
  %v251 = vsel %vm244, %v248, %v250
  %v252 = vrot.slane %v41, 7
  %v253 = vrot.slane %v42, 7
  %v254 = vsel %vm244, %v252, %v253
  %v255 = vrot.slane %v43, 7
  %v256 = vsel %vm244, %v253, %v255
  %v257 = vrot.slane %v44, 7
  %v258 = vsel %vm244, %v255, %v257
  %259 = vrot.lane.b32.xlu0 %v247, 28
  %v260 = vpop.permute.xlu0 %259
  %261 = vrot.lane.b32.xlu0 %v249, 28
  %v262 = vpop.permute.xlu0 %261
  %263 = vrot.lane.b32.xlu0 %v251, 28
  %v264 = vpop.permute.xlu0 %263
  %265 = vrot.lane.b32.xlu0 %v254, 28
  %v266 = vpop.permute.xlu0 %265
  %267 = vrot.lane.b32.xlu0 %v256, 28
  %v268 = vpop.permute.xlu0 %267
  %269 = vrot.lane.b32.xlu0 %v258, 28
  %v270 = vpop.permute.xlu0 %269
  %277 = vrot.lane.b32.xlu0 %v37, 32
  %v278 = vpop.permute.xlu0 %277
  %279 = vrot.lane.b32.xlu0 %v38, 32
  %v280 = vpop.permute.xlu0 %279
  %281 = vrot.lane.b32.xlu0 %v39, 32
  %v282 = vpop.permute.xlu0 %281
  %283 = vrot.lane.b32.xlu0 %v42, 32
  %v284 = vpop.permute.xlu0 %283
  %285 = vrot.lane.b32.xlu0 %v43, 32
  %v286 = vpop.permute.xlu0 %285
  %287 = vrot.lane.b32.xlu0 %v44, 32
  %v288 = vpop.permute.xlu0 %287
  %v295 = vrot.slane %v39, 1
  %v296 = vsel %vm52, %v56, %v295
  %v297 = vrot.slane %v44, 1
  %v298 = vsel %vm52, %v61, %v297
  %299 = vrot.lane.b32.xlu0 %v57, 36
  %v300 = vpop.permute.xlu0 %299
  %301 = vrot.lane.b32.xlu0 %v296, 36
  %v302 = vpop.permute.xlu0 %301
  %303 = vrot.lane.b32.xlu0 %v295, 36
  %v304 = vpop.permute.xlu0 %303
  %305 = vrot.lane.b32.xlu0 %v62, 36
  %v306 = vpop.permute.xlu0 %305
  %307 = vrot.lane.b32.xlu0 %v298, 36
  %v308 = vpop.permute.xlu0 %307
  %309 = vrot.lane.b32.xlu0 %v297, 36
  %v310 = vpop.permute.xlu0 %309
  %v317 = vrot.slane %v39, 2
  %v318 = vsel %vm81, %v85, %v317
  %v319 = vrot.slane %v44, 2
  %v320 = vsel %vm81, %v90, %v319
  %321 = vrot.lane.b32.xlu0 %v86, 40
  %v322 = vpop.permute.xlu0 %321
  %323 = vrot.lane.b32.xlu0 %v318, 40
  %v324 = vpop.permute.xlu0 %323
  %325 = vrot.lane.b32.xlu0 %v317, 40
  %v326 = vpop.permute.xlu0 %325
  %327 = vrot.lane.b32.xlu0 %v91, 40
  %v328 = vpop.permute.xlu0 %327
  %329 = vrot.lane.b32.xlu0 %v320, 40
  %v330 = vpop.permute.xlu0 %329
  %331 = vrot.lane.b32.xlu0 %v319, 40
  %v332 = vpop.permute.xlu0 %331
  %v341 = vrot.slane %v40, 3
  %v342 = vsel %vm112, %v118, %v341
  %v343 = vrot.slane %v45, 3
  %v344 = vsel %vm112, %v125, %v343
  %345 = vrot.lane.b32.xlu0 %v117, 44
  %v346 = vpop.permute.xlu0 %345
  %347 = vrot.lane.b32.xlu0 %v119, 44
  %v348 = vpop.permute.xlu0 %347
  %349 = vrot.lane.b32.xlu0 %v342, 44
  %v350 = vpop.permute.xlu0 %349
  %351 = vrot.lane.b32.xlu0 %v124, 44
  %v352 = vpop.permute.xlu0 %351
  %353 = vrot.lane.b32.xlu0 %v126, 44
  %v354 = vpop.permute.xlu0 %353
  %355 = vrot.lane.b32.xlu0 %v344, 44
  %v356 = vpop.permute.xlu0 %355
  %v363 = vrot.slane %v40, 4
  %v364 = vsel %vm145, %v151, %v363
  %v365 = vrot.slane %v45, 4
  %v366 = vsel %vm145, %v158, %v365
  %367 = vrot.lane.b32.xlu0 %v150, 48
  %v368 = vpop.permute.xlu0 %367
  %369 = vrot.lane.b32.xlu0 %v152, 48
  %v370 = vpop.permute.xlu0 %369
  %371 = vrot.lane.b32.xlu0 %v364, 48
  %v372 = vpop.permute.xlu0 %371
  %373 = vrot.lane.b32.xlu0 %v157, 48
  %v374 = vpop.permute.xlu0 %373
  %375 = vrot.lane.b32.xlu0 %v159, 48
  %v376 = vpop.permute.xlu0 %375
  %377 = vrot.lane.b32.xlu0 %v366, 48
  %v378 = vpop.permute.xlu0 %377
  %v385 = vrot.slane %v40, 5
  %v386 = vsel %vm178, %v184, %v385
  %v387 = vrot.slane %v45, 5
  %v388 = vsel %vm178, %v191, %v387
  %389 = vrot.lane.b32.xlu0 %v183, 52
  %v390 = vpop.permute.xlu0 %389
  %391 = vrot.lane.b32.xlu0 %v185, 52
  %v392 = vpop.permute.xlu0 %391
  %393 = vrot.lane.b32.xlu0 %v386, 52
  %v394 = vpop.permute.xlu0 %393
  %395 = vrot.lane.b32.xlu0 %v190, 52
  %v396 = vpop.permute.xlu0 %395
  %397 = vrot.lane.b32.xlu0 %v192, 52
  %v398 = vpop.permute.xlu0 %397
  %399 = vrot.lane.b32.xlu0 %v388, 52
  %v400 = vpop.permute.xlu0 %399
  %v407 = vrot.slane %v40, 6
  %v408 = vsel %vm211, %v217, %v407
  %v409 = vrot.slane %v45, 6
  %v410 = vsel %vm211, %v224, %v409
  %411 = vrot.lane.b32.xlu0 %v216, 56
  %v412 = vpop.permute.xlu0 %411
  %413 = vrot.lane.b32.xlu0 %v218, 56
  %v414 = vpop.permute.xlu0 %413
  %415 = vrot.lane.b32.xlu0 %v408, 56
  %v416 = vpop.permute.xlu0 %415
  %417 = vrot.lane.b32.xlu0 %v223, 56
  %v418 = vpop.permute.xlu0 %417
  %419 = vrot.lane.b32.xlu0 %v225, 56
  %v420 = vpop.permute.xlu0 %419
  %421 = vrot.lane.b32.xlu0 %v410, 56
  %v422 = vpop.permute.xlu0 %421
  %vm429 = vcmask 31744
  %v430 = vsel %vm429, %v36, %v64
  %v431 = vsel %vm429, %v37, %v66
  %v432 = vsel %vm429, %v38, %v68
  %v433 = vsel %vm429, %v41, %v70
  %v434 = vsel %vm429, %v42, %v72
  %v435 = vsel %vm429, %v43, %v74
  %vm436 = vcmask 64512
  %v437 = vsel %vm436, %v430, %v93
  %v438 = vsel %vm436, %v431, %v95
  %v439 = vsel %vm436, %v432, %v97
  %v440 = vsel %vm436, %v433, %v99
  %v441 = vsel %vm436, %v434, %v101
  %v442 = vsel %vm436, %v435, %v103
  %vm443 = vcmask 97280
  %v444 = vsel %vm443, %v437, %v128
  %v445 = vsel %vm443, %v438, %v130
  %v446 = vsel %vm443, %v439, %v132
  %v447 = vsel %vm443, %v440, %v134
  %v448 = vsel %vm443, %v441, %v136
  %v449 = vsel %vm443, %v442, %v138
  %vm450 = vcmask 130048
  %v451 = vsel %vm450, %v444, %v161
  %v452 = vsel %vm450, %v445, %v163
  %v453 = vsel %vm450, %v446, %v165
  %v454 = vsel %vm450, %v447, %v167
  %v455 = vsel %vm450, %v448, %v169
  %v456 = vsel %vm450, %v449, %v171
  %vm457 = vcmask 162816
  %v458 = vsel %vm457, %v451, %v194
  %v459 = vsel %vm457, %v452, %v196
  %v460 = vsel %vm457, %v453, %v198
  %v461 = vsel %vm457, %v454, %v200
  %v462 = vsel %vm457, %v455, %v202
  %v463 = vsel %vm457, %v456, %v204
  %vm464 = vcmask 195584
  %v465 = vsel %vm464, %v458, %v227
  %v466 = vsel %vm464, %v459, %v229
  %v467 = vsel %vm464, %v460, %v231
  %v468 = vsel %vm464, %v461, %v233
  %v469 = vsel %vm464, %v462, %v235
  %v470 = vsel %vm464, %v463, %v237
  %vm471 = vcmask 228352
  %v472 = vsel %vm471, %v465, %v260
  %v473 = vsel %vm471, %v466, %v262
  %v474 = vsel %vm471, %v467, %v264
  %v475 = vsel %vm471, %v468, %v266
  %v476 = vsel %vm471, %v469, %v268
  %v477 = vsel %vm471, %v470, %v270
  %vm478 = vcmask 261120
  %v479 = vsel %vm478, %v472, %v278
  %v480 = vsel %vm478, %v473, %v280
  %v481 = vsel %vm478, %v474, %v282
  %v482 = vsel %vm478, %v475, %v284
  %v483 = vsel %vm478, %v476, %v286
  %v484 = vsel %vm478, %v477, %v288
  %vm485 = vcmask 293888
  %v486 = vsel %vm485, %v479, %v300
  %v487 = vsel %vm485, %v480, %v302
  %v488 = vsel %vm485, %v481, %v304
  %v489 = vsel %vm485, %v482, %v306
  %v490 = vsel %vm485, %v483, %v308
  %v491 = vsel %vm485, %v484, %v310
  %vm492 = vcmask 326656
  %v493 = vsel %vm492, %v486, %v322
  %v494 = vsel %vm492, %v487, %v324
  %v495 = vsel %vm492, %v488, %v326
  %v496 = vsel %vm492, %v489, %v328
  %v497 = vsel %vm492, %v490, %v330
  %v498 = vsel %vm492, %v491, %v332
  %vm499 = vcmask 359424
  %v500 = vsel %vm499, %v493, %v346
  %v501 = vsel %vm499, %v494, %v348
  %v502 = vsel %vm499, %v495, %v350
  %v503 = vsel %vm499, %v496, %v352
  %v504 = vsel %vm499, %v497, %v354
  %v505 = vsel %vm499, %v498, %v356
  %vm506 = vcmask 392192
  %v507 = vsel %vm506, %v500, %v368
  %v508 = vsel %vm506, %v501, %v370
  %v509 = vsel %vm506, %v502, %v372
  %v510 = vsel %vm506, %v503, %v374
  %v511 = vsel %vm506, %v504, %v376
  %v512 = vsel %vm506, %v505, %v378
  %vm513 = vcmask 424960
  %v514 = vsel %vm513, %v507, %v390
  %v515 = vsel %vm513, %v508, %v392
  %v516 = vsel %vm513, %v509, %v394
  %v517 = vsel %vm513, %v510, %v396
  %v518 = vsel %vm513, %v511, %v398
  %v519 = vsel %vm513, %v512, %v400
  %vm520 = vcmask 457728
  %v521 = vsel %vm520, %v514, %v412
  %v522 = vsel %vm520, %v515, %v414
  %v523 = vsel %vm520, %v516, %v416
  %v524 = vsel %vm520, %v517, %v418
  %v525 = vsel %vm520, %v518, %v420
  %v526 = vsel %vm520, %v519, %v422
  %v533 = vcombine.high %v521, %v521
  %v535 = vunpack.c.l.s4 1983009808
  %v536 = vunpack.c.0.s8 %v535
  %v537 = vlaneseq
  %v538 = vshrl.u32 %v537, 7
  %v539 = vsub.s32 %v536, %v538
  %v540 = vrot.slane %v521, %v539
  %v542 = vunpack.c.l.s4 1983009808
  %v543 = vunpack.c.0.s8 %v542
  %v544 = vlaneseq
  %v545 = vshrl.u32 %v544, 7
  %v546 = vsub.s32 %v543, %v545
  %v547 = vrot.slane %v533, %v546
  %v548 = vcombine.high %v540, %v540
  %v549 = vcombine.high %v547, %v547
  %v550 = vcombine.high %v522, %v522
  %v552 = vunpack.c.l.s4 1983009808
  %v553 = vunpack.c.0.s8 %v552
  %v554 = vlaneseq
  %v555 = vshrl.u32 %v554, 7
  %v556 = vsub.s32 %v553, %v555
  %v557 = vrot.slane %v522, %v556
  %v559 = vunpack.c.l.s4 1983009808
  %v560 = vunpack.c.0.s8 %v559
  %v561 = vlaneseq
  %v562 = vshrl.u32 %v561, 7
  %v563 = vsub.s32 %v560, %v562
  %v564 = vrot.slane %v550, %v563
  %v565 = vcombine.high %v557, %v557
  %v566 = vcombine.high %v564, %v564
  %v567 = vcombine.high %v523, %v523
  %v569 = vunpack.c.l.s4 1983009808
  %v570 = vunpack.c.0.s8 %v569
  %v571 = vlaneseq
  %v572 = vshrl.u32 %v571, 7
  %v573 = vsub.s32 %v570, %v572
  %v574 = vrot.slane %v523, %v573
  %v576 = vunpack.c.l.s4 1983009808
  %v577 = vunpack.c.0.s8 %v576
  %v578 = vlaneseq
  %v579 = vshrl.u32 %v578, 7
  %v580 = vsub.s32 %v577, %v579
  %v581 = vrot.slane %v567, %v580
  %v582 = vcombine.high %v574, %v574
  %v583 = vcombine.high %v524, %v524
  %v585 = vunpack.c.l.s4 1983009808
  %v586 = vunpack.c.0.s8 %v585
  %v587 = vlaneseq
  %v588 = vshrl.u32 %v587, 7
  %v589 = vsub.s32 %v586, %v588
  %v590 = vrot.slane %v524, %v589
  %v592 = vunpack.c.l.s4 1983009808
  %v593 = vunpack.c.0.s8 %v592
  %v594 = vlaneseq
  %v595 = vshrl.u32 %v594, 7
  %v596 = vsub.s32 %v593, %v595
  %v597 = vrot.slane %v583, %v596
  %v598 = vcombine.high %v590, %v590
  %v599 = vcombine.high %v597, %v597
  %v600 = vcombine.high %v525, %v525
  %v602 = vunpack.c.l.s4 1983009808
  %v603 = vunpack.c.0.s8 %v602
  %v604 = vlaneseq
  %v605 = vshrl.u32 %v604, 7
  %v606 = vsub.s32 %v603, %v605
  %v607 = vrot.slane %v525, %v606
  %v609 = vunpack.c.l.s4 1983009808
  %v610 = vunpack.c.0.s8 %v609
  %v611 = vlaneseq
  %v612 = vshrl.u32 %v611, 7
  %v613 = vsub.s32 %v610, %v612
  %v614 = vrot.slane %v600, %v613
  %v615 = vcombine.high %v607, %v607
  %v616 = vcombine.high %v614, %v614
  %v617 = vcombine.high %v526, %v526
  %v619 = vunpack.c.l.s4 1983009808
  %v620 = vunpack.c.0.s8 %v619
  %v621 = vlaneseq
  %v622 = vshrl.u32 %v621, 7
  %v623 = vsub.s32 %v620, %v622
  %v624 = vrot.slane %v526, %v623
  %v626 = vunpack.c.l.s4 1983009808
  %v627 = vunpack.c.0.s8 %v626
  %v628 = vlaneseq
  %v629 = vshrl.u32 %v628, 7
  %v630 = vsub.s32 %v627, %v629
  %v631 = vrot.slane %v617, %v630
  %v632 = vcombine.high %v624, %v624
  %v633 = vld [vmem:[%s1] sm:$0xff]
  %v634 = vld [vmem:[%s1 + $0x8] sm:$0xff]
  %v635 = vld [vmem:[%s1 + $0x10] sm:$0xff]
  %v636 = vld [vmem:[%s1 + $0x18] sm:$0xff]
  %v637 = vld [vmem:[%s1 + $0x20] sm:$0xff]
  %v638 = vld [vmem:[%s1 + $0x28] sm:$0xff]
  %v639 = vld [vmem:[%s1 + $0x30] sm:$0xff]
  %v640 = vld [vmem:[%s1 + $0x38] sm:$0xf]
  %v641 = vld [vmem:[%s2] sm:$0x1]
  %v643 = vlaneseq
  %v644 = vshrl.u32 %v643, 7
  %v645 = vsub.s32 0, %v644
  %v646 = vrot.slane %v641, %v645
  %v648 = vcombine.low %v540, %v548
  %v649 = vcombine.low %v547, %v549
  %v651 = vunpack.c.l.s4 1983009808
  %v652 = vunpack.c.0.s8 %v651
  %v653 = vlaneseq
  %v654 = vshrl.u32 %v653, 7
  %v655 = vsub.s32 %v652, %v654
  %v656 = vrot.slane %v648, %v655
  %v658 = vunpack.c.l.s4 1983009808
  %v659 = vunpack.c.0.s8 %v658
  %v660 = vlaneseq
  %v661 = vshrl.u32 %v660, 7
  %v662 = vsub.s32 %v659, %v661
  %v663 = vrot.slane %v649, %v662
  %v664 = vcombine.low %v656, %v663
  %v665 = vcombine.low %v557, %v565
  %v666 = vcombine.low %v564, %v566
  %v668 = vunpack.c.l.s4 1983009808
  %v669 = vunpack.c.0.s8 %v668
  %v670 = vlaneseq
  %v671 = vshrl.u32 %v670, 7
  %v672 = vsub.s32 %v669, %v671
  %v673 = vrot.slane %v665, %v672
  %v675 = vunpack.c.l.s4 1983009808
  %v676 = vunpack.c.0.s8 %v675
  %v677 = vlaneseq
  %v678 = vshrl.u32 %v677, 7
  %v679 = vsub.s32 %v676, %v678
  %v680 = vrot.slane %v666, %v679
  %v681 = vcombine.low %v673, %v680
  %v682 = vcombine.low %v574, %v582
  %v683 = vcombine.low %v581, %v590
  %v685 = vunpack.c.l.s4 1983009808
  %v686 = vunpack.c.0.s8 %v685
  %v687 = vlaneseq
  %v688 = vshrl.u32 %v687, 7
  %v689 = vsub.s32 %v686, %v688
  %v690 = vrot.slane %v682, %v689
  %v692 = vunpack.c.l.s4 1983009808
  %v693 = vunpack.c.0.s8 %v692
  %v694 = vlaneseq
  %v695 = vshrl.u32 %v694, 7
  %v696 = vsub.s32 %v693, %v695
  %v697 = vrot.slane %v683, %v696
  %v698 = vcombine.low %v690, %v697
  %v699 = vcombine.low %v598, %v597
  %v700 = vcombine.low %v599, %v607
  %v702 = vunpack.c.l.s4 1983009808
  %v703 = vunpack.c.0.s8 %v702
  %v704 = vlaneseq
  %v705 = vshrl.u32 %v704, 7
  %v706 = vsub.s32 %v703, %v705
  %v707 = vrot.slane %v699, %v706
  %v709 = vunpack.c.l.s4 1983009808
  %v710 = vunpack.c.0.s8 %v709
  %v711 = vlaneseq
  %v712 = vshrl.u32 %v711, 7
  %v713 = vsub.s32 %v710, %v712
  %v714 = vrot.slane %v700, %v713
  %v715 = vcombine.low %v707, %v714
  %v716 = vcombine.low %v615, %v614
  %v717 = vcombine.low %v616, %v624
  %v719 = vunpack.c.l.s4 1983009808
  %v720 = vunpack.c.0.s8 %v719
  %v721 = vlaneseq
  %v722 = vshrl.u32 %v721, 7
  %v723 = vsub.s32 %v720, %v722
  %v724 = vrot.slane %v716, %v723
  %v726 = vunpack.c.l.s4 1983009808
  %v727 = vunpack.c.0.s8 %v726
  %v728 = vlaneseq
  %v729 = vshrl.u32 %v728, 7
  %v730 = vsub.s32 %v727, %v729
  %v731 = vrot.slane %v717, %v730
  %v732 = vcombine.low %v724, %v731
  %v733 = vcombine.low %v632, %v631
  %v735 = vunpack.c.l.s4 1983009808
  %v736 = vunpack.c.0.s8 %v735
  %v737 = vlaneseq
  %v738 = vshrl.u32 %v737, 7
  %v739 = vsub.s32 %v736, %v738
  %v740 = vrot.slane %v733, %v739
  %vm741 = vcmask 490496
  %v742 = vsel %vm741, %v664, 0
  %v744 = vsel %vm741, %v681, 0
  %v746 = vsel %vm741, %v698, 0
  %v748 = vsel %vm741, %v715, 0
  %v750 = vsel %vm741, %v732, 0
  %v752 = vsel %vm741, %v740, 0
  %v755 = vsel %vm145, %v640, 0
  %757 = vmatprep.subr.mxu0 0.0
  %758 = vmatpush1.msra.mxu0 %v633
  %759 = vmatprep.subr.mxu0 0.0
  %760 = vmatpush1.msra.mxu0 %v634
  %761 = vmatprep.subr.mxu0 0.0
  %762 = vmatpush1.msra.mxu0 %v635
  %763 = vmatprep.subr.mxu0 0.0
  %764 = vmatpush1.msra.mxu0 %v636
  %765 = vmatprep.subr.mxu0 0.0
  %766 = vmatpush1.msra.mxu0 %v637
  %767 = vmatprep.subr.mxu0 0.0
  %768 = vmatpush1.msra.mxu0 %v638
  %769 = vmatprep.subr.mxu0 0.0
  %770 = vmatpush1.msra.mxu0 %v639
  %771 = vmatprep.subr.mxu0 0.0
  %772 = vmatpush1.msra.mxu0 %v755
  %773 = vmatprep.subr.mxu0 0.0
  %774 = vmatpush1.msra.mxu0 0.0
  %775 = vmatprep.subr.mxu0 0.0
  %776 = vmatpush1.msra.mxu0 0.0
  %777 = vmatprep.subr.mxu0 0.0
  %778 = vmatpush1.msra.mxu0 0.0
  %779 = vmatprep.subr.mxu0 0.0
  %780 = vmatpush1.msra.mxu0 0.0
  %781 = vmatprep.subr.mxu0 0.0
  %782 = vmatpush1.msra.mxu0 0.0
  %783 = vmatprep.subr.mxu0 0.0
  %784 = vmatpush1.msra.mxu0 0.0
  %785 = vmatprep.subr.mxu0 0.0
  %786 = vmatpush1.msra.mxu0 0.0
  %787 = vmatprep.subr.mxu0 0.0
  %788 = vmatpush1.msra.mxu0 0.0
  %789 = vmatprep.subr.mxu0 0.0
  %790 = vmatpush1.msra.mxu0 0.0
  %791 = vmatprep.subr.mxu0 0.0
  %792 = vmatpush1.msra.mxu0 0.0
  %793 = vmatprep.subr.mxu0 0.0
  %794 = vmatpush1.msra.mxu0 0.0
  %795 = vmatprep.subr.mxu0 0.0
  %796 = vmatpush1.msra.mxu0 0.0
  %797 = vmatprep.subr.mxu0 0.0
  %798 = vmatpush1.msra.mxu0 0.0
  %799 = vmatprep.subr.mxu0 0.0
  %800 = vmatpush1.msra.mxu0 0.0
  %801 = vmatprep.subr.mxu0 0.0
  %802 = vmatpush1.msra.mxu0 0.0
  %803 = vmatprep.subr.mxu0 0.0
  %804 = vmatpush1.msra.mxu0 0.0
  %805 = vmatprep.subr.mxu0 0.0
  %806 = vmatpush1.msra.mxu0 0.0
  %807 = vmatprep.subr.mxu0 0.0
  %808 = vmatpush1.msra.mxu0 0.0
  %809 = vmatprep.subr.mxu0 0.0
  %810 = vmatpush1.msra.mxu0 0.0
  %811 = vmatprep.subr.mxu0 0.0
  %812 = vmatpush1.msra.mxu0 0.0
  %813 = vmatprep.subr.mxu0 0.0
  %814 = vmatpush1.msra.mxu0 0.0
  %815 = vmatprep.subr.mxu0 0.0
  %816 = vmatpush1.msra.mxu0 0.0
  %817 = vmatprep.subr.mxu0 0.0
  %818 = vmatpush1.msra.mxu0 0.0
  %819 = vmatprep.subr.mxu0 0.0
  %820 = vmatpush1.msra.mxu0 0.0
  %821 = vmatprep.mubr.f32.mxu0 0.0
  %822 = vmatmul.mubr.f32.gmra.mrb[0].mxu0 %v742
  %v823 = vpop.f32.mrb[0].mxu0
  %v824 = vadd.f32 %v646, %v823
  %v825 = vpop.f32.mrb[0].mxu0
  %826 = vmatprep.mubr.f32.mxu0 0.0
  %827 = vmatmul.mubr.f32.gmra.mrb[0].mxu0 %v744
  %v828 = vpop.f32.mrb[0].mxu0
  %v829 = vadd.f32 %v646, %v828
  %v830 = vpop.f32.mrb[0].mxu0
  %831 = vmatprep.mubr.f32.mxu0 0.0
  %832 = vmatmul.mubr.f32.gmra.mrb[0].mxu0 %v746
  %v833 = vpop.f32.mrb[0].mxu0
  %v834 = vadd.f32 %v646, %v833
  %v835 = vpop.f32.mrb[0].mxu0
  %836 = vmatprep.mubr.f32.mxu0 0.0
  %837 = vmatmul.mubr.f32.gmra.mrb[0].mxu0 %v748
  %v838 = vpop.f32.mrb[0].mxu0
  %v839 = vadd.f32 %v646, %v838
  %v840 = vpop.f32.mrb[0].mxu0
  %841 = vmatprep.mubr.f32.mxu0 0.0
  %842 = vmatmul.mubr.f32.gmra.mrb[0].mxu0 %v750
  %v843 = vpop.f32.mrb[0].mxu0
  %v844 = vadd.f32 %v646, %v843
  %v845 = vpop.f32.mrb[0].mxu0
  %846 = vmatprep.mubr.f32.mxu0 0.0
  %847 = vmatmul.mubr.f32.gmra.mrb[0].mxu0 %v752
  %v848 = vpop.f32.mrb[0].mxu0
  %v849 = vadd.f32 %v646, %v848
  %v850 = vpop.f32.mrb[0].mxu0
  %851 = vdwg.mxu0
  %vm852 = vcmp.gt.f32.partialorder %v824, 0.0
  %vm853 = vcmp.gt.f32.partialorder %v829, 0.0
  %vm854 = vcmp.gt.f32.partialorder %v834, 0.0
  %vm855 = vcmp.gt.f32.partialorder %v839, 0.0
  %vm856 = vcmp.gt.f32.partialorder %v844, 0.0
  %vm857 = vcmp.gt.f32.partialorder %v849, 0.0
  %v858 = vmul.f32 %v824, 0.01
  %v859 = vmul.f32 %v829, 0.01
  %v860 = vmul.f32 %v834, 0.01
  %v861 = vmul.f32 %v839, 0.01
  %v862 = vmul.f32 %v844, 0.01
  %v863 = vmul.f32 %v849, 0.01
  %v864 = vsel %vm852, %v824, %v858
  %v865 = vsel %vm853, %v829, %v859
  %v866 = vsel %vm854, %v834, %v860
  %v867 = vsel %vm855, %v839, %v861
  %v868 = vsel %vm856, %v844, %v862
  %v869 = vsel %vm857, %v849, %v863
  %v876 = vcombine.high %v864, %v864
  %v878 = vunpack.c.l.s4 1983009808
  %v879 = vunpack.c.0.s8 %v878
  %v880 = vlaneseq
  %v881 = vshrl.u32 %v880, 7
  %v882 = vsub.s32 %v879, %v881
  %v883 = vrot.slane %v864, %v882
  %v885 = vunpack.c.l.s4 1983009808
  %v886 = vunpack.c.0.s8 %v885
  %v887 = vlaneseq
  %v888 = vshrl.u32 %v887, 7
  %v889 = vsub.s32 %v886, %v888
  %v890 = vrot.slane %v876, %v889
  %v891 = vcombine.high %v883, %v883
  %v892 = vcombine.high %v890, %v890
  %v893 = vcombine.high %v865, %v865
  %v895 = vunpack.c.l.s4 1983009808
  %v896 = vunpack.c.0.s8 %v895
  %v897 = vlaneseq
  %v898 = vshrl.u32 %v897, 7
  %v899 = vsub.s32 %v896, %v898
  %v900 = vrot.slane %v865, %v899
  %v902 = vunpack.c.l.s4 1983009808
  %v903 = vunpack.c.0.s8 %v902
  %v904 = vlaneseq
  %v905 = vshrl.u32 %v904, 7
  %v906 = vsub.s32 %v903, %v905
  %v907 = vrot.slane %v893, %v906
  %v908 = vcombine.high %v900, %v900
  %v909 = vcombine.high %v907, %v907
  %v910 = vcombine.high %v866, %v866
  %v912 = vunpack.c.l.s4 1983009808
  %v913 = vunpack.c.0.s8 %v912
  %v914 = vlaneseq
  %v915 = vshrl.u32 %v914, 7
  %v916 = vsub.s32 %v913, %v915
  %v917 = vrot.slane %v866, %v916
  %v919 = vunpack.c.l.s4 1983009808
  %v920 = vunpack.c.0.s8 %v919
  %v921 = vlaneseq
  %v922 = vshrl.u32 %v921, 7
  %v923 = vsub.s32 %v920, %v922
  %v924 = vrot.slane %v910, %v923
  %v925 = vcombine.high %v917, %v917
  %v926 = vcombine.high %v924, %v924
  %v927 = vcombine.high %v867, %v867
  %v929 = vunpack.c.l.s4 1983009808
  %v930 = vunpack.c.0.s8 %v929
  %v931 = vlaneseq
  %v932 = vshrl.u32 %v931, 7
  %v933 = vsub.s32 %v930, %v932
  %v934 = vrot.slane %v867, %v933
  %v936 = vunpack.c.l.s4 1983009808
  %v937 = vunpack.c.0.s8 %v936
  %v938 = vlaneseq
  %v939 = vshrl.u32 %v938, 7
  %v940 = vsub.s32 %v937, %v939
  %v941 = vrot.slane %v927, %v940
  %v942 = vcombine.high %v934, %v934
  %v943 = vcombine.high %v941, %v941
  %v944 = vcombine.high %v868, %v868
  %v946 = vunpack.c.l.s4 1983009808
  %v947 = vunpack.c.0.s8 %v946
  %v948 = vlaneseq
  %v949 = vshrl.u32 %v948, 7
  %v950 = vsub.s32 %v947, %v949
  %v951 = vrot.slane %v868, %v950
  %v953 = vunpack.c.l.s4 1983009808
  %v954 = vunpack.c.0.s8 %v953
  %v955 = vlaneseq
  %v956 = vshrl.u32 %v955, 7
  %v957 = vsub.s32 %v954, %v956
  %v958 = vrot.slane %v944, %v957
  %v959 = vcombine.high %v951, %v951
  %v960 = vcombine.high %v958, %v958
  %v962 = vunpack.c.l.s4 1983009808
  %v963 = vunpack.c.0.s8 %v962
  %v964 = vlaneseq
  %v965 = vshrl.u32 %v964, 7
  %v966 = vsub.s32 %v963, %v965
  %v967 = vrot.slane %v869, %v966
  %v968 = vcombine.high %v967, %v967
  %s969 = ssub.s32 %s34, 3
  %v970 = vlaneseq
  %v971 = vshrl.u32 %v970, 7
  %v972 = vadd.s32 %v971, 8
  %v973 = vadd.s32 %v971, 16
  %v974 = vstv %s969
  %v975 = vadd.s32 %v974, %v971
  %v976 = vadd.s32 %v974, %v972
  %v977 = vadd.s32 %v974, %v973
  %vm978 = vcmp.ge.s32.totalorder %v975, 0
  %vm979 = vcmp.ge.s32.totalorder %v976, 0
  %vm980 = vcmp.ge.s32.totalorder %v977, 0
  %vm981 = vcmp.lt.s32.totalorder %v975, 16
  %vm982 = vcmp.lt.s32.totalorder %v976, 16
  %vm983 = vcmp.lt.s32.totalorder %v977, 16
  %vm984 = vmand %vm978, %vm981
  %vm985 = vmand %vm979, %vm982
  %vm986 = vmand %vm980, %vm983
  %v987 = vsel %vm984, 1, 0
  %v988 = vsel %vm985, 1, 0
  %v989 = vsel %vm986, 1, 0
  %vm990 = vcmp.eq.s32.totalorder %v987, 1
  %vm991 = vcmp.eq.s32.totalorder %v988, 1
  %vm992 = vcmp.eq.s32.totalorder %v989, 1
  %v993 = vcombine.low %v883, %v891
  %v994 = vcombine.low %v890, %v892
  %v996 = vunpack.c.l.s4 1983009808
  %v997 = vunpack.c.0.s8 %v996
  %v998 = vlaneseq
  %v999 = vshrl.u32 %v998, 7
  %v1000 = vsub.s32 %v997, %v999
  %v1001 = vrot.slane %v993, %v1000
  %v1003 = vunpack.c.l.s4 1983009808
  %v1004 = vunpack.c.0.s8 %v1003
  %v1005 = vlaneseq
  %v1006 = vshrl.u32 %v1005, 7
  %v1007 = vsub.s32 %v1004, %v1006
  %v1008 = vrot.slane %v994, %v1007
  %v1009 = vcombine.low %v1001, %v1008
  %v1010 = vcombine.low %v900, %v908
  %v1011 = vcombine.low %v907, %v909
  %v1013 = vunpack.c.l.s4 1983009808
  %v1014 = vunpack.c.0.s8 %v1013
  %v1015 = vlaneseq
  %v1016 = vshrl.u32 %v1015, 7
  %v1017 = vsub.s32 %v1014, %v1016
  %v1018 = vrot.slane %v1010, %v1017
  %v1020 = vunpack.c.l.s4 1983009808
  %v1021 = vunpack.c.0.s8 %v1020
  %v1022 = vlaneseq
  %v1023 = vshrl.u32 %v1022, 7
  %v1024 = vsub.s32 %v1021, %v1023
  %v1025 = vrot.slane %v1011, %v1024
  %v1026 = vcombine.low %v1018, %v1025
  %v1027 = vcombine.low %v917, %v925
  %v1029 = vunpack.c.l.s4 1983009808
  %v1030 = vunpack.c.0.s8 %v1029
  %v1031 = vlaneseq
  %v1032 = vshrl.u32 %v1031, 7
  %v1033 = vsub.s32 %v1030, %v1032
  %v1034 = vrot.slane %v1027, %v1033
  %v1036 = vunpack.c.l.s4 1983009808
  %v1037 = vunpack.c.0.s8 %v1036
  %v1038 = vlaneseq
  %v1039 = vshrl.u32 %v1038, 7
  %v1040 = vsub.s32 %v1037, %v1039
  %v1041 = vrot.slane %v924, %v1040
  %v1042 = vcombine.low %v1034, %v1041
  %v1043 = vcombine.low %v926, %v934
  %v1044 = vcombine.low %v942, %v941
  %v1046 = vunpack.c.l.s4 1983009808
  %v1047 = vunpack.c.0.s8 %v1046
  %v1048 = vlaneseq
  %v1049 = vshrl.u32 %v1048, 7
  %v1050 = vsub.s32 %v1047, %v1049
  %v1051 = vrot.slane %v1043, %v1050
  %v1053 = vunpack.c.l.s4 1983009808
  %v1054 = vunpack.c.0.s8 %v1053
  %v1055 = vlaneseq
  %v1056 = vshrl.u32 %v1055, 7
  %v1057 = vsub.s32 %v1054, %v1056
  %v1058 = vrot.slane %v1044, %v1057
  %v1059 = vcombine.low %v1051, %v1058
  %v1060 = vcombine.low %v943, %v951
  %v1061 = vcombine.low %v959, %v958
  %v1063 = vunpack.c.l.s4 1983009808
  %v1064 = vunpack.c.0.s8 %v1063
  %v1065 = vlaneseq
  %v1066 = vshrl.u32 %v1065, 7
  %v1067 = vsub.s32 %v1064, %v1066
  %v1068 = vrot.slane %v1060, %v1067
  %v1070 = vunpack.c.l.s4 1983009808
  %v1071 = vunpack.c.0.s8 %v1070
  %v1072 = vlaneseq
  %v1073 = vshrl.u32 %v1072, 7
  %v1074 = vsub.s32 %v1071, %v1073
  %v1075 = vrot.slane %v1061, %v1074
  %v1076 = vcombine.low %v1068, %v1075
  %v1077 = vcombine.low %v960, %v967
  %v1079 = vunpack.c.l.s4 1983009808
  %v1080 = vunpack.c.0.s8 %v1079
  %v1081 = vlaneseq
  %v1082 = vshrl.u32 %v1081, 7
  %v1083 = vsub.s32 %v1080, %v1082
  %v1084 = vrot.slane %v1077, %v1083
  %v1086 = vunpack.c.l.s4 1983009808
  %v1087 = vunpack.c.0.s8 %v1086
  %v1088 = vlaneseq
  %v1089 = vshrl.u32 %v1088, 7
  %v1090 = vsub.s32 %v1087, %v1089
  %v1091 = vrot.slane %v968, %v1090
  %v1092 = vcombine.low %v1084, %v1091
  %v1099 = vsel %vm990, %v1009, 0.0
  %v1100 = vsel %vm991, %v1026, 0.0
  %v1101 = vsel %vm992, %v1042, 0.0
  %v1102 = vsel %vm990, %v1059, 0.0
  %v1103 = vsel %vm991, %v1076, 0.0
  %v1104 = vsel %vm992, %v1092, 0.0
  %v1111 = vrot.slane %v1099, 1
  %v1112 = vrot.slane %v1100, 1
  %v1113 = vsel %vm52, %v1111, %v1112
  %v1114 = vrot.slane %v1101, 1
  %v1115 = vsel %vm52, %v1112, %v1114
  %v1116 = vrot.slane %v1102, 1
  %v1117 = vrot.slane %v1103, 1
  %v1118 = vsel %vm52, %v1116, %v1117
  %v1119 = vrot.slane %v1104, 1
  %v1120 = vsel %vm52, %v1117, %v1119
  %1121 = vrot.lane.b32.xlu0 %v1113, 32
  %v1122 = vpop.permute.xlu0 %1121
  %1123 = vrot.lane.b32.xlu0 %v1115, 32
  %v1124 = vpop.permute.xlu0 %1123
  %1125 = vrot.lane.b32.xlu0 %v1118, 32
  %v1126 = vpop.permute.xlu0 %1125
  %1127 = vrot.lane.b32.xlu0 %v1120, 32
  %v1128 = vpop.permute.xlu0 %1127
  %v1133 = vrot.slane %v1099, 2
  %v1134 = vrot.slane %v1100, 2
  %v1135 = vsel %vm81, %v1133, %v1134
  %v1136 = vrot.slane %v1101, 2
  %v1137 = vsel %vm81, %v1134, %v1136
  %v1138 = vrot.slane %v1102, 2
  %v1139 = vrot.slane %v1103, 2
  %v1140 = vsel %vm81, %v1138, %v1139
  %v1141 = vrot.slane %v1104, 2
  %v1142 = vsel %vm81, %v1139, %v1141
  %1143 = vrot.lane.b32.xlu0 %v1135, 64
  %v1144 = vpop.permute.xlu0 %1143
  %1145 = vrot.lane.b32.xlu0 %v1137, 64
  %v1146 = vpop.permute.xlu0 %1145
  %1147 = vrot.lane.b32.xlu0 %v1140, 64
  %v1148 = vpop.permute.xlu0 %1147
  %1149 = vrot.lane.b32.xlu0 %v1142, 64
  %v1150 = vpop.permute.xlu0 %1149
  %v1155 = vrot.slane %v1099, 3
  %v1156 = vrot.slane %v1100, 3
  %v1157 = vsel %vm112, %v1155, %v1156
  %v1158 = vrot.slane %v1101, 3
  %v1159 = vsel %vm112, %v1156, %v1158
  %v1160 = vrot.slane %v1102, 3
  %v1161 = vrot.slane %v1103, 3
  %v1162 = vsel %vm112, %v1160, %v1161
  %v1163 = vrot.slane %v1104, 3
  %v1164 = vsel %vm112, %v1161, %v1163
  %1165 = vrot.lane.b32.xlu0 %v1157, 96
  %v1166 = vpop.permute.xlu0 %1165
  %1167 = vrot.lane.b32.xlu0 %v1159, 96
  %v1168 = vpop.permute.xlu0 %1167
  %1169 = vrot.lane.b32.xlu0 %v1162, 96
  %v1170 = vpop.permute.xlu0 %1169
  %1171 = vrot.lane.b32.xlu0 %v1164, 96
  %v1172 = vpop.permute.xlu0 %1171
  %v1177 = vrot.slane %v1099, 4
  %v1178 = vrot.slane %v1100, 4
  %v1179 = vsel %vm145, %v1177, %v1178
  %v1180 = vrot.slane %v1101, 4
  %v1181 = vsel %vm145, %v1178, %v1180
  %v1182 = vrot.slane %v1102, 4
  %v1183 = vrot.slane %v1103, 4
  %v1184 = vsel %vm145, %v1182, %v1183
  %v1185 = vrot.slane %v1104, 4
  %v1186 = vsel %vm145, %v1183, %v1185
  %v1191 = vrot.slane %v1099, 5
  %v1192 = vrot.slane %v1100, 5
  %v1193 = vsel %vm178, %v1191, %v1192
  %v1194 = vrot.slane %v1101, 5
  %v1195 = vsel %vm178, %v1192, %v1194
  %v1196 = vrot.slane %v1102, 5
  %v1197 = vrot.slane %v1103, 5
  %v1198 = vsel %vm178, %v1196, %v1197
  %v1199 = vrot.slane %v1104, 5
  %v1200 = vsel %vm178, %v1197, %v1199
  %1201 = vrot.lane.b32.xlu0 %v1193, 32
  %v1202 = vpop.permute.xlu0 %1201
  %1203 = vrot.lane.b32.xlu0 %v1195, 32
  %v1204 = vpop.permute.xlu0 %1203
  %1205 = vrot.lane.b32.xlu0 %v1198, 32
  %v1206 = vpop.permute.xlu0 %1205
  %1207 = vrot.lane.b32.xlu0 %v1200, 32
  %v1208 = vpop.permute.xlu0 %1207
  %v1213 = vrot.slane %v1099, 6
  %v1214 = vrot.slane %v1100, 6
  %v1215 = vsel %vm211, %v1213, %v1214
  %v1216 = vrot.slane %v1101, 6
  %v1217 = vsel %vm211, %v1214, %v1216
  %v1218 = vrot.slane %v1102, 6
  %v1219 = vrot.slane %v1103, 6
  %v1220 = vsel %vm211, %v1218, %v1219
  %v1221 = vrot.slane %v1104, 6
  %v1222 = vsel %vm211, %v1219, %v1221
  %1223 = vrot.lane.b32.xlu0 %v1215, 64
  %v1224 = vpop.permute.xlu0 %1223
  %1225 = vrot.lane.b32.xlu0 %v1217, 64
  %v1226 = vpop.permute.xlu0 %1225
  %1227 = vrot.lane.b32.xlu0 %v1220, 64
  %v1228 = vpop.permute.xlu0 %1227
  %1229 = vrot.lane.b32.xlu0 %v1222, 64
  %v1230 = vpop.permute.xlu0 %1229
  %v1235 = vsel %vm478, %v1099, %v1122
  %v1236 = vsel %vm478, %v1100, %v1124
  %v1237 = vsel %vm478, %v1102, %v1126
  %v1238 = vsel %vm478, %v1103, %v1128
  %vm1239 = vcmask 523264
  %v1240 = vsel %vm1239, %v1235, %v1144
  %v1241 = vsel %vm1239, %v1236, %v1146
  %v1242 = vsel %vm1239, %v1237, %v1148
  %v1243 = vsel %vm1239, %v1238, %v1150
  %vm1244 = vcmask 785408
  %v1245 = vsel %vm1244, %v1240, %v1166
  %v1246 = vsel %vm1244, %v1241, %v1168
  %v1247 = vsel %vm1244, %v1242, %v1170
  %v1248 = vsel %vm1244, %v1243, %v1172
  %v1249 = vsel %vm478, %v1179, %v1202
  %v1250 = vsel %vm478, %v1181, %v1204
  %v1251 = vsel %vm478, %v1184, %v1206
  %v1252 = vsel %vm478, %v1186, %v1208
  %v1253 = vsel %vm1239, %v1249, %v1224
  %v1254 = vsel %vm1239, %v1250, %v1226
  %v1255 = vsel %vm1239, %v1251, %v1228
  %v1256 = vsel %vm1239, %v1252, %v1230
  %v1257 = vld [vmem:[%s3] sm:$0xff]
  %v1258 = vld [vmem:[%s3 + $0x8] sm:$0xff]
  %v1259 = vld [vmem:[%s3 + $0x10] sm:$0xff]
  %v1260 = vld [vmem:[%s3 + $0x18] sm:$0xff]
  %v1261 = vld [vmem:[%s3 + $0x20] sm:$0xff]
  %v1262 = vld [vmem:[%s3 + $0x28] sm:$0xff]
  %v1263 = vld [vmem:[%s3 + $0x30] sm:$0xff]
  %v1264 = vld [vmem:[%s3 + $0x38] sm:$0xff]
  %v1265 = vld [vmem:[%s3 + $0x40] sm:$0xff]
  %v1266 = vld [vmem:[%s3 + $0x48] sm:$0xff]
  %v1267 = vld [vmem:[%s3 + $0x50] sm:$0xff]
  %v1268 = vld [vmem:[%s3 + $0x58] sm:$0xff]
  %v1269 = vld [vmem:[%s3 + $0x60] sm:$0xff]
  %v1270 = vld [vmem:[%s3 + $0x68] sm:$0xff]
  %v1271 = vld [vmem:[%s3 + $0x70] sm:$0xff]
  %v1272 = vld [vmem:[%s3 + $0x78] sm:$0xff]
  %v1273 = vld [vmem:[%s3 + $0x80] sm:$0xff]
  %v1274 = vld [vmem:[%s3 + $0x88] sm:$0xff]
  %v1275 = vld [vmem:[%s3 + $0x90] sm:$0xff]
  %v1276 = vld [vmem:[%s3 + $0x98] sm:$0xff]
  %v1277 = vld [vmem:[%s3 + $0xa0] sm:$0xff]
  %v1278 = vld [vmem:[%s3 + $0xa8] sm:$0xff]
  %v1279 = vld [vmem:[%s3 + $0xb0] sm:$0xff]
  %v1280 = vld [vmem:[%s3 + $0xb8] sm:$0xff]
  %v1281 = vld [vmem:[%s3 + $0xc0] sm:$0xff]
  %v1282 = vld [vmem:[%s3 + $0xc8] sm:$0xff]
  %v1283 = vld [vmem:[%s3 + $0xd0] sm:$0xff]
  %v1284 = vld [vmem:[%s3 + $0xd8] sm:$0xff]
  %v1285 = vld [vmem:[%s4] sm:$0x1]
  %v1287 = vlaneseq
  %v1288 = vshrl.u32 %v1287, 7
  %v1289 = vsub.s32 0, %v1288
  %v1290 = vrot.slane %v1285, %v1289
  %v1293 = vsel %vm1244, %v1253, 0
  %v1296 = vsel %vm1244, %v1254, 0
  %v1299 = vsel %vm1244, %v1255, 0
  %v1302 = vsel %vm1244, %v1256, 0
  %1304 = vmatprep.subr.mxu0 0.0
  %1305 = vmatpush1.msra.mxu0 %v1257
  %1306 = vmatprep.subr.mxu0 0.0
  %1307 = vmatpush1.msra.mxu0 %v1258
  %1308 = vmatprep.subr.mxu0 0.0
  %1309 = vmatpush1.msra.mxu0 %v1259
  %1310 = vmatprep.subr.mxu0 0.0
  %1311 = vmatpush1.msra.mxu0 %v1260
  %1312 = vmatprep.subr.mxu0 0.0
  %1313 = vmatpush1.msra.mxu0 %v1261
  %1314 = vmatprep.subr.mxu0 0.0
  %1315 = vmatpush1.msra.mxu0 %v1262
  %1316 = vmatprep.subr.mxu0 0.0
  %1317 = vmatpush1.msra.mxu0 %v1263
  %1318 = vmatprep.subr.mxu0 0.0
  %1319 = vmatpush1.msra.mxu0 %v1264
  %1320 = vmatprep.subr.mxu0 0.0
  %1321 = vmatpush1.msra.mxu0 %v1265
  %1322 = vmatprep.subr.mxu0 0.0
  %1323 = vmatpush1.msra.mxu0 %v1266
  %1324 = vmatprep.subr.mxu0 0.0
  %1325 = vmatpush1.msra.mxu0 %v1267
  %1326 = vmatprep.subr.mxu0 0.0
  %1327 = vmatpush1.msra.mxu0 %v1268
  %1328 = vmatprep.subr.mxu0 0.0
  %1329 = vmatpush1.msra.mxu0 %v1269
  %1330 = vmatprep.subr.mxu0 0.0
  %1331 = vmatpush1.msra.mxu0 %v1270
  %1332 = vmatprep.subr.mxu0 0.0
  %1333 = vmatpush1.msra.mxu0 %v1271
  %1334 = vmatprep.subr.mxu0 0.0
  %1335 = vmatpush1.msra.mxu0 %v1272
  %1336 = vmatprep.subr.mxu0 0.0
  %1337 = vmatpush1.msra.mxu0 %v1273
  %1338 = vmatprep.subr.mxu0 0.0
  %1339 = vmatpush1.msra.mxu0 %v1274
  %1340 = vmatprep.subr.mxu0 0.0
  %1341 = vmatpush1.msra.mxu0 %v1275
  %1342 = vmatprep.subr.mxu0 0.0
  %1343 = vmatpush1.msra.mxu0 %v1276
  %1344 = vmatprep.subr.mxu0 0.0
  %1345 = vmatpush1.msra.mxu0 %v1277
  %1346 = vmatprep.subr.mxu0 0.0
  %1347 = vmatpush1.msra.mxu0 %v1278
  %1348 = vmatprep.subr.mxu0 0.0
  %1349 = vmatpush1.msra.mxu0 %v1279
  %1350 = vmatprep.subr.mxu0 0.0
  %1351 = vmatpush1.msra.mxu0 %v1280
  %1352 = vmatprep.subr.mxu0 0.0
  %1353 = vmatpush1.msra.mxu0 %v1281
  %1354 = vmatprep.subr.mxu0 0.0
  %1355 = vmatpush1.msra.mxu0 %v1282
  %1356 = vmatprep.subr.mxu0 0.0
  %1357 = vmatpush1.msra.mxu0 %v1283
  %1358 = vmatprep.subr.mxu0 0.0
  %1359 = vmatpush1.msra.mxu0 %v1284
  %1360 = vmatprep.subr.mxu0 0.0
  %1361 = vmatpush1.msra.mxu0 0.0
  %1362 = vmatprep.subr.mxu0 0.0
  %1363 = vmatpush1.msra.mxu0 0.0
  %1364 = vmatprep.subr.mxu0 0.0
  %1365 = vmatpush1.msra.mxu0 0.0
  %1366 = vmatprep.subr.mxu0 0.0
  %1367 = vmatpush1.msra.mxu0 0.0
  %1368 = vmatprep.mubr.f32.mxu0 %v1293
  %1369 = vmatmul.mubr.f32.gmra.mrb[0].mxu0 %v1245
  %v1370 = vpop.f32.mrb[0].mxu0
  %v1371 = vadd.f32 %v1290, %v1370
  %v1372 = vpop.f32.mrb[0].mxu0
  %1373 = vmatprep.mubr.f32.mxu0 %v1296
  %1374 = vmatmul.mubr.f32.gmra.mrb[0].mxu0 %v1246
  %v1375 = vpop.f32.mrb[0].mxu0
  %v1376 = vadd.f32 %v1290, %v1375
  %v1377 = vpop.f32.mrb[0].mxu0
  %1378 = vmatprep.mubr.f32.mxu0 %v1299
  %1379 = vmatmul.mubr.f32.gmra.mrb[0].mxu0 %v1247
  %v1380 = vpop.f32.mrb[0].mxu0
  %v1381 = vadd.f32 %v1290, %v1380
  %v1382 = vpop.f32.mrb[0].mxu0
  %1383 = vmatprep.mubr.f32.mxu0 %v1302
  %1384 = vmatmul.mubr.f32.gmra.mrb[0].mxu0 %v1248
  %v1385 = vpop.f32.mrb[0].mxu0
  %v1386 = vadd.f32 %v1290, %v1385
  %v1387 = vpop.f32.mrb[0].mxu0
  %1388 = vdwg.mxu0
  %v1389 = vld [vmem:[%s5] sm:$0xff]
  %v1390 = vld [vmem:[%s5 + $0x8] sm:$0xff]
  %v1391 = vld [vmem:[%s5 + $0x10] sm:$0xff]
  %v1392 = vld [vmem:[%s5 + $0x18] sm:$0xff]
  %v1393 = vld [vmem:[%s6] sm:$0x1]
  %v1395 = vlaneseq
  %v1396 = vshrl.u32 %v1395, 7
  %v1397 = vsub.s32 0, %v1396
  %v1398 = vrot.slane %v1393, %v1397
  %v1401 = vsel %vm478, %v1371, 0
  %v1404 = vsel %vm478, %v1376, 0
  %v1407 = vsel %vm478, %v1381, 0
  %v1410 = vsel %vm478, %v1386, 0
  %1412 = vmatprep.subr.mxu0 0.0
  %1413 = vmatpush1.msra.mxu0 %v1389
  %1414 = vmatprep.subr.mxu0 0.0
  %1415 = vmatpush1.msra.mxu0 %v1390
  %1416 = vmatprep.subr.mxu0 0.0
  %1417 = vmatpush1.msra.mxu0 %v1391
  %1418 = vmatprep.subr.mxu0 0.0
  %1419 = vmatpush1.msra.mxu0 %v1392
  %1420 = vmatprep.subr.mxu0 0.0
  %1421 = vmatpush1.msra.mxu0 0.0
  %1422 = vmatprep.subr.mxu0 0.0
  %1423 = vmatpush1.msra.mxu0 0.0
  %1424 = vmatprep.subr.mxu0 0.0
  %1425 = vmatpush1.msra.mxu0 0.0
  %1426 = vmatprep.subr.mxu0 0.0
  %1427 = vmatpush1.msra.mxu0 0.0
  %1428 = vmatprep.subr.mxu0 0.0
  %1429 = vmatpush1.msra.mxu0 0.0
  %1430 = vmatprep.subr.mxu0 0.0
  %1431 = vmatpush1.msra.mxu0 0.0
  %1432 = vmatprep.subr.mxu0 0.0
  %1433 = vmatpush1.msra.mxu0 0.0
  %1434 = vmatprep.subr.mxu0 0.0
  %1435 = vmatpush1.msra.mxu0 0.0
  %1436 = vmatprep.subr.mxu0 0.0
  %1437 = vmatpush1.msra.mxu0 0.0
  %1438 = vmatprep.subr.mxu0 0.0
  %1439 = vmatpush1.msra.mxu0 0.0
  %1440 = vmatprep.subr.mxu0 0.0
  %1441 = vmatpush1.msra.mxu0 0.0
  %1442 = vmatprep.subr.mxu0 0.0
  %1443 = vmatpush1.msra.mxu0 0.0
  %1444 = vmatprep.subr.mxu0 0.0
  %1445 = vmatpush1.msra.mxu0 0.0
  %1446 = vmatprep.subr.mxu0 0.0
  %1447 = vmatpush1.msra.mxu0 0.0
  %1448 = vmatprep.subr.mxu0 0.0
  %1449 = vmatpush1.msra.mxu0 0.0
  %1450 = vmatprep.subr.mxu0 0.0
  %1451 = vmatpush1.msra.mxu0 0.0
  %1452 = vmatprep.subr.mxu0 0.0
  %1453 = vmatpush1.msra.mxu0 0.0
  %1454 = vmatprep.subr.mxu0 0.0
  %1455 = vmatpush1.msra.mxu0 0.0
  %1456 = vmatprep.subr.mxu0 0.0
  %1457 = vmatpush1.msra.mxu0 0.0
  %1458 = vmatprep.subr.mxu0 0.0
  %1459 = vmatpush1.msra.mxu0 0.0
  %1460 = vmatprep.subr.mxu0 0.0
  %1461 = vmatpush1.msra.mxu0 0.0
  %1462 = vmatprep.subr.mxu0 0.0
  %1463 = vmatpush1.msra.mxu0 0.0
  %1464 = vmatprep.subr.mxu0 0.0
  %1465 = vmatpush1.msra.mxu0 0.0
  %1466 = vmatprep.subr.mxu0 0.0
  %1467 = vmatpush1.msra.mxu0 0.0
  %1468 = vmatprep.subr.mxu0 0.0
  %1469 = vmatpush1.msra.mxu0 0.0
  %1470 = vmatprep.subr.mxu0 0.0
  %1471 = vmatpush1.msra.mxu0 0.0
  %1472 = vmatprep.subr.mxu0 0.0
  %1473 = vmatpush1.msra.mxu0 0.0
  %1474 = vmatprep.subr.mxu0 0.0
  %1475 = vmatpush1.msra.mxu0 0.0
  %1476 = vmatprep.mubr.f32.mxu0 0.0
  %1477 = vmatmul.mubr.f32.gmra.mrb[0].mxu0 %v1401
  %v1478 = vpop.f32.mrb[0].mxu0
  %v1479 = vadd.f32 %v1398, %v1478
  %v1480 = vpop.f32.mrb[0].mxu0
  %1481 = vmatprep.mubr.f32.mxu0 0.0
  %1482 = vmatmul.mubr.f32.gmra.mrb[0].mxu0 %v1404
  %v1483 = vpop.f32.mrb[0].mxu0
  %v1484 = vadd.f32 %v1398, %v1483
  %v1485 = vpop.f32.mrb[0].mxu0
  %1486 = vmatprep.mubr.f32.mxu0 0.0
  %1487 = vmatmul.mubr.f32.gmra.mrb[0].mxu0 %v1407
  %v1488 = vpop.f32.mrb[0].mxu0
  %v1489 = vadd.f32 %v1398, %v1488
  %v1490 = vpop.f32.mrb[0].mxu0
  %1491 = vmatprep.mubr.f32.mxu0 0.0
  %1492 = vmatmul.mubr.f32.gmra.mrb[0].mxu0 %v1410
  %v1493 = vpop.f32.mrb[0].mxu0
  %v1494 = vadd.f32 %v1398, %v1493
  %v1495 = vpop.f32.mrb[0].mxu0
  %1496 = vdwg.mxu0
  %v1497 = vld [vmem:[%s7] sm:$0xff]
  %v1498 = vld [vmem:[%s7 + $0x8] sm:$0xff]
  %v1499 = vld [vmem:[%s7 + $0x10] sm:$0xff]
  %v1500 = vld [vmem:[%s7 + $0x18] sm:$0xff]
  %v1501 = vld [vmem:[%s8] sm:$0x1]
  %v1503 = vlaneseq
  %v1504 = vshrl.u32 %v1503, 7
  %v1505 = vsub.s32 0, %v1504
  %v1506 = vrot.slane %v1501, %v1505
  %1508 = vmatprep.subr.mxu0 0.0
  %1509 = vmatpush1.msra.mxu0 %v1497
  %1510 = vmatprep.subr.mxu0 0.0
  %1511 = vmatpush1.msra.mxu0 %v1498
  %1512 = vmatprep.subr.mxu0 0.0
  %1513 = vmatpush1.msra.mxu0 %v1499
  %1514 = vmatprep.subr.mxu0 0.0
  %1515 = vmatpush1.msra.mxu0 %v1500
  %1516 = vmatprep.subr.mxu0 0.0
  %1517 = vmatpush1.msra.mxu0 0.0
  %1518 = vmatprep.subr.mxu0 0.0
  %1519 = vmatpush1.msra.mxu0 0.0
  %1520 = vmatprep.subr.mxu0 0.0
  %1521 = vmatpush1.msra.mxu0 0.0
  %1522 = vmatprep.subr.mxu0 0.0
  %1523 = vmatpush1.msra.mxu0 0.0
  %1524 = vmatprep.subr.mxu0 0.0
  %1525 = vmatpush1.msra.mxu0 0.0
  %1526 = vmatprep.subr.mxu0 0.0
  %1527 = vmatpush1.msra.mxu0 0.0
  %1528 = vmatprep.subr.mxu0 0.0
  %1529 = vmatpush1.msra.mxu0 0.0
  %1530 = vmatprep.subr.mxu0 0.0
  %1531 = vmatpush1.msra.mxu0 0.0
  %1532 = vmatprep.subr.mxu0 0.0
  %1533 = vmatpush1.msra.mxu0 0.0
  %1534 = vmatprep.subr.mxu0 0.0
  %1535 = vmatpush1.msra.mxu0 0.0
  %1536 = vmatprep.subr.mxu0 0.0
  %1537 = vmatpush1.msra.mxu0 0.0
  %1538 = vmatprep.subr.mxu0 0.0
  %1539 = vmatpush1.msra.mxu0 0.0
  %1540 = vmatprep.subr.mxu0 0.0
  %1541 = vmatpush1.msra.mxu0 0.0
  %1542 = vmatprep.subr.mxu0 0.0
  %1543 = vmatpush1.msra.mxu0 0.0
  %1544 = vmatprep.subr.mxu0 0.0
  %1545 = vmatpush1.msra.mxu0 0.0
  %1546 = vmatprep.subr.mxu0 0.0
  %1547 = vmatpush1.msra.mxu0 0.0
  %1548 = vmatprep.subr.mxu0 0.0
  %1549 = vmatpush1.msra.mxu0 0.0
  %1550 = vmatprep.subr.mxu0 0.0
  %1551 = vmatpush1.msra.mxu0 0.0
  %1552 = vmatprep.subr.mxu0 0.0
  %1553 = vmatpush1.msra.mxu0 0.0
  %1554 = vmatprep.subr.mxu0 0.0
  %1555 = vmatpush1.msra.mxu0 0.0
  %1556 = vmatprep.subr.mxu0 0.0
  %1557 = vmatpush1.msra.mxu0 0.0
  %1558 = vmatprep.subr.mxu0 0.0
  %1559 = vmatpush1.msra.mxu0 0.0
  %1560 = vmatprep.subr.mxu0 0.0
  %1561 = vmatpush1.msra.mxu0 0.0
  %1562 = vmatprep.subr.mxu0 0.0
  %1563 = vmatpush1.msra.mxu0 0.0
  %1564 = vmatprep.subr.mxu0 0.0
  %1565 = vmatpush1.msra.mxu0 0.0
  %1566 = vmatprep.subr.mxu0 0.0
  %1567 = vmatpush1.msra.mxu0 0.0
  %1568 = vmatprep.subr.mxu0 0.0
  %1569 = vmatpush1.msra.mxu0 0.0
  %1570 = vmatprep.subr.mxu0 0.0
  %1571 = vmatpush1.msra.mxu0 0.0
  %1572 = vmatprep.mubr.f32.mxu0 0.0
  %1573 = vmatmul.mubr.f32.gmra.mrb[0].mxu0 %v1401
  %v1574 = vpop.f32.mrb[0].mxu0
  %v1575 = vadd.f32 %v1506, %v1574
  %v1576 = vpop.f32.mrb[0].mxu0
  %1577 = vmatprep.mubr.f32.mxu0 0.0
  %1578 = vmatmul.mubr.f32.gmra.mrb[0].mxu0 %v1404
  %v1579 = vpop.f32.mrb[0].mxu0
  %v1580 = vadd.f32 %v1506, %v1579
  %v1581 = vpop.f32.mrb[0].mxu0
  %1582 = vmatprep.mubr.f32.mxu0 0.0
  %1583 = vmatmul.mubr.f32.gmra.mrb[0].mxu0 %v1407
  %v1584 = vpop.f32.mrb[0].mxu0
  %v1585 = vadd.f32 %v1506, %v1584
  %v1586 = vpop.f32.mrb[0].mxu0
  %1587 = vmatprep.mubr.f32.mxu0 0.0
  %1588 = vmatmul.mubr.f32.gmra.mrb[0].mxu0 %v1410
  %v1589 = vpop.f32.mrb[0].mxu0
  %v1590 = vadd.f32 %v1506, %v1589
  %v1591 = vpop.f32.mrb[0].mxu0
  %1592 = vdwg.mxu0
  %1593 = vst.msk [vmem:[%s9] sm:$0xff] %vm1244, %v1479
  %1594 = vst.msk [vmem:[%s9 + $0x8] sm:$0xff] %vm1244, %v1484
  %1595 = vst.msk [vmem:[%s9 + $0x10] sm:$0xff] %vm1244, %v1489
  %1596 = vst.msk [vmem:[%s9 + $0x18] sm:$0xff] %vm1244, %v1494
  %1597 = vst.msk [vmem:[%s10] sm:$0xff] %vm1244, %v1575
  %1598 = vst.msk [vmem:[%s10 + $0x8] sm:$0xff] %vm1244, %v1580
  %1599 = vst.msk [vmem:[%s10 + $0x10] sm:$0xff] %vm1244, %v1585
  %1600 = vst.msk [vmem:[%s10 + $0x18] sm:$0xff] %vm1244, %v1590
  // Predicated region
  $region38: #{znn_forward.3} parent=0 // pred_check
    _
  $region39: #{znn_forward.3} parent=0 // pred_check_branch
    %1602 = sbr.rel (0) target = $region41
  $region40: #{znn_forward.3} parent=0 // pred_region
    _
  $region41: #{znn_forward.3} parent=0 // pred_fallthru
    _
  // Predicated region
  $region42: #{znn_forward.3} parent=0 // pred_check
    _
  $region43: #{znn_forward.3} parent=0 // pred_check_branch
    %1604 = sbr.rel (0) target = $region45
  $region44: #{znn_forward.3} parent=0 // pred_region
    _
  $region45: #{znn_forward.3} parent=0 // pred_fallthru
    _
  // Predicated region
  $region46: #{znn_forward.3} parent=0 // pred_check
    _
  $region47: #{znn_forward.3} parent=0 // pred_check_branch
    %1606 = sbr.rel (0) target = $region49
  $region48: #{znn_forward.3} parent=0 // pred_region
    _
  $region49: #{znn_forward.3} parent=0 // pred_fallthru
    _
  // Predicated region
  $region50: #{znn_forward.3} parent=0 // pred_check
    _
  $region51: #{znn_forward.3} parent=0 // pred_check_branch
    %1608 = sbr.rel (0) target = $region53
  $region52: #{znn_forward.3} parent=0 // pred_region
    _
  $region53: #{znn_forward.3} parent=0 // pred_fallthru
    _

// kernel: znn_forward.4
$region0: #{znn_forward.4}
  #allocation0 [shape = 'u32[]', space=smem, size = 0x4, offset = 0x4, fixed_abs, tag = 'smem constant byte address 0x4 - core index']
  #allocation1 [shape = 'u32[144,128]{1,0:T(1,128)}', space=vmem, size = 0x12000, scoped, tag = 'internal scratch']
  #allocation2 [shape = 'f32[4,32]{1,0:T(4,128)}', space=vmem, size = 0x800, scoped, tag = 'scratch operand']
  %s0 = inlined_call_operand.vmem [shape: f32[2,16,96], index: 0, kind: input, shape index: {}]
  %s1 = inlined_call_operand.vmem [shape: f32[2,16,96], index: 1, kind: input, shape index: {}]
  %s2 = inlined_call_operand.vmem [shape: f32[32,192], index: 2, kind: input, shape index: {}]
  %s3 = inlined_call_operand.vmem [shape: f32[4,96], index: 3, kind: input, shape index: {}]
  %s4 = inlined_call_operand.vmem [shape: f32[2,16,32], index: 4, kind: output, shape index: {0}]
  %s5 = inlined_call_operand.vmem [shape: f32[2,16,32], index: 5, kind: output, shape index: {1}]
  %6 = xla_tuple %s4, %s5
  %s7 = sld [smem:[#allocation0]]
  $region38: #{znn_forward.4} parent=0
    _
  %s9 = ssub.s32 1, %s7
  %s10 = scalar_select 0, %s9, %s7
  // Predicated region
  $region2: #{znn_forward.4} parent=0 // pred_check
    _
  $region3: #{znn_forward.4} parent=0 // pred_check_branch
    %12 = sbr.rel (0) target = $region5
  $region4: #{znn_forward.4} parent=0 // pred_region
    _
  $region5: #{znn_forward.4} parent=0 // pred_fallthru
    _
  // Predicated region
  $region6: #{znn_forward.4} parent=0 // pred_check
    _
  $region7: #{znn_forward.4} parent=0 // pred_check_branch
    %14 = sbr.rel (0) target = $region9
  $region8: #{znn_forward.4} parent=0 // pred_region
    %s15 = ssub.s32 0, 0
    %s16 = smul.u32 2, %s15
    %p17 = scmp.lt.s32.totalorder %s16, 1
    %s18 = scalar_select %p17, %s16, 1
    %s19 = smul.addr %s18, 8
    %s20 = scalar_lea.vmem %s1, %s19
    %s21 = ssub.s32 0, 0
    %s22 = smul.u32 2, %s21
  $region9: #{znn_forward.4} parent=0 // pred_fallthru
    _
  // Predicated region
  $region10: #{znn_forward.4} parent=0 // pred_check
    _
  $region11: #{znn_forward.4} parent=0 // pred_check_branch
    %24 = sbr.rel (0) target = $region13
  $region12: #{znn_forward.4} parent=0 // pred_region
    _
  $region13: #{znn_forward.4} parent=0 // pred_fallthru
    _
  // Predicated region
  $region14: #{znn_forward.4} parent=0 // pred_check
    _
  $region15: #{znn_forward.4} parent=0 // pred_check_branch
    %26 = sbr.rel (0) target = $region17
  $region16: #{znn_forward.4} parent=0 // pred_region
    _
  $region17: #{znn_forward.4} parent=0 // pred_fallthru
    _
  %s27 = ssub.s32 0, 0
  %s28 = smul.u32 2, %s27
  %p29 = scmp.lt.s32.totalorder %s28, 1
  %s30 = scalar_select %p29, %s28, 1
  %s31 = smul.addr %s30, 8
  %s32 = scalar_lea.vmem %s1, %s31
  %s33 = ssub.s32 0, 0
  %s34 = smul.u32 2, %s33
  %p35 = scmp.lt.s32.totalorder %s34, 1
  %s36 = scalar_select %p35, %s34, 1
  %s37 = smul.addr %s36, 8
  %s38 = scalar_lea.vmem %s5, %s37
  %s39 = ssub.s32 0, 0
  %s40 = smul.u32 2, %s39
  %p41 = scmp.lt.s32.totalorder %s40, 1
  %s42 = scalar_select %p41, %s40, 1
  %s43 = smul.addr %s42, 8
  %s44 = scalar_lea.vmem %s1, %s43
  %s45 = ssub.s32 0, 0
  %s46 = smul.u32 2, %s45
  %s47 = ssub.s32 0, 0
  %s48 = smul.u32 2, %s47
  %p49 = scmp.lt.s32.totalorder %s48, 1
  %s50 = scalar_select %p49, %s48, 1
  %s51 = smul.addr %s50, 8
  %s52 = scalar_lea.vmem %s5, %s51
  %s53 = ssub.s32 0, 0
  %s54 = smul.u32 2, %s53
  %p55 = scmp.eq.s32.totalorder 0, 0
  // Predicated region
  $region18: #{znn_forward.4} parent=0 // pred_check
    %p56 = pneg %p55
  $region19: #{znn_forward.4} parent=0 // pred_check_branch
    %58 = sbr.rel (%p56) target = $region21
  $region20: #{znn_forward.4} parent=0 // pred_region
    %vm59 = vcmask 257024
    %60 = vst.msk [vmem:[#allocation2] sm:$0xf] %vm59, 0.0
  $region21: #{znn_forward.4} parent=0 // pred_fallthru
    _
  %v61 = vld [vmem:[%s2] sm:$0xff]
  %v62 = vld [vmem:[%s2 + $0x8] sm:$0xff]
  %v63 = vld [vmem:[%s2 + $0x10] sm:$0xff]
  %v64 = vld [vmem:[%s2 + $0x18] sm:$0xff]
  %v65 = vld [vmem:[%s2 + $0x20] sm:$0xff]
  %v66 = vld [vmem:[%s2 + $0x28] sm:$0xff]
  %v67 = vld [vmem:[%s2 + $0x30] sm:$0xff]
  %v68 = vld [vmem:[%s2 + $0x38] sm:$0xff]
  %v69 = vld [vmem:[%s3] sm:$0xf]
  %v70 = vlaneseq
  %v71 = vshrl.u32 %v70, 7
  %vm72 = vcmp.lt.s32.totalorder %v71, 2
  %v73 = vld [vmem:[#allocation2] sm:$0xf]
  %v74 = vld [vmem:[%s0] sm:$0x1]
  %v75 = vld [vmem:[%s0 + $0x10] sm:$0x1]
  %v76 = vld [vmem:[%s44 + $0xf] sm:$0x1]
  %v77 = vld [vmem:[%s44 + $0x1f] sm:$0x1]
  %v80 = vrot.slane %v75, 7
  %vm81 = vcmask 1041409
  %v82 = vsel %vm81, %v80, %v74
  %v86 = vrot.slane %v76, 6
  %v87 = vrot.slane %v77, 5
  %vm88 = vcmask 1043459
  %v89 = vsel %vm88, %v87, %v86
  %vm91 = vcmask 1041408
  %v92 = vsel %vm91, %v82, %v89
  %vm93 = vcmask 261120
  %v95 = vsel %vm93, %v73, 0
  %97 = vmatprep.subr.mxu0 %v62
  %98 = vmatpush1.msra.mxu0 %v61
  %99 = vmatprep.subr.mxu0 %v64
  %100 = vmatpush1.msra.mxu0 %v63
  %101 = vmatprep.subr.mxu0 %v66
  %102 = vmatpush1.msra.mxu0 %v65
  %103 = vmatprep.subr.mxu0 %v68
  %104 = vmatpush1.msra.mxu0 %v67
  %105 = vmatprep.subr.mxu0 0.0
  %106 = vmatpush1.msra.mxu0 0.0
  %107 = vmatprep.subr.mxu0 0.0
  %108 = vmatpush1.msra.mxu0 0.0
  %109 = vmatprep.subr.mxu0 0.0
  %110 = vmatpush1.msra.mxu0 0.0
  %111 = vmatprep.subr.mxu0 0.0
  %112 = vmatpush1.msra.mxu0 0.0
  %113 = vmatprep.subr.mxu0 0.0
  %114 = vmatpush1.msra.mxu0 0.0
  %115 = vmatprep.subr.mxu0 0.0
  %116 = vmatpush1.msra.mxu0 0.0
  %117 = vmatprep.subr.mxu0 0.0
  %118 = vmatpush1.msra.mxu0 0.0
  %119 = vmatprep.subr.mxu0 0.0
  %120 = vmatpush1.msra.mxu0 0.0
  %121 = vmatprep.subr.mxu0 0.0
  %122 = vmatpush1.msra.mxu0 0.0
  %123 = vmatprep.subr.mxu0 0.0
  %124 = vmatpush1.msra.mxu0 0.0
  %125 = vmatprep.subr.mxu0 0.0
  %126 = vmatpush1.msra.mxu0 0.0
  %127 = vmatprep.subr.mxu0 0.0
  %128 = vmatpush1.msra.mxu0 0.0
  %129 = vmatprep.subr.mxu0 0.0
  %130 = vmatpush1.msra.mxu0 0.0
  %131 = vmatprep.subr.mxu0 0.0
  %132 = vmatpush1.msra.mxu0 0.0
  %133 = vmatprep.subr.mxu0 0.0
  %134 = vmatpush1.msra.mxu0 0.0
  %135 = vmatprep.subr.mxu0 0.0
  %136 = vmatpush1.msra.mxu0 0.0
  %137 = vmatprep.subr.mxu0 0.0
  %138 = vmatpush1.msra.mxu0 0.0
  %139 = vmatprep.subr.mxu0 0.0
  %140 = vmatpush1.msra.mxu0 0.0
  %141 = vmatprep.subr.mxu0 0.0
  %142 = vmatpush1.msra.mxu0 0.0
  %143 = vmatprep.subr.mxu0 0.0
  %144 = vmatpush1.msra.mxu0 0.0
  %145 = vmatprep.subr.mxu0 0.0
  %146 = vmatpush1.msra.mxu0 0.0
  %147 = vmatprep.subr.mxu0 0.0
  %148 = vmatpush1.msra.mxu0 0.0
  %149 = vmatprep.subr.mxu0 0.0
  %150 = vmatpush1.msra.mxu0 0.0
  %151 = vmatprep.subr.mxu0 0.0
  %152 = vmatpush1.msra.mxu0 0.0
  %153 = vmatprep.subr.mxu0 0.0
  %154 = vmatpush1.msra.mxu0 0.0
  %155 = vmatprep.subr.mxu0 0.0
  %156 = vmatpush1.msra.mxu0 0.0
  %157 = vmatprep.subr.mxu0 0.0
  %158 = vmatpush1.msra.mxu0 0.0
  %159 = vmatprep.subr.mxu0 0.0
  %160 = vmatpush1.msra.mxu0 0.0
  %161 = vmatprep.mubr.f32.mxu0 0.0
  %162 = vmatmul.mubr.f32.gmra.mrb[0].mxu0 %v95
  %v163 = vpop.f32.mrb[0].mxu0
  %v164 = vadd.f32 0.0, %v163
  %v165 = vpop.f32.mrb[0].mxu0
  %v166 = vadd.f32 0.0, %v165
  %167 = vdwg.mxu0
  %v168 = vsel %vm72, 1, 0
  %vm169 = vcmp.eq.s32.totalorder %v168, 1
  %172 = vrot.lane.b32.xlu0 %v164, 32
  %v173 = vpop.permute.xlu0 %172
  %174 = vrot.lane.b32.xlu0 %v166, 32
  %v175 = vpop.permute.xlu0 %174
  %v176 = vsel %vm93, %v173, %v175
  %v178 = vsel %vm169, %v164, %v176
  %v179 = vadd.f32 %v178, %v69
  %v180 = vadd.f32 %v92, %v179
  %v181 = vxor.u32 %v180, 2147483648
  %v182 = vmul.f32 %v181, 1.442695
  %v183 = vpow.pop %v182
  %v184 = vadd.f32 %v183, 1.0
  %v185 = vrcp.pop %v184
  %v186 = vmul.f32 1.0, %v185
  %188 = vrot.lane.b32.xlu0 %v179, 64
  %v189 = vpop.permute.xlu0 %188
  %v191 = vmul.f32 %v186, %v189
  %193 = vrot.lane.b32.xlu0 %v191, 64
  %v194 = vpop.permute.xlu0 %193
  %v196 = vadd.f32 %v92, %v194
  %v197 = vtanh.pop %v196
  %v198 = vsub.f32 1.0, %v186
  %200 = vrot.lane.b32.xlu0 %v197, 96
  %v201 = vpop.permute.xlu0 %200
  %v203 = vmul.f32 %v198, %v201
  %204 = vrot.lane.b32.xlu0 %v73, 32
  %v205 = vpop.permute.xlu0 %204
  %v207 = vmul.f32 %v186, %v205
  %v208 = vadd.f32 %v203, %v207
  %v211 = vunpack.c.l.s4 1966171168
  %v212 = vunpack.c.0.s8 %v211
  %v213 = vlaneseq
  %v214 = vshrl.u32 %v213, 7
  %v215 = vsub.s32 %v212, %v214
  %v216 = vrot.slane %v208, %v215
  %v217 = vcombine.high %v216, %v216
  %v219 = vunpack.c.l.s4 1966171168
  %v220 = vunpack.c.0.s8 %v219
  %v221 = vlaneseq
  %v222 = vshrl.u32 %v221, 7
  %v223 = vsub.s32 %v220, %v222
  %v224 = vrot.slane %v216, %v223
  %v226 = vunpack.c.l.s4 1966171168
  %v227 = vunpack.c.0.s8 %v226
  %v228 = vlaneseq
  %v229 = vshrl.u32 %v228, 7
  %v230 = vsub.s32 %v227, %v229
  %v231 = vrot.slane %v217, %v230
  %v232 = vlaneseq
  %v233 = vshrl.u32 %v232, 7
  %v234 = vsub.s32 0, %v233
  %v235 = vrot.slane %v224, %v234
  %v236 = vlaneseq
  %v237 = vshrl.u32 %v236, 7
  %v238 = vsub.s32 0, %v237
  %v239 = vrot.slane %v231, %v238
  %240 = vrot.lane.b32.xlu0 %v235, 96
  %v241 = vpop.permute.xlu0 %240
  %242 = vrot.lane.b32.xlu0 %v239, 96
  %v243 = vpop.permute.xlu0 %242
  %vm246 = vcmask 253952
  %247 = vst.msk [vmem:[%s4] sm:$0x1] %vm246, %v241
  %248 = vst.msk [vmem:[%s4 + $0x10] sm:$0x1] %vm246, %v243
  %v249 = vcombine.high %v224, %v224
  %v250 = vcombine.high %v231, %v231
  %v251 = vlaneseq
  %v252 = vshrl.u32 %v251, 7
  %v253 = vsub.s32 0, %v252
  %v254 = vrot.slane %v249, %v253
  %v255 = vlaneseq
  %v256 = vshrl.u32 %v255, 7
  %v257 = vsub.s32 0, %v256
  %v258 = vrot.slane %v250, %v257
  %259 = vrot.lane.b32.xlu0 %v254, 96
  %v260 = vpop.permute.xlu0 %259
  %261 = vrot.lane.b32.xlu0 %v258, 96
  %v262 = vpop.permute.xlu0 %261
  %265 = vst.msk [vmem:[%s52 + $0xf] sm:$0x1] %vm246, %v260
  %266 = vst.msk [vmem:[%s52 + $0x1f] sm:$0x1] %vm246, %v262
  %v267 = vld [vmem:[%s0 + $0x1] sm:$0x1]
  %v268 = vld [vmem:[%s0 + $0x11] sm:$0x1]
  %v269 = vld [vmem:[%s44 + $0xe] sm:$0x1]
  %v270 = vld [vmem:[%s44 + $0x1e] sm:$0x1]
  %v273 = vrot.slane %v268, 7
  %v274 = vsel %vm81, %v273, %v267
  %v278 = vrot.slane %v269, 6
  %v279 = vrot.slane %v270, 5
  %v280 = vsel %vm88, %v279, %v278
  %v282 = vsel %vm91, %v274, %v280
  %283 = vrot.lane.b32.xlu0 %v208, 96
  %v284 = vpop.permute.xlu0 %283
  %v285 = vsel %vm93, %v284, 0
  %287 = vmatprep.subr.mxu0 %v62
  %288 = vmatpush1.msra.mxu0 %v61
  %289 = vmatprep.subr.mxu0 %v64
  %290 = vmatpush1.msra.mxu0 %v63
  %291 = vmatprep.subr.mxu0 %v66
  %292 = vmatpush1.msra.mxu0 %v65
  %293 = vmatprep.subr.mxu0 %v68
  %294 = vmatpush1.msra.mxu0 %v67
  %295 = vmatprep.subr.mxu0 0.0
  %296 = vmatpush1.msra.mxu0 0.0
  %297 = vmatprep.subr.mxu0 0.0
  %298 = vmatpush1.msra.mxu0 0.0
  %299 = vmatprep.subr.mxu0 0.0
  %300 = vmatpush1.msra.mxu0 0.0
  %301 = vmatprep.subr.mxu0 0.0
  %302 = vmatpush1.msra.mxu0 0.0
  %303 = vmatprep.subr.mxu0 0.0
  %304 = vmatpush1.msra.mxu0 0.0
  %305 = vmatprep.subr.mxu0 0.0
  %306 = vmatpush1.msra.mxu0 0.0
  %307 = vmatprep.subr.mxu0 0.0
  %308 = vmatpush1.msra.mxu0 0.0
  %309 = vmatprep.subr.mxu0 0.0
  %310 = vmatpush1.msra.mxu0 0.0
  %311 = vmatprep.subr.mxu0 0.0
  %312 = vmatpush1.msra.mxu0 0.0
  %313 = vmatprep.subr.mxu0 0.0
  %314 = vmatpush1.msra.mxu0 0.0
  %315 = vmatprep.subr.mxu0 0.0
  %316 = vmatpush1.msra.mxu0 0.0
  %317 = vmatprep.subr.mxu0 0.0
  %318 = vmatpush1.msra.mxu0 0.0
  %319 = vmatprep.subr.mxu0 0.0
  %320 = vmatpush1.msra.mxu0 0.0
  %321 = vmatprep.subr.mxu0 0.0
  %322 = vmatpush1.msra.mxu0 0.0
  %323 = vmatprep.subr.mxu0 0.0
  %324 = vmatpush1.msra.mxu0 0.0
  %325 = vmatprep.subr.mxu0 0.0
  %326 = vmatpush1.msra.mxu0 0.0
  %327 = vmatprep.subr.mxu0 0.0
  %328 = vmatpush1.msra.mxu0 0.0
  %329 = vmatprep.subr.mxu0 0.0
  %330 = vmatpush1.msra.mxu0 0.0
  %331 = vmatprep.subr.mxu0 0.0
  %332 = vmatpush1.msra.mxu0 0.0
  %333 = vmatprep.subr.mxu0 0.0
  %334 = vmatpush1.msra.mxu0 0.0
  %335 = vmatprep.subr.mxu0 0.0
  %336 = vmatpush1.msra.mxu0 0.0
  %337 = vmatprep.subr.mxu0 0.0
  %338 = vmatpush1.msra.mxu0 0.0
  %339 = vmatprep.subr.mxu0 0.0
  %340 = vmatpush1.msra.mxu0 0.0
  %341 = vmatprep.subr.mxu0 0.0
  %342 = vmatpush1.msra.mxu0 0.0
  %343 = vmatprep.subr.mxu0 0.0
  %344 = vmatpush1.msra.mxu0 0.0
  %345 = vmatprep.subr.mxu0 0.0
  %346 = vmatpush1.msra.mxu0 0.0
  %347 = vmatprep.subr.mxu0 0.0
  %348 = vmatpush1.msra.mxu0 0.0
  %349 = vmatprep.subr.mxu0 0.0
  %350 = vmatpush1.msra.mxu0 0.0
  %351 = vmatprep.mubr.f32.mxu0 0.0
  %352 = vmatmul.mubr.f32.gmra.mrb[0].mxu0 %v285
  %v353 = vpop.f32.mrb[0].mxu0
  %v354 = vadd.f32 0.0, %v353
  %v355 = vpop.f32.mrb[0].mxu0
  %v356 = vadd.f32 0.0, %v355
  %357 = vdwg.mxu0
  %360 = vrot.lane.b32.xlu0 %v354, 32
  %v361 = vpop.permute.xlu0 %360
  %362 = vrot.lane.b32.xlu0 %v356, 32
  %v363 = vpop.permute.xlu0 %362
  %v364 = vsel %vm93, %v361, %v363
  %v366 = vsel %vm169, %v354, %v364
  %v367 = vadd.f32 %v366, %v69
  %v368 = vadd.f32 %v282, %v367
  %v369 = vxor.u32 %v368, 2147483648
  %v370 = vmul.f32 %v369, 1.442695
  %v371 = vpow.pop %v370
  %v372 = vadd.f32 %v371, 1.0
  %v373 = vrcp.pop %v372
  %v374 = vmul.f32 1.0, %v373
  %376 = vrot.lane.b32.xlu0 %v367, 64
  %v377 = vpop.permute.xlu0 %376
  %v379 = vmul.f32 %v374, %v377
  %381 = vrot.lane.b32.xlu0 %v379, 64
  %v382 = vpop.permute.xlu0 %381
  %v384 = vadd.f32 %v282, %v382
  %v385 = vtanh.pop %v384
  %v386 = vsub.f32 1.0, %v374
  %388 = vrot.lane.b32.xlu0 %v385, 96
  %v389 = vpop.permute.xlu0 %388
  %v391 = vmul.f32 %v386, %v389
  %v392 = vmul.f32 %v374, %v208
  %v393 = vadd.f32 %v391, %v392
  %v396 = vunpack.c.l.s4 1966171168
  %v397 = vunpack.c.0.s8 %v396
  %v398 = vlaneseq
  %v399 = vshrl.u32 %v398, 7
  %v400 = vsub.s32 %v397, %v399
  %v401 = vrot.slane %v393, %v400
  %v402 = vcombine.high %v401, %v401
  %v404 = vunpack.c.l.s4 1966171168
  %v405 = vunpack.c.0.s8 %v404
  %v406 = vlaneseq
  %v407 = vshrl.u32 %v406, 7
  %v408 = vsub.s32 %v405, %v407
  %v409 = vrot.slane %v401, %v408
  %v411 = vunpack.c.l.s4 1966171168
  %v412 = vunpack.c.0.s8 %v411
  %v413 = vlaneseq
  %v414 = vshrl.u32 %v413, 7
  %v415 = vsub.s32 %v412, %v414
  %v416 = vrot.slane %v402, %v415
  %v417 = vlaneseq
  %v418 = vshrl.u32 %v417, 7
  %v419 = vsub.s32 0, %v418
  %v420 = vrot.slane %v409, %v419
  %v421 = vlaneseq
  %v422 = vshrl.u32 %v421, 7
  %v423 = vsub.s32 0, %v422
  %v424 = vrot.slane %v416, %v423
  %425 = vrot.lane.b32.xlu0 %v420, 96
  %v426 = vpop.permute.xlu0 %425
  %427 = vrot.lane.b32.xlu0 %v424, 96
  %v428 = vpop.permute.xlu0 %427
  %431 = vst.msk [vmem:[%s4 + $0x1] sm:$0x1] %vm246, %v426
  %432 = vst.msk [vmem:[%s4 + $0x11] sm:$0x1] %vm246, %v428
  %v433 = vcombine.high %v409, %v409
  %v434 = vcombine.high %v416, %v416
  %v435 = vlaneseq
  %v436 = vshrl.u32 %v435, 7
  %v437 = vsub.s32 0, %v436
  %v438 = vrot.slane %v433, %v437
  %v439 = vlaneseq
  %v440 = vshrl.u32 %v439, 7
  %v441 = vsub.s32 0, %v440
  %v442 = vrot.slane %v434, %v441
  %443 = vrot.lane.b32.xlu0 %v438, 96
  %v444 = vpop.permute.xlu0 %443
  %445 = vrot.lane.b32.xlu0 %v442, 96
  %v446 = vpop.permute.xlu0 %445
  %449 = vst.msk [vmem:[%s52 + $0xe] sm:$0x1] %vm246, %v444
  %450 = vst.msk [vmem:[%s52 + $0x1e] sm:$0x1] %vm246, %v446
  %v451 = vld [vmem:[%s0 + $0x2] sm:$0x1]
  %v452 = vld [vmem:[%s0 + $0x12] sm:$0x1]
  %v453 = vld [vmem:[%s44 + $0xd] sm:$0x1]
  %v454 = vld [vmem:[%s44 + $0x1d] sm:$0x1]
  %v457 = vrot.slane %v452, 7
  %v458 = vsel %vm81, %v457, %v451
  %v462 = vrot.slane %v453, 6
  %v463 = vrot.slane %v454, 5
  %v464 = vsel %vm88, %v463, %v462
  %v466 = vsel %vm91, %v458, %v464
  %467 = vrot.lane.b32.xlu0 %v393, 96
  %v468 = vpop.permute.xlu0 %467
  %v469 = vsel %vm93, %v468, 0
  %471 = vmatprep.subr.mxu0 %v62
  %472 = vmatpush1.msra.mxu0 %v61
  %473 = vmatprep.subr.mxu0 %v64
  %474 = vmatpush1.msra.mxu0 %v63
  %475 = vmatprep.subr.mxu0 %v66
  %476 = vmatpush1.msra.mxu0 %v65
  %477 = vmatprep.subr.mxu0 %v68
  %478 = vmatpush1.msra.mxu0 %v67
  %479 = vmatprep.subr.mxu0 0.0
  %480 = vmatpush1.msra.mxu0 0.0
  %481 = vmatprep.subr.mxu0 0.0
  %482 = vmatpush1.msra.mxu0 0.0
  %483 = vmatprep.subr.mxu0 0.0
  %484 = vmatpush1.msra.mxu0 0.0
  %485 = vmatprep.subr.mxu0 0.0
  %486 = vmatpush1.msra.mxu0 0.0
  %487 = vmatprep.subr.mxu0 0.0
  %488 = vmatpush1.msra.mxu0 0.0
  %489 = vmatprep.subr.mxu0 0.0
  %490 = vmatpush1.msra.mxu0 0.0
  %491 = vmatprep.subr.mxu0 0.0
  %492 = vmatpush1.msra.mxu0 0.0
  %493 = vmatprep.subr.mxu0 0.0
  %494 = vmatpush1.msra.mxu0 0.0
  %495 = vmatprep.subr.mxu0 0.0
  %496 = vmatpush1.msra.mxu0 0.0
  %497 = vmatprep.subr.mxu0 0.0
  %498 = vmatpush1.msra.mxu0 0.0
  %499 = vmatprep.subr.mxu0 0.0
  %500 = vmatpush1.msra.mxu0 0.0
  %501 = vmatprep.subr.mxu0 0.0
  %502 = vmatpush1.msra.mxu0 0.0
  %503 = vmatprep.subr.mxu0 0.0
  %504 = vmatpush1.msra.mxu0 0.0
  %505 = vmatprep.subr.mxu0 0.0
  %506 = vmatpush1.msra.mxu0 0.0
  %507 = vmatprep.subr.mxu0 0.0
  %508 = vmatpush1.msra.mxu0 0.0
  %509 = vmatprep.subr.mxu0 0.0
  %510 = vmatpush1.msra.mxu0 0.0
  %511 = vmatprep.subr.mxu0 0.0
  %512 = vmatpush1.msra.mxu0 0.0
  %513 = vmatprep.subr.mxu0 0.0
  %514 = vmatpush1.msra.mxu0 0.0
  %515 = vmatprep.subr.mxu0 0.0
  %516 = vmatpush1.msra.mxu0 0.0
  %517 = vmatprep.subr.mxu0 0.0
  %518 = vmatpush1.msra.mxu0 0.0
  %519 = vmatprep.subr.mxu0 0.0
  %520 = vmatpush1.msra.mxu0 0.0
  %521 = vmatprep.subr.mxu0 0.0
  %522 = vmatpush1.msra.mxu0 0.0
  %523 = vmatprep.subr.mxu0 0.0
  %524 = vmatpush1.msra.mxu0 0.0
  %525 = vmatprep.subr.mxu0 0.0
  %526 = vmatpush1.msra.mxu0 0.0
  %527 = vmatprep.subr.mxu0 0.0
  %528 = vmatpush1.msra.mxu0 0.0
  %529 = vmatprep.subr.mxu0 0.0
  %530 = vmatpush1.msra.mxu0 0.0
  %531 = vmatprep.subr.mxu0 0.0
  %532 = vmatpush1.msra.mxu0 0.0
  %533 = vmatprep.subr.mxu0 0.0
  %534 = vmatpush1.msra.mxu0 0.0
  %535 = vmatprep.mubr.f32.mxu0 0.0
  %536 = vmatmul.mubr.f32.gmra.mrb[0].mxu0 %v469
  %v537 = vpop.f32.mrb[0].mxu0
  %v538 = vadd.f32 0.0, %v537
  %v539 = vpop.f32.mrb[0].mxu0
  %v540 = vadd.f32 0.0, %v539
  %541 = vdwg.mxu0
  %544 = vrot.lane.b32.xlu0 %v538, 32
  %v545 = vpop.permute.xlu0 %544
  %546 = vrot.lane.b32.xlu0 %v540, 32
  %v547 = vpop.permute.xlu0 %546
  %v548 = vsel %vm93, %v545, %v547
  %v550 = vsel %vm169, %v538, %v548
  %v551 = vadd.f32 %v550, %v69
  %v552 = vadd.f32 %v466, %v551
  %v553 = vxor.u32 %v552, 2147483648
  %v554 = vmul.f32 %v553, 1.442695
  %v555 = vpow.pop %v554
  %v556 = vadd.f32 %v555, 1.0
  %v557 = vrcp.pop %v556
  %v558 = vmul.f32 1.0, %v557
  %560 = vrot.lane.b32.xlu0 %v551, 64
  %v561 = vpop.permute.xlu0 %560
  %v563 = vmul.f32 %v558, %v561
  %565 = vrot.lane.b32.xlu0 %v563, 64
  %v566 = vpop.permute.xlu0 %565
  %v568 = vadd.f32 %v466, %v566
  %v569 = vtanh.pop %v568
  %v570 = vsub.f32 1.0, %v558
  %572 = vrot.lane.b32.xlu0 %v569, 96
  %v573 = vpop.permute.xlu0 %572
  %v575 = vmul.f32 %v570, %v573
  %v576 = vmul.f32 %v558, %v393
  %v577 = vadd.f32 %v575, %v576
  %v580 = vunpack.c.l.s4 1966171168
  %v581 = vunpack.c.0.s8 %v580
  %v582 = vlaneseq
  %v583 = vshrl.u32 %v582, 7
  %v584 = vsub.s32 %v581, %v583
  %v585 = vrot.slane %v577, %v584
  %v586 = vcombine.high %v585, %v585
  %v588 = vunpack.c.l.s4 1966171168
  %v589 = vunpack.c.0.s8 %v588
  %v590 = vlaneseq
  %v591 = vshrl.u32 %v590, 7
  %v592 = vsub.s32 %v589, %v591
  %v593 = vrot.slane %v585, %v592
  %v595 = vunpack.c.l.s4 1966171168
  %v596 = vunpack.c.0.s8 %v595
  %v597 = vlaneseq
  %v598 = vshrl.u32 %v597, 7
  %v599 = vsub.s32 %v596, %v598
  %v600 = vrot.slane %v586, %v599
  %v601 = vlaneseq
  %v602 = vshrl.u32 %v601, 7
  %v603 = vsub.s32 0, %v602
  %v604 = vrot.slane %v593, %v603
  %v605 = vlaneseq
  %v606 = vshrl.u32 %v605, 7
  %v607 = vsub.s32 0, %v606
  %v608 = vrot.slane %v600, %v607
  %609 = vrot.lane.b32.xlu0 %v604, 96
  %v610 = vpop.permute.xlu0 %609
  %611 = vrot.lane.b32.xlu0 %v608, 96
  %v612 = vpop.permute.xlu0 %611
  %615 = vst.msk [vmem:[%s4 + $0x2] sm:$0x1] %vm246, %v610
  %616 = vst.msk [vmem:[%s4 + $0x12] sm:$0x1] %vm246, %v612
  %v617 = vcombine.high %v593, %v593
  %v618 = vcombine.high %v600, %v600
  %v619 = vlaneseq
  %v620 = vshrl.u32 %v619, 7
  %v621 = vsub.s32 0, %v620
  %v622 = vrot.slane %v617, %v621
  %v623 = vlaneseq
  %v624 = vshrl.u32 %v623, 7
  %v625 = vsub.s32 0, %v624
  %v626 = vrot.slane %v618, %v625
  %627 = vrot.lane.b32.xlu0 %v622, 96
  %v628 = vpop.permute.xlu0 %627
  %629 = vrot.lane.b32.xlu0 %v626, 96
  %v630 = vpop.permute.xlu0 %629
  %633 = vst.msk [vmem:[%s52 + $0xd] sm:$0x1] %vm246, %v628
  %634 = vst.msk [vmem:[%s52 + $0x1d] sm:$0x1] %vm246, %v630
  %v635 = vld [vmem:[%s0 + $0x3] sm:$0x1]
  %v636 = vld [vmem:[%s0 + $0x13] sm:$0x1]
  %v637 = vld [vmem:[%s44 + $0xc] sm:$0x1]
  %v638 = vld [vmem:[%s44 + $0x1c] sm:$0x1]
  %v641 = vrot.slane %v636, 7
  %v642 = vsel %vm81, %v641, %v635
  %v646 = vrot.slane %v637, 6
  %v647 = vrot.slane %v638, 5
  %v648 = vsel %vm88, %v647, %v646
  %v650 = vsel %vm91, %v642, %v648
  %651 = vrot.lane.b32.xlu0 %v577, 96
  %v652 = vpop.permute.xlu0 %651
  %v653 = vsel %vm93, %v652, 0
  %655 = vmatprep.subr.mxu0 %v62
  %656 = vmatpush1.msra.mxu0 %v61
  %657 = vmatprep.subr.mxu0 %v64
  %658 = vmatpush1.msra.mxu0 %v63
  %659 = vmatprep.subr.mxu0 %v66
  %660 = vmatpush1.msra.mxu0 %v65
  %661 = vmatprep.subr.mxu0 %v68
  %662 = vmatpush1.msra.mxu0 %v67
  %663 = vmatprep.subr.mxu0 0.0
  %664 = vmatpush1.msra.mxu0 0.0
  %665 = vmatprep.subr.mxu0 0.0
  %666 = vmatpush1.msra.mxu0 0.0
  %667 = vmatprep.subr.mxu0 0.0
  %668 = vmatpush1.msra.mxu0 0.0
  %669 = vmatprep.subr.mxu0 0.0
  %670 = vmatpush1.msra.mxu0 0.0
  %671 = vmatprep.subr.mxu0 0.0
  %672 = vmatpush1.msra.mxu0 0.0
  %673 = vmatprep.subr.mxu0 0.0
  %674 = vmatpush1.msra.mxu0 0.0
  %675 = vmatprep.subr.mxu0 0.0
  %676 = vmatpush1.msra.mxu0 0.0
  %677 = vmatprep.subr.mxu0 0.0
  %678 = vmatpush1.msra.mxu0 0.0
  %679 = vmatprep.subr.mxu0 0.0
  %680 = vmatpush1.msra.mxu0 0.0
  %681 = vmatprep.subr.mxu0 0.0
  %682 = vmatpush1.msra.mxu0 0.0
  %683 = vmatprep.subr.mxu0 0.0
  %684 = vmatpush1.msra.mxu0 0.0
  %685 = vmatprep.subr.mxu0 0.0
  %686 = vmatpush1.msra.mxu0 0.0
  %687 = vmatprep.subr.mxu0 0.0
  %688 = vmatpush1.msra.mxu0 0.0
  %689 = vmatprep.subr.mxu0 0.0
  %690 = vmatpush1.msra.mxu0 0.0
  %691 = vmatprep.subr.mxu0 0.0
  %692 = vmatpush1.msra.mxu0 0.0
  %693 = vmatprep.subr.mxu0 0.0
  %694 = vmatpush1.msra.mxu0 0.0
  %695 = vmatprep.subr.mxu0 0.0
  %696 = vmatpush1.msra.mxu0 0.0
  %697 = vmatprep.subr.mxu0 0.0
  %698 = vmatpush1.msra.mxu0 0.0
  %699 = vmatprep.subr.mxu0 0.0
  %700 = vmatpush1.msra.mxu0 0.0
  %701 = vmatprep.subr.mxu0 0.0
  %702 = vmatpush1.msra.mxu0 0.0
  %703 = vmatprep.subr.mxu0 0.0
  %704 = vmatpush1.msra.mxu0 0.0
  %705 = vmatprep.subr.mxu0 0.0
  %706 = vmatpush1.msra.mxu0 0.0
  %707 = vmatprep.subr.mxu0 0.0
  %708 = vmatpush1.msra.mxu0 0.0
  %709 = vmatprep.subr.mxu0 0.0
  %710 = vmatpush1.msra.mxu0 0.0
  %711 = vmatprep.subr.mxu0 0.0
  %712 = vmatpush1.msra.mxu0 0.0
  %713 = vmatprep.subr.mxu0 0.0
  %714 = vmatpush1.msra.mxu0 0.0
  %715 = vmatprep.subr.mxu0 0.0
  %716 = vmatpush1.msra.mxu0 0.0
  %717 = vmatprep.subr.mxu0 0.0
  %718 = vmatpush1.msra.mxu0 0.0
  %719 = vmatprep.mubr.f32.mxu0 0.0
  %720 = vmatmul.mubr.f32.gmra.mrb[0].mxu0 %v653
  %v721 = vpop.f32.mrb[0].mxu0
  %v722 = vadd.f32 0.0, %v721
  %v723 = vpop.f32.mrb[0].mxu0
  %v724 = vadd.f32 0.0, %v723
  %725 = vdwg.mxu0
  %728 = vrot.lane.b32.xlu0 %v722, 32
  %v729 = vpop.permute.xlu0 %728
  %730 = vrot.lane.b32.xlu0 %v724, 32
  %v731 = vpop.permute.xlu0 %730
  %v732 = vsel %vm93, %v729, %v731
  %v734 = vsel %vm169, %v722, %v732
  %v735 = vadd.f32 %v734, %v69
  %v736 = vadd.f32 %v650, %v735
  %v737 = vxor.u32 %v736, 2147483648
  %v738 = vmul.f32 %v737, 1.442695
  %v739 = vpow.pop %v738
  %v740 = vadd.f32 %v739, 1.0
  %v741 = vrcp.pop %v740
  %v742 = vmul.f32 1.0, %v741
  %744 = vrot.lane.b32.xlu0 %v735, 64
  %v745 = vpop.permute.xlu0 %744
  %v747 = vmul.f32 %v742, %v745
  %749 = vrot.lane.b32.xlu0 %v747, 64
  %v750 = vpop.permute.xlu0 %749
  %v752 = vadd.f32 %v650, %v750
  %v753 = vtanh.pop %v752
  %v754 = vsub.f32 1.0, %v742
  %756 = vrot.lane.b32.xlu0 %v753, 96
  %v757 = vpop.permute.xlu0 %756
  %v759 = vmul.f32 %v754, %v757
  %v760 = vmul.f32 %v742, %v577
  %v761 = vadd.f32 %v759, %v760
  %v764 = vunpack.c.l.s4 1966171168
  %v765 = vunpack.c.0.s8 %v764
  %v766 = vlaneseq
  %v767 = vshrl.u32 %v766, 7
  %v768 = vsub.s32 %v765, %v767
  %v769 = vrot.slane %v761, %v768
  %v770 = vcombine.high %v769, %v769
  %v772 = vunpack.c.l.s4 1966171168
  %v773 = vunpack.c.0.s8 %v772
  %v774 = vlaneseq
  %v775 = vshrl.u32 %v774, 7
  %v776 = vsub.s32 %v773, %v775
  %v777 = vrot.slane %v769, %v776
  %v779 = vunpack.c.l.s4 1966171168
  %v780 = vunpack.c.0.s8 %v779
  %v781 = vlaneseq
  %v782 = vshrl.u32 %v781, 7
  %v783 = vsub.s32 %v780, %v782
  %v784 = vrot.slane %v770, %v783
  %v785 = vlaneseq
  %v786 = vshrl.u32 %v785, 7
  %v787 = vsub.s32 0, %v786
  %v788 = vrot.slane %v777, %v787
  %v789 = vlaneseq
  %v790 = vshrl.u32 %v789, 7
  %v791 = vsub.s32 0, %v790
  %v792 = vrot.slane %v784, %v791
  %793 = vrot.lane.b32.xlu0 %v788, 96
  %v794 = vpop.permute.xlu0 %793
  %795 = vrot.lane.b32.xlu0 %v792, 96
  %v796 = vpop.permute.xlu0 %795
  %799 = vst.msk [vmem:[%s4 + $0x3] sm:$0x1] %vm246, %v794
  %800 = vst.msk [vmem:[%s4 + $0x13] sm:$0x1] %vm246, %v796
  %v801 = vcombine.high %v777, %v777
  %v802 = vcombine.high %v784, %v784
  %v803 = vlaneseq
  %v804 = vshrl.u32 %v803, 7
  %v805 = vsub.s32 0, %v804
  %v806 = vrot.slane %v801, %v805
  %v807 = vlaneseq
  %v808 = vshrl.u32 %v807, 7
  %v809 = vsub.s32 0, %v808
  %v810 = vrot.slane %v802, %v809
  %811 = vrot.lane.b32.xlu0 %v806, 96
  %v812 = vpop.permute.xlu0 %811
  %813 = vrot.lane.b32.xlu0 %v810, 96
  %v814 = vpop.permute.xlu0 %813
  %817 = vst.msk [vmem:[%s52 + $0xc] sm:$0x1] %vm246, %v812
  %818 = vst.msk [vmem:[%s52 + $0x1c] sm:$0x1] %vm246, %v814
  %v819 = vld [vmem:[%s0 + $0x4] sm:$0x1]
  %v820 = vld [vmem:[%s0 + $0x14] sm:$0x1]
  %v821 = vld [vmem:[%s44 + $0xb] sm:$0x1]
  %v822 = vld [vmem:[%s44 + $0x1b] sm:$0x1]
  %v825 = vrot.slane %v820, 7
  %v826 = vsel %vm81, %v825, %v819
  %v830 = vrot.slane %v821, 6
  %v831 = vrot.slane %v822, 5
  %v832 = vsel %vm88, %v831, %v830
  %v834 = vsel %vm91, %v826, %v832
  %835 = vrot.lane.b32.xlu0 %v761, 96
  %v836 = vpop.permute.xlu0 %835
  %v837 = vsel %vm93, %v836, 0
  %839 = vmatprep.subr.mxu0 %v62
  %840 = vmatpush1.msra.mxu0 %v61
  %841 = vmatprep.subr.mxu0 %v64
  %842 = vmatpush1.msra.mxu0 %v63
  %843 = vmatprep.subr.mxu0 %v66
  %844 = vmatpush1.msra.mxu0 %v65
  %845 = vmatprep.subr.mxu0 %v68
  %846 = vmatpush1.msra.mxu0 %v67
  %847 = vmatprep.subr.mxu0 0.0
  %848 = vmatpush1.msra.mxu0 0.0
  %849 = vmatprep.subr.mxu0 0.0
  %850 = vmatpush1.msra.mxu0 0.0
  %851 = vmatprep.subr.mxu0 0.0
  %852 = vmatpush1.msra.mxu0 0.0
  %853 = vmatprep.subr.mxu0 0.0
  %854 = vmatpush1.msra.mxu0 0.0
  %855 = vmatprep.subr.mxu0 0.0
  %856 = vmatpush1.msra.mxu0 0.0
  %857 = vmatprep.subr.mxu0 0.0
  %858 = vmatpush1.msra.mxu0 0.0
  %859 = vmatprep.subr.mxu0 0.0
  %860 = vmatpush1.msra.mxu0 0.0
  %861 = vmatprep.subr.mxu0 0.0
  %862 = vmatpush1.msra.mxu0 0.0
  %863 = vmatprep.subr.mxu0 0.0
  %864 = vmatpush1.msra.mxu0 0.0
  %865 = vmatprep.subr.mxu0 0.0
  %866 = vmatpush1.msra.mxu0 0.0
  %867 = vmatprep.subr.mxu0 0.0
  %868 = vmatpush1.msra.mxu0 0.0
  %869 = vmatprep.subr.mxu0 0.0
  %870 = vmatpush1.msra.mxu0 0.0
  %871 = vmatprep.subr.mxu0 0.0
  %872 = vmatpush1.msra.mxu0 0.0
  %873 = vmatprep.subr.mxu0 0.0
  %874 = vmatpush1.msra.mxu0 0.0
  %875 = vmatprep.subr.mxu0 0.0
  %876 = vmatpush1.msra.mxu0 0.0
  %877 = vmatprep.subr.mxu0 0.0
  %878 = vmatpush1.msra.mxu0 0.0
  %879 = vmatprep.subr.mxu0 0.0
  %880 = vmatpush1.msra.mxu0 0.0
  %881 = vmatprep.subr.mxu0 0.0
  %882 = vmatpush1.msra.mxu0 0.0
  %883 = vmatprep.subr.mxu0 0.0
  %884 = vmatpush1.msra.mxu0 0.0
  %885 = vmatprep.subr.mxu0 0.0
  %886 = vmatpush1.msra.mxu0 0.0
  %887 = vmatprep.subr.mxu0 0.0
  %888 = vmatpush1.msra.mxu0 0.0
  %889 = vmatprep.subr.mxu0 0.0
  %890 = vmatpush1.msra.mxu0 0.0
  %891 = vmatprep.subr.mxu0 0.0
  %892 = vmatpush1.msra.mxu0 0.0
  %893 = vmatprep.subr.mxu0 0.0
  %894 = vmatpush1.msra.mxu0 0.0
  %895 = vmatprep.subr.mxu0 0.0
  %896 = vmatpush1.msra.mxu0 0.0
  %897 = vmatprep.subr.mxu0 0.0
  %898 = vmatpush1.msra.mxu0 0.0
  %899 = vmatprep.subr.mxu0 0.0
  %900 = vmatpush1.msra.mxu0 0.0
  %901 = vmatprep.subr.mxu0 0.0
  %902 = vmatpush1.msra.mxu0 0.0
  %903 = vmatprep.mubr.f32.mxu0 0.0
  %904 = vmatmul.mubr.f32.gmra.mrb[0].mxu0 %v837
  %v905 = vpop.f32.mrb[0].mxu0
  %v906 = vadd.f32 0.0, %v905
  %v907 = vpop.f32.mrb[0].mxu0
  %v908 = vadd.f32 0.0, %v907
  %909 = vdwg.mxu0
  %912 = vrot.lane.b32.xlu0 %v906, 32
  %v913 = vpop.permute.xlu0 %912
  %914 = vrot.lane.b32.xlu0 %v908, 32
  %v915 = vpop.permute.xlu0 %914
  %v916 = vsel %vm93, %v913, %v915
  %v918 = vsel %vm169, %v906, %v916
  %v919 = vadd.f32 %v918, %v69
  %v920 = vadd.f32 %v834, %v919
  %v921 = vxor.u32 %v920, 2147483648
  %v922 = vmul.f32 %v921, 1.442695
  %v923 = vpow.pop %v922
  %v924 = vadd.f32 %v923, 1.0
  %v925 = vrcp.pop %v924
  %v926 = vmul.f32 1.0, %v925
  %928 = vrot.lane.b32.xlu0 %v919, 64
  %v929 = vpop.permute.xlu0 %928
  %v931 = vmul.f32 %v926, %v929
  %933 = vrot.lane.b32.xlu0 %v931, 64
  %v934 = vpop.permute.xlu0 %933
  %v936 = vadd.f32 %v834, %v934
  %v937 = vtanh.pop %v936
  %v938 = vsub.f32 1.0, %v926
  %940 = vrot.lane.b32.xlu0 %v937, 96
  %v941 = vpop.permute.xlu0 %940
  %v943 = vmul.f32 %v938, %v941
  %v944 = vmul.f32 %v926, %v761
  %v945 = vadd.f32 %v943, %v944
  %v948 = vunpack.c.l.s4 1966171168
  %v949 = vunpack.c.0.s8 %v948
  %v950 = vlaneseq
  %v951 = vshrl.u32 %v950, 7
  %v952 = vsub.s32 %v949, %v951
  %v953 = vrot.slane %v945, %v952
  %v954 = vcombine.high %v953, %v953
  %v956 = vunpack.c.l.s4 1966171168
  %v957 = vunpack.c.0.s8 %v956
  %v958 = vlaneseq
  %v959 = vshrl.u32 %v958, 7
  %v960 = vsub.s32 %v957, %v959
  %v961 = vrot.slane %v953, %v960
  %v963 = vunpack.c.l.s4 1966171168
  %v964 = vunpack.c.0.s8 %v963
  %v965 = vlaneseq
  %v966 = vshrl.u32 %v965, 7
  %v967 = vsub.s32 %v964, %v966
  %v968 = vrot.slane %v954, %v967
  %v969 = vlaneseq
  %v970 = vshrl.u32 %v969, 7
  %v971 = vsub.s32 0, %v970
  %v972 = vrot.slane %v961, %v971
  %v973 = vlaneseq
  %v974 = vshrl.u32 %v973, 7
  %v975 = vsub.s32 0, %v974
  %v976 = vrot.slane %v968, %v975
  %977 = vrot.lane.b32.xlu0 %v972, 96
  %v978 = vpop.permute.xlu0 %977
  %979 = vrot.lane.b32.xlu0 %v976, 96
  %v980 = vpop.permute.xlu0 %979
  %983 = vst.msk [vmem:[%s4 + $0x4] sm:$0x1] %vm246, %v978
  %984 = vst.msk [vmem:[%s4 + $0x14] sm:$0x1] %vm246, %v980
  %v985 = vcombine.high %v961, %v961
  %v986 = vcombine.high %v968, %v968
  %v987 = vlaneseq
  %v988 = vshrl.u32 %v987, 7
  %v989 = vsub.s32 0, %v988
  %v990 = vrot.slane %v985, %v989
  %v991 = vlaneseq
  %v992 = vshrl.u32 %v991, 7
  %v993 = vsub.s32 0, %v992
  %v994 = vrot.slane %v986, %v993
  %995 = vrot.lane.b32.xlu0 %v990, 96
  %v996 = vpop.permute.xlu0 %995
  %997 = vrot.lane.b32.xlu0 %v994, 96
  %v998 = vpop.permute.xlu0 %997
  %1001 = vst.msk [vmem:[%s52 + $0xb] sm:$0x1] %vm246, %v996
  %1002 = vst.msk [vmem:[%s52 + $0x1b] sm:$0x1] %vm246, %v998
  %v1003 = vld [vmem:[%s0 + $0x5] sm:$0x1]
  %v1004 = vld [vmem:[%s0 + $0x15] sm:$0x1]
  %v1005 = vld [vmem:[%s44 + $0xa] sm:$0x1]
  %v1006 = vld [vmem:[%s44 + $0x1a] sm:$0x1]
  %v1009 = vrot.slane %v1004, 7
  %v1010 = vsel %vm81, %v1009, %v1003
  %v1014 = vrot.slane %v1005, 6
  %v1015 = vrot.slane %v1006, 5
  %v1016 = vsel %vm88, %v1015, %v1014
  %v1018 = vsel %vm91, %v1010, %v1016
  %1019 = vrot.lane.b32.xlu0 %v945, 96
  %v1020 = vpop.permute.xlu0 %1019
  %v1021 = vsel %vm93, %v1020, 0
  %1023 = vmatprep.subr.mxu0 %v62
  %1024 = vmatpush1.msra.mxu0 %v61
  %1025 = vmatprep.subr.mxu0 %v64
  %1026 = vmatpush1.msra.mxu0 %v63
  %1027 = vmatprep.subr.mxu0 %v66
  %1028 = vmatpush1.msra.mxu0 %v65
  %1029 = vmatprep.subr.mxu0 %v68
  %1030 = vmatpush1.msra.mxu0 %v67
  %1031 = vmatprep.subr.mxu0 0.0
  %1032 = vmatpush1.msra.mxu0 0.0
  %1033 = vmatprep.subr.mxu0 0.0
  %1034 = vmatpush1.msra.mxu0 0.0
  %1035 = vmatprep.subr.mxu0 0.0
  %1036 = vmatpush1.msra.mxu0 0.0
  %1037 = vmatprep.subr.mxu0 0.0
  %1038 = vmatpush1.msra.mxu0 0.0
  %1039 = vmatprep.subr.mxu0 0.0
  %1040 = vmatpush1.msra.mxu0 0.0
  %1041 = vmatprep.subr.mxu0 0.0
  %1042 = vmatpush1.msra.mxu0 0.0
  %1043 = vmatprep.subr.mxu0 0.0
  %1044 = vmatpush1.msra.mxu0 0.0
  %1045 = vmatprep.subr.mxu0 0.0
  %1046 = vmatpush1.msra.mxu0 0.0
  %1047 = vmatprep.subr.mxu0 0.0
  %1048 = vmatpush1.msra.mxu0 0.0
  %1049 = vmatprep.subr.mxu0 0.0
  %1050 = vmatpush1.msra.mxu0 0.0
  %1051 = vmatprep.subr.mxu0 0.0
  %1052 = vmatpush1.msra.mxu0 0.0
  %1053 = vmatprep.subr.mxu0 0.0
  %1054 = vmatpush1.msra.mxu0 0.0
  %1055 = vmatprep.subr.mxu0 0.0
  %1056 = vmatpush1.msra.mxu0 0.0
  %1057 = vmatprep.subr.mxu0 0.0
  %1058 = vmatpush1.msra.mxu0 0.0
  %1059 = vmatprep.subr.mxu0 0.0
  %1060 = vmatpush1.msra.mxu0 0.0
  %1061 = vmatprep.subr.mxu0 0.0
  %1062 = vmatpush1.msra.mxu0 0.0
  %1063 = vmatprep.subr.mxu0 0.0
  %1064 = vmatpush1.msra.mxu0 0.0
  %1065 = vmatprep.subr.mxu0 0.0
  %1066 = vmatpush1.msra.mxu0 0.0
  %1067 = vmatprep.subr.mxu0 0.0
  %1068 = vmatpush1.msra.mxu0 0.0
  %1069 = vmatprep.subr.mxu0 0.0
  %1070 = vmatpush1.msra.mxu0 0.0
  %1071 = vmatprep.subr.mxu0 0.0
  %1072 = vmatpush1.msra.mxu0 0.0
  %1073 = vmatprep.subr.mxu0 0.0
  %1074 = vmatpush1.msra.mxu0 0.0
  %1075 = vmatprep.subr.mxu0 0.0
  %1076 = vmatpush1.msra.mxu0 0.0
  %1077 = vmatprep.subr.mxu0 0.0
  %1078 = vmatpush1.msra.mxu0 0.0
  %1079 = vmatprep.subr.mxu0 0.0
  %1080 = vmatpush1.msra.mxu0 0.0
  %1081 = vmatprep.subr.mxu0 0.0
  %1082 = vmatpush1.msra.mxu0 0.0
  %1083 = vmatprep.subr.mxu0 0.0
  %1084 = vmatpush1.msra.mxu0 0.0
  %1085 = vmatprep.subr.mxu0 0.0
  %1086 = vmatpush1.msra.mxu0 0.0
  %1087 = vmatprep.mubr.f32.mxu0 0.0
  %1088 = vmatmul.mubr.f32.gmra.mrb[0].mxu0 %v1021
  %v1089 = vpop.f32.mrb[0].mxu0
  %v1090 = vadd.f32 0.0, %v1089
  %v1091 = vpop.f32.mrb[0].mxu0
  %v1092 = vadd.f32 0.0, %v1091
  %1093 = vdwg.mxu0
  %1096 = vrot.lane.b32.xlu0 %v1090, 32
  %v1097 = vpop.permute.xlu0 %1096
  %1098 = vrot.lane.b32.xlu0 %v1092, 32
  %v1099 = vpop.permute.xlu0 %1098
  %v1100 = vsel %vm93, %v1097, %v1099
  %v1102 = vsel %vm169, %v1090, %v1100
  %v1103 = vadd.f32 %v1102, %v69
  %v1104 = vadd.f32 %v1018, %v1103
  %v1105 = vxor.u32 %v1104, 2147483648
  %v1106 = vmul.f32 %v1105, 1.442695
  %v1107 = vpow.pop %v1106
  %v1108 = vadd.f32 %v1107, 1.0
  %v1109 = vrcp.pop %v1108
  %v1110 = vmul.f32 1.0, %v1109
  %1112 = vrot.lane.b32.xlu0 %v1103, 64
  %v1113 = vpop.permute.xlu0 %1112
  %v1115 = vmul.f32 %v1110, %v1113
  %1117 = vrot.lane.b32.xlu0 %v1115, 64
  %v1118 = vpop.permute.xlu0 %1117
  %v1120 = vadd.f32 %v1018, %v1118
  %v1121 = vtanh.pop %v1120
  %v1122 = vsub.f32 1.0, %v1110
  %1124 = vrot.lane.b32.xlu0 %v1121, 96
  %v1125 = vpop.permute.xlu0 %1124
  %v1127 = vmul.f32 %v1122, %v1125
  %v1128 = vmul.f32 %v1110, %v945
  %v1129 = vadd.f32 %v1127, %v1128
  %v1132 = vunpack.c.l.s4 1966171168
  %v1133 = vunpack.c.0.s8 %v1132
  %v1134 = vlaneseq
  %v1135 = vshrl.u32 %v1134, 7
  %v1136 = vsub.s32 %v1133, %v1135
  %v1137 = vrot.slane %v1129, %v1136
  %v1138 = vcombine.high %v1137, %v1137
  %v1140 = vunpack.c.l.s4 1966171168
  %v1141 = vunpack.c.0.s8 %v1140
  %v1142 = vlaneseq
  %v1143 = vshrl.u32 %v1142, 7
  %v1144 = vsub.s32 %v1141, %v1143
  %v1145 = vrot.slane %v1137, %v1144
  %v1147 = vunpack.c.l.s4 1966171168
  %v1148 = vunpack.c.0.s8 %v1147
  %v1149 = vlaneseq
  %v1150 = vshrl.u32 %v1149, 7
  %v1151 = vsub.s32 %v1148, %v1150
  %v1152 = vrot.slane %v1138, %v1151
  %v1153 = vlaneseq
  %v1154 = vshrl.u32 %v1153, 7
  %v1155 = vsub.s32 0, %v1154
  %v1156 = vrot.slane %v1145, %v1155
  %v1157 = vlaneseq
  %v1158 = vshrl.u32 %v1157, 7
  %v1159 = vsub.s32 0, %v1158
  %v1160 = vrot.slane %v1152, %v1159
  %1161 = vrot.lane.b32.xlu0 %v1156, 96
  %v1162 = vpop.permute.xlu0 %1161
  %1163 = vrot.lane.b32.xlu0 %v1160, 96
  %v1164 = vpop.permute.xlu0 %1163
  %1167 = vst.msk [vmem:[%s4 + $0x5] sm:$0x1] %vm246, %v1162
  %1168 = vst.msk [vmem:[%s4 + $0x15] sm:$0x1] %vm246, %v1164
  %v1169 = vcombine.high %v1145, %v1145
  %v1170 = vcombine.high %v1152, %v1152
  %v1171 = vlaneseq
  %v1172 = vshrl.u32 %v1171, 7
  %v1173 = vsub.s32 0, %v1172
  %v1174 = vrot.slane %v1169, %v1173
  %v1175 = vlaneseq
  %v1176 = vshrl.u32 %v1175, 7
  %v1177 = vsub.s32 0, %v1176
  %v1178 = vrot.slane %v1170, %v1177
  %1179 = vrot.lane.b32.xlu0 %v1174, 96
  %v1180 = vpop.permute.xlu0 %1179
  %1181 = vrot.lane.b32.xlu0 %v1178, 96
  %v1182 = vpop.permute.xlu0 %1181
  %1185 = vst.msk [vmem:[%s52 + $0xa] sm:$0x1] %vm246, %v1180
  %1186 = vst.msk [vmem:[%s52 + $0x1a] sm:$0x1] %vm246, %v1182
  %v1187 = vld [vmem:[%s0 + $0x6] sm:$0x1]
  %v1188 = vld [vmem:[%s0 + $0x16] sm:$0x1]
  %v1189 = vld [vmem:[%s44 + $0x9] sm:$0x1]
  %v1190 = vld [vmem:[%s44 + $0x19] sm:$0x1]
  %v1193 = vrot.slane %v1188, 7
  %v1194 = vsel %vm81, %v1193, %v1187
  %v1198 = vrot.slane %v1189, 6
  %v1199 = vrot.slane %v1190, 5
  %v1200 = vsel %vm88, %v1199, %v1198
  %v1202 = vsel %vm91, %v1194, %v1200
  %1203 = vrot.lane.b32.xlu0 %v1129, 96
  %v1204 = vpop.permute.xlu0 %1203
  %v1205 = vsel %vm93, %v1204, 0
  %1207 = vmatprep.subr.mxu0 %v62
  %1208 = vmatpush1.msra.mxu0 %v61
  %1209 = vmatprep.subr.mxu0 %v64
  %1210 = vmatpush1.msra.mxu0 %v63
  %1211 = vmatprep.subr.mxu0 %v66
  %1212 = vmatpush1.msra.mxu0 %v65
  %1213 = vmatprep.subr.mxu0 %v68
  %1214 = vmatpush1.msra.mxu0 %v67
  %1215 = vmatprep.subr.mxu0 0.0
  %1216 = vmatpush1.msra.mxu0 0.0
  %1217 = vmatprep.subr.mxu0 0.0
  %1218 = vmatpush1.msra.mxu0 0.0
  %1219 = vmatprep.subr.mxu0 0.0
  %1220 = vmatpush1.msra.mxu0 0.0
  %1221 = vmatprep.subr.mxu0 0.0
  %1222 = vmatpush1.msra.mxu0 0.0
  %1223 = vmatprep.subr.mxu0 0.0
  %1224 = vmatpush1.msra.mxu0 0.0
  %1225 = vmatprep.subr.mxu0 0.0
  %1226 = vmatpush1.msra.mxu0 0.0
  %1227 = vmatprep.subr.mxu0 0.0
  %1228 = vmatpush1.msra.mxu0 0.0
  %1229 = vmatprep.subr.mxu0 0.0
  %1230 = vmatpush1.msra.mxu0 0.0
  %1231 = vmatprep.subr.mxu0 0.0
  %1232 = vmatpush1.msra.mxu0 0.0
  %1233 = vmatprep.subr.mxu0 0.0
  %1234 = vmatpush1.msra.mxu0 0.0
  %1235 = vmatprep.subr.mxu0 0.0
  %1236 = vmatpush1.msra.mxu0 0.0
  %1237 = vmatprep.subr.mxu0 0.0
  %1238 = vmatpush1.msra.mxu0 0.0
  %1239 = vmatprep.subr.mxu0 0.0
  %1240 = vmatpush1.msra.mxu0 0.0
  %1241 = vmatprep.subr.mxu0 0.0
  %1242 = vmatpush1.msra.mxu0 0.0
  %1243 = vmatprep.subr.mxu0 0.0
  %1244 = vmatpush1.msra.mxu0 0.0
  %1245 = vmatprep.subr.mxu0 0.0
  %1246 = vmatpush1.msra.mxu0 0.0
  %1247 = vmatprep.subr.mxu0 0.0
  %1248 = vmatpush1.msra.mxu0 0.0
  %1249 = vmatprep.subr.mxu0 0.0
  %1250 = vmatpush1.msra.mxu0 0.0
  %1251 = vmatprep.subr.mxu0 0.0
  %1252 = vmatpush1.msra.mxu0 0.0
  %1253 = vmatprep.subr.mxu0 0.0
  %1254 = vmatpush1.msra.mxu0 0.0
  %1255 = vmatprep.subr.mxu0 0.0
  %1256 = vmatpush1.msra.mxu0 0.0
  %1257 = vmatprep.subr.mxu0 0.0
  %1258 = vmatpush1.msra.mxu0 0.0
  %1259 = vmatprep.subr.mxu0 0.0
  %1260 = vmatpush1.msra.mxu0 0.0
  %1261 = vmatprep.subr.mxu0 0.0
  %1262 = vmatpush1.msra.mxu0 0.0
  %1263 = vmatprep.subr.mxu0 0.0
  %1264 = vmatpush1.msra.mxu0 0.0
  %1265 = vmatprep.subr.mxu0 0.0
  %1266 = vmatpush1.msra.mxu0 0.0
  %1267 = vmatprep.subr.mxu0 0.0
  %1268 = vmatpush1.msra.mxu0 0.0
  %1269 = vmatprep.subr.mxu0 0.0
  %1270 = vmatpush1.msra.mxu0 0.0
  %1271 = vmatprep.mubr.f32.mxu0 0.0
  %1272 = vmatmul.mubr.f32.gmra.mrb[0].mxu0 %v1205
  %v1273 = vpop.f32.mrb[0].mxu0
  %v1274 = vadd.f32 0.0, %v1273
  %v1275 = vpop.f32.mrb[0].mxu0
  %v1276 = vadd.f32 0.0, %v1275
  %1277 = vdwg.mxu0
  %1280 = vrot.lane.b32.xlu0 %v1274, 32
  %v1281 = vpop.permute.xlu0 %1280
  %1282 = vrot.lane.b32.xlu0 %v1276, 32
  %v1283 = vpop.permute.xlu0 %1282
  %v1284 = vsel %vm93, %v1281, %v1283
  %v1286 = vsel %vm169, %v1274, %v1284
  %v1287 = vadd.f32 %v1286, %v69
  %v1288 = vadd.f32 %v1202, %v1287
  %v1289 = vxor.u32 %v1288, 2147483648
  %v1290 = vmul.f32 %v1289, 1.442695
  %v1291 = vpow.pop %v1290
  %v1292 = vadd.f32 %v1291, 1.0
  %v1293 = vrcp.pop %v1292
  %v1294 = vmul.f32 1.0, %v1293
  %1296 = vrot.lane.b32.xlu0 %v1287, 64
  %v1297 = vpop.permute.xlu0 %1296
  %v1299 = vmul.f32 %v1294, %v1297
  %1301 = vrot.lane.b32.xlu0 %v1299, 64
  %v1302 = vpop.permute.xlu0 %1301
  %v1304 = vadd.f32 %v1202, %v1302
  %v1305 = vtanh.pop %v1304
  %v1306 = vsub.f32 1.0, %v1294
  %1308 = vrot.lane.b32.xlu0 %v1305, 96
  %v1309 = vpop.permute.xlu0 %1308
  %v1311 = vmul.f32 %v1306, %v1309
  %v1312 = vmul.f32 %v1294, %v1129
  %v1313 = vadd.f32 %v1311, %v1312
  %v1316 = vunpack.c.l.s4 1966171168
  %v1317 = vunpack.c.0.s8 %v1316
  %v1318 = vlaneseq
  %v1319 = vshrl.u32 %v1318, 7
  %v1320 = vsub.s32 %v1317, %v1319
  %v1321 = vrot.slane %v1313, %v1320
  %v1322 = vcombine.high %v1321, %v1321
  %v1324 = vunpack.c.l.s4 1966171168
  %v1325 = vunpack.c.0.s8 %v1324
  %v1326 = vlaneseq
  %v1327 = vshrl.u32 %v1326, 7
  %v1328 = vsub.s32 %v1325, %v1327
  %v1329 = vrot.slane %v1321, %v1328
  %v1331 = vunpack.c.l.s4 1966171168
  %v1332 = vunpack.c.0.s8 %v1331
  %v1333 = vlaneseq
  %v1334 = vshrl.u32 %v1333, 7
  %v1335 = vsub.s32 %v1332, %v1334
  %v1336 = vrot.slane %v1322, %v1335
  %v1337 = vlaneseq
  %v1338 = vshrl.u32 %v1337, 7
  %v1339 = vsub.s32 0, %v1338
  %v1340 = vrot.slane %v1329, %v1339
  %v1341 = vlaneseq
  %v1342 = vshrl.u32 %v1341, 7
  %v1343 = vsub.s32 0, %v1342
  %v1344 = vrot.slane %v1336, %v1343
  %1345 = vrot.lane.b32.xlu0 %v1340, 96
  %v1346 = vpop.permute.xlu0 %1345
  %1347 = vrot.lane.b32.xlu0 %v1344, 96
  %v1348 = vpop.permute.xlu0 %1347
  %1351 = vst.msk [vmem:[%s4 + $0x6] sm:$0x1] %vm246, %v1346
  %1352 = vst.msk [vmem:[%s4 + $0x16] sm:$0x1] %vm246, %v1348
  %v1353 = vcombine.high %v1329, %v1329
  %v1354 = vcombine.high %v1336, %v1336
  %v1355 = vlaneseq
  %v1356 = vshrl.u32 %v1355, 7
  %v1357 = vsub.s32 0, %v1356
  %v1358 = vrot.slane %v1353, %v1357
  %v1359 = vlaneseq
  %v1360 = vshrl.u32 %v1359, 7
  %v1361 = vsub.s32 0, %v1360
  %v1362 = vrot.slane %v1354, %v1361
  %1363 = vrot.lane.b32.xlu0 %v1358, 96
  %v1364 = vpop.permute.xlu0 %1363
  %1365 = vrot.lane.b32.xlu0 %v1362, 96
  %v1366 = vpop.permute.xlu0 %1365
  %1369 = vst.msk [vmem:[%s52 + $0x9] sm:$0x1] %vm246, %v1364
  %1370 = vst.msk [vmem:[%s52 + $0x19] sm:$0x1] %vm246, %v1366
  %v1371 = vld [vmem:[%s0 + $0x7] sm:$0x1]
  %v1372 = vld [vmem:[%s0 + $0x17] sm:$0x1]
  %v1373 = vld [vmem:[%s44 + $0x8] sm:$0x1]
  %v1374 = vld [vmem:[%s44 + $0x18] sm:$0x1]
  %v1377 = vrot.slane %v1372, 7
  %v1378 = vsel %vm81, %v1377, %v1371
  %v1382 = vrot.slane %v1373, 6
  %v1383 = vrot.slane %v1374, 5
  %v1384 = vsel %vm88, %v1383, %v1382
  %v1386 = vsel %vm91, %v1378, %v1384
  %1387 = vrot.lane.b32.xlu0 %v1313, 96
  %v1388 = vpop.permute.xlu0 %1387
  %v1389 = vsel %vm93, %v1388, 0
  %1391 = vmatprep.subr.mxu0 %v62
  %1392 = vmatpush1.msra.mxu0 %v61
  %1393 = vmatprep.subr.mxu0 %v64
  %1394 = vmatpush1.msra.mxu0 %v63
  %1395 = vmatprep.subr.mxu0 %v66
  %1396 = vmatpush1.msra.mxu0 %v65
  %1397 = vmatprep.subr.mxu0 %v68
  %1398 = vmatpush1.msra.mxu0 %v67
  %1399 = vmatprep.subr.mxu0 0.0
  %1400 = vmatpush1.msra.mxu0 0.0
  %1401 = vmatprep.subr.mxu0 0.0
  %1402 = vmatpush1.msra.mxu0 0.0
  %1403 = vmatprep.subr.mxu0 0.0
  %1404 = vmatpush1.msra.mxu0 0.0
  %1405 = vmatprep.subr.mxu0 0.0
  %1406 = vmatpush1.msra.mxu0 0.0
  %1407 = vmatprep.subr.mxu0 0.0
  %1408 = vmatpush1.msra.mxu0 0.0
  %1409 = vmatprep.subr.mxu0 0.0
  %1410 = vmatpush1.msra.mxu0 0.0
  %1411 = vmatprep.subr.mxu0 0.0
  %1412 = vmatpush1.msra.mxu0 0.0
  %1413 = vmatprep.subr.mxu0 0.0
  %1414 = vmatpush1.msra.mxu0 0.0
  %1415 = vmatprep.subr.mxu0 0.0
  %1416 = vmatpush1.msra.mxu0 0.0
  %1417 = vmatprep.subr.mxu0 0.0
  %1418 = vmatpush1.msra.mxu0 0.0
  %1419 = vmatprep.subr.mxu0 0.0
  %1420 = vmatpush1.msra.mxu0 0.0
  %1421 = vmatprep.subr.mxu0 0.0
  %1422 = vmatpush1.msra.mxu0 0.0
  %1423 = vmatprep.subr.mxu0 0.0
  %1424 = vmatpush1.msra.mxu0 0.0
  %1425 = vmatprep.subr.mxu0 0.0
  %1426 = vmatpush1.msra.mxu0 0.0
  %1427 = vmatprep.subr.mxu0 0.0
  %1428 = vmatpush1.msra.mxu0 0.0
  %1429 = vmatprep.subr.mxu0 0.0
  %1430 = vmatpush1.msra.mxu0 0.0
  %1431 = vmatprep.subr.mxu0 0.0
  %1432 = vmatpush1.msra.mxu0 0.0
  %1433 = vmatprep.subr.mxu0 0.0
  %1434 = vmatpush1.msra.mxu0 0.0
  %1435 = vmatprep.subr.mxu0 0.0
  %1436 = vmatpush1.msra.mxu0 0.0
  %1437 = vmatprep.subr.mxu0 0.0
  %1438 = vmatpush1.msra.mxu0 0.0
  %1439 = vmatprep.subr.mxu0 0.0
  %1440 = vmatpush1.msra.mxu0 0.0
  %1441 = vmatprep.subr.mxu0 0.0
  %1442 = vmatpush1.msra.mxu0 0.0
  %1443 = vmatprep.subr.mxu0 0.0
  %1444 = vmatpush1.msra.mxu0 0.0
  %1445 = vmatprep.subr.mxu0 0.0
  %1446 = vmatpush1.msra.mxu0 0.0
  %1447 = vmatprep.subr.mxu0 0.0
  %1448 = vmatpush1.msra.mxu0 0.0
  %1449 = vmatprep.subr.mxu0 0.0
  %1450 = vmatpush1.msra.mxu0 0.0
  %1451 = vmatprep.subr.mxu0 0.0
  %1452 = vmatpush1.msra.mxu0 0.0
  %1453 = vmatprep.subr.mxu0 0.0
  %1454 = vmatpush1.msra.mxu0 0.0
  %1455 = vmatprep.mubr.f32.mxu0 0.0
  %1456 = vmatmul.mubr.f32.gmra.mrb[0].mxu0 %v1389
  %v1457 = vpop.f32.mrb[0].mxu0
  %v1458 = vadd.f32 0.0, %v1457
  %v1459 = vpop.f32.mrb[0].mxu0
  %v1460 = vadd.f32 0.0, %v1459
  %1461 = vdwg.mxu0
  %1464 = vrot.lane.b32.xlu0 %v1458, 32
  %v1465 = vpop.permute.xlu0 %1464
  %1466 = vrot.lane.b32.xlu0 %v1460, 32
  %v1467 = vpop.permute.xlu0 %1466
  %v1468 = vsel %vm93, %v1465, %v1467
  %v1470 = vsel %vm169, %v1458, %v1468
  %v1471 = vadd.f32 %v1470, %v69
  %v1472 = vadd.f32 %v1386, %v1471
  %v1473 = vxor.u32 %v1472, 2147483648
  %v1474 = vmul.f32 %v1473, 1.442695
  %v1475 = vpow.pop %v1474
  %v1476 = vadd.f32 %v1475, 1.0
  %v1477 = vrcp.pop %v1476
  %v1478 = vmul.f32 1.0, %v1477
  %1480 = vrot.lane.b32.xlu0 %v1471, 64
  %v1481 = vpop.permute.xlu0 %1480
  %v1483 = vmul.f32 %v1478, %v1481
  %1485 = vrot.lane.b32.xlu0 %v1483, 64
  %v1486 = vpop.permute.xlu0 %1485
  %v1488 = vadd.f32 %v1386, %v1486
  %v1489 = vtanh.pop %v1488
  %v1490 = vsub.f32 1.0, %v1478
  %1492 = vrot.lane.b32.xlu0 %v1489, 96
  %v1493 = vpop.permute.xlu0 %1492
  %v1495 = vmul.f32 %v1490, %v1493
  %v1496 = vmul.f32 %v1478, %v1313
  %v1497 = vadd.f32 %v1495, %v1496
  %v1500 = vunpack.c.l.s4 1966171168
  %v1501 = vunpack.c.0.s8 %v1500
  %v1502 = vlaneseq
  %v1503 = vshrl.u32 %v1502, 7
  %v1504 = vsub.s32 %v1501, %v1503
  %v1505 = vrot.slane %v1497, %v1504
  %v1506 = vcombine.high %v1505, %v1505
  %v1508 = vunpack.c.l.s4 1966171168
  %v1509 = vunpack.c.0.s8 %v1508
  %v1510 = vlaneseq
  %v1511 = vshrl.u32 %v1510, 7
  %v1512 = vsub.s32 %v1509, %v1511
  %v1513 = vrot.slane %v1505, %v1512
  %v1515 = vunpack.c.l.s4 1966171168
  %v1516 = vunpack.c.0.s8 %v1515
  %v1517 = vlaneseq
  %v1518 = vshrl.u32 %v1517, 7
  %v1519 = vsub.s32 %v1516, %v1518
  %v1520 = vrot.slane %v1506, %v1519
  %v1521 = vlaneseq
  %v1522 = vshrl.u32 %v1521, 7
  %v1523 = vsub.s32 0, %v1522
  %v1524 = vrot.slane %v1513, %v1523
  %v1525 = vlaneseq
  %v1526 = vshrl.u32 %v1525, 7
  %v1527 = vsub.s32 0, %v1526
  %v1528 = vrot.slane %v1520, %v1527
  %1529 = vrot.lane.b32.xlu0 %v1524, 96
  %v1530 = vpop.permute.xlu0 %1529
  %1531 = vrot.lane.b32.xlu0 %v1528, 96
  %v1532 = vpop.permute.xlu0 %1531
  %1535 = vst.msk [vmem:[%s4 + $0x7] sm:$0x1] %vm246, %v1530
  %1536 = vst.msk [vmem:[%s4 + $0x17] sm:$0x1] %vm246, %v1532
  %v1537 = vcombine.high %v1513, %v1513
  %v1538 = vcombine.high %v1520, %v1520
  %v1539 = vlaneseq
  %v1540 = vshrl.u32 %v1539, 7
  %v1541 = vsub.s32 0, %v1540
  %v1542 = vrot.slane %v1537, %v1541
  %v1543 = vlaneseq
  %v1544 = vshrl.u32 %v1543, 7
  %v1545 = vsub.s32 0, %v1544
  %v1546 = vrot.slane %v1538, %v1545
  %1547 = vrot.lane.b32.xlu0 %v1542, 96
  %v1548 = vpop.permute.xlu0 %1547
  %1549 = vrot.lane.b32.xlu0 %v1546, 96
  %v1550 = vpop.permute.xlu0 %1549
  %1553 = vst.msk [vmem:[%s52 + $0x8] sm:$0x1] %vm246, %v1548
  %1554 = vst.msk [vmem:[%s52 + $0x18] sm:$0x1] %vm246, %v1550
  %v1555 = vld [vmem:[%s0 + $0x8] sm:$0x1]
  %v1556 = vld [vmem:[%s0 + $0x18] sm:$0x1]
  %v1557 = vld [vmem:[%s44 + $0x7] sm:$0x1]
  %v1558 = vld [vmem:[%s44 + $0x17] sm:$0x1]
  %v1561 = vrot.slane %v1556, 7
  %v1562 = vsel %vm81, %v1561, %v1555
  %v1566 = vrot.slane %v1557, 6
  %v1567 = vrot.slane %v1558, 5
  %v1568 = vsel %vm88, %v1567, %v1566
  %v1570 = vsel %vm91, %v1562, %v1568
  %1571 = vrot.lane.b32.xlu0 %v1497, 96
  %v1572 = vpop.permute.xlu0 %1571
  %v1573 = vsel %vm93, %v1572, 0
  %1575 = vmatprep.subr.mxu0 %v62
  %1576 = vmatpush1.msra.mxu0 %v61
  %1577 = vmatprep.subr.mxu0 %v64
  %1578 = vmatpush1.msra.mxu0 %v63
  %1579 = vmatprep.subr.mxu0 %v66
  %1580 = vmatpush1.msra.mxu0 %v65
  %1581 = vmatprep.subr.mxu0 %v68
  %1582 = vmatpush1.msra.mxu0 %v67
  %1583 = vmatprep.subr.mxu0 0.0
  %1584 = vmatpush1.msra.mxu0 0.0
  %1585 = vmatprep.subr.mxu0 0.0
  %1586 = vmatpush1.msra.mxu0 0.0
  %1587 = vmatprep.subr.mxu0 0.0
  %1588 = vmatpush1.msra.mxu0 0.0
  %1589 = vmatprep.subr.mxu0 0.0
  %1590 = vmatpush1.msra.mxu0 0.0
  %1591 = vmatprep.subr.mxu0 0.0
  %1592 = vmatpush1.msra.mxu0 0.0
  %1593 = vmatprep.subr.mxu0 0.0
  %1594 = vmatpush1.msra.mxu0 0.0
  %1595 = vmatprep.subr.mxu0 0.0
  %1596 = vmatpush1.msra.mxu0 0.0
  %1597 = vmatprep.subr.mxu0 0.0
  %1598 = vmatpush1.msra.mxu0 0.0
  %1599 = vmatprep.subr.mxu0 0.0
  %1600 = vmatpush1.msra.mxu0 0.0
  %1601 = vmatprep.subr.mxu0 0.0
  %1602 = vmatpush1.msra.mxu0 0.0
  %1603 = vmatprep.subr.mxu0 0.0
  %1604 = vmatpush1.msra.mxu0 0.0
  %1605 = vmatprep.subr.mxu0 0.0
  %1606 = vmatpush1.msra.mxu0 0.0
  %1607 = vmatprep.subr.mxu0 0.0
  %1608 = vmatpush1.msra.mxu0 0.0
  %1609 = vmatprep.subr.mxu0 0.0
  %1610 = vmatpush1.msra.mxu0 0.0
  %1611 = vmatprep.subr.mxu0 0.0
  %1612 = vmatpush1.msra.mxu0 0.0
  %1613 = vmatprep.subr.mxu0 0.0
  %1614 = vmatpush1.msra.mxu0 0.0
  %1615 = vmatprep.subr.mxu0 0.0
  %1616 = vmatpush1.msra.mxu0 0.0
  %1617 = vmatprep.subr.mxu0 0.0
  %1618 = vmatpush1.msra.mxu0 0.0
  %1619 = vmatprep.subr.mxu0 0.0
  %1620 = vmatpush1.msra.mxu0 0.0
  %1621 = vmatprep.subr.mxu0 0.0
  %1622 = vmatpush1.msra.mxu0 0.0
  %1623 = vmatprep.subr.mxu0 0.0
  %1624 = vmatpush1.msra.mxu0 0.0
  %1625 = vmatprep.subr.mxu0 0.0
  %1626 = vmatpush1.msra.mxu0 0.0
  %1627 = vmatprep.subr.mxu0 0.0
  %1628 = vmatpush1.msra.mxu0 0.0
  %1629 = vmatprep.subr.mxu0 0.0
  %1630 = vmatpush1.msra.mxu0 0.0
  %1631 = vmatprep.subr.mxu0 0.0
  %1632 = vmatpush1.msra.mxu0 0.0
  %1633 = vmatprep.subr.mxu0 0.0
  %1634 = vmatpush1.msra.mxu0 0.0
  %1635 = vmatprep.subr.mxu0 0.0
  %1636 = vmatpush1.msra.mxu0 0.0
  %1637 = vmatprep.subr.mxu0 0.0
  %1638 = vmatpush1.msra.mxu0 0.0
  %1639 = vmatprep.mubr.f32.mxu0 0.0
  %1640 = vmatmul.mubr.f32.gmra.mrb[0].mxu0 %v1573
  %v1641 = vpop.f32.mrb[0].mxu0
  %v1642 = vadd.f32 0.0, %v1641
  %v1643 = vpop.f32.mrb[0].mxu0
  %v1644 = vadd.f32 0.0, %v1643
  %1645 = vdwg.mxu0
  %1648 = vrot.lane.b32.xlu0 %v1642, 32
  %v1649 = vpop.permute.xlu0 %1648
  %1650 = vrot.lane.b32.xlu0 %v1644, 32
  %v1651 = vpop.permute.xlu0 %1650
  %v1652 = vsel %vm93, %v1649, %v1651
  %v1654 = vsel %vm169, %v1642, %v1652
  %v1655 = vadd.f32 %v1654, %v69
  %v1656 = vadd.f32 %v1570, %v1655
  %v1657 = vxor.u32 %v1656, 2147483648
  %v1658 = vmul.f32 %v1657, 1.442695
  %v1659 = vpow.pop %v1658
  %v1660 = vadd.f32 %v1659, 1.0
  %v1661 = vrcp.pop %v1660
  %v1662 = vmul.f32 1.0, %v1661
  %1664 = vrot.lane.b32.xlu0 %v1655, 64
  %v1665 = vpop.permute.xlu0 %1664
  %v1667 = vmul.f32 %v1662, %v1665
  %1669 = vrot.lane.b32.xlu0 %v1667, 64
  %v1670 = vpop.permute.xlu0 %1669
  %v1672 = vadd.f32 %v1570, %v1670
  %v1673 = vtanh.pop %v1672
  %v1674 = vsub.f32 1.0, %v1662
  %1676 = vrot.lane.b32.xlu0 %v1673, 96
  %v1677 = vpop.permute.xlu0 %1676
  %v1679 = vmul.f32 %v1674, %v1677
  %v1680 = vmul.f32 %v1662, %v1497
  %v1681 = vadd.f32 %v1679, %v1680
  %v1684 = vunpack.c.l.s4 1966171168
  %v1685 = vunpack.c.0.s8 %v1684
  %v1686 = vlaneseq
  %v1687 = vshrl.u32 %v1686, 7
  %v1688 = vsub.s32 %v1685, %v1687
  %v1689 = vrot.slane %v1681, %v1688
  %v1690 = vcombine.high %v1689, %v1689
  %v1692 = vunpack.c.l.s4 1966171168
  %v1693 = vunpack.c.0.s8 %v1692
  %v1694 = vlaneseq
  %v1695 = vshrl.u32 %v1694, 7
  %v1696 = vsub.s32 %v1693, %v1695
  %v1697 = vrot.slane %v1689, %v1696
  %v1699 = vunpack.c.l.s4 1966171168
  %v1700 = vunpack.c.0.s8 %v1699
  %v1701 = vlaneseq
  %v1702 = vshrl.u32 %v1701, 7
  %v1703 = vsub.s32 %v1700, %v1702
  %v1704 = vrot.slane %v1690, %v1703
  %v1705 = vlaneseq
  %v1706 = vshrl.u32 %v1705, 7
  %v1707 = vsub.s32 0, %v1706
  %v1708 = vrot.slane %v1697, %v1707
  %v1709 = vlaneseq
  %v1710 = vshrl.u32 %v1709, 7
  %v1711 = vsub.s32 0, %v1710
  %v1712 = vrot.slane %v1704, %v1711
  %1713 = vrot.lane.b32.xlu0 %v1708, 96
  %v1714 = vpop.permute.xlu0 %1713
  %1715 = vrot.lane.b32.xlu0 %v1712, 96
  %v1716 = vpop.permute.xlu0 %1715
  %1719 = vst.msk [vmem:[%s4 + $0x8] sm:$0x1] %vm246, %v1714
  %1720 = vst.msk [vmem:[%s4 + $0x18] sm:$0x1] %vm246, %v1716
  %v1721 = vcombine.high %v1697, %v1697
  %v1722 = vcombine.high %v1704, %v1704
  %v1723 = vlaneseq
  %v1724 = vshrl.u32 %v1723, 7
  %v1725 = vsub.s32 0, %v1724
  %v1726 = vrot.slane %v1721, %v1725
  %v1727 = vlaneseq
  %v1728 = vshrl.u32 %v1727, 7
  %v1729 = vsub.s32 0, %v1728
  %v1730 = vrot.slane %v1722, %v1729
  %1731 = vrot.lane.b32.xlu0 %v1726, 96
  %v1732 = vpop.permute.xlu0 %1731
  %1733 = vrot.lane.b32.xlu0 %v1730, 96
  %v1734 = vpop.permute.xlu0 %1733
  %1737 = vst.msk [vmem:[%s52 + $0x7] sm:$0x1] %vm246, %v1732
  %1738 = vst.msk [vmem:[%s52 + $0x17] sm:$0x1] %vm246, %v1734
  %v1739 = vld [vmem:[%s0 + $0x9] sm:$0x1]
  %v1740 = vld [vmem:[%s0 + $0x19] sm:$0x1]
  %v1741 = vld [vmem:[%s44 + $0x6] sm:$0x1]
  %v1742 = vld [vmem:[%s44 + $0x16] sm:$0x1]
  %v1745 = vrot.slane %v1740, 7
  %v1746 = vsel %vm81, %v1745, %v1739
  %v1750 = vrot.slane %v1741, 6
  %v1751 = vrot.slane %v1742, 5
  %v1752 = vsel %vm88, %v1751, %v1750
  %v1754 = vsel %vm91, %v1746, %v1752
  %1755 = vrot.lane.b32.xlu0 %v1681, 96
  %v1756 = vpop.permute.xlu0 %1755
  %v1757 = vsel %vm93, %v1756, 0
  %1759 = vmatprep.subr.mxu0 %v62
  %1760 = vmatpush1.msra.mxu0 %v61
  %1761 = vmatprep.subr.mxu0 %v64
  %1762 = vmatpush1.msra.mxu0 %v63
  %1763 = vmatprep.subr.mxu0 %v66
  %1764 = vmatpush1.msra.mxu0 %v65
  %1765 = vmatprep.subr.mxu0 %v68
  %1766 = vmatpush1.msra.mxu0 %v67
  %1767 = vmatprep.subr.mxu0 0.0
  %1768 = vmatpush1.msra.mxu0 0.0
  %1769 = vmatprep.subr.mxu0 0.0
  %1770 = vmatpush1.msra.mxu0 0.0
  %1771 = vmatprep.subr.mxu0 0.0
  %1772 = vmatpush1.msra.mxu0 0.0
  %1773 = vmatprep.subr.mxu0 0.0
  %1774 = vmatpush1.msra.mxu0 0.0
  %1775 = vmatprep.subr.mxu0 0.0
  %1776 = vmatpush1.msra.mxu0 0.0
  %1777 = vmatprep.subr.mxu0 0.0
  %1778 = vmatpush1.msra.mxu0 0.0
  %1779 = vmatprep.subr.mxu0 0.0
  %1780 = vmatpush1.msra.mxu0 0.0
  %1781 = vmatprep.subr.mxu0 0.0
  %1782 = vmatpush1.msra.mxu0 0.0
  %1783 = vmatprep.subr.mxu0 0.0
  %1784 = vmatpush1.msra.mxu0 0.0
  %1785 = vmatprep.subr.mxu0 0.0
  %1786 = vmatpush1.msra.mxu0 0.0
  %1787 = vmatprep.subr.mxu0 0.0
  %1788 = vmatpush1.msra.mxu0 0.0
  %1789 = vmatprep.subr.mxu0 0.0
  %1790 = vmatpush1.msra.mxu0 0.0
  %1791 = vmatprep.subr.mxu0 0.0
  %1792 = vmatpush1.msra.mxu0 0.0
  %1793 = vmatprep.subr.mxu0 0.0
  %1794 = vmatpush1.msra.mxu0 0.0
  %1795 = vmatprep.subr.mxu0 0.0
  %1796 = vmatpush1.msra.mxu0 0.0
  %1797 = vmatprep.subr.mxu0 0.0
  %1798 = vmatpush1.msra.mxu0 0.0
  %1799 = vmatprep.subr.mxu0 0.0
  %1800 = vmatpush1.msra.mxu0 0.0
  %1801 = vmatprep.subr.mxu0 0.0
  %1802 = vmatpush1.msra.mxu0 0.0
  %1803 = vmatprep.subr.mxu0 0.0
  %1804 = vmatpush1.msra.mxu0 0.0
  %1805 = vmatprep.subr.mxu0 0.0
  %1806 = vmatpush1.msra.mxu0 0.0
  %1807 = vmatprep.subr.mxu0 0.0
  %1808 = vmatpush1.msra.mxu0 0.0
  %1809 = vmatprep.subr.mxu0 0.0
  %1810 = vmatpush1.msra.mxu0 0.0
  %1811 = vmatprep.subr.mxu0 0.0
  %1812 = vmatpush1.msra.mxu0 0.0
  %1813 = vmatprep.subr.mxu0 0.0
  %1814 = vmatpush1.msra.mxu0 0.0
  %1815 = vmatprep.subr.mxu0 0.0
  %1816 = vmatpush1.msra.mxu0 0.0
  %1817 = vmatprep.subr.mxu0 0.0
  %1818 = vmatpush1.msra.mxu0 0.0
  %1819 = vmatprep.subr.mxu0 0.0
  %1820 = vmatpush1.msra.mxu0 0.0
  %1821 = vmatprep.subr.mxu0 0.0
  %1822 = vmatpush1.msra.mxu0 0.0
  %1823 = vmatprep.mubr.f32.mxu0 0.0
  %1824 = vmatmul.mubr.f32.gmra.mrb[0].mxu0 %v1757
  %v1825 = vpop.f32.mrb[0].mxu0
  %v1826 = vadd.f32 0.0, %v1825
  %v1827 = vpop.f32.mrb[0].mxu0
  %v1828 = vadd.f32 0.0, %v1827
  %1829 = vdwg.mxu0
  %1832 = vrot.lane.b32.xlu0 %v1826, 32
  %v1833 = vpop.permute.xlu0 %1832
  %1834 = vrot.lane.b32.xlu0 %v1828, 32
  %v1835 = vpop.permute.xlu0 %1834
  %v1836 = vsel %vm93, %v1833, %v1835
  %v1838 = vsel %vm169, %v1826, %v1836
  %v1839 = vadd.f32 %v1838, %v69
  %v1840 = vadd.f32 %v1754, %v1839
  %v1841 = vxor.u32 %v1840, 2147483648
  %v1842 = vmul.f32 %v1841, 1.442695
  %v1843 = vpow.pop %v1842
  %v1844 = vadd.f32 %v1843, 1.0
  %v1845 = vrcp.pop %v1844
  %v1846 = vmul.f32 1.0, %v1845
  %1848 = vrot.lane.b32.xlu0 %v1839, 64
  %v1849 = vpop.permute.xlu0 %1848
  %v1851 = vmul.f32 %v1846, %v1849
  %1853 = vrot.lane.b32.xlu0 %v1851, 64
  %v1854 = vpop.permute.xlu0 %1853
  %v1856 = vadd.f32 %v1754, %v1854
  %v1857 = vtanh.pop %v1856
  %v1858 = vsub.f32 1.0, %v1846
  %1860 = vrot.lane.b32.xlu0 %v1857, 96
  %v1861 = vpop.permute.xlu0 %1860
  %v1863 = vmul.f32 %v1858, %v1861
  %v1864 = vmul.f32 %v1846, %v1681
  %v1865 = vadd.f32 %v1863, %v1864
  %v1868 = vunpack.c.l.s4 1966171168
  %v1869 = vunpack.c.0.s8 %v1868
  %v1870 = vlaneseq
  %v1871 = vshrl.u32 %v1870, 7
  %v1872 = vsub.s32 %v1869, %v1871
  %v1873 = vrot.slane %v1865, %v1872
  %v1874 = vcombine.high %v1873, %v1873
  %v1876 = vunpack.c.l.s4 1966171168
  %v1877 = vunpack.c.0.s8 %v1876
  %v1878 = vlaneseq
  %v1879 = vshrl.u32 %v1878, 7
  %v1880 = vsub.s32 %v1877, %v1879
  %v1881 = vrot.slane %v1873, %v1880
  %v1883 = vunpack.c.l.s4 1966171168
  %v1884 = vunpack.c.0.s8 %v1883
  %v1885 = vlaneseq
  %v1886 = vshrl.u32 %v1885, 7
  %v1887 = vsub.s32 %v1884, %v1886
  %v1888 = vrot.slane %v1874, %v1887
  %v1889 = vlaneseq
  %v1890 = vshrl.u32 %v1889, 7
  %v1891 = vsub.s32 0, %v1890
  %v1892 = vrot.slane %v1881, %v1891
  %v1893 = vlaneseq
  %v1894 = vshrl.u32 %v1893, 7
  %v1895 = vsub.s32 0, %v1894
  %v1896 = vrot.slane %v1888, %v1895
  %1897 = vrot.lane.b32.xlu0 %v1892, 96
  %v1898 = vpop.permute.xlu0 %1897
  %1899 = vrot.lane.b32.xlu0 %v1896, 96
  %v1900 = vpop.permute.xlu0 %1899
  %1903 = vst.msk [vmem:[%s4 + $0x9] sm:$0x1] %vm246, %v1898
  %1904 = vst.msk [vmem:[%s4 + $0x19] sm:$0x1] %vm246, %v1900
  %v1905 = vcombine.high %v1881, %v1881
  %v1906 = vcombine.high %v1888, %v1888
  %v1907 = vlaneseq
  %v1908 = vshrl.u32 %v1907, 7
  %v1909 = vsub.s32 0, %v1908
  %v1910 = vrot.slane %v1905, %v1909
  %v1911 = vlaneseq
  %v1912 = vshrl.u32 %v1911, 7
  %v1913 = vsub.s32 0, %v1912
  %v1914 = vrot.slane %v1906, %v1913
  %1915 = vrot.lane.b32.xlu0 %v1910, 96
  %v1916 = vpop.permute.xlu0 %1915
  %1917 = vrot.lane.b32.xlu0 %v1914, 96
  %v1918 = vpop.permute.xlu0 %1917
  %1921 = vst.msk [vmem:[%s52 + $0x6] sm:$0x1] %vm246, %v1916
  %1922 = vst.msk [vmem:[%s52 + $0x16] sm:$0x1] %vm246, %v1918
  %v1923 = vld [vmem:[%s0 + $0xa] sm:$0x1]
  %v1924 = vld [vmem:[%s0 + $0x1a] sm:$0x1]
  %v1925 = vld [vmem:[%s44 + $0x5] sm:$0x1]
  %v1926 = vld [vmem:[%s44 + $0x15] sm:$0x1]
  %v1929 = vrot.slane %v1924, 7
  %v1930 = vsel %vm81, %v1929, %v1923
  %v1934 = vrot.slane %v1925, 6
  %v1935 = vrot.slane %v1926, 5
  %v1936 = vsel %vm88, %v1935, %v1934
  %v1938 = vsel %vm91, %v1930, %v1936
  %1939 = vrot.lane.b32.xlu0 %v1865, 96
  %v1940 = vpop.permute.xlu0 %1939
  %v1941 = vsel %vm93, %v1940, 0
  %1943 = vmatprep.subr.mxu0 %v62
  %1944 = vmatpush1.msra.mxu0 %v61
  %1945 = vmatprep.subr.mxu0 %v64
  %1946 = vmatpush1.msra.mxu0 %v63
  %1947 = vmatprep.subr.mxu0 %v66
  %1948 = vmatpush1.msra.mxu0 %v65
  %1949 = vmatprep.subr.mxu0 %v68
  %1950 = vmatpush1.msra.mxu0 %v67
  %1951 = vmatprep.subr.mxu0 0.0
  %1952 = vmatpush1.msra.mxu0 0.0
  %1953 = vmatprep.subr.mxu0 0.0
  %1954 = vmatpush1.msra.mxu0 0.0
  %1955 = vmatprep.subr.mxu0 0.0
  %1956 = vmatpush1.msra.mxu0 0.0
  %1957 = vmatprep.subr.mxu0 0.0
  %1958 = vmatpush1.msra.mxu0 0.0
  %1959 = vmatprep.subr.mxu0 0.0
  %1960 = vmatpush1.msra.mxu0 0.0
  %1961 = vmatprep.subr.mxu0 0.0
  %1962 = vmatpush1.msra.mxu0 0.0
  %1963 = vmatprep.subr.mxu0 0.0
  %1964 = vmatpush1.msra.mxu0 0.0
  %1965 = vmatprep.subr.mxu0 0.0
  %1966 = vmatpush1.msra.mxu0 0.0
  %1967 = vmatprep.subr.mxu0 0.0
  %1968 = vmatpush1.msra.mxu0 0.0
  %1969 = vmatprep.subr.mxu0 0.0
  %1970 = vmatpush1.msra.mxu0 0.0
  %1971 = vmatprep.subr.mxu0 0.0
  %1972 = vmatpush1.msra.mxu0 0.0
  %1973 = vmatprep.subr.mxu0 0.0
  %1974 = vmatpush1.msra.mxu0 0.0
  %1975 = vmatprep.subr.mxu0 0.0
  %1976 = vmatpush1.msra.mxu0 0.0
  %1977 = vmatprep.subr.mxu0 0.0
  %1978 = vmatpush1.msra.mxu0 0.0
  %1979 = vmatprep.subr.mxu0 0.0
  %1980 = vmatpush1.msra.mxu0 0.0
  %1981 = vmatprep.subr.mxu0 0.0
  %1982 = vmatpush1.msra.mxu0 0.0
  %1983 = vmatprep.subr.mxu0 0.0
  %1984 = vmatpush1.msra.mxu0 0.0
  %1985 = vmatprep.subr.mxu0 0.0
  %1986 = vmatpush1.msra.mxu0 0.0
  %1987 = vmatprep.subr.mxu0 0.0
  %1988 = vmatpush1.msra.mxu0 0.0
  %1989 = vmatprep.subr.mxu0 0.0
  %1990 = vmatpush1.msra.mxu0 0.0
  %1991 = vmatprep.subr.mxu0 0.0
  %1992 = vmatpush1.msra.mxu0 0.0
  %1993 = vmatprep.subr.mxu0 0.0
  %1994 = vmatpush1.msra.mxu0 0.0
  %1995 = vmatprep.subr.mxu0 0.0
  %1996 = vmatpush1.msra.mxu0 0.0
  %1997 = vmatprep.subr.mxu0 0.0
  %1998 = vmatpush1.msra.mxu0 0.0
  %1999 = vmatprep.subr.mxu0 0.0
  %2000 = vmatpush1.msra.mxu0 0.0
  %2001 = vmatprep.subr.mxu0 0.0
  %2002 = vmatpush1.msra.mxu0 0.0
  %2003 = vmatprep.subr.mxu0 0.0
  %2004 = vmatpush1.msra.mxu0 0.0
  %2005 = vmatprep.subr.mxu0 0.0
  %2006 = vmatpush1.msra.mxu0 0.0
  %2007 = vmatprep.mubr.f32.mxu0 0.0
  %2008 = vmatmul.mubr.f32.gmra.mrb[0].mxu0 %v1941
  %v2009 = vpop.f32.mrb[0].mxu0
  %v2010 = vadd.f32 0.0, %v2009
  %v2011 = vpop.f32.mrb[0].mxu0
  %v2012 = vadd.f32 0.0, %v2011
  %2013 = vdwg.mxu0
  %2016 = vrot.lane.b32.xlu0 %v2010, 32
  %v2017 = vpop.permute.xlu0 %2016
  %2018 = vrot.lane.b32.xlu0 %v2012, 32
  %v2019 = vpop.permute.xlu0 %2018
  %v2020 = vsel %vm93, %v2017, %v2019
  %v2022 = vsel %vm169, %v2010, %v2020
  %v2023 = vadd.f32 %v2022, %v69
  %v2024 = vadd.f32 %v1938, %v2023
  %v2025 = vxor.u32 %v2024, 2147483648
  %v2026 = vmul.f32 %v2025, 1.442695
  %v2027 = vpow.pop %v2026
  %v2028 = vadd.f32 %v2027, 1.0
  %v2029 = vrcp.pop %v2028
  %v2030 = vmul.f32 1.0, %v2029
  %2032 = vrot.lane.b32.xlu0 %v2023, 64
  %v2033 = vpop.permute.xlu0 %2032
  %v2035 = vmul.f32 %v2030, %v2033
  %2037 = vrot.lane.b32.xlu0 %v2035, 64
  %v2038 = vpop.permute.xlu0 %2037
  %v2040 = vadd.f32 %v1938, %v2038
  %v2041 = vtanh.pop %v2040
  %v2042 = vsub.f32 1.0, %v2030
  %2044 = vrot.lane.b32.xlu0 %v2041, 96
  %v2045 = vpop.permute.xlu0 %2044
  %v2047 = vmul.f32 %v2042, %v2045
  %v2048 = vmul.f32 %v2030, %v1865
  %v2049 = vadd.f32 %v2047, %v2048
  %v2052 = vunpack.c.l.s4 1966171168
  %v2053 = vunpack.c.0.s8 %v2052
  %v2054 = vlaneseq
  %v2055 = vshrl.u32 %v2054, 7
  %v2056 = vsub.s32 %v2053, %v2055
  %v2057 = vrot.slane %v2049, %v2056
  %v2058 = vcombine.high %v2057, %v2057
  %v2060 = vunpack.c.l.s4 1966171168
  %v2061 = vunpack.c.0.s8 %v2060
  %v2062 = vlaneseq
  %v2063 = vshrl.u32 %v2062, 7
  %v2064 = vsub.s32 %v2061, %v2063
  %v2065 = vrot.slane %v2057, %v2064
  %v2067 = vunpack.c.l.s4 1966171168
  %v2068 = vunpack.c.0.s8 %v2067
  %v2069 = vlaneseq
  %v2070 = vshrl.u32 %v2069, 7
  %v2071 = vsub.s32 %v2068, %v2070
  %v2072 = vrot.slane %v2058, %v2071
  %v2073 = vlaneseq
  %v2074 = vshrl.u32 %v2073, 7
  %v2075 = vsub.s32 0, %v2074
  %v2076 = vrot.slane %v2065, %v2075
  %v2077 = vlaneseq
  %v2078 = vshrl.u32 %v2077, 7
  %v2079 = vsub.s32 0, %v2078
  %v2080 = vrot.slane %v2072, %v2079
  %2081 = vrot.lane.b32.xlu0 %v2076, 96
  %v2082 = vpop.permute.xlu0 %2081
  %2083 = vrot.lane.b32.xlu0 %v2080, 96
  %v2084 = vpop.permute.xlu0 %2083
  %2087 = vst.msk [vmem:[%s4 + $0xa] sm:$0x1] %vm246, %v2082
  %2088 = vst.msk [vmem:[%s4 + $0x1a] sm:$0x1] %vm246, %v2084
  %v2089 = vcombine.high %v2065, %v2065
  %v2090 = vcombine.high %v2072, %v2072
  %v2091 = vlaneseq
  %v2092 = vshrl.u32 %v2091, 7
  %v2093 = vsub.s32 0, %v2092
  %v2094 = vrot.slane %v2089, %v2093
  %v2095 = vlaneseq
  %v2096 = vshrl.u32 %v2095, 7
  %v2097 = vsub.s32 0, %v2096
  %v2098 = vrot.slane %v2090, %v2097
  %2099 = vrot.lane.b32.xlu0 %v2094, 96
  %v2100 = vpop.permute.xlu0 %2099
  %2101 = vrot.lane.b32.xlu0 %v2098, 96
  %v2102 = vpop.permute.xlu0 %2101
  %2105 = vst.msk [vmem:[%s52 + $0x5] sm:$0x1] %vm246, %v2100
  %2106 = vst.msk [vmem:[%s52 + $0x15] sm:$0x1] %vm246, %v2102
  %v2107 = vld [vmem:[%s0 + $0xb] sm:$0x1]
  %v2108 = vld [vmem:[%s0 + $0x1b] sm:$0x1]
  %v2109 = vld [vmem:[%s44 + $0x4] sm:$0x1]
  %v2110 = vld [vmem:[%s44 + $0x14] sm:$0x1]
  %v2113 = vrot.slane %v2108, 7
  %v2114 = vsel %vm81, %v2113, %v2107
  %v2118 = vrot.slane %v2109, 6
  %v2119 = vrot.slane %v2110, 5
  %v2120 = vsel %vm88, %v2119, %v2118
  %v2122 = vsel %vm91, %v2114, %v2120
  %2123 = vrot.lane.b32.xlu0 %v2049, 96
  %v2124 = vpop.permute.xlu0 %2123
  %v2125 = vsel %vm93, %v2124, 0
  %2127 = vmatprep.subr.mxu0 %v62
  %2128 = vmatpush1.msra.mxu0 %v61
  %2129 = vmatprep.subr.mxu0 %v64
  %2130 = vmatpush1.msra.mxu0 %v63
  %2131 = vmatprep.subr.mxu0 %v66
  %2132 = vmatpush1.msra.mxu0 %v65
  %2133 = vmatprep.subr.mxu0 %v68
  %2134 = vmatpush1.msra.mxu0 %v67
  %2135 = vmatprep.subr.mxu0 0.0
  %2136 = vmatpush1.msra.mxu0 0.0
  %2137 = vmatprep.subr.mxu0 0.0
  %2138 = vmatpush1.msra.mxu0 0.0
  %2139 = vmatprep.subr.mxu0 0.0
  %2140 = vmatpush1.msra.mxu0 0.0
  %2141 = vmatprep.subr.mxu0 0.0
  %2142 = vmatpush1.msra.mxu0 0.0
  %2143 = vmatprep.subr.mxu0 0.0
  %2144 = vmatpush1.msra.mxu0 0.0
  %2145 = vmatprep.subr.mxu0 0.0
  %2146 = vmatpush1.msra.mxu0 0.0
  %2147 = vmatprep.subr.mxu0 0.0
  %2148 = vmatpush1.msra.mxu0 0.0
  %2149 = vmatprep.subr.mxu0 0.0
  %2150 = vmatpush1.msra.mxu0 0.0
  %2151 = vmatprep.subr.mxu0 0.0
  %2152 = vmatpush1.msra.mxu0 0.0
  %2153 = vmatprep.subr.mxu0 0.0
  %2154 = vmatpush1.msra.mxu0 0.0
  %2155 = vmatprep.subr.mxu0 0.0
  %2156 = vmatpush1.msra.mxu0 0.0
  %2157 = vmatprep.subr.mxu0 0.0
  %2158 = vmatpush1.msra.mxu0 0.0
  %2159 = vmatprep.subr.mxu0 0.0
  %2160 = vmatpush1.msra.mxu0 0.0
  %2161 = vmatprep.subr.mxu0 0.0
  %2162 = vmatpush1.msra.mxu0 0.0
  %2163 = vmatprep.subr.mxu0 0.0
  %2164 = vmatpush1.msra.mxu0 0.0
  %2165 = vmatprep.subr.mxu0 0.0
  %2166 = vmatpush1.msra.mxu0 0.0
  %2167 = vmatprep.subr.mxu0 0.0
  %2168 = vmatpush1.msra.mxu0 0.0
  %2169 = vmatprep.subr.mxu0 0.0
  %2170 = vmatpush1.msra.mxu0 0.0
  %2171 = vmatprep.subr.mxu0 0.0
  %2172 = vmatpush1.msra.mxu0 0.0
  %2173 = vmatprep.subr.mxu0 0.0
  %2174 = vmatpush1.msra.mxu0 0.0
  %2175 = vmatprep.subr.mxu0 0.0
  %2176 = vmatpush1.msra.mxu0 0.0
  %2177 = vmatprep.subr.mxu0 0.0
  %2178 = vmatpush1.msra.mxu0 0.0
  %2179 = vmatprep.subr.mxu0 0.0
  %2180 = vmatpush1.msra.mxu0 0.0
  %2181 = vmatprep.subr.mxu0 0.0
  %2182 = vmatpush1.msra.mxu0 0.0
  %2183 = vmatprep.subr.mxu0 0.0
  %2184 = vmatpush1.msra.mxu0 0.0
  %2185 = vmatprep.subr.mxu0 0.0
  %2186 = vmatpush1.msra.mxu0 0.0
  %2187 = vmatprep.subr.mxu0 0.0
  %2188 = vmatpush1.msra.mxu0 0.0
  %2189 = vmatprep.subr.mxu0 0.0
  %2190 = vmatpush1.msra.mxu0 0.0
  %2191 = vmatprep.mubr.f32.mxu0 0.0
  %2192 = vmatmul.mubr.f32.gmra.mrb[0].mxu0 %v2125
  %v2193 = vpop.f32.mrb[0].mxu0
  %v2194 = vadd.f32 0.0, %v2193
  %v2195 = vpop.f32.mrb[0].mxu0
  %v2196 = vadd.f32 0.0, %v2195
  %2197 = vdwg.mxu0
  %2200 = vrot.lane.b32.xlu0 %v2194, 32
  %v2201 = vpop.permute.xlu0 %2200
  %2202 = vrot.lane.b32.xlu0 %v2196, 32
  %v2203 = vpop.permute.xlu0 %2202
  %v2204 = vsel %vm93, %v2201, %v2203
  %v2206 = vsel %vm169, %v2194, %v2204
  %v2207 = vadd.f32 %v2206, %v69
  %v2208 = vadd.f32 %v2122, %v2207
  %v2209 = vxor.u32 %v2208, 2147483648
  %v2210 = vmul.f32 %v2209, 1.442695
  %v2211 = vpow.pop %v2210
  %v2212 = vadd.f32 %v2211, 1.0
  %v2213 = vrcp.pop %v2212
  %v2214 = vmul.f32 1.0, %v2213
  %2216 = vrot.lane.b32.xlu0 %v2207, 64
  %v2217 = vpop.permute.xlu0 %2216
  %v2219 = vmul.f32 %v2214, %v2217
  %2221 = vrot.lane.b32.xlu0 %v2219, 64
  %v2222 = vpop.permute.xlu0 %2221
  %v2224 = vadd.f32 %v2122, %v2222
  %v2225 = vtanh.pop %v2224
  %v2226 = vsub.f32 1.0, %v2214
  %2228 = vrot.lane.b32.xlu0 %v2225, 96
  %v2229 = vpop.permute.xlu0 %2228
  %v2231 = vmul.f32 %v2226, %v2229
  %v2232 = vmul.f32 %v2214, %v2049
  %v2233 = vadd.f32 %v2231, %v2232
  %v2236 = vunpack.c.l.s4 1966171168
  %v2237 = vunpack.c.0.s8 %v2236
  %v2238 = vlaneseq
  %v2239 = vshrl.u32 %v2238, 7
  %v2240 = vsub.s32 %v2237, %v2239
  %v2241 = vrot.slane %v2233, %v2240
  %v2242 = vcombine.high %v2241, %v2241
  %v2244 = vunpack.c.l.s4 1966171168
  %v2245 = vunpack.c.0.s8 %v2244
  %v2246 = vlaneseq
  %v2247 = vshrl.u32 %v2246, 7
  %v2248 = vsub.s32 %v2245, %v2247
  %v2249 = vrot.slane %v2241, %v2248
  %v2251 = vunpack.c.l.s4 1966171168
  %v2252 = vunpack.c.0.s8 %v2251
  %v2253 = vlaneseq
  %v2254 = vshrl.u32 %v2253, 7
  %v2255 = vsub.s32 %v2252, %v2254
  %v2256 = vrot.slane %v2242, %v2255
  %v2257 = vlaneseq
  %v2258 = vshrl.u32 %v2257, 7
  %v2259 = vsub.s32 0, %v2258
  %v2260 = vrot.slane %v2249, %v2259
  %v2261 = vlaneseq
  %v2262 = vshrl.u32 %v2261, 7
  %v2263 = vsub.s32 0, %v2262
  %v2264 = vrot.slane %v2256, %v2263
  %2265 = vrot.lane.b32.xlu0 %v2260, 96
  %v2266 = vpop.permute.xlu0 %2265
  %2267 = vrot.lane.b32.xlu0 %v2264, 96
  %v2268 = vpop.permute.xlu0 %2267
  %2271 = vst.msk [vmem:[%s4 + $0xb] sm:$0x1] %vm246, %v2266
  %2272 = vst.msk [vmem:[%s4 + $0x1b] sm:$0x1] %vm246, %v2268
  %v2273 = vcombine.high %v2249, %v2249
  %v2274 = vcombine.high %v2256, %v2256
  %v2275 = vlaneseq
  %v2276 = vshrl.u32 %v2275, 7
  %v2277 = vsub.s32 0, %v2276
  %v2278 = vrot.slane %v2273, %v2277
  %v2279 = vlaneseq
  %v2280 = vshrl.u32 %v2279, 7
  %v2281 = vsub.s32 0, %v2280
  %v2282 = vrot.slane %v2274, %v2281
  %2283 = vrot.lane.b32.xlu0 %v2278, 96
  %v2284 = vpop.permute.xlu0 %2283
  %2285 = vrot.lane.b32.xlu0 %v2282, 96
  %v2286 = vpop.permute.xlu0 %2285
  %2289 = vst.msk [vmem:[%s52 + $0x4] sm:$0x1] %vm246, %v2284
  %2290 = vst.msk [vmem:[%s52 + $0x14] sm:$0x1] %vm246, %v2286
  %v2291 = vld [vmem:[%s0 + $0xc] sm:$0x1]
  %v2292 = vld [vmem:[%s0 + $0x1c] sm:$0x1]
  %v2293 = vld [vmem:[%s44 + $0x3] sm:$0x1]
  %v2294 = vld [vmem:[%s44 + $0x13] sm:$0x1]
  %v2297 = vrot.slane %v2292, 7
  %v2298 = vsel %vm81, %v2297, %v2291
  %v2302 = vrot.slane %v2293, 6
  %v2303 = vrot.slane %v2294, 5
  %v2304 = vsel %vm88, %v2303, %v2302
  %v2306 = vsel %vm91, %v2298, %v2304
  %2307 = vrot.lane.b32.xlu0 %v2233, 96
  %v2308 = vpop.permute.xlu0 %2307
  %v2309 = vsel %vm93, %v2308, 0
  %2311 = vmatprep.subr.mxu0 %v62
  %2312 = vmatpush1.msra.mxu0 %v61
  %2313 = vmatprep.subr.mxu0 %v64
  %2314 = vmatpush1.msra.mxu0 %v63
  %2315 = vmatprep.subr.mxu0 %v66
  %2316 = vmatpush1.msra.mxu0 %v65
  %2317 = vmatprep.subr.mxu0 %v68
  %2318 = vmatpush1.msra.mxu0 %v67
  %2319 = vmatprep.subr.mxu0 0.0
  %2320 = vmatpush1.msra.mxu0 0.0
  %2321 = vmatprep.subr.mxu0 0.0
  %2322 = vmatpush1.msra.mxu0 0.0
  %2323 = vmatprep.subr.mxu0 0.0
  %2324 = vmatpush1.msra.mxu0 0.0
  %2325 = vmatprep.subr.mxu0 0.0
  %2326 = vmatpush1.msra.mxu0 0.0
  %2327 = vmatprep.subr.mxu0 0.0
  %2328 = vmatpush1.msra.mxu0 0.0
  %2329 = vmatprep.subr.mxu0 0.0
  %2330 = vmatpush1.msra.mxu0 0.0
  %2331 = vmatprep.subr.mxu0 0.0
  %2332 = vmatpush1.msra.mxu0 0.0
  %2333 = vmatprep.subr.mxu0 0.0
  %2334 = vmatpush1.msra.mxu0 0.0
  %2335 = vmatprep.subr.mxu0 0.0
  %2336 = vmatpush1.msra.mxu0 0.0
  %2337 = vmatprep.subr.mxu0 0.0
  %2338 = vmatpush1.msra.mxu0 0.0
  %2339 = vmatprep.subr.mxu0 0.0
  %2340 = vmatpush1.msra.mxu0 0.0
  %2341 = vmatprep.subr.mxu0 0.0
  %2342 = vmatpush1.msra.mxu0 0.0
  %2343 = vmatprep.subr.mxu0 0.0
  %2344 = vmatpush1.msra.mxu0 0.0
  %2345 = vmatprep.subr.mxu0 0.0
  %2346 = vmatpush1.msra.mxu0 0.0
  %2347 = vmatprep.subr.mxu0 0.0
  %2348 = vmatpush1.msra.mxu0 0.0
  %2349 = vmatprep.subr.mxu0 0.0
  %2350 = vmatpush1.msra.mxu0 0.0
  %2351 = vmatprep.subr.mxu0 0.0
  %2352 = vmatpush1.msra.mxu0 0.0
  %2353 = vmatprep.subr.mxu0 0.0
  %2354 = vmatpush1.msra.mxu0 0.0
  %2355 = vmatprep.subr.mxu0 0.0
  %2356 = vmatpush1.msra.mxu0 0.0
  %2357 = vmatprep.subr.mxu0 0.0
  %2358 = vmatpush1.msra.mxu0 0.0
  %2359 = vmatprep.subr.mxu0 0.0
  %2360 = vmatpush1.msra.mxu0 0.0
  %2361 = vmatprep.subr.mxu0 0.0
  %2362 = vmatpush1.msra.mxu0 0.0
  %2363 = vmatprep.subr.mxu0 0.0
  %2364 = vmatpush1.msra.mxu0 0.0
  %2365 = vmatprep.subr.mxu0 0.0
  %2366 = vmatpush1.msra.mxu0 0.0
  %2367 = vmatprep.subr.mxu0 0.0
  %2368 = vmatpush1.msra.mxu0 0.0
  %2369 = vmatprep.subr.mxu0 0.0
  %2370 = vmatpush1.msra.mxu0 0.0
  %2371 = vmatprep.subr.mxu0 0.0
  %2372 = vmatpush1.msra.mxu0 0.0
  %2373 = vmatprep.subr.mxu0 0.0
  %2374 = vmatpush1.msra.mxu0 0.0
  %2375 = vmatprep.mubr.f32.mxu0 0.0
  %2376 = vmatmul.mubr.f32.gmra.mrb[0].mxu0 %v2309
  %v2377 = vpop.f32.mrb[0].mxu0
  %v2378 = vadd.f32 0.0, %v2377
  %v2379 = vpop.f32.mrb[0].mxu0
  %v2380 = vadd.f32 0.0, %v2379
  %2381 = vdwg.mxu0
  %2384 = vrot.lane.b32.xlu0 %v2378, 32
  %v2385 = vpop.permute.xlu0 %2384
  %2386 = vrot.lane.b32.xlu0 %v2380, 32
  %v2387 = vpop.permute.xlu0 %2386
  %v2388 = vsel %vm93, %v2385, %v2387
  %v2390 = vsel %vm169, %v2378, %v2388
  %v2391 = vadd.f32 %v2390, %v69
  %v2392 = vadd.f32 %v2306, %v2391
  %v2393 = vxor.u32 %v2392, 2147483648
  %v2394 = vmul.f32 %v2393, 1.442695
  %v2395 = vpow.pop %v2394
  %v2396 = vadd.f32 %v2395, 1.0
  %v2397 = vrcp.pop %v2396
  %v2398 = vmul.f32 1.0, %v2397
  %2400 = vrot.lane.b32.xlu0 %v2391, 64
  %v2401 = vpop.permute.xlu0 %2400
  %v2403 = vmul.f32 %v2398, %v2401
  %2405 = vrot.lane.b32.xlu0 %v2403, 64
  %v2406 = vpop.permute.xlu0 %2405
  %v2408 = vadd.f32 %v2306, %v2406
  %v2409 = vtanh.pop %v2408
  %v2410 = vsub.f32 1.0, %v2398
  %2412 = vrot.lane.b32.xlu0 %v2409, 96
  %v2413 = vpop.permute.xlu0 %2412
  %v2415 = vmul.f32 %v2410, %v2413
  %v2416 = vmul.f32 %v2398, %v2233
  %v2417 = vadd.f32 %v2415, %v2416
  %v2420 = vunpack.c.l.s4 1966171168
  %v2421 = vunpack.c.0.s8 %v2420
  %v2422 = vlaneseq
  %v2423 = vshrl.u32 %v2422, 7
  %v2424 = vsub.s32 %v2421, %v2423
  %v2425 = vrot.slane %v2417, %v2424
  %v2426 = vcombine.high %v2425, %v2425
  %v2428 = vunpack.c.l.s4 1966171168
  %v2429 = vunpack.c.0.s8 %v2428
  %v2430 = vlaneseq
  %v2431 = vshrl.u32 %v2430, 7
  %v2432 = vsub.s32 %v2429, %v2431
  %v2433 = vrot.slane %v2425, %v2432
  %v2435 = vunpack.c.l.s4 1966171168
  %v2436 = vunpack.c.0.s8 %v2435
  %v2437 = vlaneseq
  %v2438 = vshrl.u32 %v2437, 7
  %v2439 = vsub.s32 %v2436, %v2438
  %v2440 = vrot.slane %v2426, %v2439
  %v2441 = vlaneseq
  %v2442 = vshrl.u32 %v2441, 7
  %v2443 = vsub.s32 0, %v2442
  %v2444 = vrot.slane %v2433, %v2443
  %v2445 = vlaneseq
  %v2446 = vshrl.u32 %v2445, 7
  %v2447 = vsub.s32 0, %v2446
  %v2448 = vrot.slane %v2440, %v2447
  %2449 = vrot.lane.b32.xlu0 %v2444, 96
  %v2450 = vpop.permute.xlu0 %2449
  %2451 = vrot.lane.b32.xlu0 %v2448, 96
  %v2452 = vpop.permute.xlu0 %2451
  %2455 = vst.msk [vmem:[%s4 + $0xc] sm:$0x1] %vm246, %v2450
  %2456 = vst.msk [vmem:[%s4 + $0x1c] sm:$0x1] %vm246, %v2452
  %v2457 = vcombine.high %v2433, %v2433
  %v2458 = vcombine.high %v2440, %v2440
  %v2459 = vlaneseq
  %v2460 = vshrl.u32 %v2459, 7
  %v2461 = vsub.s32 0, %v2460
  %v2462 = vrot.slane %v2457, %v2461
  %v2463 = vlaneseq
  %v2464 = vshrl.u32 %v2463, 7
  %v2465 = vsub.s32 0, %v2464
  %v2466 = vrot.slane %v2458, %v2465
  %2467 = vrot.lane.b32.xlu0 %v2462, 96
  %v2468 = vpop.permute.xlu0 %2467
  %2469 = vrot.lane.b32.xlu0 %v2466, 96
  %v2470 = vpop.permute.xlu0 %2469
  %2473 = vst.msk [vmem:[%s52 + $0x3] sm:$0x1] %vm246, %v2468
  %2474 = vst.msk [vmem:[%s52 + $0x13] sm:$0x1] %vm246, %v2470
  %v2475 = vld [vmem:[%s0 + $0xd] sm:$0x1]
  %v2476 = vld [vmem:[%s0 + $0x1d] sm:$0x1]
  %v2477 = vld [vmem:[%s44 + $0x2] sm:$0x1]
  %v2478 = vld [vmem:[%s44 + $0x12] sm:$0x1]
  %v2481 = vrot.slane %v2476, 7
  %v2482 = vsel %vm81, %v2481, %v2475
  %v2486 = vrot.slane %v2477, 6
  %v2487 = vrot.slane %v2478, 5
  %v2488 = vsel %vm88, %v2487, %v2486
  %v2490 = vsel %vm91, %v2482, %v2488
  %2491 = vrot.lane.b32.xlu0 %v2417, 96
  %v2492 = vpop.permute.xlu0 %2491
  %v2493 = vsel %vm93, %v2492, 0
  %2495 = vmatprep.subr.mxu0 %v62
  %2496 = vmatpush1.msra.mxu0 %v61
  %2497 = vmatprep.subr.mxu0 %v64
  %2498 = vmatpush1.msra.mxu0 %v63
  %2499 = vmatprep.subr.mxu0 %v66
  %2500 = vmatpush1.msra.mxu0 %v65
  %2501 = vmatprep.subr.mxu0 %v68
  %2502 = vmatpush1.msra.mxu0 %v67
  %2503 = vmatprep.subr.mxu0 0.0
  %2504 = vmatpush1.msra.mxu0 0.0
  %2505 = vmatprep.subr.mxu0 0.0
  %2506 = vmatpush1.msra.mxu0 0.0
  %2507 = vmatprep.subr.mxu0 0.0
  %2508 = vmatpush1.msra.mxu0 0.0
  %2509 = vmatprep.subr.mxu0 0.0
  %2510 = vmatpush1.msra.mxu0 0.0
  %2511 = vmatprep.subr.mxu0 0.0
  %2512 = vmatpush1.msra.mxu0 0.0
  %2513 = vmatprep.subr.mxu0 0.0
  %2514 = vmatpush1.msra.mxu0 0.0
  %2515 = vmatprep.subr.mxu0 0.0
  %2516 = vmatpush1.msra.mxu0 0.0
  %2517 = vmatprep.subr.mxu0 0.0
  %2518 = vmatpush1.msra.mxu0 0.0
  %2519 = vmatprep.subr.mxu0 0.0
  %2520 = vmatpush1.msra.mxu0 0.0
  %2521 = vmatprep.subr.mxu0 0.0
  %2522 = vmatpush1.msra.mxu0 0.0
  %2523 = vmatprep.subr.mxu0 0.0
  %2524 = vmatpush1.msra.mxu0 0.0
  %2525 = vmatprep.subr.mxu0 0.0
  %2526 = vmatpush1.msra.mxu0 0.0
  %2527 = vmatprep.subr.mxu0 0.0
  %2528 = vmatpush1.msra.mxu0 0.0
  %2529 = vmatprep.subr.mxu0 0.0
  %2530 = vmatpush1.msra.mxu0 0.0
  %2531 = vmatprep.subr.mxu0 0.0
  %2532 = vmatpush1.msra.mxu0 0.0
  %2533 = vmatprep.subr.mxu0 0.0
  %2534 = vmatpush1.msra.mxu0 0.0
  %2535 = vmatprep.subr.mxu0 0.0
  %2536 = vmatpush1.msra.mxu0 0.0
  %2537 = vmatprep.subr.mxu0 0.0
  %2538 = vmatpush1.msra.mxu0 0.0
  %2539 = vmatprep.subr.mxu0 0.0
  %2540 = vmatpush1.msra.mxu0 0.0
  %2541 = vmatprep.subr.mxu0 0.0
  %2542 = vmatpush1.msra.mxu0 0.0
  %2543 = vmatprep.subr.mxu0 0.0
  %2544 = vmatpush1.msra.mxu0 0.0
  %2545 = vmatprep.subr.mxu0 0.0
  %2546 = vmatpush1.msra.mxu0 0.0
  %2547 = vmatprep.subr.mxu0 0.0
  %2548 = vmatpush1.msra.mxu0 0.0
  %2549 = vmatprep.subr.mxu0 0.0
  %2550 = vmatpush1.msra.mxu0 0.0
  %2551 = vmatprep.subr.mxu0 0.0
  %2552 = vmatpush1.msra.mxu0 0.0
  %2553 = vmatprep.subr.mxu0 0.0
  %2554 = vmatpush1.msra.mxu0 0.0
  %2555 = vmatprep.subr.mxu0 0.0
  %2556 = vmatpush1.msra.mxu0 0.0
  %2557 = vmatprep.subr.mxu0 0.0
  %2558 = vmatpush1.msra.mxu0 0.0
  %2559 = vmatprep.mubr.f32.mxu0 0.0
  %2560 = vmatmul.mubr.f32.gmra.mrb[0].mxu0 %v2493
  %v2561 = vpop.f32.mrb[0].mxu0
  %v2562 = vadd.f32 0.0, %v2561
  %v2563 = vpop.f32.mrb[0].mxu0
  %v2564 = vadd.f32 0.0, %v2563
  %2565 = vdwg.mxu0
  %2568 = vrot.lane.b32.xlu0 %v2562, 32
  %v2569 = vpop.permute.xlu0 %2568
  %2570 = vrot.lane.b32.xlu0 %v2564, 32
  %v2571 = vpop.permute.xlu0 %2570
  %v2572 = vsel %vm93, %v2569, %v2571
  %v2574 = vsel %vm169, %v2562, %v2572
  %v2575 = vadd.f32 %v2574, %v69
  %v2576 = vadd.f32 %v2490, %v2575
  %v2577 = vxor.u32 %v2576, 2147483648
  %v2578 = vmul.f32 %v2577, 1.442695
  %v2579 = vpow.pop %v2578
  %v2580 = vadd.f32 %v2579, 1.0
  %v2581 = vrcp.pop %v2580
  %v2582 = vmul.f32 1.0, %v2581
  %2584 = vrot.lane.b32.xlu0 %v2575, 64
  %v2585 = vpop.permute.xlu0 %2584
  %v2587 = vmul.f32 %v2582, %v2585
  %2589 = vrot.lane.b32.xlu0 %v2587, 64
  %v2590 = vpop.permute.xlu0 %2589
  %v2592 = vadd.f32 %v2490, %v2590
  %v2593 = vtanh.pop %v2592
  %v2594 = vsub.f32 1.0, %v2582
  %2596 = vrot.lane.b32.xlu0 %v2593, 96
  %v2597 = vpop.permute.xlu0 %2596
  %v2599 = vmul.f32 %v2594, %v2597
  %v2600 = vmul.f32 %v2582, %v2417
  %v2601 = vadd.f32 %v2599, %v2600
  %v2604 = vunpack.c.l.s4 1966171168
  %v2605 = vunpack.c.0.s8 %v2604
  %v2606 = vlaneseq
  %v2607 = vshrl.u32 %v2606, 7
  %v2608 = vsub.s32 %v2605, %v2607
  %v2609 = vrot.slane %v2601, %v2608
  %v2610 = vcombine.high %v2609, %v2609
  %v2612 = vunpack.c.l.s4 1966171168
  %v2613 = vunpack.c.0.s8 %v2612
  %v2614 = vlaneseq
  %v2615 = vshrl.u32 %v2614, 7
  %v2616 = vsub.s32 %v2613, %v2615
  %v2617 = vrot.slane %v2609, %v2616
  %v2619 = vunpack.c.l.s4 1966171168
  %v2620 = vunpack.c.0.s8 %v2619
  %v2621 = vlaneseq
  %v2622 = vshrl.u32 %v2621, 7
  %v2623 = vsub.s32 %v2620, %v2622
  %v2624 = vrot.slane %v2610, %v2623
  %v2625 = vlaneseq
  %v2626 = vshrl.u32 %v2625, 7
  %v2627 = vsub.s32 0, %v2626
  %v2628 = vrot.slane %v2617, %v2627
  %v2629 = vlaneseq
  %v2630 = vshrl.u32 %v2629, 7
  %v2631 = vsub.s32 0, %v2630
  %v2632 = vrot.slane %v2624, %v2631
  %2633 = vrot.lane.b32.xlu0 %v2628, 96
  %v2634 = vpop.permute.xlu0 %2633
  %2635 = vrot.lane.b32.xlu0 %v2632, 96
  %v2636 = vpop.permute.xlu0 %2635
  %2639 = vst.msk [vmem:[%s4 + $0xd] sm:$0x1] %vm246, %v2634
  %2640 = vst.msk [vmem:[%s4 + $0x1d] sm:$0x1] %vm246, %v2636
  %v2641 = vcombine.high %v2617, %v2617
  %v2642 = vcombine.high %v2624, %v2624
  %v2643 = vlaneseq
  %v2644 = vshrl.u32 %v2643, 7
  %v2645 = vsub.s32 0, %v2644
  %v2646 = vrot.slane %v2641, %v2645
  %v2647 = vlaneseq
  %v2648 = vshrl.u32 %v2647, 7
  %v2649 = vsub.s32 0, %v2648
  %v2650 = vrot.slane %v2642, %v2649
  %2651 = vrot.lane.b32.xlu0 %v2646, 96
  %v2652 = vpop.permute.xlu0 %2651
  %2653 = vrot.lane.b32.xlu0 %v2650, 96
  %v2654 = vpop.permute.xlu0 %2653
  %2657 = vst.msk [vmem:[%s52 + $0x2] sm:$0x1] %vm246, %v2652
  %2658 = vst.msk [vmem:[%s52 + $0x12] sm:$0x1] %vm246, %v2654
  %v2659 = vld [vmem:[%s0 + $0xe] sm:$0x1]
  %v2660 = vld [vmem:[%s0 + $0x1e] sm:$0x1]
  %v2661 = vld [vmem:[%s44 + $0x1] sm:$0x1]
  %v2662 = vld [vmem:[%s44 + $0x11] sm:$0x1]
  %v2665 = vrot.slane %v2660, 7
  %v2666 = vsel %vm81, %v2665, %v2659
  %v2670 = vrot.slane %v2661, 6
  %v2671 = vrot.slane %v2662, 5
  %v2672 = vsel %vm88, %v2671, %v2670
  %v2674 = vsel %vm91, %v2666, %v2672
  %2675 = vrot.lane.b32.xlu0 %v2601, 96
  %v2676 = vpop.permute.xlu0 %2675
  %v2677 = vsel %vm93, %v2676, 0
  %2679 = vmatprep.subr.mxu0 %v62
  %2680 = vmatpush1.msra.mxu0 %v61
  %2681 = vmatprep.subr.mxu0 %v64
  %2682 = vmatpush1.msra.mxu0 %v63
  %2683 = vmatprep.subr.mxu0 %v66
  %2684 = vmatpush1.msra.mxu0 %v65
  %2685 = vmatprep.subr.mxu0 %v68
  %2686 = vmatpush1.msra.mxu0 %v67
  %2687 = vmatprep.subr.mxu0 0.0
  %2688 = vmatpush1.msra.mxu0 0.0
  %2689 = vmatprep.subr.mxu0 0.0
  %2690 = vmatpush1.msra.mxu0 0.0
  %2691 = vmatprep.subr.mxu0 0.0
  %2692 = vmatpush1.msra.mxu0 0.0
  %2693 = vmatprep.subr.mxu0 0.0
  %2694 = vmatpush1.msra.mxu0 0.0
  %2695 = vmatprep.subr.mxu0 0.0
  %2696 = vmatpush1.msra.mxu0 0.0
  %2697 = vmatprep.subr.mxu0 0.0
  %2698 = vmatpush1.msra.mxu0 0.0
  %2699 = vmatprep.subr.mxu0 0.0
  %2700 = vmatpush1.msra.mxu0 0.0
  %2701 = vmatprep.subr.mxu0 0.0
  %2702 = vmatpush1.msra.mxu0 0.0
  %2703 = vmatprep.subr.mxu0 0.0
  %2704 = vmatpush1.msra.mxu0 0.0
  %2705 = vmatprep.subr.mxu0 0.0
  %2706 = vmatpush1.msra.mxu0 0.0
  %2707 = vmatprep.subr.mxu0 0.0
  %2708 = vmatpush1.msra.mxu0 0.0
  %2709 = vmatprep.subr.mxu0 0.0
  %2710 = vmatpush1.msra.mxu0 0.0
  %2711 = vmatprep.subr.mxu0 0.0
  %2712 = vmatpush1.msra.mxu0 0.0
  %2713 = vmatprep.subr.mxu0 0.0
  %2714 = vmatpush1.msra.mxu0 0.0
  %2715 = vmatprep.subr.mxu0 0.0
  %2716 = vmatpush1.msra.mxu0 0.0
  %2717 = vmatprep.subr.mxu0 0.0
  %2718 = vmatpush1.msra.mxu0 0.0
  %2719 = vmatprep.subr.mxu0 0.0
  %2720 = vmatpush1.msra.mxu0 0.0
  %2721 = vmatprep.subr.mxu0 0.0
  %2722 = vmatpush1.msra.mxu0 0.0
  %2723 = vmatprep.subr.mxu0 0.0
  %2724 = vmatpush1.msra.mxu0 0.0
  %2725 = vmatprep.subr.mxu0 0.0
  %2726 = vmatpush1.msra.mxu0 0.0
  %2727 = vmatprep.subr.mxu0 0.0
  %2728 = vmatpush1.msra.mxu0 0.0
  %2729 = vmatprep.subr.mxu0 0.0
  %2730 = vmatpush1.msra.mxu0 0.0
  %2731 = vmatprep.subr.mxu0 0.0
  %2732 = vmatpush1.msra.mxu0 0.0
  %2733 = vmatprep.subr.mxu0 0.0
  %2734 = vmatpush1.msra.mxu0 0.0
  %2735 = vmatprep.subr.mxu0 0.0
  %2736 = vmatpush1.msra.mxu0 0.0
  %2737 = vmatprep.subr.mxu0 0.0
  %2738 = vmatpush1.msra.mxu0 0.0
  %2739 = vmatprep.subr.mxu0 0.0
  %2740 = vmatpush1.msra.mxu0 0.0
  %2741 = vmatprep.subr.mxu0 0.0
  %2742 = vmatpush1.msra.mxu0 0.0
  %2743 = vmatprep.mubr.f32.mxu0 0.0
  %2744 = vmatmul.mubr.f32.gmra.mrb[0].mxu0 %v2677
  %v2745 = vpop.f32.mrb[0].mxu0
  %v2746 = vadd.f32 0.0, %v2745
  %v2747 = vpop.f32.mrb[0].mxu0
  %v2748 = vadd.f32 0.0, %v2747
  %2749 = vdwg.mxu0
  %2752 = vrot.lane.b32.xlu0 %v2746, 32
  %v2753 = vpop.permute.xlu0 %2752
  %2754 = vrot.lane.b32.xlu0 %v2748, 32
  %v2755 = vpop.permute.xlu0 %2754
  %v2756 = vsel %vm93, %v2753, %v2755
  %v2758 = vsel %vm169, %v2746, %v2756
  %v2759 = vadd.f32 %v2758, %v69
  %v2760 = vadd.f32 %v2674, %v2759
  %v2761 = vxor.u32 %v2760, 2147483648
  %v2762 = vmul.f32 %v2761, 1.442695
  %v2763 = vpow.pop %v2762
  %v2764 = vadd.f32 %v2763, 1.0
  %v2765 = vrcp.pop %v2764
  %v2766 = vmul.f32 1.0, %v2765
  %2768 = vrot.lane.b32.xlu0 %v2759, 64
  %v2769 = vpop.permute.xlu0 %2768
  %v2771 = vmul.f32 %v2766, %v2769
  %2773 = vrot.lane.b32.xlu0 %v2771, 64
  %v2774 = vpop.permute.xlu0 %2773
  %v2776 = vadd.f32 %v2674, %v2774
  %v2777 = vtanh.pop %v2776
  %v2778 = vsub.f32 1.0, %v2766
  %2780 = vrot.lane.b32.xlu0 %v2777, 96
  %v2781 = vpop.permute.xlu0 %2780
  %v2783 = vmul.f32 %v2778, %v2781
  %v2784 = vmul.f32 %v2766, %v2601
  %v2785 = vadd.f32 %v2783, %v2784
  %v2788 = vunpack.c.l.s4 1966171168
  %v2789 = vunpack.c.0.s8 %v2788
  %v2790 = vlaneseq
  %v2791 = vshrl.u32 %v2790, 7
  %v2792 = vsub.s32 %v2789, %v2791
  %v2793 = vrot.slane %v2785, %v2792
  %v2794 = vcombine.high %v2793, %v2793
  %v2796 = vunpack.c.l.s4 1966171168
  %v2797 = vunpack.c.0.s8 %v2796
  %v2798 = vlaneseq
  %v2799 = vshrl.u32 %v2798, 7
  %v2800 = vsub.s32 %v2797, %v2799
  %v2801 = vrot.slane %v2793, %v2800
  %v2803 = vunpack.c.l.s4 1966171168
  %v2804 = vunpack.c.0.s8 %v2803
  %v2805 = vlaneseq
  %v2806 = vshrl.u32 %v2805, 7
  %v2807 = vsub.s32 %v2804, %v2806
  %v2808 = vrot.slane %v2794, %v2807
  %v2809 = vlaneseq
  %v2810 = vshrl.u32 %v2809, 7
  %v2811 = vsub.s32 0, %v2810
  %v2812 = vrot.slane %v2801, %v2811
  %v2813 = vlaneseq
  %v2814 = vshrl.u32 %v2813, 7
  %v2815 = vsub.s32 0, %v2814
  %v2816 = vrot.slane %v2808, %v2815
  %2817 = vrot.lane.b32.xlu0 %v2812, 96
  %v2818 = vpop.permute.xlu0 %2817
  %2819 = vrot.lane.b32.xlu0 %v2816, 96
  %v2820 = vpop.permute.xlu0 %2819
  %2823 = vst.msk [vmem:[%s4 + $0xe] sm:$0x1] %vm246, %v2818
  %2824 = vst.msk [vmem:[%s4 + $0x1e] sm:$0x1] %vm246, %v2820
  %v2825 = vcombine.high %v2801, %v2801
  %v2826 = vcombine.high %v2808, %v2808
  %v2827 = vlaneseq
  %v2828 = vshrl.u32 %v2827, 7
  %v2829 = vsub.s32 0, %v2828
  %v2830 = vrot.slane %v2825, %v2829
  %v2831 = vlaneseq
  %v2832 = vshrl.u32 %v2831, 7
  %v2833 = vsub.s32 0, %v2832
  %v2834 = vrot.slane %v2826, %v2833
  %2835 = vrot.lane.b32.xlu0 %v2830, 96
  %v2836 = vpop.permute.xlu0 %2835
  %2837 = vrot.lane.b32.xlu0 %v2834, 96
  %v2838 = vpop.permute.xlu0 %2837
  %2841 = vst.msk [vmem:[%s52 + $0x1] sm:$0x1] %vm246, %v2836
  %2842 = vst.msk [vmem:[%s52 + $0x11] sm:$0x1] %vm246, %v2838
  %v2843 = vld [vmem:[%s0 + $0xf] sm:$0x1]
  %v2844 = vld [vmem:[%s0 + $0x1f] sm:$0x1]
  %v2845 = vld [vmem:[%s44] sm:$0x1]
  %v2846 = vld [vmem:[%s44 + $0x10] sm:$0x1]
  %v2849 = vrot.slane %v2844, 7
  %v2850 = vsel %vm81, %v2849, %v2843
  %v2854 = vrot.slane %v2845, 6
  %v2855 = vrot.slane %v2846, 5
  %v2856 = vsel %vm88, %v2855, %v2854
  %v2858 = vsel %vm91, %v2850, %v2856
  %2859 = vrot.lane.b32.xlu0 %v2785, 96
  %v2860 = vpop.permute.xlu0 %2859
  %v2861 = vsel %vm93, %v2860, 0
  %2863 = vmatprep.subr.mxu0 %v62
  %2864 = vmatpush1.msra.mxu0 %v61
  %2865 = vmatprep.subr.mxu0 %v64
  %2866 = vmatpush1.msra.mxu0 %v63
  %2867 = vmatprep.subr.mxu0 %v66
  %2868 = vmatpush1.msra.mxu0 %v65
  %2869 = vmatprep.subr.mxu0 %v68
  %2870 = vmatpush1.msra.mxu0 %v67
  %2871 = vmatprep.subr.mxu0 0.0
  %2872 = vmatpush1.msra.mxu0 0.0
  %2873 = vmatprep.subr.mxu0 0.0
  %2874 = vmatpush1.msra.mxu0 0.0
  %2875 = vmatprep.subr.mxu0 0.0
  %2876 = vmatpush1.msra.mxu0 0.0
  %2877 = vmatprep.subr.mxu0 0.0
  %2878 = vmatpush1.msra.mxu0 0.0
  %2879 = vmatprep.subr.mxu0 0.0
  %2880 = vmatpush1.msra.mxu0 0.0
  %2881 = vmatprep.subr.mxu0 0.0
  %2882 = vmatpush1.msra.mxu0 0.0
  %2883 = vmatprep.subr.mxu0 0.0
  %2884 = vmatpush1.msra.mxu0 0.0
  %2885 = vmatprep.subr.mxu0 0.0
  %2886 = vmatpush1.msra.mxu0 0.0
  %2887 = vmatprep.subr.mxu0 0.0
  %2888 = vmatpush1.msra.mxu0 0.0
  %2889 = vmatprep.subr.mxu0 0.0
  %2890 = vmatpush1.msra.mxu0 0.0
  %2891 = vmatprep.subr.mxu0 0.0
  %2892 = vmatpush1.msra.mxu0 0.0
  %2893 = vmatprep.subr.mxu0 0.0
  %2894 = vmatpush1.msra.mxu0 0.0
  %2895 = vmatprep.subr.mxu0 0.0
  %2896 = vmatpush1.msra.mxu0 0.0
  %2897 = vmatprep.subr.mxu0 0.0
  %2898 = vmatpush1.msra.mxu0 0.0
  %2899 = vmatprep.subr.mxu0 0.0
  %2900 = vmatpush1.msra.mxu0 0.0
  %2901 = vmatprep.subr.mxu0 0.0
  %2902 = vmatpush1.msra.mxu0 0.0
  %2903 = vmatprep.subr.mxu0 0.0
  %2904 = vmatpush1.msra.mxu0 0.0
  %2905 = vmatprep.subr.mxu0 0.0
  %2906 = vmatpush1.msra.mxu0 0.0
  %2907 = vmatprep.subr.mxu0 0.0
  %2908 = vmatpush1.msra.mxu0 0.0
  %2909 = vmatprep.subr.mxu0 0.0
  %2910 = vmatpush1.msra.mxu0 0.0
  %2911 = vmatprep.subr.mxu0 0.0
  %2912 = vmatpush1.msra.mxu0 0.0
  %2913 = vmatprep.subr.mxu0 0.0
  %2914 = vmatpush1.msra.mxu0 0.0
  %2915 = vmatprep.subr.mxu0 0.0
  %2916 = vmatpush1.msra.mxu0 0.0
  %2917 = vmatprep.subr.mxu0 0.0
  %2918 = vmatpush1.msra.mxu0 0.0
  %2919 = vmatprep.subr.mxu0 0.0
  %2920 = vmatpush1.msra.mxu0 0.0
  %2921 = vmatprep.subr.mxu0 0.0
  %2922 = vmatpush1.msra.mxu0 0.0
  %2923 = vmatprep.subr.mxu0 0.0
  %2924 = vmatpush1.msra.mxu0 0.0
  %2925 = vmatprep.subr.mxu0 0.0
  %2926 = vmatpush1.msra.mxu0 0.0
  %2927 = vmatprep.mubr.f32.mxu0 0.0
  %2928 = vmatmul.mubr.f32.gmra.mrb[0].mxu0 %v2861
  %v2929 = vpop.f32.mrb[0].mxu0
  %v2930 = vadd.f32 0.0, %v2929
  %v2931 = vpop.f32.mrb[0].mxu0
  %v2932 = vadd.f32 0.0, %v2931
  %2933 = vdwg.mxu0
  %2936 = vrot.lane.b32.xlu0 %v2930, 32
  %v2937 = vpop.permute.xlu0 %2936
  %2938 = vrot.lane.b32.xlu0 %v2932, 32
  %v2939 = vpop.permute.xlu0 %2938
  %v2940 = vsel %vm93, %v2937, %v2939
  %v2942 = vsel %vm169, %v2930, %v2940
  %v2943 = vadd.f32 %v2942, %v69
  %v2944 = vadd.f32 %v2858, %v2943
  %v2945 = vxor.u32 %v2944, 2147483648
  %v2946 = vmul.f32 %v2945, 1.442695
  %v2947 = vpow.pop %v2946
  %v2948 = vadd.f32 %v2947, 1.0
  %v2949 = vrcp.pop %v2948
  %v2950 = vmul.f32 1.0, %v2949
  %2952 = vrot.lane.b32.xlu0 %v2943, 64
  %v2953 = vpop.permute.xlu0 %2952
  %v2955 = vmul.f32 %v2950, %v2953
  %2957 = vrot.lane.b32.xlu0 %v2955, 64
  %v2958 = vpop.permute.xlu0 %2957
  %v2960 = vadd.f32 %v2858, %v2958
  %v2961 = vtanh.pop %v2960
  %v2962 = vsub.f32 1.0, %v2950
  %2964 = vrot.lane.b32.xlu0 %v2961, 96
  %v2965 = vpop.permute.xlu0 %2964
  %v2967 = vmul.f32 %v2962, %v2965
  %v2968 = vmul.f32 %v2950, %v2785
  %v2969 = vadd.f32 %v2967, %v2968
  %v2972 = vunpack.c.l.s4 1966171168
  %v2973 = vunpack.c.0.s8 %v2972
  %v2974 = vlaneseq
  %v2975 = vshrl.u32 %v2974, 7
  %v2976 = vsub.s32 %v2973, %v2975
  %v2977 = vrot.slane %v2969, %v2976
  %v2978 = vcombine.high %v2977, %v2977
  %v2980 = vunpack.c.l.s4 1966171168
  %v2981 = vunpack.c.0.s8 %v2980
  %v2982 = vlaneseq
  %v2983 = vshrl.u32 %v2982, 7
  %v2984 = vsub.s32 %v2981, %v2983
  %v2985 = vrot.slane %v2977, %v2984
  %v2987 = vunpack.c.l.s4 1966171168
  %v2988 = vunpack.c.0.s8 %v2987
  %v2989 = vlaneseq
  %v2990 = vshrl.u32 %v2989, 7
  %v2991 = vsub.s32 %v2988, %v2990
  %v2992 = vrot.slane %v2978, %v2991
  %v2993 = vlaneseq
  %v2994 = vshrl.u32 %v2993, 7
  %v2995 = vsub.s32 0, %v2994
  %v2996 = vrot.slane %v2985, %v2995
  %v2997 = vlaneseq
  %v2998 = vshrl.u32 %v2997, 7
  %v2999 = vsub.s32 0, %v2998
  %v3000 = vrot.slane %v2992, %v2999
  %3001 = vrot.lane.b32.xlu0 %v2996, 96
  %v3002 = vpop.permute.xlu0 %3001
  %3003 = vrot.lane.b32.xlu0 %v3000, 96
  %v3004 = vpop.permute.xlu0 %3003
  %3007 = vst.msk [vmem:[%s4 + $0xf] sm:$0x1] %vm246, %v3002
  %3008 = vst.msk [vmem:[%s4 + $0x1f] sm:$0x1] %vm246, %v3004
  %v3009 = vcombine.high %v2985, %v2985
  %v3010 = vcombine.high %v2992, %v2992
  %v3011 = vlaneseq
  %v3012 = vshrl.u32 %v3011, 7
  %v3013 = vsub.s32 0, %v3012
  %v3014 = vrot.slane %v3009, %v3013
  %v3015 = vlaneseq
  %v3016 = vshrl.u32 %v3015, 7
  %v3017 = vsub.s32 0, %v3016
  %v3018 = vrot.slane %v3010, %v3017
  %3019 = vrot.lane.b32.xlu0 %v3014, 96
  %v3020 = vpop.permute.xlu0 %3019
  %3021 = vrot.lane.b32.xlu0 %v3018, 96
  %v3022 = vpop.permute.xlu0 %3021
  %3025 = vst.msk [vmem:[%s52] sm:$0x1] %vm246, %v3020
  %3026 = vst.msk [vmem:[%s52 + $0x10] sm:$0x1] %vm246, %v3022
  %3027 = vrot.lane.b32.xlu0 %v2969, 96
  %v3028 = vpop.permute.xlu0 %3027
  %vm3030 = vcmask 257024
  %3031 = vst.msk [vmem:[#allocation2] sm:$0xf] %vm3030, %v3028
  %s3032 = ssub.s32 0, 0
  %s3033 = smul.u32 2, %s3032
  %p3034 = scmp.lt.s32.totalorder %s3033, 1
  %s3035 = scalar_select %p3034, %s3033, 1
  %s3036 = smul.addr %s3035, 8
  %s3037 = scalar_lea.vmem %s5, %s3036
  // Predicated region
  $region22: #{znn_forward.4} parent=0 // pred_check
    _
  $region23: #{znn_forward.4} parent=0 // pred_check_branch
    %3039 = sbr.rel (0) target = $region25
  $region24: #{znn_forward.4} parent=0 // pred_region
    _
  $region25: #{znn_forward.4} parent=0 // pred_fallthru
    _
  // Predicated region
  $region26: #{znn_forward.4} parent=0 // pred_check
    _
  $region27: #{znn_forward.4} parent=0 // pred_check_branch
    %3041 = sbr.rel (0) target = $region29
  $region28: #{znn_forward.4} parent=0 // pred_region
    %s3042 = ssub.s32 0, 0
    %s3043 = smul.u32 2, %s3042
  $region29: #{znn_forward.4} parent=0 // pred_fallthru
    _
  // Predicated region
  $region30: #{znn_forward.4} parent=0 // pred_check
    _
  $region31: #{znn_forward.4} parent=0 // pred_check_branch
    %3045 = sbr.rel (0) target = $region33
  $region32: #{znn_forward.4} parent=0 // pred_region
    _
  $region33: #{znn_forward.4} parent=0 // pred_fallthru
    _
  // Predicated region
  $region34: #{znn_forward.4} parent=0 // pred_check
    _
  $region35: #{znn_forward.4} parent=0 // pred_check_branch
    %3047 = sbr.rel (0) target = $region37
  $region36: #{znn_forward.4} parent=0 // pred_region
    %s3048 = ssub.s32 0, 0
    %s3049 = smul.u32 2, %s3048
    %p3050 = scmp.lt.s32.totalorder %s3049, 1
    %s3051 = scalar_select %p3050, %s3049, 1
    %s3052 = smul.addr %s3051, 8
    %s3053 = scalar_lea.vmem %s5, %s3052
  $region37: #{znn_forward.4} parent=0 // pred_fallthru
    _

</llo_original>
